<compile_context>
chip_gen: v7x
topology: tpu7x:2x2x1
jax: 0.10.0
libtpu: 0.0.40
codegen_flags: <defaults>
</compile_context>

<pallas_src>
import jax
import jax.numpy as jnp
from jax.experimental import pallas as pl
from jax.experimental.pallas import tpu as pltpu

_N_OUT = 3 * 224 * 224  # 150528


def _decoder_kernel(h_ref, w2_ref, b2_ref, o_ref):
    # fc2 tile + bias + ReLU. h is the tiny resident bf16 fc1 activation;
    # W2/b2 stream from HBM tile-by-tile (bf16), accumulation in f32 on MXU.
    out = jnp.dot(h_ref[...], w2_ref[...], preferred_element_type=jnp.float32)
    out = out + b2_ref[...].astype(jnp.float32)
    # NOTE: with B=2 only 2 of 8 sublanes per output vreg are live -> masked
    # stores; harmless here (output is ~6% of HBM traffic). If B grows, keep
    # it a multiple of 8 for unmasked vst.
    o_ref[...] = jnp.maximum(out, 0.0).astype(o_ref.dtype)


def _default_tile_n():
    """N/4 tile on v6e/v7x (fits the 32 MiB scoped-VMEM default, halves step
    count); N/8 on v5e / older / unknown parts (16 MiB scoped-VMEM default)."""
    try:
        kind = jax.devices()[0].device_kind.lower()
    except Exception:  # pragma: no cover - defensive fallback
        kind = ""
    if ("v6" in kind) or ("v7" in kind) or ("7x" in kind):
        return _N_OUT // 4  # 37632 -> 4 grid steps (even: splits across 2 TCs)
    return _N_OUT // 8      # 18816 -> 8 grid steps


def linear_decoder_forward(z, w1_t, b1, w2_t, b2, *, tn=None):
    """relu(fc1(z)) -> relu(fc2(.)) -> reshape(B, 3, 224, 224).

    z: (B, L) f32; w1_t: (L, I); b1: (1, I); w2_t: (I, N); b2: (1, N).
    Weights are pre-transposed ((in, out)) relative to PyTorch nn.Linear
    (out, in). Pass w2_t / b2 already converted to bf16 at weight-load time;
    this function does NOT cast them, so the kernel runs at the HBM roofline.
    """
    B, L = z.shape
    I = w1_t.shape[1]
    N = w2_t.shape[1]
    assert N == _N_OUT
    if tn is None:
        tn = _default_tile_n()
    assert N % tn == 0 and tn % 128 == 0
    grid_steps = N // tn

    # fc1 + ReLU hoisted out of the grid loop: a tiny (B,L)x(L,I) matmul whose
    # traffic (~KBs) is negligible next to the ~19 MB bf16 W2 stream.
    h = jnp.maximum(jnp.dot(z, w1_t, preferred_element_type=jnp.float32) + b1, 0.0)
    h = h.astype(w2_t.dtype)  # bf16 MXU operand (matches the streamed weights)

    cost = pl.CostEstimate(
        flops=2 * B * I * N,
        transcendentals=0,
        bytes_accessed=(w2_t.size * w2_t.dtype.itemsize      # dominant weight stream
                        + b2.size * b2.dtype.itemsize
                        + h.size * h.dtype.itemsize * grid_steps
                        + B * N * 4),                         # f32 output writeback
    )

    flat = pl.pallas_call(
        _decoder_kernel,
        out_shape=jax.ShapeDtypeStruct((B, N), jnp.float32),
        grid_spec=pltpu.PrefetchScalarGridSpec(
            num_scalar_prefetch=0,
            grid=(grid_steps,),
            in_specs=[
                pl.BlockSpec((B, I), lambda j: (0, 0)),    # h (resident, tiny)
                pl.BlockSpec((I, tn), lambda j: (0, j)),   # W2^T tile (bf16 stream)
                pl.BlockSpec((1, tn), lambda j: (0, j)),   # b2 tile (bf16 stream)
            ],
            out_specs=pl.BlockSpec((B, tn), lambda j: (0, j)),  # lane-dense slab
        ),
        compiler_params=pltpu.CompilerParams(
            # No cross-step state -> tiles shard across both TCs on v7x.
            dimension_semantics=("parallel",),
        ),
        cost_estimate=cost,
    )(h, w2_t, b2)

    return flat.reshape(B, 3, 224, 224)


def _reference_forward(z, w1_t, b1, w2_t, b2):
    h = jnp.maximum(z @ w1_t + b1, 0.0)
    out = jnp.maximum(h @ w2_t + b2, 0.0)
    return out.reshape(z.shape[0], 3, 224, 224)


if __name__ == "__main__":
    # Output spatial shape is fixed by the module at (3, 224, 224); latent /
    # intermediate sizes are free hyperparameters kept small.
    B = 2
    latent_size = 32
    intermediate_size = 64
    N = _N_OUT

    key = jax.random.PRNGKey(0)
    kz, k1, k2, k3, k4 = jax.random.split(key, 5)

    z = jax.random.normal(kz, (B, latent_size), dtype=jnp.float32)

    # Synthetic params (PyTorch layout (out, in), stored pre-transposed (in, out)).
    w1_t = jax.random.normal(k1, (latent_size, intermediate_size),
                             dtype=jnp.float32) * 0.05
    b1 = jax.random.normal(k2, (1, intermediate_size), dtype=jnp.float32) * 0.05
    w2_t = jax.random.normal(k3, (intermediate_size, N), dtype=jnp.float32) * 0.05
    b2 = jax.random.normal(k4, (1, N), dtype=jnp.float32) * 0.05

    # One-time "weight-load" conversion: the bf16 copies are the params the
    # forward path sees, so no per-call f32->bf16 cast over the ~38 MB W2.
    w2_bf16 = jax.block_until_ready(w2_t.astype(jnp.bfloat16))
    b2_bf16 = jax.block_until_ready(b2.astype(jnp.bfloat16))

    fwd = jax.jit(linear_decoder_forward, static_argnames=("tn",))
    out = jax.block_until_ready(fwd(z, w1_t, b1, w2_bf16, b2_bf16))

    # Full-f32 reference; tolerance accounts for bf16 quantization of the
    # W2/b2 stream and the bf16 fc1-activation operand to the MXU.
    ref = _reference_forward(z, w1_t, b1, w2_t, b2)
    assert out.shape == (B, 3, 224, 224)
    assert jnp.allclose(out, ref, atol=2e-2, rtol=2e-2)

    print("KERNEL_OK")
</pallas_src>

<mosaic_0001>
module attributes {stable_mosaic.version = 11 : i64} {
  func.func @_decoder_kernel(%arg0: i32, %arg1: memref<2x64xbf16, #tpu.memory_space<vmem>>, %arg2: memref<64x18816xbf16, #tpu.memory_space<vmem>>, %arg3: memref<1x18816xbf16, #tpu.memory_space<vmem>>, %arg4: memref<2x18816xf32, #tpu.memory_space<vmem>>) attributes {dimension_semantics = [#tpu.dimension_semantics<parallel>], iteration_bounds = array<i64: 8>, scalar_prefetch = 0 : i64, scratch_operands = 0 : i64, tpu.core_type = #tpu.core_type<tc>, window_params = [{pipeline_mode = #tpu.pipeline_mode<synchronous>, transform_indices = @transform_0, window_bounds = array<i64: 2, 64>}, {transform_indices = @transform_1, window_bounds = array<i64: 64, 18816>}, {transform_indices = @transform_2, window_bounds = array<i64: 1, 18816>}, {transform_indices = @transform_3, window_bounds = array<i64: 2, 18816>}]} {
    %c0 = arith.constant 0 : index
    %c0_0 = arith.constant 0 : index
    %0 = vector.load %arg1[%c0, %c0_0] : memref<2x64xbf16, #tpu.memory_space<vmem>>, vector<2x64xbf16>
    %c0_1 = arith.constant 0 : index
    %c0_2 = arith.constant 0 : index
    %1 = vector.load %arg2[%c0_1, %c0_2] : memref<64x18816xbf16, #tpu.memory_space<vmem>>, vector<64x18816xbf16>
    %cst = arith.constant dense<0.000000e+00> : vector<2x18816xf32>
    %2 = tpu.matmul %0, %1, %cst {dimension_numbers = #tpu.dot_dimension_numbers<[1], [0], [0], [1], [0, 0, 1, 1], [], []>} : vector<2x64xbf16>, vector<64x18816xbf16>, vector<2x18816xf32> -> vector<2x18816xf32>
    %c0_3 = arith.constant 0 : index
    %c0_4 = arith.constant 0 : index
    %3 = vector.load %arg3[%c0_3, %c0_4] : memref<1x18816xbf16, #tpu.memory_space<vmem>>, vector<1x18816xbf16>
    %4 = arith.extf %3 : vector<1x18816xbf16> to vector<1x18816xf32>
    %5 = vector.broadcast %4 : vector<1x18816xf32> to vector<2x18816xf32>
    %6 = arith.addf %2, %5 : vector<2x18816xf32>
    %cst_5 = arith.constant 0.000000e+00 : f32
    %7 = vector.broadcast %cst_5 : f32 to vector<2x18816xf32>
    %8 = arith.maximumf %6, %7 : vector<2x18816xf32>
    %c0_6 = arith.constant 0 : index
    %c0_7 = arith.constant 0 : index
    %9 = vector.load %arg4[%c0_6, %c0_7] : memref<2x18816xf32, #tpu.memory_space<vmem>>, vector<2x18816xf32>
    tpu.vector_store %arg4[%c0_6, %c0_7], %8 {strides = array<i32>} : memref<2x18816xf32, #tpu.memory_space<vmem>>, vector<2x18816xf32>,
    return
  }
  func.func @transform_0(%arg0: i32) -> (i32, i32) {
    %c0_i32 = arith.constant 0 : i32
    %c0_i32_0 = arith.constant 0 : i32
    %c0_i32_1 = arith.constant 0 : i32
    return %c0_i32, %c0_i32_0 : i32, i32
  }
  func.func @transform_1(%arg0: i32) -> (i32, i32) {
    %c0_i32 = arith.constant 0 : i32
    %c0_i32_0 = arith.constant 0 : i32
    return %c0_i32, %arg0 : i32, i32
  }
  func.func @transform_2(%arg0: i32) -> (i32, i32) {
    %c0_i32 = arith.constant 0 : i32
    %c0_i32_0 = arith.constant 0 : i32
    return %c0_i32, %arg0 : i32, i32
  }
  func.func @transform_3(%arg0: i32) -> (i32, i32) {
    %c0_i32 = arith.constant 0 : i32
    %c0_i32_0 = arith.constant 0 : i32
    return %c0_i32, %arg0 : i32, i32
  }
}

</mosaic_0001>

<llo_original>
// kernel: linear_decoder_forward.1
$region0: #{linear_decoder_forward.1}
  #allocation0 [shape = 'u32[]', space=smem, size = 0x4, offset = 0x4, fixed_abs, tag = 'smem constant byte address 0x4 - core index']
  #allocation1 [shape = 'u32[144,128]{1,0:T(1,128)}', space=vmem, size = 0x12000, scoped, tag = 'internal scratch']
  %s0 = inlined_call_operand.vmem [shape: bf16[2,64], index: 0, kind: input, shape index: {}]
  %s1 = inlined_call_operand.hbm [shape: bf16[64,150528], index: 1, kind: input, shape index: {}]
  %s2 = inlined_call_operand.hbm [shape: bf16[1,150528], index: 2, kind: input, shape index: {}]
  %s3 = inlined_call_operand.vmem [shape: f32[2,150528], index: 3, kind: output, shape index: {}]
  %s4 = sld [smem:[#allocation0]]
  $region53: #{linear_decoder_forward.1} parent=0
    _
  %s6 = ssub.s32 1, %s4
  %s7 = scalar_select 0, %s6, %s4
  $region1: #{linear_decoder_forward.1} parent=0
    #allocation2 [shape = 'u8[4816896]{0}', space=vmem, size = 0x498000, scoped, tag = 'input window, operand 1']
    #allocation3 [shape = 's32[2]{0}', space=sflag, size = 0x8, scoped, tag = 'scoped memory for linear_decoder_forward.1']
    #allocation4 [shape = 'u8[150528]{0}', space=vmem, size = 0x24c00, scoped, tag = 'input window, operand 2']
    #allocation5 [shape = 's32[2]{0}', space=sflag, size = 0x8, scoped, tag = 'scoped memory for linear_decoder_forward.1']
    %8 = vsyncpa [#allocation3], 0
    %s9 = scalar_lea.sflag [#allocation3], 1
    %10 = vsyncpa %s9, 0
    %11 = vsyncpa [#allocation5], 0
    %s12 = scalar_lea.sflag [#allocation5], 1
    %13 = vsyncpa %s12, 0
    loop: start=0, step=1, limit=10
    $region2: #{linear_decoder_forward.1} parent=1 // loop_pre_header
      _
    $region3: #{linear_decoder_forward.1} parent=1 // loop_header
      %s15 = sphi 0, %s19
      %p16 = scmp.ge.s32.totalorder %s15, 10
      %s23 = sphi 0, %s23
      %s25 = sphi 0, %s23
      %s26 = sphi 0, %s25
      %s40 = sphi 0, %s26
      %s46 = sphi 0, %s48
      %s49 = sphi 0, %s46
      %s50 = sphi 0, %s49
      %s66 = sphi 0, %s50
      %s72 = sphi 0, %s74
      %s75 = sphi 0, %s72
      %s76 = sphi 0, %s75
      %s92 = sphi 0, %s76
      %s98 = sphi 0, %s100
      %s101 = sphi 0, %s98
      %s102 = sphi 0, %s101
      %s118 = sphi 0, %s102
    $region4: #{linear_decoder_forward.1} parent=1 // loop_header_branch
      %18 = sbr.rel (%p16) target = $region8
    $region5: #{linear_decoder_forward.1} parent=1 // loop_body
      %s20 = ssub.s32 %s15, 1
      %s21 = ssub.s32 %s15, 2
      %s22 = sadd.s32 %s15, 1
      %s24 = sadd.s32 %s23, 1
      %p27 = scmp.eq.s32.totalorder %s15, 7
      %p28 = scmp.ne.s32.totalorder %s23, %s25
      %p29 = scmp.eq.s32.totalorder %s15, 0
      %p30 = por %p28, %p29
      %p31 = scmp.ne.s32.totalorder %s23, %s25
      %p32 = scmp.eq.s32.totalorder %s20, 7
      %p33 = por %p31, %p32
      %p34 = scmp.ne.s32.totalorder %s25, %s26
      %p35 = scmp.eq.s32.totalorder %s20, 0
      %p36 = por %p34, %p35
      %p37 = scmp.ne.s32.totalorder %s25, %s26
      %p38 = scmp.eq.s32.totalorder %s21, 7
      %p39 = por %p37, %p38
      %p41 = scmp.ne.s32.totalorder %s26, %s40
      %p42 = scmp.eq.s32.totalorder %s21, 0
      %p43 = por %p41, %p42
      %s44 = ssub.s32 %s15, %s22
      %p45 = scmp.eq.s32.totalorder %s44, 0
      %s47 = sadd.s32 %s46, 1
      %s48 = scalar_select %p45, %s46, %s47
      %p51 = pneg %p45
      %p52 = scmp.eq.s32.totalorder %s15, 7
      %p53 = por %p51, %p52
      %p54 = scmp.ne.s32.totalorder %s46, %s49
      %p55 = scmp.eq.s32.totalorder %s15, 0
      %p56 = por %p54, %p55
      %p57 = scmp.ne.s32.totalorder %s46, %s49
      %p58 = scmp.eq.s32.totalorder %s20, 7
      %p59 = por %p57, %p58
      %p60 = scmp.ne.s32.totalorder %s49, %s50
      %p61 = scmp.eq.s32.totalorder %s20, 0
      %p62 = por %p60, %p61
      %p63 = scmp.ne.s32.totalorder %s49, %s50
      %p64 = scmp.eq.s32.totalorder %s21, 7
      %p65 = por %p63, %p64
      %p67 = scmp.ne.s32.totalorder %s50, %s66
      %p68 = scmp.eq.s32.totalorder %s21, 0
      %p69 = por %p67, %p68
      %s70 = ssub.s32 %s15, %s22
      %p71 = scmp.eq.s32.totalorder %s70, 0
      %s73 = sadd.s32 %s72, 1
      %s74 = scalar_select %p71, %s72, %s73
      %p77 = pneg %p71
      %p78 = scmp.eq.s32.totalorder %s15, 7
      %p79 = por %p77, %p78
      %p80 = scmp.ne.s32.totalorder %s72, %s75
      %p81 = scmp.eq.s32.totalorder %s15, 0
      %p82 = por %p80, %p81
      %p83 = scmp.ne.s32.totalorder %s72, %s75
      %p84 = scmp.eq.s32.totalorder %s20, 7
      %p85 = por %p83, %p84
      %p86 = scmp.ne.s32.totalorder %s75, %s76
      %p87 = scmp.eq.s32.totalorder %s20, 0
      %p88 = por %p86, %p87
      %p89 = scmp.ne.s32.totalorder %s75, %s76
      %p90 = scmp.eq.s32.totalorder %s21, 7
      %p91 = por %p89, %p90
      %p93 = scmp.ne.s32.totalorder %s76, %s92
      %p94 = scmp.eq.s32.totalorder %s21, 0
      %p95 = por %p93, %p94
      %s96 = ssub.s32 %s15, %s22
      %p97 = scmp.eq.s32.totalorder %s96, 0
      %s99 = sadd.s32 %s98, 1
      %s100 = scalar_select %p97, %s98, %s99
      %p103 = pneg %p97
      %p104 = scmp.eq.s32.totalorder %s15, 7
      %p105 = por %p103, %p104
      %p106 = scmp.ne.s32.totalorder %s98, %s101
      %p107 = scmp.eq.s32.totalorder %s15, 0
      %p108 = por %p106, %p107
      %p109 = scmp.ne.s32.totalorder %s98, %s101
      %p110 = scmp.eq.s32.totalorder %s20, 7
      %p111 = por %p109, %p110
      %p112 = scmp.ne.s32.totalorder %s101, %s102
      %p113 = scmp.eq.s32.totalorder %s20, 0
      %p114 = por %p112, %p113
      %p115 = scmp.ne.s32.totalorder %s101, %s102
      %p116 = scmp.eq.s32.totalorder %s21, 7
      %p117 = por %p115, %p116
      %p119 = scmp.ne.s32.totalorder %s102, %s118
      %p120 = scmp.eq.s32.totalorder %s21, 0
      %p121 = por %p119, %p120
      %p122 = scmp.le.s32.totalorder 1, %s15
      %p123 = scmp.lt.s32.totalorder %s15, 9
      %p124 = pnand %p122, %p123
      %p125 = pneg %p124
      // Predicated region
      $region9: #{linear_decoder_forward.1} parent=5 // pred_check
        _
      $region10: #{linear_decoder_forward.1} parent=5 // pred_check_branch
        %127 = sbr.rel (%p124) target = $region12
      $region11: #{linear_decoder_forward.1} parent=5 // pred_region
        %s128 = ssub.s32 %s15, 1
        // Predicated region
        $region13: #{linear_decoder_forward.1} parent=11 // pred_check
          %p129 = pneg %p36
        $region14: #{linear_decoder_forward.1} parent=11 // pred_check_branch
          %131 = sbr.rel (%p129) target = $region16
        $region15: #{linear_decoder_forward.1} parent=11 // pred_region
          _
        $region16: #{linear_decoder_forward.1} parent=11 // pred_fallthru
          _
      $region12: #{linear_decoder_forward.1} parent=5 // pred_fallthru
        _
      %p132 = scmp.lt.s32.totalorder %s15, 8
      // Predicated region
      $region17: #{linear_decoder_forward.1} parent=5 // pred_check
        %p133 = pneg %p132
      $region18: #{linear_decoder_forward.1} parent=5 // pred_check_branch
        %135 = sbr.rel (%p133) target = $region20
      $region19: #{linear_decoder_forward.1} parent=5 // pred_region
        // Predicated region
        $region21: #{linear_decoder_forward.1} parent=19 // pred_check
          %p136 = pneg %p56
        $region22: #{linear_decoder_forward.1} parent=19 // pred_check_branch
          %138 = sbr.rel (%p136) target = $region24
        $region23: #{linear_decoder_forward.1} parent=19 // pred_region
          %s139 = sand.u32 %s46, 1
          %s140 = scalar_lea.sflag [#allocation3], %s139
          %s141 = sand.u32 %s46, 1
          %s142 = smul.addr %s141, 4704
          %s143 = scalar_lea.vmem [#allocation2], %s142
          %s144 = smul.u32 147, %s15
          %s146 = ssub.s32 75264, 75264
          %147 = vsyncadd %s140, %s146
          %s148 = smul.addr %s144, 64
          %s149 = scalar_lea.hbm %s1, %s148
          %s150 = sshll.u32 %s143, 4
          %s151 = int_to_ptr.vmem [resolvable:$true] %s150
          %156 = dma.hbm_to_vmem [thread:$0]  %s149, 75264, %s151, %s140, 75264, 9408, 588
        $region24: #{linear_decoder_forward.1} parent=19 // pred_fallthru
          _
        // Predicated region
        $region25: #{linear_decoder_forward.1} parent=19 // pred_check
          %p157 = pneg %p82
        $region26: #{linear_decoder_forward.1} parent=19 // pred_check_branch
          %159 = sbr.rel (%p157) target = $region28
        $region27: #{linear_decoder_forward.1} parent=19 // pred_region
          %s160 = sand.u32 %s72, 1
          %s161 = scalar_lea.sflag [#allocation5], %s160
          %s162 = sand.u32 %s72, 1
          %s163 = smul.addr %s162, 147
          %s164 = scalar_lea.vmem [#allocation4], %s163
          %s165 = smul.u32 147, %s15
          %s167 = ssub.s32 2352, 2352
          %168 = vsyncadd %s161, %s167
          %s169 = smul.addr %s165, 16
          %s170 = scalar_lea.hbm %s2, %s169
          %s172 = sshll.u32 %s164, 4
          %s173 = int_to_ptr.vmem [resolvable:$true] %s172
          %175 = dma.hbm_to_vmem [thread:$0]  %s170, 2352, %s173, %s161
        $region28: #{linear_decoder_forward.1} parent=19 // pred_fallthru
          _
      $region20: #{linear_decoder_forward.1} parent=5 // pred_fallthru
        _
      %p176 = scmp.le.s32.totalorder 1, %s15
      %p177 = scmp.lt.s32.totalorder %s15, 9
      %p178 = pnand %p176, %p177
      %p179 = pneg %p178
      // Predicated region
      $region29: #{linear_decoder_forward.1} parent=5 // pred_check
        _
      $region30: #{linear_decoder_forward.1} parent=5 // pred_check_branch
        %181 = sbr.rel (%p178) target = $region32
      $region31: #{linear_decoder_forward.1} parent=5 // pred_region
        %s182 = ssub.s32 %s15, 1
        %s183 = sand.u32 %s49, 1
        %s184 = scalar_lea.sflag [#allocation3], %s183
        %s185 = sand.u32 %s49, 1
        %s186 = smul.addr %s185, 4704
        %s187 = scalar_lea.vmem [#allocation2], %s186
        // Predicated region
        $region33: #{linear_decoder_forward.1} parent=31 // pred_check
          %p188 = pneg %p62
        $region34: #{linear_decoder_forward.1} parent=31 // pred_check_branch
          %190 = sbr.rel (%p188) target = $region36
        $region35: #{linear_decoder_forward.1} parent=31 // pred_region
          %191 = dma.done %s184, 75264
        $region36: #{linear_decoder_forward.1} parent=31 // pred_fallthru
          _
        %s192 = sand.u32 %s75, 1
        %s193 = scalar_lea.sflag [#allocation5], %s192
        %s194 = sand.u32 %s75, 1
        %s195 = smul.addr %s194, 147
        %s196 = scalar_lea.vmem [#allocation4], %s195
        // Predicated region
        $region37: #{linear_decoder_forward.1} parent=31 // pred_check
          %p197 = pneg %p88
        $region38: #{linear_decoder_forward.1} parent=31 // pred_check_branch
          %199 = sbr.rel (%p197) target = $region40
        $region39: #{linear_decoder_forward.1} parent=31 // pred_region
          %200 = dma.done %s193, 2352
        $region40: #{linear_decoder_forward.1} parent=31 // pred_fallthru
          _
        %p201 = pneg %p36
        %p202 = pneg %p33
        %s203 = sand.u32 %s49, 1
        %s204 = scalar_lea.sflag [#allocation3], %s203
        %s205 = sand.u32 %s49, 1
        %s206 = smul.addr %s205, 4704
        %s207 = scalar_lea.vmem [#allocation2], %s206
        %p208 = pneg %p62
        %p209 = pneg %p59
        %s210 = sand.u32 %s75, 1
        %s211 = scalar_lea.sflag [#allocation5], %s210
        %s212 = sand.u32 %s75, 1
        %s213 = smul.addr %s212, 147
        %s214 = scalar_lea.vmem [#allocation4], %s213
        %p215 = pneg %p88
        %p216 = pneg %p85
        %p217 = pneg %p114
        %p218 = pneg %p111
        %s219 = smul.u32 147, %s20
        %p220 = scmp.lt.s32.totalorder %s219, 1175
        %s221 = scalar_select %p220, %s219, 1175
        %s222 = smul.addr %s221, 2
        %s223 = scalar_lea.vmem %s3, %s222
        %s224 = smul.u32 147, %s20
        %s225 = smul.u32 147, %s20
        %s226 = smul.u32 147, %s20
        %p227 = scmp.lt.s32.totalorder %s226, 1175
        %s228 = scalar_select %p227, %s226, 1175
        %s229 = smul.addr %s228, 2
        %s230 = scalar_lea.vmem %s3, %s229
        %s231 = smul.u32 147, %s20
        %v233 = vld [vmem:[%s0] sm:$0x1]
        %v234 = vld [vmem:[%s187] sm:$0xff]
        %v235 = vld [vmem:[%s187 + $0x8] sm:$0xff]
        %v236 = vld [vmem:[%s187 + $0x10] sm:$0xff]
        %v237 = vld [vmem:[%s187 + $0x18] sm:$0xff]
        %v238 = vld [vmem:[%s187 + $0x20] sm:$0xff]
        %v239 = vld [vmem:[%s187 + $0x28] sm:$0xff]
        %v240 = vld [vmem:[%s187 + $0x30] sm:$0xff]
        %v241 = vld [vmem:[%s187 + $0x38] sm:$0xff]
        %v242 = vld [vmem:[%s187 + $0x40] sm:$0xff]
        %v243 = vld [vmem:[%s187 + $0x48] sm:$0xff]
        %v244 = vld [vmem:[%s187 + $0x50] sm:$0xff]
        %v245 = vld [vmem:[%s187 + $0x58] sm:$0xff]
        %v246 = vld [vmem:[%s187 + $0x60] sm:$0xff]
        %v247 = vld [vmem:[%s187 + $0x68] sm:$0xff]
        %v248 = vld [vmem:[%s187 + $0x70] sm:$0xff]
        %v249 = vld [vmem:[%s187 + $0x78] sm:$0xff]
        %v250 = vld [vmem:[%s187 + $0x80] sm:$0xff]
        %v251 = vld [vmem:[%s187 + $0x88] sm:$0xff]
        %v252 = vld [vmem:[%s187 + $0x90] sm:$0xff]
        %v253 = vld [vmem:[%s187 + $0x98] sm:$0xff]
        %v254 = vld [vmem:[%s187 + $0xa0] sm:$0xff]
        %v255 = vld [vmem:[%s187 + $0xa8] sm:$0xff]
        %v256 = vld [vmem:[%s187 + $0xb0] sm:$0xff]
        %v257 = vld [vmem:[%s187 + $0xb8] sm:$0xff]
        %v258 = vld [vmem:[%s187 + $0xc0] sm:$0xff]
        %v259 = vld [vmem:[%s187 + $0xc8] sm:$0xff]
        %v260 = vld [vmem:[%s187 + $0xd0] sm:$0xff]
        %v261 = vld [vmem:[%s187 + $0xd8] sm:$0xff]
        %v262 = vld [vmem:[%s187 + $0xe0] sm:$0xff]
        %v263 = vld [vmem:[%s187 + $0xe8] sm:$0xff]
        %v264 = vld [vmem:[%s187 + $0xf0] sm:$0xff]
        %v265 = vld [vmem:[%s187 + $0xf8] sm:$0xff]
        %v266 = vld [vmem:[%s187 + $0x100] sm:$0xff]
        %v267 = vld [vmem:[%s187 + $0x108] sm:$0xff]
        %v268 = vld [vmem:[%s187 + $0x110] sm:$0xff]
        %v269 = vld [vmem:[%s187 + $0x118] sm:$0xff]
        %v270 = vld [vmem:[%s187 + $0x120] sm:$0xff]
        %v271 = vld [vmem:[%s187 + $0x128] sm:$0xff]
        %v272 = vld [vmem:[%s187 + $0x130] sm:$0xff]
        %v273 = vld [vmem:[%s187 + $0x138] sm:$0xff]
        %v274 = vld [vmem:[%s187 + $0x140] sm:$0xff]
        %v275 = vld [vmem:[%s187 + $0x148] sm:$0xff]
        %v276 = vld [vmem:[%s187 + $0x150] sm:$0xff]
        %v277 = vld [vmem:[%s187 + $0x158] sm:$0xff]
        %v278 = vld [vmem:[%s187 + $0x160] sm:$0xff]
        %v279 = vld [vmem:[%s187 + $0x168] sm:$0xff]
        %v280 = vld [vmem:[%s187 + $0x170] sm:$0xff]
        %v281 = vld [vmem:[%s187 + $0x178] sm:$0xff]
        %v282 = vld [vmem:[%s187 + $0x180] sm:$0xff]
        %v283 = vld [vmem:[%s187 + $0x188] sm:$0xff]
        %v284 = vld [vmem:[%s187 + $0x190] sm:$0xff]
        %v285 = vld [vmem:[%s187 + $0x198] sm:$0xff]
        %v286 = vld [vmem:[%s187 + $0x1a0] sm:$0xff]
        %v287 = vld [vmem:[%s187 + $0x1a8] sm:$0xff]
        %v288 = vld [vmem:[%s187 + $0x1b0] sm:$0xff]
        %v289 = vld [vmem:[%s187 + $0x1b8] sm:$0xff]
        %v290 = vld [vmem:[%s187 + $0x1c0] sm:$0xff]
        %v291 = vld [vmem:[%s187 + $0x1c8] sm:$0xff]
        %v292 = vld [vmem:[%s187 + $0x1d0] sm:$0xff]
        %v293 = vld [vmem:[%s187 + $0x1d8] sm:$0xff]
        %v294 = vld [vmem:[%s187 + $0x1e0] sm:$0xff]
        %v295 = vld [vmem:[%s187 + $0x1e8] sm:$0xff]
        %v296 = vld [vmem:[%s187 + $0x1f0] sm:$0xff]
        %v297 = vld [vmem:[%s187 + $0x1f8] sm:$0xff]
        %v298 = vld [vmem:[%s187 + $0x200] sm:$0xff]
        %v299 = vld [vmem:[%s187 + $0x208] sm:$0xff]
        %v300 = vld [vmem:[%s187 + $0x210] sm:$0xff]
        %v301 = vld [vmem:[%s187 + $0x218] sm:$0xff]
        %v302 = vld [vmem:[%s187 + $0x220] sm:$0xff]
        %v303 = vld [vmem:[%s187 + $0x228] sm:$0xff]
        %v304 = vld [vmem:[%s187 + $0x230] sm:$0xff]
        %v305 = vld [vmem:[%s187 + $0x238] sm:$0xff]
        %v306 = vld [vmem:[%s187 + $0x240] sm:$0xff]
        %v307 = vld [vmem:[%s187 + $0x248] sm:$0xf]
        %v308 = vld [vmem:[%s187 + $0x24c] sm:$0xff]
        %v309 = vld [vmem:[%s187 + $0x254] sm:$0xff]
        %v310 = vld [vmem:[%s187 + $0x25c] sm:$0xff]
        %v311 = vld [vmem:[%s187 + $0x264] sm:$0xff]
        %v312 = vld [vmem:[%s187 + $0x26c] sm:$0xff]
        %v313 = vld [vmem:[%s187 + $0x274] sm:$0xff]
        %v314 = vld [vmem:[%s187 + $0x27c] sm:$0xff]
        %v315 = vld [vmem:[%s187 + $0x284] sm:$0xff]
        %v316 = vld [vmem:[%s187 + $0x28c] sm:$0xff]
        %v317 = vld [vmem:[%s187 + $0x294] sm:$0xff]
        %v318 = vld [vmem:[%s187 + $0x29c] sm:$0xff]
        %v319 = vld [vmem:[%s187 + $0x2a4] sm:$0xff]
        %v320 = vld [vmem:[%s187 + $0x2ac] sm:$0xff]
        %v321 = vld [vmem:[%s187 + $0x2b4] sm:$0xff]
        %v322 = vld [vmem:[%s187 + $0x2bc] sm:$0xff]
        %v323 = vld [vmem:[%s187 + $0x2c4] sm:$0xff]
        %v324 = vld [vmem:[%s187 + $0x2cc] sm:$0xff]
        %v325 = vld [vmem:[%s187 + $0x2d4] sm:$0xff]
        %v326 = vld [vmem:[%s187 + $0x2dc] sm:$0xff]
        %v327 = vld [vmem:[%s187 + $0x2e4] sm:$0xff]
        %v328 = vld [vmem:[%s187 + $0x2ec] sm:$0xff]
        %v329 = vld [vmem:[%s187 + $0x2f4] sm:$0xff]
        %v330 = vld [vmem:[%s187 + $0x2fc] sm:$0xff]
        %v331 = vld [vmem:[%s187 + $0x304] sm:$0xff]
        %v332 = vld [vmem:[%s187 + $0x30c] sm:$0xff]
        %v333 = vld [vmem:[%s187 + $0x314] sm:$0xff]
        %v334 = vld [vmem:[%s187 + $0x31c] sm:$0xff]
        %v335 = vld [vmem:[%s187 + $0x324] sm:$0xff]
        %v336 = vld [vmem:[%s187 + $0x32c] sm:$0xff]
        %v337 = vld [vmem:[%s187 + $0x334] sm:$0xff]
        %v338 = vld [vmem:[%s187 + $0x33c] sm:$0xff]
        %v339 = vld [vmem:[%s187 + $0x344] sm:$0xff]
        %v340 = vld [vmem:[%s187 + $0x34c] sm:$0xff]
        %v341 = vld [vmem:[%s187 + $0x354] sm:$0xff]
        %v342 = vld [vmem:[%s187 + $0x35c] sm:$0xff]
        %v343 = vld [vmem:[%s187 + $0x364] sm:$0xff]
        %v344 = vld [vmem:[%s187 + $0x36c] sm:$0xff]
        %v345 = vld [vmem:[%s187 + $0x374] sm:$0xff]
        %v346 = vld [vmem:[%s187 + $0x37c] sm:$0xff]
        %v347 = vld [vmem:[%s187 + $0x384] sm:$0xff]
        %v348 = vld [vmem:[%s187 + $0x38c] sm:$0xff]
        %v349 = vld [vmem:[%s187 + $0x394] sm:$0xff]
        %v350 = vld [vmem:[%s187 + $0x39c] sm:$0xff]
        %v351 = vld [vmem:[%s187 + $0x3a4] sm:$0xff]
        %v352 = vld [vmem:[%s187 + $0x3ac] sm:$0xff]
        %v353 = vld [vmem:[%s187 + $0x3b4] sm:$0xff]
        %v354 = vld [vmem:[%s187 + $0x3bc] sm:$0xff]
        %v355 = vld [vmem:[%s187 + $0x3c4] sm:$0xff]
        %v356 = vld [vmem:[%s187 + $0x3cc] sm:$0xff]
        %v357 = vld [vmem:[%s187 + $0x3d4] sm:$0xff]
        %v358 = vld [vmem:[%s187 + $0x3dc] sm:$0xff]
        %v359 = vld [vmem:[%s187 + $0x3e4] sm:$0xff]
        %v360 = vld [vmem:[%s187 + $0x3ec] sm:$0xff]
        %v361 = vld [vmem:[%s187 + $0x3f4] sm:$0xff]
        %v362 = vld [vmem:[%s187 + $0x3fc] sm:$0xff]
        %v363 = vld [vmem:[%s187 + $0x404] sm:$0xff]
        %v364 = vld [vmem:[%s187 + $0x40c] sm:$0xff]
        %v365 = vld [vmem:[%s187 + $0x414] sm:$0xff]
        %v366 = vld [vmem:[%s187 + $0x41c] sm:$0xff]
        %v367 = vld [vmem:[%s187 + $0x424] sm:$0xff]
        %v368 = vld [vmem:[%s187 + $0x42c] sm:$0xff]
        %v369 = vld [vmem:[%s187 + $0x434] sm:$0xff]
        %v370 = vld [vmem:[%s187 + $0x43c] sm:$0xff]
        %v371 = vld [vmem:[%s187 + $0x444] sm:$0xff]
        %v372 = vld [vmem:[%s187 + $0x44c] sm:$0xff]
        %v373 = vld [vmem:[%s187 + $0x454] sm:$0xff]
        %v374 = vld [vmem:[%s187 + $0x45c] sm:$0xff]
        %v375 = vld [vmem:[%s187 + $0x464] sm:$0xff]
        %v376 = vld [vmem:[%s187 + $0x46c] sm:$0xff]
        %v377 = vld [vmem:[%s187 + $0x474] sm:$0xff]
        %v378 = vld [vmem:[%s187 + $0x47c] sm:$0xff]
        %v379 = vld [vmem:[%s187 + $0x484] sm:$0xff]
        %v380 = vld [vmem:[%s187 + $0x48c] sm:$0xff]
        %v381 = vld [vmem:[%s187 + $0x494] sm:$0xf]
        %v382 = vld [vmem:[%s187 + $0x498] sm:$0xff]
        %v383 = vld [vmem:[%s187 + $0x4a0] sm:$0xff]
        %v384 = vld [vmem:[%s187 + $0x4a8] sm:$0xff]
        %v385 = vld [vmem:[%s187 + $0x4b0] sm:$0xff]
        %v386 = vld [vmem:[%s187 + $0x4b8] sm:$0xff]
        %v387 = vld [vmem:[%s187 + $0x4c0] sm:$0xff]
        %v388 = vld [vmem:[%s187 + $0x4c8] sm:$0xff]
        %v389 = vld [vmem:[%s187 + $0x4d0] sm:$0xff]
        %v390 = vld [vmem:[%s187 + $0x4d8] sm:$0xff]
        %v391 = vld [vmem:[%s187 + $0x4e0] sm:$0xff]
        %v392 = vld [vmem:[%s187 + $0x4e8] sm:$0xff]
        %v393 = vld [vmem:[%s187 + $0x4f0] sm:$0xff]
        %v394 = vld [vmem:[%s187 + $0x4f8] sm:$0xff]
        %v395 = vld [vmem:[%s187 + $0x500] sm:$0xff]
        %v396 = vld [vmem:[%s187 + $0x508] sm:$0xff]
        %v397 = vld [vmem:[%s187 + $0x510] sm:$0xff]
        %v398 = vld [vmem:[%s187 + $0x518] sm:$0xff]
        %v399 = vld [vmem:[%s187 + $0x520] sm:$0xff]
        %v400 = vld [vmem:[%s187 + $0x528] sm:$0xff]
        %v401 = vld [vmem:[%s187 + $0x530] sm:$0xff]
        %v402 = vld [vmem:[%s187 + $0x538] sm:$0xff]
        %v403 = vld [vmem:[%s187 + $0x540] sm:$0xff]
        %v404 = vld [vmem:[%s187 + $0x548] sm:$0xff]
        %v405 = vld [vmem:[%s187 + $0x550] sm:$0xff]
        %v406 = vld [vmem:[%s187 + $0x558] sm:$0xff]
        %v407 = vld [vmem:[%s187 + $0x560] sm:$0xff]
        %v408 = vld [vmem:[%s187 + $0x568] sm:$0xff]
        %v409 = vld [vmem:[%s187 + $0x570] sm:$0xff]
        %v410 = vld [vmem:[%s187 + $0x578] sm:$0xff]
        %v411 = vld [vmem:[%s187 + $0x580] sm:$0xff]
        %v412 = vld [vmem:[%s187 + $0x588] sm:$0xff]
        %v413 = vld [vmem:[%s187 + $0x590] sm:$0xff]
        %v414 = vld [vmem:[%s187 + $0x598] sm:$0xff]
        %v415 = vld [vmem:[%s187 + $0x5a0] sm:$0xff]
        %v416 = vld [vmem:[%s187 + $0x5a8] sm:$0xff]
        %v417 = vld [vmem:[%s187 + $0x5b0] sm:$0xff]
        %v418 = vld [vmem:[%s187 + $0x5b8] sm:$0xff]
        %v419 = vld [vmem:[%s187 + $0x5c0] sm:$0xff]
        %v420 = vld [vmem:[%s187 + $0x5c8] sm:$0xff]
        %v421 = vld [vmem:[%s187 + $0x5d0] sm:$0xff]
        %v422 = vld [vmem:[%s187 + $0x5d8] sm:$0xff]
        %v423 = vld [vmem:[%s187 + $0x5e0] sm:$0xff]
        %v424 = vld [vmem:[%s187 + $0x5e8] sm:$0xff]
        %v425 = vld [vmem:[%s187 + $0x5f0] sm:$0xff]
        %v426 = vld [vmem:[%s187 + $0x5f8] sm:$0xff]
        %v427 = vld [vmem:[%s187 + $0x600] sm:$0xff]
        %v428 = vld [vmem:[%s187 + $0x608] sm:$0xff]
        %v429 = vld [vmem:[%s187 + $0x610] sm:$0xff]
        %v430 = vld [vmem:[%s187 + $0x618] sm:$0xff]
        %v431 = vld [vmem:[%s187 + $0x620] sm:$0xff]
        %v432 = vld [vmem:[%s187 + $0x628] sm:$0xff]
        %v433 = vld [vmem:[%s187 + $0x630] sm:$0xff]
        %v434 = vld [vmem:[%s187 + $0x638] sm:$0xff]
        %v435 = vld [vmem:[%s187 + $0x640] sm:$0xff]
        %v436 = vld [vmem:[%s187 + $0x648] sm:$0xff]
        %v437 = vld [vmem:[%s187 + $0x650] sm:$0xff]
        %v438 = vld [vmem:[%s187 + $0x658] sm:$0xff]
        %v439 = vld [vmem:[%s187 + $0x660] sm:$0xff]
        %v440 = vld [vmem:[%s187 + $0x668] sm:$0xff]
        %v441 = vld [vmem:[%s187 + $0x670] sm:$0xff]
        %v442 = vld [vmem:[%s187 + $0x678] sm:$0xff]
        %v443 = vld [vmem:[%s187 + $0x680] sm:$0xff]
        %v444 = vld [vmem:[%s187 + $0x688] sm:$0xff]
        %v445 = vld [vmem:[%s187 + $0x690] sm:$0xff]
        %v446 = vld [vmem:[%s187 + $0x698] sm:$0xff]
        %v447 = vld [vmem:[%s187 + $0x6a0] sm:$0xff]
        %v448 = vld [vmem:[%s187 + $0x6a8] sm:$0xff]
        %v449 = vld [vmem:[%s187 + $0x6b0] sm:$0xff]
        %v450 = vld [vmem:[%s187 + $0x6b8] sm:$0xff]
        %v451 = vld [vmem:[%s187 + $0x6c0] sm:$0xff]
        %v452 = vld [vmem:[%s187 + $0x6c8] sm:$0xff]
        %v453 = vld [vmem:[%s187 + $0x6d0] sm:$0xff]
        %v454 = vld [vmem:[%s187 + $0x6d8] sm:$0xff]
        %v455 = vld [vmem:[%s187 + $0x6e0] sm:$0xf]
        %v456 = vld [vmem:[%s187 + $0x6e4] sm:$0xff]
        %v457 = vld [vmem:[%s187 + $0x6ec] sm:$0xff]
        %v458 = vld [vmem:[%s187 + $0x6f4] sm:$0xff]
        %v459 = vld [vmem:[%s187 + $0x6fc] sm:$0xff]
        %v460 = vld [vmem:[%s187 + $0x704] sm:$0xff]
        %v461 = vld [vmem:[%s187 + $0x70c] sm:$0xff]
        %v462 = vld [vmem:[%s187 + $0x714] sm:$0xff]
        %v463 = vld [vmem:[%s187 + $0x71c] sm:$0xff]
        %v464 = vld [vmem:[%s187 + $0x724] sm:$0xff]
        %v465 = vld [vmem:[%s187 + $0x72c] sm:$0xff]
        %v466 = vld [vmem:[%s187 + $0x734] sm:$0xff]
        %v467 = vld [vmem:[%s187 + $0x73c] sm:$0xff]
        %v468 = vld [vmem:[%s187 + $0x744] sm:$0xff]
        %v469 = vld [vmem:[%s187 + $0x74c] sm:$0xff]
        %v470 = vld [vmem:[%s187 + $0x754] sm:$0xff]
        %v471 = vld [vmem:[%s187 + $0x75c] sm:$0xff]
        %v472 = vld [vmem:[%s187 + $0x764] sm:$0xff]
        %v473 = vld [vmem:[%s187 + $0x76c] sm:$0xff]
        %v474 = vld [vmem:[%s187 + $0x774] sm:$0xff]
        %v475 = vld [vmem:[%s187 + $0x77c] sm:$0xff]
        %v476 = vld [vmem:[%s187 + $0x784] sm:$0xff]
        %v477 = vld [vmem:[%s187 + $0x78c] sm:$0xff]
        %v478 = vld [vmem:[%s187 + $0x794] sm:$0xff]
        %v479 = vld [vmem:[%s187 + $0x79c] sm:$0xff]
        %v480 = vld [vmem:[%s187 + $0x7a4] sm:$0xff]
        %v481 = vld [vmem:[%s187 + $0x7ac] sm:$0xff]
        %v482 = vld [vmem:[%s187 + $0x7b4] sm:$0xff]
        %v483 = vld [vmem:[%s187 + $0x7bc] sm:$0xff]
        %v484 = vld [vmem:[%s187 + $0x7c4] sm:$0xff]
        %v485 = vld [vmem:[%s187 + $0x7cc] sm:$0xff]
        %v486 = vld [vmem:[%s187 + $0x7d4] sm:$0xff]
        %v487 = vld [vmem:[%s187 + $0x7dc] sm:$0xff]
        %v488 = vld [vmem:[%s187 + $0x7e4] sm:$0xff]
        %v489 = vld [vmem:[%s187 + $0x7ec] sm:$0xff]
        %v490 = vld [vmem:[%s187 + $0x7f4] sm:$0xff]
        %v491 = vld [vmem:[%s187 + $0x7fc] sm:$0xff]
        %v492 = vld [vmem:[%s187 + $0x804] sm:$0xff]
        %v493 = vld [vmem:[%s187 + $0x80c] sm:$0xff]
        %v494 = vld [vmem:[%s187 + $0x814] sm:$0xff]
        %v495 = vld [vmem:[%s187 + $0x81c] sm:$0xff]
        %v496 = vld [vmem:[%s187 + $0x824] sm:$0xff]
        %v497 = vld [vmem:[%s187 + $0x82c] sm:$0xff]
        %v498 = vld [vmem:[%s187 + $0x834] sm:$0xff]
        %v499 = vld [vmem:[%s187 + $0x83c] sm:$0xff]
        %v500 = vld [vmem:[%s187 + $0x844] sm:$0xff]
        %v501 = vld [vmem:[%s187 + $0x84c] sm:$0xff]
        %v502 = vld [vmem:[%s187 + $0x854] sm:$0xff]
        %v503 = vld [vmem:[%s187 + $0x85c] sm:$0xff]
        %v504 = vld [vmem:[%s187 + $0x864] sm:$0xff]
        %v505 = vld [vmem:[%s187 + $0x86c] sm:$0xff]
        %v506 = vld [vmem:[%s187 + $0x874] sm:$0xff]
        %v507 = vld [vmem:[%s187 + $0x87c] sm:$0xff]
        %v508 = vld [vmem:[%s187 + $0x884] sm:$0xff]
        %v509 = vld [vmem:[%s187 + $0x88c] sm:$0xff]
        %v510 = vld [vmem:[%s187 + $0x894] sm:$0xff]
        %v511 = vld [vmem:[%s187 + $0x89c] sm:$0xff]
        %v512 = vld [vmem:[%s187 + $0x8a4] sm:$0xff]
        %v513 = vld [vmem:[%s187 + $0x8ac] sm:$0xff]
        %v514 = vld [vmem:[%s187 + $0x8b4] sm:$0xff]
        %v515 = vld [vmem:[%s187 + $0x8bc] sm:$0xff]
        %v516 = vld [vmem:[%s187 + $0x8c4] sm:$0xff]
        %v517 = vld [vmem:[%s187 + $0x8cc] sm:$0xff]
        %v518 = vld [vmem:[%s187 + $0x8d4] sm:$0xff]
        %v519 = vld [vmem:[%s187 + $0x8dc] sm:$0xff]
        %v520 = vld [vmem:[%s187 + $0x8e4] sm:$0xff]
        %v521 = vld [vmem:[%s187 + $0x8ec] sm:$0xff]
        %v522 = vld [vmem:[%s187 + $0x8f4] sm:$0xff]
        %v523 = vld [vmem:[%s187 + $0x8fc] sm:$0xff]
        %v524 = vld [vmem:[%s187 + $0x904] sm:$0xff]
        %v525 = vld [vmem:[%s187 + $0x90c] sm:$0xff]
        %v526 = vld [vmem:[%s187 + $0x914] sm:$0xff]
        %v527 = vld [vmem:[%s187 + $0x91c] sm:$0xff]
        %v528 = vld [vmem:[%s187 + $0x924] sm:$0xff]
        %v529 = vld [vmem:[%s187 + $0x92c] sm:$0xf]
        %v530 = vld [vmem:[%s187 + $0x930] sm:$0xff]
        %v531 = vld [vmem:[%s187 + $0x938] sm:$0xff]
        %v532 = vld [vmem:[%s187 + $0x940] sm:$0xff]
        %v533 = vld [vmem:[%s187 + $0x948] sm:$0xff]
        %v534 = vld [vmem:[%s187 + $0x950] sm:$0xff]
        %v535 = vld [vmem:[%s187 + $0x958] sm:$0xff]
        %v536 = vld [vmem:[%s187 + $0x960] sm:$0xff]
        %v537 = vld [vmem:[%s187 + $0x968] sm:$0xff]
        %v538 = vld [vmem:[%s187 + $0x970] sm:$0xff]
        %v539 = vld [vmem:[%s187 + $0x978] sm:$0xff]
        %v540 = vld [vmem:[%s187 + $0x980] sm:$0xff]
        %v541 = vld [vmem:[%s187 + $0x988] sm:$0xff]
        %v542 = vld [vmem:[%s187 + $0x990] sm:$0xff]
        %v543 = vld [vmem:[%s187 + $0x998] sm:$0xff]
        %v544 = vld [vmem:[%s187 + $0x9a0] sm:$0xff]
        %v545 = vld [vmem:[%s187 + $0x9a8] sm:$0xff]
        %v546 = vld [vmem:[%s187 + $0x9b0] sm:$0xff]
        %v547 = vld [vmem:[%s187 + $0x9b8] sm:$0xff]
        %v548 = vld [vmem:[%s187 + $0x9c0] sm:$0xff]
        %v549 = vld [vmem:[%s187 + $0x9c8] sm:$0xff]
        %v550 = vld [vmem:[%s187 + $0x9d0] sm:$0xff]
        %v551 = vld [vmem:[%s187 + $0x9d8] sm:$0xff]
        %v552 = vld [vmem:[%s187 + $0x9e0] sm:$0xff]
        %v553 = vld [vmem:[%s187 + $0x9e8] sm:$0xff]
        %v554 = vld [vmem:[%s187 + $0x9f0] sm:$0xff]
        %v555 = vld [vmem:[%s187 + $0x9f8] sm:$0xff]
        %v556 = vld [vmem:[%s187 + $0xa00] sm:$0xff]
        %v557 = vld [vmem:[%s187 + $0xa08] sm:$0xff]
        %v558 = vld [vmem:[%s187 + $0xa10] sm:$0xff]
        %v559 = vld [vmem:[%s187 + $0xa18] sm:$0xff]
        %v560 = vld [vmem:[%s187 + $0xa20] sm:$0xff]
        %v561 = vld [vmem:[%s187 + $0xa28] sm:$0xff]
        %v562 = vld [vmem:[%s187 + $0xa30] sm:$0xff]
        %v563 = vld [vmem:[%s187 + $0xa38] sm:$0xff]
        %v564 = vld [vmem:[%s187 + $0xa40] sm:$0xff]
        %v565 = vld [vmem:[%s187 + $0xa48] sm:$0xff]
        %v566 = vld [vmem:[%s187 + $0xa50] sm:$0xff]
        %v567 = vld [vmem:[%s187 + $0xa58] sm:$0xff]
        %v568 = vld [vmem:[%s187 + $0xa60] sm:$0xff]
        %v569 = vld [vmem:[%s187 + $0xa68] sm:$0xff]
        %v570 = vld [vmem:[%s187 + $0xa70] sm:$0xff]
        %v571 = vld [vmem:[%s187 + $0xa78] sm:$0xff]
        %v572 = vld [vmem:[%s187 + $0xa80] sm:$0xff]
        %v573 = vld [vmem:[%s187 + $0xa88] sm:$0xff]
        %v574 = vld [vmem:[%s187 + $0xa90] sm:$0xff]
        %v575 = vld [vmem:[%s187 + $0xa98] sm:$0xff]
        %v576 = vld [vmem:[%s187 + $0xaa0] sm:$0xff]
        %v577 = vld [vmem:[%s187 + $0xaa8] sm:$0xff]
        %v578 = vld [vmem:[%s187 + $0xab0] sm:$0xff]
        %v579 = vld [vmem:[%s187 + $0xab8] sm:$0xff]
        %v580 = vld [vmem:[%s187 + $0xac0] sm:$0xff]
        %v581 = vld [vmem:[%s187 + $0xac8] sm:$0xff]
        %v582 = vld [vmem:[%s187 + $0xad0] sm:$0xff]
        %v583 = vld [vmem:[%s187 + $0xad8] sm:$0xff]
        %v584 = vld [vmem:[%s187 + $0xae0] sm:$0xff]
        %v585 = vld [vmem:[%s187 + $0xae8] sm:$0xff]
        %v586 = vld [vmem:[%s187 + $0xaf0] sm:$0xff]
        %v587 = vld [vmem:[%s187 + $0xaf8] sm:$0xff]
        %v588 = vld [vmem:[%s187 + $0xb00] sm:$0xff]
        %v589 = vld [vmem:[%s187 + $0xb08] sm:$0xff]
        %v590 = vld [vmem:[%s187 + $0xb10] sm:$0xff]
        %v591 = vld [vmem:[%s187 + $0xb18] sm:$0xff]
        %v592 = vld [vmem:[%s187 + $0xb20] sm:$0xff]
        %v593 = vld [vmem:[%s187 + $0xb28] sm:$0xff]
        %v594 = vld [vmem:[%s187 + $0xb30] sm:$0xff]
        %v595 = vld [vmem:[%s187 + $0xb38] sm:$0xff]
        %v596 = vld [vmem:[%s187 + $0xb40] sm:$0xff]
        %v597 = vld [vmem:[%s187 + $0xb48] sm:$0xff]
        %v598 = vld [vmem:[%s187 + $0xb50] sm:$0xff]
        %v599 = vld [vmem:[%s187 + $0xb58] sm:$0xff]
        %v600 = vld [vmem:[%s187 + $0xb60] sm:$0xff]
        %v601 = vld [vmem:[%s187 + $0xb68] sm:$0xff]
        %v602 = vld [vmem:[%s187 + $0xb70] sm:$0xff]
        %v603 = vld [vmem:[%s187 + $0xb78] sm:$0xf]
        %v604 = vld [vmem:[%s187 + $0xb7c] sm:$0xff]
        %v605 = vld [vmem:[%s187 + $0xb84] sm:$0xff]
        %v606 = vld [vmem:[%s187 + $0xb8c] sm:$0xff]
        %v607 = vld [vmem:[%s187 + $0xb94] sm:$0xff]
        %v608 = vld [vmem:[%s187 + $0xb9c] sm:$0xff]
        %v609 = vld [vmem:[%s187 + $0xba4] sm:$0xff]
        %v610 = vld [vmem:[%s187 + $0xbac] sm:$0xff]
        %v611 = vld [vmem:[%s187 + $0xbb4] sm:$0xff]
        %v612 = vld [vmem:[%s187 + $0xbbc] sm:$0xff]
        %v613 = vld [vmem:[%s187 + $0xbc4] sm:$0xff]
        %v614 = vld [vmem:[%s187 + $0xbcc] sm:$0xff]
        %v615 = vld [vmem:[%s187 + $0xbd4] sm:$0xff]
        %v616 = vld [vmem:[%s187 + $0xbdc] sm:$0xff]
        %v617 = vld [vmem:[%s187 + $0xbe4] sm:$0xff]
        %v618 = vld [vmem:[%s187 + $0xbec] sm:$0xff]
        %v619 = vld [vmem:[%s187 + $0xbf4] sm:$0xff]
        %v620 = vld [vmem:[%s187 + $0xbfc] sm:$0xff]
        %v621 = vld [vmem:[%s187 + $0xc04] sm:$0xff]
        %v622 = vld [vmem:[%s187 + $0xc0c] sm:$0xff]
        %v623 = vld [vmem:[%s187 + $0xc14] sm:$0xff]
        %v624 = vld [vmem:[%s187 + $0xc1c] sm:$0xff]
        %v625 = vld [vmem:[%s187 + $0xc24] sm:$0xff]
        %v626 = vld [vmem:[%s187 + $0xc2c] sm:$0xff]
        %v627 = vld [vmem:[%s187 + $0xc34] sm:$0xff]
        %v628 = vld [vmem:[%s187 + $0xc3c] sm:$0xff]
        %v629 = vld [vmem:[%s187 + $0xc44] sm:$0xff]
        %v630 = vld [vmem:[%s187 + $0xc4c] sm:$0xff]
        %v631 = vld [vmem:[%s187 + $0xc54] sm:$0xff]
        %v632 = vld [vmem:[%s187 + $0xc5c] sm:$0xff]
        %v633 = vld [vmem:[%s187 + $0xc64] sm:$0xff]
        %v634 = vld [vmem:[%s187 + $0xc6c] sm:$0xff]
        %v635 = vld [vmem:[%s187 + $0xc74] sm:$0xff]
        %v636 = vld [vmem:[%s187 + $0xc7c] sm:$0xff]
        %v637 = vld [vmem:[%s187 + $0xc84] sm:$0xff]
        %v638 = vld [vmem:[%s187 + $0xc8c] sm:$0xff]
        %v639 = vld [vmem:[%s187 + $0xc94] sm:$0xff]
        %v640 = vld [vmem:[%s187 + $0xc9c] sm:$0xff]
        %v641 = vld [vmem:[%s187 + $0xca4] sm:$0xff]
        %v642 = vld [vmem:[%s187 + $0xcac] sm:$0xff]
        %v643 = vld [vmem:[%s187 + $0xcb4] sm:$0xff]
        %v644 = vld [vmem:[%s187 + $0xcbc] sm:$0xff]
        %v645 = vld [vmem:[%s187 + $0xcc4] sm:$0xff]
        %v646 = vld [vmem:[%s187 + $0xccc] sm:$0xff]
        %v647 = vld [vmem:[%s187 + $0xcd4] sm:$0xff]
        %v648 = vld [vmem:[%s187 + $0xcdc] sm:$0xff]
        %v649 = vld [vmem:[%s187 + $0xce4] sm:$0xff]
        %v650 = vld [vmem:[%s187 + $0xcec] sm:$0xff]
        %v651 = vld [vmem:[%s187 + $0xcf4] sm:$0xff]
        %v652 = vld [vmem:[%s187 + $0xcfc] sm:$0xff]
        %v653 = vld [vmem:[%s187 + $0xd04] sm:$0xff]
        %v654 = vld [vmem:[%s187 + $0xd0c] sm:$0xff]
        %v655 = vld [vmem:[%s187 + $0xd14] sm:$0xff]
        %v656 = vld [vmem:[%s187 + $0xd1c] sm:$0xff]
        %v657 = vld [vmem:[%s187 + $0xd24] sm:$0xff]
        %v658 = vld [vmem:[%s187 + $0xd2c] sm:$0xff]
        %v659 = vld [vmem:[%s187 + $0xd34] sm:$0xff]
        %v660 = vld [vmem:[%s187 + $0xd3c] sm:$0xff]
        %v661 = vld [vmem:[%s187 + $0xd44] sm:$0xff]
        %v662 = vld [vmem:[%s187 + $0xd4c] sm:$0xff]
        %v663 = vld [vmem:[%s187 + $0xd54] sm:$0xff]
        %v664 = vld [vmem:[%s187 + $0xd5c] sm:$0xff]
        %v665 = vld [vmem:[%s187 + $0xd64] sm:$0xff]
        %v666 = vld [vmem:[%s187 + $0xd6c] sm:$0xff]
        %v667 = vld [vmem:[%s187 + $0xd74] sm:$0xff]
        %v668 = vld [vmem:[%s187 + $0xd7c] sm:$0xff]
        %v669 = vld [vmem:[%s187 + $0xd84] sm:$0xff]
        %v670 = vld [vmem:[%s187 + $0xd8c] sm:$0xff]
        %v671 = vld [vmem:[%s187 + $0xd94] sm:$0xff]
        %v672 = vld [vmem:[%s187 + $0xd9c] sm:$0xff]
        %v673 = vld [vmem:[%s187 + $0xda4] sm:$0xff]
        %v674 = vld [vmem:[%s187 + $0xdac] sm:$0xff]
        %v675 = vld [vmem:[%s187 + $0xdb4] sm:$0xff]
        %v676 = vld [vmem:[%s187 + $0xdbc] sm:$0xff]
        %v677 = vld [vmem:[%s187 + $0xdc4] sm:$0xf]
        %v678 = vld [vmem:[%s187 + $0xdc8] sm:$0xff]
        %v679 = vld [vmem:[%s187 + $0xdd0] sm:$0xff]
        %v680 = vld [vmem:[%s187 + $0xdd8] sm:$0xff]
        %v681 = vld [vmem:[%s187 + $0xde0] sm:$0xff]
        %v682 = vld [vmem:[%s187 + $0xde8] sm:$0xff]
        %v683 = vld [vmem:[%s187 + $0xdf0] sm:$0xff]
        %v684 = vld [vmem:[%s187 + $0xdf8] sm:$0xff]
        %v685 = vld [vmem:[%s187 + $0xe00] sm:$0xff]
        %v686 = vld [vmem:[%s187 + $0xe08] sm:$0xff]
        %v687 = vld [vmem:[%s187 + $0xe10] sm:$0xff]
        %v688 = vld [vmem:[%s187 + $0xe18] sm:$0xff]
        %v689 = vld [vmem:[%s187 + $0xe20] sm:$0xff]
        %v690 = vld [vmem:[%s187 + $0xe28] sm:$0xff]
        %v691 = vld [vmem:[%s187 + $0xe30] sm:$0xff]
        %v692 = vld [vmem:[%s187 + $0xe38] sm:$0xff]
        %v693 = vld [vmem:[%s187 + $0xe40] sm:$0xff]
        %v694 = vld [vmem:[%s187 + $0xe48] sm:$0xff]
        %v695 = vld [vmem:[%s187 + $0xe50] sm:$0xff]
        %v696 = vld [vmem:[%s187 + $0xe58] sm:$0xff]
        %v697 = vld [vmem:[%s187 + $0xe60] sm:$0xff]
        %v698 = vld [vmem:[%s187 + $0xe68] sm:$0xff]
        %v699 = vld [vmem:[%s187 + $0xe70] sm:$0xff]
        %v700 = vld [vmem:[%s187 + $0xe78] sm:$0xff]
        %v701 = vld [vmem:[%s187 + $0xe80] sm:$0xff]
        %v702 = vld [vmem:[%s187 + $0xe88] sm:$0xff]
        %v703 = vld [vmem:[%s187 + $0xe90] sm:$0xff]
        %v704 = vld [vmem:[%s187 + $0xe98] sm:$0xff]
        %v705 = vld [vmem:[%s187 + $0xea0] sm:$0xff]
        %v706 = vld [vmem:[%s187 + $0xea8] sm:$0xff]
        %v707 = vld [vmem:[%s187 + $0xeb0] sm:$0xff]
        %v708 = vld [vmem:[%s187 + $0xeb8] sm:$0xff]
        %v709 = vld [vmem:[%s187 + $0xec0] sm:$0xff]
        %v710 = vld [vmem:[%s187 + $0xec8] sm:$0xff]
        %v711 = vld [vmem:[%s187 + $0xed0] sm:$0xff]
        %v712 = vld [vmem:[%s187 + $0xed8] sm:$0xff]
        %v713 = vld [vmem:[%s187 + $0xee0] sm:$0xff]
        %v714 = vld [vmem:[%s187 + $0xee8] sm:$0xff]
        %v715 = vld [vmem:[%s187 + $0xef0] sm:$0xff]
        %v716 = vld [vmem:[%s187 + $0xef8] sm:$0xff]
        %v717 = vld [vmem:[%s187 + $0xf00] sm:$0xff]
        %v718 = vld [vmem:[%s187 + $0xf08] sm:$0xff]
        %v719 = vld [vmem:[%s187 + $0xf10] sm:$0xff]
        %v720 = vld [vmem:[%s187 + $0xf18] sm:$0xff]
        %v721 = vld [vmem:[%s187 + $0xf20] sm:$0xff]
        %v722 = vld [vmem:[%s187 + $0xf28] sm:$0xff]
        %v723 = vld [vmem:[%s187 + $0xf30] sm:$0xff]
        %v724 = vld [vmem:[%s187 + $0xf38] sm:$0xff]
        %v725 = vld [vmem:[%s187 + $0xf40] sm:$0xff]
        %v726 = vld [vmem:[%s187 + $0xf48] sm:$0xff]
        %v727 = vld [vmem:[%s187 + $0xf50] sm:$0xff]
        %v728 = vld [vmem:[%s187 + $0xf58] sm:$0xff]
        %v729 = vld [vmem:[%s187 + $0xf60] sm:$0xff]
        %v730 = vld [vmem:[%s187 + $0xf68] sm:$0xff]
        %v731 = vld [vmem:[%s187 + $0xf70] sm:$0xff]
        %v732 = vld [vmem:[%s187 + $0xf78] sm:$0xff]
        %v733 = vld [vmem:[%s187 + $0xf80] sm:$0xff]
        %v734 = vld [vmem:[%s187 + $0xf88] sm:$0xff]
        %v735 = vld [vmem:[%s187 + $0xf90] sm:$0xff]
        %v736 = vld [vmem:[%s187 + $0xf98] sm:$0xff]
        %v737 = vld [vmem:[%s187 + $0xfa0] sm:$0xff]
        %v738 = vld [vmem:[%s187 + $0xfa8] sm:$0xff]
        %v739 = vld [vmem:[%s187 + $0xfb0] sm:$0xff]
        %v740 = vld [vmem:[%s187 + $0xfb8] sm:$0xff]
        %v741 = vld [vmem:[%s187 + $0xfc0] sm:$0xff]
        %v742 = vld [vmem:[%s187 + $0xfc8] sm:$0xff]
        %v743 = vld [vmem:[%s187 + $0xfd0] sm:$0xff]
        %v744 = vld [vmem:[%s187 + $0xfd8] sm:$0xff]
        %v745 = vld [vmem:[%s187 + $0xfe0] sm:$0xff]
        %v746 = vld [vmem:[%s187 + $0xfe8] sm:$0xff]
        %v747 = vld [vmem:[%s187 + $0xff0] sm:$0xff]
        %v748 = vld [vmem:[%s187 + $0xff8] sm:$0xff]
        %v749 = vld [vmem:[%s187 + $0x1000] sm:$0xff]
        %v750 = vld [vmem:[%s187 + $0x1008] sm:$0xff]
        %v751 = vld [vmem:[%s187 + $0x1010] sm:$0xf]
        %v752 = vld [vmem:[%s187 + $0x1014] sm:$0xff]
        %v753 = vld [vmem:[%s187 + $0x101c] sm:$0xff]
        %v754 = vld [vmem:[%s187 + $0x1024] sm:$0xff]
        %v755 = vld [vmem:[%s187 + $0x102c] sm:$0xff]
        %v756 = vld [vmem:[%s187 + $0x1034] sm:$0xff]
        %v757 = vld [vmem:[%s187 + $0x103c] sm:$0xff]
        %v758 = vld [vmem:[%s187 + $0x1044] sm:$0xff]
        %v759 = vld [vmem:[%s187 + $0x104c] sm:$0xff]
        %v760 = vld [vmem:[%s187 + $0x1054] sm:$0xff]
        %v761 = vld [vmem:[%s187 + $0x105c] sm:$0xff]
        %v762 = vld [vmem:[%s187 + $0x1064] sm:$0xff]
        %v763 = vld [vmem:[%s187 + $0x106c] sm:$0xff]
        %v764 = vld [vmem:[%s187 + $0x1074] sm:$0xff]
        %v765 = vld [vmem:[%s187 + $0x107c] sm:$0xff]
        %v766 = vld [vmem:[%s187 + $0x1084] sm:$0xff]
        %v767 = vld [vmem:[%s187 + $0x108c] sm:$0xff]
        %v768 = vld [vmem:[%s187 + $0x1094] sm:$0xff]
        %v769 = vld [vmem:[%s187 + $0x109c] sm:$0xff]
        %v770 = vld [vmem:[%s187 + $0x10a4] sm:$0xff]
        %v771 = vld [vmem:[%s187 + $0x10ac] sm:$0xff]
        %v772 = vld [vmem:[%s187 + $0x10b4] sm:$0xff]
        %v773 = vld [vmem:[%s187 + $0x10bc] sm:$0xff]
        %v774 = vld [vmem:[%s187 + $0x10c4] sm:$0xff]
        %v775 = vld [vmem:[%s187 + $0x10cc] sm:$0xff]
        %v776 = vld [vmem:[%s187 + $0x10d4] sm:$0xff]
        %v777 = vld [vmem:[%s187 + $0x10dc] sm:$0xff]
        %v778 = vld [vmem:[%s187 + $0x10e4] sm:$0xff]
        %v779 = vld [vmem:[%s187 + $0x10ec] sm:$0xff]
        %v780 = vld [vmem:[%s187 + $0x10f4] sm:$0xff]
        %v781 = vld [vmem:[%s187 + $0x10fc] sm:$0xff]
        %v782 = vld [vmem:[%s187 + $0x1104] sm:$0xff]
        %v783 = vld [vmem:[%s187 + $0x110c] sm:$0xff]
        %v784 = vld [vmem:[%s187 + $0x1114] sm:$0xff]
        %v785 = vld [vmem:[%s187 + $0x111c] sm:$0xff]
        %v786 = vld [vmem:[%s187 + $0x1124] sm:$0xff]
        %v787 = vld [vmem:[%s187 + $0x112c] sm:$0xff]
        %v788 = vld [vmem:[%s187 + $0x1134] sm:$0xff]
        %v789 = vld [vmem:[%s187 + $0x113c] sm:$0xff]
        %v790 = vld [vmem:[%s187 + $0x1144] sm:$0xff]
        %v791 = vld [vmem:[%s187 + $0x114c] sm:$0xff]
        %v792 = vld [vmem:[%s187 + $0x1154] sm:$0xff]
        %v793 = vld [vmem:[%s187 + $0x115c] sm:$0xff]
        %v794 = vld [vmem:[%s187 + $0x1164] sm:$0xff]
        %v795 = vld [vmem:[%s187 + $0x116c] sm:$0xff]
        %v796 = vld [vmem:[%s187 + $0x1174] sm:$0xff]
        %v797 = vld [vmem:[%s187 + $0x117c] sm:$0xff]
        %v798 = vld [vmem:[%s187 + $0x1184] sm:$0xff]
        %v799 = vld [vmem:[%s187 + $0x118c] sm:$0xff]
        %v800 = vld [vmem:[%s187 + $0x1194] sm:$0xff]
        %v801 = vld [vmem:[%s187 + $0x119c] sm:$0xff]
        %v802 = vld [vmem:[%s187 + $0x11a4] sm:$0xff]
        %v803 = vld [vmem:[%s187 + $0x11ac] sm:$0xff]
        %v804 = vld [vmem:[%s187 + $0x11b4] sm:$0xff]
        %v805 = vld [vmem:[%s187 + $0x11bc] sm:$0xff]
        %v806 = vld [vmem:[%s187 + $0x11c4] sm:$0xff]
        %v807 = vld [vmem:[%s187 + $0x11cc] sm:$0xff]
        %v808 = vld [vmem:[%s187 + $0x11d4] sm:$0xff]
        %v809 = vld [vmem:[%s187 + $0x11dc] sm:$0xff]
        %v810 = vld [vmem:[%s187 + $0x11e4] sm:$0xff]
        %v811 = vld [vmem:[%s187 + $0x11ec] sm:$0xff]
        %v812 = vld [vmem:[%s187 + $0x11f4] sm:$0xff]
        %v813 = vld [vmem:[%s187 + $0x11fc] sm:$0xff]
        %v814 = vld [vmem:[%s187 + $0x1204] sm:$0xff]
        %v815 = vld [vmem:[%s187 + $0x120c] sm:$0xff]
        %v816 = vld [vmem:[%s187 + $0x1214] sm:$0xff]
        %v817 = vld [vmem:[%s187 + $0x121c] sm:$0xff]
        %v818 = vld [vmem:[%s187 + $0x1224] sm:$0xff]
        %v819 = vld [vmem:[%s187 + $0x122c] sm:$0xff]
        %v820 = vld [vmem:[%s187 + $0x1234] sm:$0xff]
        %v821 = vld [vmem:[%s187 + $0x123c] sm:$0xff]
        %v822 = vld [vmem:[%s187 + $0x1244] sm:$0xff]
        %v823 = vld [vmem:[%s187 + $0x124c] sm:$0xff]
        %v824 = vld [vmem:[%s187 + $0x1254] sm:$0xff]
        %v825 = vld [vmem:[%s187 + $0x125c] sm:$0xf]
        %v826 = vld [vmem:[%s196] sm:$0xff]
        %v827 = vld [vmem:[%s196 + $0x8] sm:$0xff]
        %v828 = vld [vmem:[%s196 + $0x10] sm:$0xff]
        %v829 = vld [vmem:[%s196 + $0x18] sm:$0xff]
        %v830 = vld [vmem:[%s196 + $0x20] sm:$0xff]
        %v831 = vld [vmem:[%s196 + $0x28] sm:$0xff]
        %v832 = vld [vmem:[%s196 + $0x30] sm:$0xff]
        %v833 = vld [vmem:[%s196 + $0x38] sm:$0xff]
        %v834 = vld [vmem:[%s196 + $0x40] sm:$0xff]
        %v835 = vld [vmem:[%s196 + $0x48] sm:$0xff]
        %v836 = vld [vmem:[%s196 + $0x50] sm:$0xff]
        %v837 = vld [vmem:[%s196 + $0x58] sm:$0xff]
        %v838 = vld [vmem:[%s196 + $0x60] sm:$0xff]
        %v839 = vld [vmem:[%s196 + $0x68] sm:$0xff]
        %v840 = vld [vmem:[%s196 + $0x70] sm:$0xff]
        %v841 = vld [vmem:[%s196 + $0x78] sm:$0xff]
        %v842 = vld [vmem:[%s196 + $0x80] sm:$0xff]
        %v843 = vld [vmem:[%s196 + $0x88] sm:$0xff]
        %v844 = vld [vmem:[%s196 + $0x90] sm:$0x7]
        %v845 = vunpack.c.l.bf16 %v826
        %v846 = vunpack.c.h.bf16 %v826
        %v847 = vunpack.c.l.bf16 %v827
        %v848 = vunpack.c.h.bf16 %v827
        %v849 = vunpack.c.l.bf16 %v828
        %v850 = vunpack.c.h.bf16 %v828
        %v851 = vunpack.c.l.bf16 %v829
        %v852 = vunpack.c.h.bf16 %v829
        %v853 = vunpack.c.l.bf16 %v830
        %v854 = vunpack.c.h.bf16 %v830
        %v855 = vunpack.c.l.bf16 %v831
        %v856 = vunpack.c.h.bf16 %v831
        %v857 = vunpack.c.l.bf16 %v832
        %v858 = vunpack.c.h.bf16 %v832
        %v859 = vunpack.c.l.bf16 %v833
        %v860 = vunpack.c.h.bf16 %v833
        %v861 = vunpack.c.l.bf16 %v834
        %v862 = vunpack.c.h.bf16 %v834
        %v863 = vunpack.c.l.bf16 %v835
        %v864 = vunpack.c.h.bf16 %v835
        %v865 = vunpack.c.l.bf16 %v836
        %v866 = vunpack.c.h.bf16 %v836
        %v867 = vunpack.c.l.bf16 %v837
        %v868 = vunpack.c.h.bf16 %v837
        %v869 = vunpack.c.l.bf16 %v838
        %v870 = vunpack.c.h.bf16 %v838
        %v871 = vunpack.c.l.bf16 %v839
        %v872 = vunpack.c.h.bf16 %v839
        %v873 = vunpack.c.l.bf16 %v840
        %v874 = vunpack.c.h.bf16 %v840
        %v875 = vunpack.c.l.bf16 %v841
        %v876 = vunpack.c.h.bf16 %v841
        %v877 = vunpack.c.l.bf16 %v842
        %v878 = vunpack.c.h.bf16 %v842
        %v879 = vunpack.c.l.bf16 %v843
        %v880 = vunpack.c.h.bf16 %v843
        %v881 = vunpack.c.l.bf16 %v844
        %v919 = vlaneseq
        %v920 = vshrl.u32 %v919, 7
        %v921 = vsub.s32 0, %v920
        %v922 = vrot.slane %v845, %v921
        %v923 = vlaneseq
        %v924 = vshrl.u32 %v923, 7
        %v925 = vsub.s32 2, %v924
        %v926 = vrot.slane %v845, %v925
        %v927 = vlaneseq
        %v928 = vshrl.u32 %v927, 7
        %v929 = vsub.s32 4, %v928
        %v930 = vrot.slane %v845, %v929
        %v931 = vlaneseq
        %v932 = vshrl.u32 %v931, 7
        %v933 = vsub.s32 6, %v932
        %v934 = vrot.slane %v845, %v933
        %v935 = vlaneseq
        %v936 = vshrl.u32 %v935, 7
        %v937 = vsub.s32 0, %v936
        %v938 = vrot.slane %v846, %v937
        %v939 = vlaneseq
        %v940 = vshrl.u32 %v939, 7
        %v941 = vsub.s32 2, %v940
        %v942 = vrot.slane %v846, %v941
        %v943 = vlaneseq
        %v944 = vshrl.u32 %v943, 7
        %v945 = vsub.s32 4, %v944
        %v946 = vrot.slane %v846, %v945
        %v947 = vlaneseq
        %v948 = vshrl.u32 %v947, 7
        %v949 = vsub.s32 6, %v948
        %v950 = vrot.slane %v846, %v949
        %v951 = vlaneseq
        %v952 = vshrl.u32 %v951, 7
        %v953 = vsub.s32 0, %v952
        %v954 = vrot.slane %v847, %v953
        %v955 = vlaneseq
        %v956 = vshrl.u32 %v955, 7
        %v957 = vsub.s32 2, %v956
        %v958 = vrot.slane %v847, %v957
        %v959 = vlaneseq
        %v960 = vshrl.u32 %v959, 7
        %v961 = vsub.s32 4, %v960
        %v962 = vrot.slane %v847, %v961
        %v963 = vlaneseq
        %v964 = vshrl.u32 %v963, 7
        %v965 = vsub.s32 6, %v964
        %v966 = vrot.slane %v847, %v965
        %v967 = vlaneseq
        %v968 = vshrl.u32 %v967, 7
        %v969 = vsub.s32 0, %v968
        %v970 = vrot.slane %v848, %v969
        %v971 = vlaneseq
        %v972 = vshrl.u32 %v971, 7
        %v973 = vsub.s32 2, %v972
        %v974 = vrot.slane %v848, %v973
        %v975 = vlaneseq
        %v976 = vshrl.u32 %v975, 7
        %v977 = vsub.s32 4, %v976
        %v978 = vrot.slane %v848, %v977
        %v979 = vlaneseq
        %v980 = vshrl.u32 %v979, 7
        %v981 = vsub.s32 6, %v980
        %v982 = vrot.slane %v848, %v981
        %v983 = vlaneseq
        %v984 = vshrl.u32 %v983, 7
        %v985 = vsub.s32 0, %v984
        %v986 = vrot.slane %v849, %v985
        %v987 = vlaneseq
        %v988 = vshrl.u32 %v987, 7
        %v989 = vsub.s32 2, %v988
        %v990 = vrot.slane %v849, %v989
        %v991 = vlaneseq
        %v992 = vshrl.u32 %v991, 7
        %v993 = vsub.s32 4, %v992
        %v994 = vrot.slane %v849, %v993
        %v995 = vlaneseq
        %v996 = vshrl.u32 %v995, 7
        %v997 = vsub.s32 6, %v996
        %v998 = vrot.slane %v849, %v997
        %v999 = vlaneseq
        %v1000 = vshrl.u32 %v999, 7
        %v1001 = vsub.s32 0, %v1000
        %v1002 = vrot.slane %v850, %v1001
        %v1003 = vlaneseq
        %v1004 = vshrl.u32 %v1003, 7
        %v1005 = vsub.s32 2, %v1004
        %v1006 = vrot.slane %v850, %v1005
        %v1007 = vlaneseq
        %v1008 = vshrl.u32 %v1007, 7
        %v1009 = vsub.s32 4, %v1008
        %v1010 = vrot.slane %v850, %v1009
        %v1011 = vlaneseq
        %v1012 = vshrl.u32 %v1011, 7
        %v1013 = vsub.s32 6, %v1012
        %v1014 = vrot.slane %v850, %v1013
        %v1015 = vlaneseq
        %v1016 = vshrl.u32 %v1015, 7
        %v1017 = vsub.s32 0, %v1016
        %v1018 = vrot.slane %v851, %v1017
        %v1019 = vlaneseq
        %v1020 = vshrl.u32 %v1019, 7
        %v1021 = vsub.s32 2, %v1020
        %v1022 = vrot.slane %v851, %v1021
        %v1023 = vlaneseq
        %v1024 = vshrl.u32 %v1023, 7
        %v1025 = vsub.s32 4, %v1024
        %v1026 = vrot.slane %v851, %v1025
        %v1027 = vlaneseq
        %v1028 = vshrl.u32 %v1027, 7
        %v1029 = vsub.s32 6, %v1028
        %v1030 = vrot.slane %v851, %v1029
        %v1031 = vlaneseq
        %v1032 = vshrl.u32 %v1031, 7
        %v1033 = vsub.s32 0, %v1032
        %v1034 = vrot.slane %v852, %v1033
        %v1035 = vlaneseq
        %v1036 = vshrl.u32 %v1035, 7
        %v1037 = vsub.s32 2, %v1036
        %v1038 = vrot.slane %v852, %v1037
        %v1039 = vlaneseq
        %v1040 = vshrl.u32 %v1039, 7
        %v1041 = vsub.s32 4, %v1040
        %v1042 = vrot.slane %v852, %v1041
        %v1043 = vlaneseq
        %v1044 = vshrl.u32 %v1043, 7
        %v1045 = vsub.s32 6, %v1044
        %v1046 = vrot.slane %v852, %v1045
        %v1047 = vlaneseq
        %v1048 = vshrl.u32 %v1047, 7
        %v1049 = vsub.s32 0, %v1048
        %v1050 = vrot.slane %v853, %v1049
        %v1051 = vlaneseq
        %v1052 = vshrl.u32 %v1051, 7
        %v1053 = vsub.s32 2, %v1052
        %v1054 = vrot.slane %v853, %v1053
        %v1055 = vlaneseq
        %v1056 = vshrl.u32 %v1055, 7
        %v1057 = vsub.s32 4, %v1056
        %v1058 = vrot.slane %v853, %v1057
        %v1059 = vlaneseq
        %v1060 = vshrl.u32 %v1059, 7
        %v1061 = vsub.s32 6, %v1060
        %v1062 = vrot.slane %v853, %v1061
        %v1063 = vlaneseq
        %v1064 = vshrl.u32 %v1063, 7
        %v1065 = vsub.s32 0, %v1064
        %v1066 = vrot.slane %v854, %v1065
        %v1067 = vlaneseq
        %v1068 = vshrl.u32 %v1067, 7
        %v1069 = vsub.s32 2, %v1068
        %v1070 = vrot.slane %v854, %v1069
        %v1071 = vlaneseq
        %v1072 = vshrl.u32 %v1071, 7
        %v1073 = vsub.s32 4, %v1072
        %v1074 = vrot.slane %v854, %v1073
        %v1075 = vlaneseq
        %v1076 = vshrl.u32 %v1075, 7
        %v1077 = vsub.s32 6, %v1076
        %v1078 = vrot.slane %v854, %v1077
        %v1079 = vlaneseq
        %v1080 = vshrl.u32 %v1079, 7
        %v1081 = vsub.s32 0, %v1080
        %v1082 = vrot.slane %v855, %v1081
        %v1083 = vlaneseq
        %v1084 = vshrl.u32 %v1083, 7
        %v1085 = vsub.s32 2, %v1084
        %v1086 = vrot.slane %v855, %v1085
        %v1087 = vlaneseq
        %v1088 = vshrl.u32 %v1087, 7
        %v1089 = vsub.s32 4, %v1088
        %v1090 = vrot.slane %v855, %v1089
        %v1091 = vlaneseq
        %v1092 = vshrl.u32 %v1091, 7
        %v1093 = vsub.s32 6, %v1092
        %v1094 = vrot.slane %v855, %v1093
        %v1095 = vlaneseq
        %v1096 = vshrl.u32 %v1095, 7
        %v1097 = vsub.s32 0, %v1096
        %v1098 = vrot.slane %v856, %v1097
        %v1099 = vlaneseq
        %v1100 = vshrl.u32 %v1099, 7
        %v1101 = vsub.s32 2, %v1100
        %v1102 = vrot.slane %v856, %v1101
        %v1103 = vlaneseq
        %v1104 = vshrl.u32 %v1103, 7
        %v1105 = vsub.s32 4, %v1104
        %v1106 = vrot.slane %v856, %v1105
        %v1107 = vlaneseq
        %v1108 = vshrl.u32 %v1107, 7
        %v1109 = vsub.s32 6, %v1108
        %v1110 = vrot.slane %v856, %v1109
        %v1111 = vlaneseq
        %v1112 = vshrl.u32 %v1111, 7
        %v1113 = vsub.s32 0, %v1112
        %v1114 = vrot.slane %v857, %v1113
        %v1115 = vlaneseq
        %v1116 = vshrl.u32 %v1115, 7
        %v1117 = vsub.s32 2, %v1116
        %v1118 = vrot.slane %v857, %v1117
        %v1119 = vlaneseq
        %v1120 = vshrl.u32 %v1119, 7
        %v1121 = vsub.s32 4, %v1120
        %v1122 = vrot.slane %v857, %v1121
        %v1123 = vlaneseq
        %v1124 = vshrl.u32 %v1123, 7
        %v1125 = vsub.s32 6, %v1124
        %v1126 = vrot.slane %v857, %v1125
        %v1127 = vlaneseq
        %v1128 = vshrl.u32 %v1127, 7
        %v1129 = vsub.s32 0, %v1128
        %v1130 = vrot.slane %v858, %v1129
        %v1131 = vlaneseq
        %v1132 = vshrl.u32 %v1131, 7
        %v1133 = vsub.s32 2, %v1132
        %v1134 = vrot.slane %v858, %v1133
        %v1135 = vlaneseq
        %v1136 = vshrl.u32 %v1135, 7
        %v1137 = vsub.s32 4, %v1136
        %v1138 = vrot.slane %v858, %v1137
        %v1139 = vlaneseq
        %v1140 = vshrl.u32 %v1139, 7
        %v1141 = vsub.s32 6, %v1140
        %v1142 = vrot.slane %v858, %v1141
        %v1143 = vlaneseq
        %v1144 = vshrl.u32 %v1143, 7
        %v1145 = vsub.s32 0, %v1144
        %v1146 = vrot.slane %v859, %v1145
        %v1147 = vlaneseq
        %v1148 = vshrl.u32 %v1147, 7
        %v1149 = vsub.s32 2, %v1148
        %v1150 = vrot.slane %v859, %v1149
        %v1151 = vlaneseq
        %v1152 = vshrl.u32 %v1151, 7
        %v1153 = vsub.s32 4, %v1152
        %v1154 = vrot.slane %v859, %v1153
        %v1155 = vlaneseq
        %v1156 = vshrl.u32 %v1155, 7
        %v1157 = vsub.s32 6, %v1156
        %v1158 = vrot.slane %v859, %v1157
        %v1159 = vlaneseq
        %v1160 = vshrl.u32 %v1159, 7
        %v1161 = vsub.s32 0, %v1160
        %v1162 = vrot.slane %v860, %v1161
        %v1163 = vlaneseq
        %v1164 = vshrl.u32 %v1163, 7
        %v1165 = vsub.s32 2, %v1164
        %v1166 = vrot.slane %v860, %v1165
        %v1167 = vlaneseq
        %v1168 = vshrl.u32 %v1167, 7
        %v1169 = vsub.s32 4, %v1168
        %v1170 = vrot.slane %v860, %v1169
        %v1171 = vlaneseq
        %v1172 = vshrl.u32 %v1171, 7
        %v1173 = vsub.s32 6, %v1172
        %v1174 = vrot.slane %v860, %v1173
        %v1175 = vlaneseq
        %v1176 = vshrl.u32 %v1175, 7
        %v1177 = vsub.s32 0, %v1176
        %v1178 = vrot.slane %v861, %v1177
        %v1179 = vlaneseq
        %v1180 = vshrl.u32 %v1179, 7
        %v1181 = vsub.s32 2, %v1180
        %v1182 = vrot.slane %v861, %v1181
        %v1183 = vlaneseq
        %v1184 = vshrl.u32 %v1183, 7
        %v1185 = vsub.s32 4, %v1184
        %v1186 = vrot.slane %v861, %v1185
        %v1187 = vlaneseq
        %v1188 = vshrl.u32 %v1187, 7
        %v1189 = vsub.s32 6, %v1188
        %v1190 = vrot.slane %v861, %v1189
        %v1191 = vlaneseq
        %v1192 = vshrl.u32 %v1191, 7
        %v1193 = vsub.s32 0, %v1192
        %v1194 = vrot.slane %v862, %v1193
        %v1195 = vlaneseq
        %v1196 = vshrl.u32 %v1195, 7
        %v1197 = vsub.s32 2, %v1196
        %v1198 = vrot.slane %v862, %v1197
        %v1199 = vlaneseq
        %v1200 = vshrl.u32 %v1199, 7
        %v1201 = vsub.s32 4, %v1200
        %v1202 = vrot.slane %v862, %v1201
        %v1203 = vlaneseq
        %v1204 = vshrl.u32 %v1203, 7
        %v1205 = vsub.s32 6, %v1204
        %v1206 = vrot.slane %v862, %v1205
        %v1207 = vlaneseq
        %v1208 = vshrl.u32 %v1207, 7
        %v1209 = vsub.s32 0, %v1208
        %v1210 = vrot.slane %v863, %v1209
        %v1211 = vlaneseq
        %v1212 = vshrl.u32 %v1211, 7
        %v1213 = vsub.s32 2, %v1212
        %v1214 = vrot.slane %v863, %v1213
        %v1215 = vlaneseq
        %v1216 = vshrl.u32 %v1215, 7
        %v1217 = vsub.s32 4, %v1216
        %v1218 = vrot.slane %v863, %v1217
        %v1219 = vlaneseq
        %v1220 = vshrl.u32 %v1219, 7
        %v1221 = vsub.s32 6, %v1220
        %v1222 = vrot.slane %v863, %v1221
        %v1223 = vlaneseq
        %v1224 = vshrl.u32 %v1223, 7
        %v1225 = vsub.s32 0, %v1224
        %v1226 = vrot.slane %v864, %v1225
        %v1227 = vlaneseq
        %v1228 = vshrl.u32 %v1227, 7
        %v1229 = vsub.s32 2, %v1228
        %v1230 = vrot.slane %v864, %v1229
        %v1231 = vlaneseq
        %v1232 = vshrl.u32 %v1231, 7
        %v1233 = vsub.s32 4, %v1232
        %v1234 = vrot.slane %v864, %v1233
        %v1235 = vlaneseq
        %v1236 = vshrl.u32 %v1235, 7
        %v1237 = vsub.s32 6, %v1236
        %v1238 = vrot.slane %v864, %v1237
        %v1239 = vlaneseq
        %v1240 = vshrl.u32 %v1239, 7
        %v1241 = vsub.s32 0, %v1240
        %v1242 = vrot.slane %v865, %v1241
        %v1243 = vlaneseq
        %v1244 = vshrl.u32 %v1243, 7
        %v1245 = vsub.s32 2, %v1244
        %v1246 = vrot.slane %v865, %v1245
        %v1247 = vlaneseq
        %v1248 = vshrl.u32 %v1247, 7
        %v1249 = vsub.s32 4, %v1248
        %v1250 = vrot.slane %v865, %v1249
        %v1251 = vlaneseq
        %v1252 = vshrl.u32 %v1251, 7
        %v1253 = vsub.s32 6, %v1252
        %v1254 = vrot.slane %v865, %v1253
        %v1255 = vlaneseq
        %v1256 = vshrl.u32 %v1255, 7
        %v1257 = vsub.s32 0, %v1256
        %v1258 = vrot.slane %v866, %v1257
        %v1259 = vlaneseq
        %v1260 = vshrl.u32 %v1259, 7
        %v1261 = vsub.s32 2, %v1260
        %v1262 = vrot.slane %v866, %v1261
        %v1263 = vlaneseq
        %v1264 = vshrl.u32 %v1263, 7
        %v1265 = vsub.s32 4, %v1264
        %v1266 = vrot.slane %v866, %v1265
        %v1267 = vlaneseq
        %v1268 = vshrl.u32 %v1267, 7
        %v1269 = vsub.s32 6, %v1268
        %v1270 = vrot.slane %v866, %v1269
        %v1271 = vlaneseq
        %v1272 = vshrl.u32 %v1271, 7
        %v1273 = vsub.s32 0, %v1272
        %v1274 = vrot.slane %v867, %v1273
        %v1275 = vlaneseq
        %v1276 = vshrl.u32 %v1275, 7
        %v1277 = vsub.s32 2, %v1276
        %v1278 = vrot.slane %v867, %v1277
        %v1279 = vlaneseq
        %v1280 = vshrl.u32 %v1279, 7
        %v1281 = vsub.s32 4, %v1280
        %v1282 = vrot.slane %v867, %v1281
        %v1283 = vlaneseq
        %v1284 = vshrl.u32 %v1283, 7
        %v1285 = vsub.s32 6, %v1284
        %v1286 = vrot.slane %v867, %v1285
        %v1287 = vlaneseq
        %v1288 = vshrl.u32 %v1287, 7
        %v1289 = vsub.s32 0, %v1288
        %v1290 = vrot.slane %v868, %v1289
        %v1291 = vlaneseq
        %v1292 = vshrl.u32 %v1291, 7
        %v1293 = vsub.s32 2, %v1292
        %v1294 = vrot.slane %v868, %v1293
        %v1295 = vlaneseq
        %v1296 = vshrl.u32 %v1295, 7
        %v1297 = vsub.s32 4, %v1296
        %v1298 = vrot.slane %v868, %v1297
        %v1299 = vlaneseq
        %v1300 = vshrl.u32 %v1299, 7
        %v1301 = vsub.s32 6, %v1300
        %v1302 = vrot.slane %v868, %v1301
        %v1303 = vlaneseq
        %v1304 = vshrl.u32 %v1303, 7
        %v1305 = vsub.s32 0, %v1304
        %v1306 = vrot.slane %v869, %v1305
        %v1307 = vlaneseq
        %v1308 = vshrl.u32 %v1307, 7
        %v1309 = vsub.s32 2, %v1308
        %v1310 = vrot.slane %v869, %v1309
        %v1311 = vlaneseq
        %v1312 = vshrl.u32 %v1311, 7
        %v1313 = vsub.s32 4, %v1312
        %v1314 = vrot.slane %v869, %v1313
        %v1315 = vlaneseq
        %v1316 = vshrl.u32 %v1315, 7
        %v1317 = vsub.s32 6, %v1316
        %v1318 = vrot.slane %v869, %v1317
        %v1319 = vlaneseq
        %v1320 = vshrl.u32 %v1319, 7
        %v1321 = vsub.s32 0, %v1320
        %v1322 = vrot.slane %v870, %v1321
        %v1323 = vlaneseq
        %v1324 = vshrl.u32 %v1323, 7
        %v1325 = vsub.s32 2, %v1324
        %v1326 = vrot.slane %v870, %v1325
        %v1327 = vlaneseq
        %v1328 = vshrl.u32 %v1327, 7
        %v1329 = vsub.s32 4, %v1328
        %v1330 = vrot.slane %v870, %v1329
        %v1331 = vlaneseq
        %v1332 = vshrl.u32 %v1331, 7
        %v1333 = vsub.s32 6, %v1332
        %v1334 = vrot.slane %v870, %v1333
        %v1335 = vlaneseq
        %v1336 = vshrl.u32 %v1335, 7
        %v1337 = vsub.s32 0, %v1336
        %v1338 = vrot.slane %v871, %v1337
        %v1339 = vlaneseq
        %v1340 = vshrl.u32 %v1339, 7
        %v1341 = vsub.s32 2, %v1340
        %v1342 = vrot.slane %v871, %v1341
        %v1343 = vlaneseq
        %v1344 = vshrl.u32 %v1343, 7
        %v1345 = vsub.s32 4, %v1344
        %v1346 = vrot.slane %v871, %v1345
        %v1347 = vlaneseq
        %v1348 = vshrl.u32 %v1347, 7
        %v1349 = vsub.s32 6, %v1348
        %v1350 = vrot.slane %v871, %v1349
        %v1351 = vlaneseq
        %v1352 = vshrl.u32 %v1351, 7
        %v1353 = vsub.s32 0, %v1352
        %v1354 = vrot.slane %v872, %v1353
        %v1355 = vlaneseq
        %v1356 = vshrl.u32 %v1355, 7
        %v1357 = vsub.s32 2, %v1356
        %v1358 = vrot.slane %v872, %v1357
        %v1359 = vlaneseq
        %v1360 = vshrl.u32 %v1359, 7
        %v1361 = vsub.s32 4, %v1360
        %v1362 = vrot.slane %v872, %v1361
        %v1363 = vlaneseq
        %v1364 = vshrl.u32 %v1363, 7
        %v1365 = vsub.s32 6, %v1364
        %v1366 = vrot.slane %v872, %v1365
        %v1367 = vlaneseq
        %v1368 = vshrl.u32 %v1367, 7
        %v1369 = vsub.s32 0, %v1368
        %v1370 = vrot.slane %v873, %v1369
        %v1371 = vlaneseq
        %v1372 = vshrl.u32 %v1371, 7
        %v1373 = vsub.s32 2, %v1372
        %v1374 = vrot.slane %v873, %v1373
        %v1375 = vlaneseq
        %v1376 = vshrl.u32 %v1375, 7
        %v1377 = vsub.s32 4, %v1376
        %v1378 = vrot.slane %v873, %v1377
        %v1379 = vlaneseq
        %v1380 = vshrl.u32 %v1379, 7
        %v1381 = vsub.s32 6, %v1380
        %v1382 = vrot.slane %v873, %v1381
        %v1383 = vlaneseq
        %v1384 = vshrl.u32 %v1383, 7
        %v1385 = vsub.s32 0, %v1384
        %v1386 = vrot.slane %v874, %v1385
        %v1387 = vlaneseq
        %v1388 = vshrl.u32 %v1387, 7
        %v1389 = vsub.s32 2, %v1388
        %v1390 = vrot.slane %v874, %v1389
        %v1391 = vlaneseq
        %v1392 = vshrl.u32 %v1391, 7
        %v1393 = vsub.s32 4, %v1392
        %v1394 = vrot.slane %v874, %v1393
        %v1395 = vlaneseq
        %v1396 = vshrl.u32 %v1395, 7
        %v1397 = vsub.s32 6, %v1396
        %v1398 = vrot.slane %v874, %v1397
        %v1399 = vlaneseq
        %v1400 = vshrl.u32 %v1399, 7
        %v1401 = vsub.s32 0, %v1400
        %v1402 = vrot.slane %v875, %v1401
        %v1403 = vlaneseq
        %v1404 = vshrl.u32 %v1403, 7
        %v1405 = vsub.s32 2, %v1404
        %v1406 = vrot.slane %v875, %v1405
        %v1407 = vlaneseq
        %v1408 = vshrl.u32 %v1407, 7
        %v1409 = vsub.s32 4, %v1408
        %v1410 = vrot.slane %v875, %v1409
        %v1411 = vlaneseq
        %v1412 = vshrl.u32 %v1411, 7
        %v1413 = vsub.s32 6, %v1412
        %v1414 = vrot.slane %v875, %v1413
        %v1415 = vlaneseq
        %v1416 = vshrl.u32 %v1415, 7
        %v1417 = vsub.s32 0, %v1416
        %v1418 = vrot.slane %v876, %v1417
        %v1419 = vlaneseq
        %v1420 = vshrl.u32 %v1419, 7
        %v1421 = vsub.s32 2, %v1420
        %v1422 = vrot.slane %v876, %v1421
        %v1423 = vlaneseq
        %v1424 = vshrl.u32 %v1423, 7
        %v1425 = vsub.s32 4, %v1424
        %v1426 = vrot.slane %v876, %v1425
        %v1427 = vlaneseq
        %v1428 = vshrl.u32 %v1427, 7
        %v1429 = vsub.s32 6, %v1428
        %v1430 = vrot.slane %v876, %v1429
        %v1431 = vlaneseq
        %v1432 = vshrl.u32 %v1431, 7
        %v1433 = vsub.s32 0, %v1432
        %v1434 = vrot.slane %v877, %v1433
        %v1435 = vlaneseq
        %v1436 = vshrl.u32 %v1435, 7
        %v1437 = vsub.s32 2, %v1436
        %v1438 = vrot.slane %v877, %v1437
        %v1439 = vlaneseq
        %v1440 = vshrl.u32 %v1439, 7
        %v1441 = vsub.s32 4, %v1440
        %v1442 = vrot.slane %v877, %v1441
        %v1443 = vlaneseq
        %v1444 = vshrl.u32 %v1443, 7
        %v1445 = vsub.s32 6, %v1444
        %v1446 = vrot.slane %v877, %v1445
        %v1447 = vlaneseq
        %v1448 = vshrl.u32 %v1447, 7
        %v1449 = vsub.s32 0, %v1448
        %v1450 = vrot.slane %v878, %v1449
        %v1451 = vlaneseq
        %v1452 = vshrl.u32 %v1451, 7
        %v1453 = vsub.s32 2, %v1452
        %v1454 = vrot.slane %v878, %v1453
        %v1455 = vlaneseq
        %v1456 = vshrl.u32 %v1455, 7
        %v1457 = vsub.s32 4, %v1456
        %v1458 = vrot.slane %v878, %v1457
        %v1459 = vlaneseq
        %v1460 = vshrl.u32 %v1459, 7
        %v1461 = vsub.s32 6, %v1460
        %v1462 = vrot.slane %v878, %v1461
        %v1463 = vlaneseq
        %v1464 = vshrl.u32 %v1463, 7
        %v1465 = vsub.s32 0, %v1464
        %v1466 = vrot.slane %v879, %v1465
        %v1467 = vlaneseq
        %v1468 = vshrl.u32 %v1467, 7
        %v1469 = vsub.s32 2, %v1468
        %v1470 = vrot.slane %v879, %v1469
        %v1471 = vlaneseq
        %v1472 = vshrl.u32 %v1471, 7
        %v1473 = vsub.s32 4, %v1472
        %v1474 = vrot.slane %v879, %v1473
        %v1475 = vlaneseq
        %v1476 = vshrl.u32 %v1475, 7
        %v1477 = vsub.s32 6, %v1476
        %v1478 = vrot.slane %v879, %v1477
        %v1479 = vlaneseq
        %v1480 = vshrl.u32 %v1479, 7
        %v1481 = vsub.s32 0, %v1480
        %v1482 = vrot.slane %v880, %v1481
        %v1483 = vlaneseq
        %v1484 = vshrl.u32 %v1483, 7
        %v1485 = vsub.s32 2, %v1484
        %v1486 = vrot.slane %v880, %v1485
        %v1487 = vlaneseq
        %v1488 = vshrl.u32 %v1487, 7
        %v1489 = vsub.s32 4, %v1488
        %v1490 = vrot.slane %v880, %v1489
        %v1491 = vlaneseq
        %v1492 = vshrl.u32 %v1491, 7
        %v1493 = vsub.s32 6, %v1492
        %v1494 = vrot.slane %v880, %v1493
        %v1495 = vlaneseq
        %v1496 = vshrl.u32 %v1495, 7
        %v1497 = vsub.s32 0, %v1496
        %v1498 = vrot.slane %v881, %v1497
        %v1499 = vlaneseq
        %v1500 = vshrl.u32 %v1499, 7
        %v1501 = vsub.s32 2, %v1500
        %v1502 = vrot.slane %v881, %v1501
        %v1503 = vlaneseq
        %v1504 = vshrl.u32 %v1503, 7
        %v1505 = vsub.s32 4, %v1504
        %v1506 = vrot.slane %v881, %v1505
        %v1654 = vlaneseq
        %v1655 = vshrl.u32 %v1654, 7
        %v1656 = vsub.s32 0, %v1655
        %v1657 = vrot.slane %v922, %v1656
        %v1658 = vlaneseq
        %v1659 = vshrl.u32 %v1658, 7
        %v1660 = vsub.s32 0, %v1659
        %v1661 = vrot.slane %v926, %v1660
        %v1662 = vlaneseq
        %v1663 = vshrl.u32 %v1662, 7
        %v1664 = vsub.s32 0, %v1663
        %v1665 = vrot.slane %v930, %v1664
        %v1666 = vlaneseq
        %v1667 = vshrl.u32 %v1666, 7
        %v1668 = vsub.s32 0, %v1667
        %v1669 = vrot.slane %v934, %v1668
        %v1670 = vlaneseq
        %v1671 = vshrl.u32 %v1670, 7
        %v1672 = vsub.s32 0, %v1671
        %v1673 = vrot.slane %v938, %v1672
        %v1674 = vlaneseq
        %v1675 = vshrl.u32 %v1674, 7
        %v1676 = vsub.s32 0, %v1675
        %v1677 = vrot.slane %v942, %v1676
        %v1678 = vlaneseq
        %v1679 = vshrl.u32 %v1678, 7
        %v1680 = vsub.s32 0, %v1679
        %v1681 = vrot.slane %v946, %v1680
        %v1682 = vlaneseq
        %v1683 = vshrl.u32 %v1682, 7
        %v1684 = vsub.s32 0, %v1683
        %v1685 = vrot.slane %v950, %v1684
        %v1686 = vlaneseq
        %v1687 = vshrl.u32 %v1686, 7
        %v1688 = vsub.s32 0, %v1687
        %v1689 = vrot.slane %v954, %v1688
        %v1690 = vlaneseq
        %v1691 = vshrl.u32 %v1690, 7
        %v1692 = vsub.s32 0, %v1691
        %v1693 = vrot.slane %v958, %v1692
        %v1694 = vlaneseq
        %v1695 = vshrl.u32 %v1694, 7
        %v1696 = vsub.s32 0, %v1695
        %v1697 = vrot.slane %v962, %v1696
        %v1698 = vlaneseq
        %v1699 = vshrl.u32 %v1698, 7
        %v1700 = vsub.s32 0, %v1699
        %v1701 = vrot.slane %v966, %v1700
        %v1702 = vlaneseq
        %v1703 = vshrl.u32 %v1702, 7
        %v1704 = vsub.s32 0, %v1703
        %v1705 = vrot.slane %v970, %v1704
        %v1706 = vlaneseq
        %v1707 = vshrl.u32 %v1706, 7
        %v1708 = vsub.s32 0, %v1707
        %v1709 = vrot.slane %v974, %v1708
        %v1710 = vlaneseq
        %v1711 = vshrl.u32 %v1710, 7
        %v1712 = vsub.s32 0, %v1711
        %v1713 = vrot.slane %v978, %v1712
        %v1714 = vlaneseq
        %v1715 = vshrl.u32 %v1714, 7
        %v1716 = vsub.s32 0, %v1715
        %v1717 = vrot.slane %v982, %v1716
        %v1718 = vlaneseq
        %v1719 = vshrl.u32 %v1718, 7
        %v1720 = vsub.s32 0, %v1719
        %v1721 = vrot.slane %v986, %v1720
        %v1722 = vlaneseq
        %v1723 = vshrl.u32 %v1722, 7
        %v1724 = vsub.s32 0, %v1723
        %v1725 = vrot.slane %v990, %v1724
        %v1726 = vlaneseq
        %v1727 = vshrl.u32 %v1726, 7
        %v1728 = vsub.s32 0, %v1727
        %v1729 = vrot.slane %v994, %v1728
        %v1730 = vlaneseq
        %v1731 = vshrl.u32 %v1730, 7
        %v1732 = vsub.s32 0, %v1731
        %v1733 = vrot.slane %v998, %v1732
        %v1734 = vlaneseq
        %v1735 = vshrl.u32 %v1734, 7
        %v1736 = vsub.s32 0, %v1735
        %v1737 = vrot.slane %v1002, %v1736
        %v1738 = vlaneseq
        %v1739 = vshrl.u32 %v1738, 7
        %v1740 = vsub.s32 0, %v1739
        %v1741 = vrot.slane %v1006, %v1740
        %v1742 = vlaneseq
        %v1743 = vshrl.u32 %v1742, 7
        %v1744 = vsub.s32 0, %v1743
        %v1745 = vrot.slane %v1010, %v1744
        %v1746 = vlaneseq
        %v1747 = vshrl.u32 %v1746, 7
        %v1748 = vsub.s32 0, %v1747
        %v1749 = vrot.slane %v1014, %v1748
        %v1750 = vlaneseq
        %v1751 = vshrl.u32 %v1750, 7
        %v1752 = vsub.s32 0, %v1751
        %v1753 = vrot.slane %v1018, %v1752
        %v1754 = vlaneseq
        %v1755 = vshrl.u32 %v1754, 7
        %v1756 = vsub.s32 0, %v1755
        %v1757 = vrot.slane %v1022, %v1756
        %v1758 = vlaneseq
        %v1759 = vshrl.u32 %v1758, 7
        %v1760 = vsub.s32 0, %v1759
        %v1761 = vrot.slane %v1026, %v1760
        %v1762 = vlaneseq
        %v1763 = vshrl.u32 %v1762, 7
        %v1764 = vsub.s32 0, %v1763
        %v1765 = vrot.slane %v1030, %v1764
        %v1766 = vlaneseq
        %v1767 = vshrl.u32 %v1766, 7
        %v1768 = vsub.s32 0, %v1767
        %v1769 = vrot.slane %v1034, %v1768
        %v1770 = vlaneseq
        %v1771 = vshrl.u32 %v1770, 7
        %v1772 = vsub.s32 0, %v1771
        %v1773 = vrot.slane %v1038, %v1772
        %v1774 = vlaneseq
        %v1775 = vshrl.u32 %v1774, 7
        %v1776 = vsub.s32 0, %v1775
        %v1777 = vrot.slane %v1042, %v1776
        %v1778 = vlaneseq
        %v1779 = vshrl.u32 %v1778, 7
        %v1780 = vsub.s32 0, %v1779
        %v1781 = vrot.slane %v1046, %v1780
        %v1782 = vlaneseq
        %v1783 = vshrl.u32 %v1782, 7
        %v1784 = vsub.s32 0, %v1783
        %v1785 = vrot.slane %v1050, %v1784
        %v1786 = vlaneseq
        %v1787 = vshrl.u32 %v1786, 7
        %v1788 = vsub.s32 0, %v1787
        %v1789 = vrot.slane %v1054, %v1788
        %v1790 = vlaneseq
        %v1791 = vshrl.u32 %v1790, 7
        %v1792 = vsub.s32 0, %v1791
        %v1793 = vrot.slane %v1058, %v1792
        %v1794 = vlaneseq
        %v1795 = vshrl.u32 %v1794, 7
        %v1796 = vsub.s32 0, %v1795
        %v1797 = vrot.slane %v1062, %v1796
        %v1798 = vlaneseq
        %v1799 = vshrl.u32 %v1798, 7
        %v1800 = vsub.s32 0, %v1799
        %v1801 = vrot.slane %v1066, %v1800
        %v1802 = vlaneseq
        %v1803 = vshrl.u32 %v1802, 7
        %v1804 = vsub.s32 0, %v1803
        %v1805 = vrot.slane %v1070, %v1804
        %v1806 = vlaneseq
        %v1807 = vshrl.u32 %v1806, 7
        %v1808 = vsub.s32 0, %v1807
        %v1809 = vrot.slane %v1074, %v1808
        %v1810 = vlaneseq
        %v1811 = vshrl.u32 %v1810, 7
        %v1812 = vsub.s32 0, %v1811
        %v1813 = vrot.slane %v1078, %v1812
        %v1814 = vlaneseq
        %v1815 = vshrl.u32 %v1814, 7
        %v1816 = vsub.s32 0, %v1815
        %v1817 = vrot.slane %v1082, %v1816
        %v1818 = vlaneseq
        %v1819 = vshrl.u32 %v1818, 7
        %v1820 = vsub.s32 0, %v1819
        %v1821 = vrot.slane %v1086, %v1820
        %v1822 = vlaneseq
        %v1823 = vshrl.u32 %v1822, 7
        %v1824 = vsub.s32 0, %v1823
        %v1825 = vrot.slane %v1090, %v1824
        %v1826 = vlaneseq
        %v1827 = vshrl.u32 %v1826, 7
        %v1828 = vsub.s32 0, %v1827
        %v1829 = vrot.slane %v1094, %v1828
        %v1830 = vlaneseq
        %v1831 = vshrl.u32 %v1830, 7
        %v1832 = vsub.s32 0, %v1831
        %v1833 = vrot.slane %v1098, %v1832
        %v1834 = vlaneseq
        %v1835 = vshrl.u32 %v1834, 7
        %v1836 = vsub.s32 0, %v1835
        %v1837 = vrot.slane %v1102, %v1836
        %v1838 = vlaneseq
        %v1839 = vshrl.u32 %v1838, 7
        %v1840 = vsub.s32 0, %v1839
        %v1841 = vrot.slane %v1106, %v1840
        %v1842 = vlaneseq
        %v1843 = vshrl.u32 %v1842, 7
        %v1844 = vsub.s32 0, %v1843
        %v1845 = vrot.slane %v1110, %v1844
        %v1846 = vlaneseq
        %v1847 = vshrl.u32 %v1846, 7
        %v1848 = vsub.s32 0, %v1847
        %v1849 = vrot.slane %v1114, %v1848
        %v1850 = vlaneseq
        %v1851 = vshrl.u32 %v1850, 7
        %v1852 = vsub.s32 0, %v1851
        %v1853 = vrot.slane %v1118, %v1852
        %v1854 = vlaneseq
        %v1855 = vshrl.u32 %v1854, 7
        %v1856 = vsub.s32 0, %v1855
        %v1857 = vrot.slane %v1122, %v1856
        %v1858 = vlaneseq
        %v1859 = vshrl.u32 %v1858, 7
        %v1860 = vsub.s32 0, %v1859
        %v1861 = vrot.slane %v1126, %v1860
        %v1862 = vlaneseq
        %v1863 = vshrl.u32 %v1862, 7
        %v1864 = vsub.s32 0, %v1863
        %v1865 = vrot.slane %v1130, %v1864
        %v1866 = vlaneseq
        %v1867 = vshrl.u32 %v1866, 7
        %v1868 = vsub.s32 0, %v1867
        %v1869 = vrot.slane %v1134, %v1868
        %v1870 = vlaneseq
        %v1871 = vshrl.u32 %v1870, 7
        %v1872 = vsub.s32 0, %v1871
        %v1873 = vrot.slane %v1138, %v1872
        %v1874 = vlaneseq
        %v1875 = vshrl.u32 %v1874, 7
        %v1876 = vsub.s32 0, %v1875
        %v1877 = vrot.slane %v1142, %v1876
        %v1878 = vlaneseq
        %v1879 = vshrl.u32 %v1878, 7
        %v1880 = vsub.s32 0, %v1879
        %v1881 = vrot.slane %v1146, %v1880
        %v1882 = vlaneseq
        %v1883 = vshrl.u32 %v1882, 7
        %v1884 = vsub.s32 0, %v1883
        %v1885 = vrot.slane %v1150, %v1884
        %v1886 = vlaneseq
        %v1887 = vshrl.u32 %v1886, 7
        %v1888 = vsub.s32 0, %v1887
        %v1889 = vrot.slane %v1154, %v1888
        %v1890 = vlaneseq
        %v1891 = vshrl.u32 %v1890, 7
        %v1892 = vsub.s32 0, %v1891
        %v1893 = vrot.slane %v1158, %v1892
        %v1894 = vlaneseq
        %v1895 = vshrl.u32 %v1894, 7
        %v1896 = vsub.s32 0, %v1895
        %v1897 = vrot.slane %v1162, %v1896
        %v1898 = vlaneseq
        %v1899 = vshrl.u32 %v1898, 7
        %v1900 = vsub.s32 0, %v1899
        %v1901 = vrot.slane %v1166, %v1900
        %v1902 = vlaneseq
        %v1903 = vshrl.u32 %v1902, 7
        %v1904 = vsub.s32 0, %v1903
        %v1905 = vrot.slane %v1170, %v1904
        %v1906 = vlaneseq
        %v1907 = vshrl.u32 %v1906, 7
        %v1908 = vsub.s32 0, %v1907
        %v1909 = vrot.slane %v1174, %v1908
        %v1910 = vlaneseq
        %v1911 = vshrl.u32 %v1910, 7
        %v1912 = vsub.s32 0, %v1911
        %v1913 = vrot.slane %v1178, %v1912
        %v1914 = vlaneseq
        %v1915 = vshrl.u32 %v1914, 7
        %v1916 = vsub.s32 0, %v1915
        %v1917 = vrot.slane %v1182, %v1916
        %v1918 = vlaneseq
        %v1919 = vshrl.u32 %v1918, 7
        %v1920 = vsub.s32 0, %v1919
        %v1921 = vrot.slane %v1186, %v1920
        %v1922 = vlaneseq
        %v1923 = vshrl.u32 %v1922, 7
        %v1924 = vsub.s32 0, %v1923
        %v1925 = vrot.slane %v1190, %v1924
        %v1926 = vlaneseq
        %v1927 = vshrl.u32 %v1926, 7
        %v1928 = vsub.s32 0, %v1927
        %v1929 = vrot.slane %v1194, %v1928
        %v1930 = vlaneseq
        %v1931 = vshrl.u32 %v1930, 7
        %v1932 = vsub.s32 0, %v1931
        %v1933 = vrot.slane %v1198, %v1932
        %v1934 = vlaneseq
        %v1935 = vshrl.u32 %v1934, 7
        %v1936 = vsub.s32 0, %v1935
        %v1937 = vrot.slane %v1202, %v1936
        %v1938 = vlaneseq
        %v1939 = vshrl.u32 %v1938, 7
        %v1940 = vsub.s32 0, %v1939
        %v1941 = vrot.slane %v1206, %v1940
        %v1942 = vlaneseq
        %v1943 = vshrl.u32 %v1942, 7
        %v1944 = vsub.s32 0, %v1943
        %v1945 = vrot.slane %v1210, %v1944
        %v1946 = vlaneseq
        %v1947 = vshrl.u32 %v1946, 7
        %v1948 = vsub.s32 0, %v1947
        %v1949 = vrot.slane %v1214, %v1948
        %v1950 = vlaneseq
        %v1951 = vshrl.u32 %v1950, 7
        %v1952 = vsub.s32 0, %v1951
        %v1953 = vrot.slane %v1218, %v1952
        %v1954 = vlaneseq
        %v1955 = vshrl.u32 %v1954, 7
        %v1956 = vsub.s32 0, %v1955
        %v1957 = vrot.slane %v1222, %v1956
        %v1958 = vlaneseq
        %v1959 = vshrl.u32 %v1958, 7
        %v1960 = vsub.s32 0, %v1959
        %v1961 = vrot.slane %v1226, %v1960
        %v1962 = vlaneseq
        %v1963 = vshrl.u32 %v1962, 7
        %v1964 = vsub.s32 0, %v1963
        %v1965 = vrot.slane %v1230, %v1964
        %v1966 = vlaneseq
        %v1967 = vshrl.u32 %v1966, 7
        %v1968 = vsub.s32 0, %v1967
        %v1969 = vrot.slane %v1234, %v1968
        %v1970 = vlaneseq
        %v1971 = vshrl.u32 %v1970, 7
        %v1972 = vsub.s32 0, %v1971
        %v1973 = vrot.slane %v1238, %v1972
        %v1974 = vlaneseq
        %v1975 = vshrl.u32 %v1974, 7
        %v1976 = vsub.s32 0, %v1975
        %v1977 = vrot.slane %v1242, %v1976
        %v1978 = vlaneseq
        %v1979 = vshrl.u32 %v1978, 7
        %v1980 = vsub.s32 0, %v1979
        %v1981 = vrot.slane %v1246, %v1980
        %v1982 = vlaneseq
        %v1983 = vshrl.u32 %v1982, 7
        %v1984 = vsub.s32 0, %v1983
        %v1985 = vrot.slane %v1250, %v1984
        %v1986 = vlaneseq
        %v1987 = vshrl.u32 %v1986, 7
        %v1988 = vsub.s32 0, %v1987
        %v1989 = vrot.slane %v1254, %v1988
        %v1990 = vlaneseq
        %v1991 = vshrl.u32 %v1990, 7
        %v1992 = vsub.s32 0, %v1991
        %v1993 = vrot.slane %v1258, %v1992
        %v1994 = vlaneseq
        %v1995 = vshrl.u32 %v1994, 7
        %v1996 = vsub.s32 0, %v1995
        %v1997 = vrot.slane %v1262, %v1996
        %v1998 = vlaneseq
        %v1999 = vshrl.u32 %v1998, 7
        %v2000 = vsub.s32 0, %v1999
        %v2001 = vrot.slane %v1266, %v2000
        %v2002 = vlaneseq
        %v2003 = vshrl.u32 %v2002, 7
        %v2004 = vsub.s32 0, %v2003
        %v2005 = vrot.slane %v1270, %v2004
        %v2006 = vlaneseq
        %v2007 = vshrl.u32 %v2006, 7
        %v2008 = vsub.s32 0, %v2007
        %v2009 = vrot.slane %v1274, %v2008
        %v2010 = vlaneseq
        %v2011 = vshrl.u32 %v2010, 7
        %v2012 = vsub.s32 0, %v2011
        %v2013 = vrot.slane %v1278, %v2012
        %v2014 = vlaneseq
        %v2015 = vshrl.u32 %v2014, 7
        %v2016 = vsub.s32 0, %v2015
        %v2017 = vrot.slane %v1282, %v2016
        %v2018 = vlaneseq
        %v2019 = vshrl.u32 %v2018, 7
        %v2020 = vsub.s32 0, %v2019
        %v2021 = vrot.slane %v1286, %v2020
        %v2022 = vlaneseq
        %v2023 = vshrl.u32 %v2022, 7
        %v2024 = vsub.s32 0, %v2023
        %v2025 = vrot.slane %v1290, %v2024
        %v2026 = vlaneseq
        %v2027 = vshrl.u32 %v2026, 7
        %v2028 = vsub.s32 0, %v2027
        %v2029 = vrot.slane %v1294, %v2028
        %v2030 = vlaneseq
        %v2031 = vshrl.u32 %v2030, 7
        %v2032 = vsub.s32 0, %v2031
        %v2033 = vrot.slane %v1298, %v2032
        %v2034 = vlaneseq
        %v2035 = vshrl.u32 %v2034, 7
        %v2036 = vsub.s32 0, %v2035
        %v2037 = vrot.slane %v1302, %v2036
        %v2038 = vlaneseq
        %v2039 = vshrl.u32 %v2038, 7
        %v2040 = vsub.s32 0, %v2039
        %v2041 = vrot.slane %v1306, %v2040
        %v2042 = vlaneseq
        %v2043 = vshrl.u32 %v2042, 7
        %v2044 = vsub.s32 0, %v2043
        %v2045 = vrot.slane %v1310, %v2044
        %v2046 = vlaneseq
        %v2047 = vshrl.u32 %v2046, 7
        %v2048 = vsub.s32 0, %v2047
        %v2049 = vrot.slane %v1314, %v2048
        %v2050 = vlaneseq
        %v2051 = vshrl.u32 %v2050, 7
        %v2052 = vsub.s32 0, %v2051
        %v2053 = vrot.slane %v1318, %v2052
        %v2054 = vlaneseq
        %v2055 = vshrl.u32 %v2054, 7
        %v2056 = vsub.s32 0, %v2055
        %v2057 = vrot.slane %v1322, %v2056
        %v2058 = vlaneseq
        %v2059 = vshrl.u32 %v2058, 7
        %v2060 = vsub.s32 0, %v2059
        %v2061 = vrot.slane %v1326, %v2060
        %v2062 = vlaneseq
        %v2063 = vshrl.u32 %v2062, 7
        %v2064 = vsub.s32 0, %v2063
        %v2065 = vrot.slane %v1330, %v2064
        %v2066 = vlaneseq
        %v2067 = vshrl.u32 %v2066, 7
        %v2068 = vsub.s32 0, %v2067
        %v2069 = vrot.slane %v1334, %v2068
        %v2070 = vlaneseq
        %v2071 = vshrl.u32 %v2070, 7
        %v2072 = vsub.s32 0, %v2071
        %v2073 = vrot.slane %v1338, %v2072
        %v2074 = vlaneseq
        %v2075 = vshrl.u32 %v2074, 7
        %v2076 = vsub.s32 0, %v2075
        %v2077 = vrot.slane %v1342, %v2076
        %v2078 = vlaneseq
        %v2079 = vshrl.u32 %v2078, 7
        %v2080 = vsub.s32 0, %v2079
        %v2081 = vrot.slane %v1346, %v2080
        %v2082 = vlaneseq
        %v2083 = vshrl.u32 %v2082, 7
        %v2084 = vsub.s32 0, %v2083
        %v2085 = vrot.slane %v1350, %v2084
        %v2086 = vlaneseq
        %v2087 = vshrl.u32 %v2086, 7
        %v2088 = vsub.s32 0, %v2087
        %v2089 = vrot.slane %v1354, %v2088
        %v2090 = vlaneseq
        %v2091 = vshrl.u32 %v2090, 7
        %v2092 = vsub.s32 0, %v2091
        %v2093 = vrot.slane %v1358, %v2092
        %v2094 = vlaneseq
        %v2095 = vshrl.u32 %v2094, 7
        %v2096 = vsub.s32 0, %v2095
        %v2097 = vrot.slane %v1362, %v2096
        %v2098 = vlaneseq
        %v2099 = vshrl.u32 %v2098, 7
        %v2100 = vsub.s32 0, %v2099
        %v2101 = vrot.slane %v1366, %v2100
        %v2102 = vlaneseq
        %v2103 = vshrl.u32 %v2102, 7
        %v2104 = vsub.s32 0, %v2103
        %v2105 = vrot.slane %v1370, %v2104
        %v2106 = vlaneseq
        %v2107 = vshrl.u32 %v2106, 7
        %v2108 = vsub.s32 0, %v2107
        %v2109 = vrot.slane %v1374, %v2108
        %v2110 = vlaneseq
        %v2111 = vshrl.u32 %v2110, 7
        %v2112 = vsub.s32 0, %v2111
        %v2113 = vrot.slane %v1378, %v2112
        %v2114 = vlaneseq
        %v2115 = vshrl.u32 %v2114, 7
        %v2116 = vsub.s32 0, %v2115
        %v2117 = vrot.slane %v1382, %v2116
        %v2118 = vlaneseq
        %v2119 = vshrl.u32 %v2118, 7
        %v2120 = vsub.s32 0, %v2119
        %v2121 = vrot.slane %v1386, %v2120
        %v2122 = vlaneseq
        %v2123 = vshrl.u32 %v2122, 7
        %v2124 = vsub.s32 0, %v2123
        %v2125 = vrot.slane %v1390, %v2124
        %v2126 = vlaneseq
        %v2127 = vshrl.u32 %v2126, 7
        %v2128 = vsub.s32 0, %v2127
        %v2129 = vrot.slane %v1394, %v2128
        %v2130 = vlaneseq
        %v2131 = vshrl.u32 %v2130, 7
        %v2132 = vsub.s32 0, %v2131
        %v2133 = vrot.slane %v1398, %v2132
        %v2134 = vlaneseq
        %v2135 = vshrl.u32 %v2134, 7
        %v2136 = vsub.s32 0, %v2135
        %v2137 = vrot.slane %v1402, %v2136
        %v2138 = vlaneseq
        %v2139 = vshrl.u32 %v2138, 7
        %v2140 = vsub.s32 0, %v2139
        %v2141 = vrot.slane %v1406, %v2140
        %v2142 = vlaneseq
        %v2143 = vshrl.u32 %v2142, 7
        %v2144 = vsub.s32 0, %v2143
        %v2145 = vrot.slane %v1410, %v2144
        %v2146 = vlaneseq
        %v2147 = vshrl.u32 %v2146, 7
        %v2148 = vsub.s32 0, %v2147
        %v2149 = vrot.slane %v1414, %v2148
        %v2150 = vlaneseq
        %v2151 = vshrl.u32 %v2150, 7
        %v2152 = vsub.s32 0, %v2151
        %v2153 = vrot.slane %v1418, %v2152
        %v2154 = vlaneseq
        %v2155 = vshrl.u32 %v2154, 7
        %v2156 = vsub.s32 0, %v2155
        %v2157 = vrot.slane %v1422, %v2156
        %v2158 = vlaneseq
        %v2159 = vshrl.u32 %v2158, 7
        %v2160 = vsub.s32 0, %v2159
        %v2161 = vrot.slane %v1426, %v2160
        %v2162 = vlaneseq
        %v2163 = vshrl.u32 %v2162, 7
        %v2164 = vsub.s32 0, %v2163
        %v2165 = vrot.slane %v1430, %v2164
        %v2166 = vlaneseq
        %v2167 = vshrl.u32 %v2166, 7
        %v2168 = vsub.s32 0, %v2167
        %v2169 = vrot.slane %v1434, %v2168
        %v2170 = vlaneseq
        %v2171 = vshrl.u32 %v2170, 7
        %v2172 = vsub.s32 0, %v2171
        %v2173 = vrot.slane %v1438, %v2172
        %v2174 = vlaneseq
        %v2175 = vshrl.u32 %v2174, 7
        %v2176 = vsub.s32 0, %v2175
        %v2177 = vrot.slane %v1442, %v2176
        %v2178 = vlaneseq
        %v2179 = vshrl.u32 %v2178, 7
        %v2180 = vsub.s32 0, %v2179
        %v2181 = vrot.slane %v1446, %v2180
        %v2182 = vlaneseq
        %v2183 = vshrl.u32 %v2182, 7
        %v2184 = vsub.s32 0, %v2183
        %v2185 = vrot.slane %v1450, %v2184
        %v2186 = vlaneseq
        %v2187 = vshrl.u32 %v2186, 7
        %v2188 = vsub.s32 0, %v2187
        %v2189 = vrot.slane %v1454, %v2188
        %v2190 = vlaneseq
        %v2191 = vshrl.u32 %v2190, 7
        %v2192 = vsub.s32 0, %v2191
        %v2193 = vrot.slane %v1458, %v2192
        %v2194 = vlaneseq
        %v2195 = vshrl.u32 %v2194, 7
        %v2196 = vsub.s32 0, %v2195
        %v2197 = vrot.slane %v1462, %v2196
        %v2198 = vlaneseq
        %v2199 = vshrl.u32 %v2198, 7
        %v2200 = vsub.s32 0, %v2199
        %v2201 = vrot.slane %v1466, %v2200
        %v2202 = vlaneseq
        %v2203 = vshrl.u32 %v2202, 7
        %v2204 = vsub.s32 0, %v2203
        %v2205 = vrot.slane %v1470, %v2204
        %v2206 = vlaneseq
        %v2207 = vshrl.u32 %v2206, 7
        %v2208 = vsub.s32 0, %v2207
        %v2209 = vrot.slane %v1474, %v2208
        %v2210 = vlaneseq
        %v2211 = vshrl.u32 %v2210, 7
        %v2212 = vsub.s32 0, %v2211
        %v2213 = vrot.slane %v1478, %v2212
        %v2214 = vlaneseq
        %v2215 = vshrl.u32 %v2214, 7
        %v2216 = vsub.s32 0, %v2215
        %v2217 = vrot.slane %v1482, %v2216
        %v2218 = vlaneseq
        %v2219 = vshrl.u32 %v2218, 7
        %v2220 = vsub.s32 0, %v2219
        %v2221 = vrot.slane %v1486, %v2220
        %v2222 = vlaneseq
        %v2223 = vshrl.u32 %v2222, 7
        %v2224 = vsub.s32 0, %v2223
        %v2225 = vrot.slane %v1490, %v2224
        %v2226 = vlaneseq
        %v2227 = vshrl.u32 %v2226, 7
        %v2228 = vsub.s32 0, %v2227
        %v2229 = vrot.slane %v1494, %v2228
        %v2230 = vlaneseq
        %v2231 = vshrl.u32 %v2230, 7
        %v2232 = vsub.s32 0, %v2231
        %v2233 = vrot.slane %v1498, %v2232
        %v2234 = vlaneseq
        %v2235 = vshrl.u32 %v2234, 7
        %v2236 = vsub.s32 0, %v2235
        %v2237 = vrot.slane %v1502, %v2236
        %v2238 = vlaneseq
        %v2239 = vshrl.u32 %v2238, 7
        %v2240 = vsub.s32 0, %v2239
        %v2241 = vrot.slane %v1506, %v2240
        %v2834 = vunpack.c.l.b16 %v234
        %v2835 = vunpack.c.h.b16 %v234
        %v2836 = vunpack.c.l.b16 %v235
        %v2837 = vunpack.c.h.b16 %v235
        %v2838 = vunpack.c.l.b16 %v236
        %v2839 = vunpack.c.h.b16 %v236
        %v2840 = vunpack.c.l.b16 %v237
        %v2841 = vunpack.c.h.b16 %v237
        %v2842 = vunpack.c.l.b16 %v238
        %v2843 = vunpack.c.h.b16 %v238
        %v2844 = vunpack.c.l.b16 %v239
        %v2845 = vunpack.c.h.b16 %v239
        %v2846 = vunpack.c.l.b16 %v240
        %v2847 = vunpack.c.h.b16 %v240
        %v2848 = vunpack.c.l.b16 %v241
        %v2849 = vunpack.c.h.b16 %v241
        %v2850 = vunpack.c.l.b16 %v242
        %v2851 = vunpack.c.h.b16 %v242
        %v2852 = vunpack.c.l.b16 %v243
        %v2853 = vunpack.c.h.b16 %v243
        %v2854 = vunpack.c.l.b16 %v244
        %v2855 = vunpack.c.h.b16 %v244
        %v2856 = vunpack.c.l.b16 %v245
        %v2857 = vunpack.c.h.b16 %v245
        %v2858 = vunpack.c.l.b16 %v246
        %v2859 = vunpack.c.h.b16 %v246
        %v2860 = vunpack.c.l.b16 %v247
        %v2861 = vunpack.c.h.b16 %v247
        %v2862 = vunpack.c.l.b16 %v248
        %v2863 = vunpack.c.h.b16 %v248
        %v2864 = vunpack.c.l.b16 %v249
        %v2865 = vunpack.c.h.b16 %v249
        %v2866 = vunpack.c.l.b16 %v250
        %v2867 = vunpack.c.h.b16 %v250
        %v2868 = vunpack.c.l.b16 %v251
        %v2869 = vunpack.c.h.b16 %v251
        %v2870 = vunpack.c.l.b16 %v252
        %v2871 = vunpack.c.h.b16 %v252
        %v2872 = vunpack.c.l.b16 %v253
        %v2873 = vunpack.c.h.b16 %v253
        %v2874 = vunpack.c.l.b16 %v254
        %v2875 = vunpack.c.h.b16 %v254
        %v2876 = vunpack.c.l.b16 %v255
        %v2877 = vunpack.c.h.b16 %v255
        %v2878 = vunpack.c.l.b16 %v256
        %v2879 = vunpack.c.h.b16 %v256
        %v2880 = vunpack.c.l.b16 %v257
        %v2881 = vunpack.c.h.b16 %v257
        %v2882 = vunpack.c.l.b16 %v258
        %v2883 = vunpack.c.h.b16 %v258
        %v2884 = vunpack.c.l.b16 %v259
        %v2885 = vunpack.c.h.b16 %v259
        %v2886 = vunpack.c.l.b16 %v260
        %v2887 = vunpack.c.h.b16 %v260
        %v2888 = vunpack.c.l.b16 %v261
        %v2889 = vunpack.c.h.b16 %v261
        %v2890 = vunpack.c.l.b16 %v262
        %v2891 = vunpack.c.h.b16 %v262
        %v2892 = vunpack.c.l.b16 %v263
        %v2893 = vunpack.c.h.b16 %v263
        %v2894 = vunpack.c.l.b16 %v264
        %v2895 = vunpack.c.h.b16 %v264
        %v2896 = vunpack.c.l.b16 %v265
        %v2897 = vunpack.c.h.b16 %v265
        %v2898 = vunpack.c.l.b16 %v266
        %v2899 = vunpack.c.h.b16 %v266
        %v2900 = vunpack.c.l.b16 %v267
        %v2901 = vunpack.c.h.b16 %v267
        %v2902 = vunpack.c.l.b16 %v268
        %v2903 = vunpack.c.h.b16 %v268
        %v2904 = vunpack.c.l.b16 %v269
        %v2905 = vunpack.c.h.b16 %v269
        %v2906 = vunpack.c.l.b16 %v270
        %v2907 = vunpack.c.h.b16 %v270
        %v2908 = vunpack.c.l.b16 %v271
        %v2909 = vunpack.c.h.b16 %v271
        %v2910 = vunpack.c.l.b16 %v272
        %v2911 = vunpack.c.h.b16 %v272
        %v2912 = vunpack.c.l.b16 %v273
        %v2913 = vunpack.c.h.b16 %v273
        %v2914 = vunpack.c.l.b16 %v274
        %v2915 = vunpack.c.h.b16 %v274
        %v2916 = vunpack.c.l.b16 %v275
        %v2917 = vunpack.c.h.b16 %v275
        %v2918 = vunpack.c.l.b16 %v276
        %v2919 = vunpack.c.h.b16 %v276
        %v2920 = vunpack.c.l.b16 %v277
        %v2921 = vunpack.c.h.b16 %v277
        %v2922 = vunpack.c.l.b16 %v278
        %v2923 = vunpack.c.h.b16 %v278
        %v2924 = vunpack.c.l.b16 %v279
        %v2925 = vunpack.c.h.b16 %v279
        %v2926 = vunpack.c.l.b16 %v280
        %v2927 = vunpack.c.h.b16 %v280
        %v2928 = vunpack.c.l.b16 %v281
        %v2929 = vunpack.c.h.b16 %v281
        %v2930 = vunpack.c.l.b16 %v282
        %v2931 = vunpack.c.h.b16 %v282
        %v2932 = vunpack.c.l.b16 %v283
        %v2933 = vunpack.c.h.b16 %v283
        %v2934 = vunpack.c.l.b16 %v284
        %v2935 = vunpack.c.h.b16 %v284
        %v2936 = vunpack.c.l.b16 %v285
        %v2937 = vunpack.c.h.b16 %v285
        %v2938 = vunpack.c.l.b16 %v286
        %v2939 = vunpack.c.h.b16 %v286
        %v2940 = vunpack.c.l.b16 %v287
        %v2941 = vunpack.c.h.b16 %v287
        %v2942 = vunpack.c.l.b16 %v288
        %v2943 = vunpack.c.h.b16 %v288
        %v2944 = vunpack.c.l.b16 %v289
        %v2945 = vunpack.c.h.b16 %v289
        %v2946 = vunpack.c.l.b16 %v290
        %v2947 = vunpack.c.h.b16 %v290
        %v2948 = vunpack.c.l.b16 %v291
        %v2949 = vunpack.c.h.b16 %v291
        %v2950 = vunpack.c.l.b16 %v292
        %v2951 = vunpack.c.h.b16 %v292
        %v2952 = vunpack.c.l.b16 %v293
        %v2953 = vunpack.c.h.b16 %v293
        %v2954 = vunpack.c.l.b16 %v294
        %v2955 = vunpack.c.h.b16 %v294
        %v2956 = vunpack.c.l.b16 %v295
        %v2957 = vunpack.c.h.b16 %v295
        %v2958 = vunpack.c.l.b16 %v296
        %v2959 = vunpack.c.h.b16 %v296
        %v2960 = vunpack.c.l.b16 %v297
        %v2961 = vunpack.c.h.b16 %v297
        %v2962 = vunpack.c.l.b16 %v298
        %v2963 = vunpack.c.h.b16 %v298
        %v2964 = vunpack.c.l.b16 %v299
        %v2965 = vunpack.c.h.b16 %v299
        %v2966 = vunpack.c.l.b16 %v300
        %v2967 = vunpack.c.h.b16 %v300
        %v2968 = vunpack.c.l.b16 %v301
        %v2969 = vunpack.c.h.b16 %v301
        %v2970 = vunpack.c.l.b16 %v302
        %v2971 = vunpack.c.h.b16 %v302
        %v2972 = vunpack.c.l.b16 %v303
        %v2973 = vunpack.c.h.b16 %v303
        %v2974 = vunpack.c.l.b16 %v304
        %v2975 = vunpack.c.h.b16 %v304
        %v2976 = vunpack.c.l.b16 %v305
        %v2977 = vunpack.c.h.b16 %v305
        %v2978 = vunpack.c.l.b16 %v306
        %v2979 = vunpack.c.h.b16 %v306
        %v2980 = vunpack.c.l.b16 %v307
        %v2981 = vunpack.c.l.b16 %v308
        %v2982 = vunpack.c.h.b16 %v308
        %v2983 = vunpack.c.l.b16 %v309
        %v2984 = vunpack.c.h.b16 %v309
        %v2985 = vunpack.c.l.b16 %v310
        %v2986 = vunpack.c.h.b16 %v310
        %v2987 = vunpack.c.l.b16 %v311
        %v2988 = vunpack.c.h.b16 %v311
        %v2989 = vunpack.c.l.b16 %v312
        %v2990 = vunpack.c.h.b16 %v312
        %v2991 = vunpack.c.l.b16 %v313
        %v2992 = vunpack.c.h.b16 %v313
        %v2993 = vunpack.c.l.b16 %v314
        %v2994 = vunpack.c.h.b16 %v314
        %v2995 = vunpack.c.l.b16 %v315
        %v2996 = vunpack.c.h.b16 %v315
        %v2997 = vunpack.c.l.b16 %v316
        %v2998 = vunpack.c.h.b16 %v316
        %v2999 = vunpack.c.l.b16 %v317
        %v3000 = vunpack.c.h.b16 %v317
        %v3001 = vunpack.c.l.b16 %v318
        %v3002 = vunpack.c.h.b16 %v318
        %v3003 = vunpack.c.l.b16 %v319
        %v3004 = vunpack.c.h.b16 %v319
        %v3005 = vunpack.c.l.b16 %v320
        %v3006 = vunpack.c.h.b16 %v320
        %v3007 = vunpack.c.l.b16 %v321
        %v3008 = vunpack.c.h.b16 %v321
        %v3009 = vunpack.c.l.b16 %v322
        %v3010 = vunpack.c.h.b16 %v322
        %v3011 = vunpack.c.l.b16 %v323
        %v3012 = vunpack.c.h.b16 %v323
        %v3013 = vunpack.c.l.b16 %v324
        %v3014 = vunpack.c.h.b16 %v324
        %v3015 = vunpack.c.l.b16 %v325
        %v3016 = vunpack.c.h.b16 %v325
        %v3017 = vunpack.c.l.b16 %v326
        %v3018 = vunpack.c.h.b16 %v326
        %v3019 = vunpack.c.l.b16 %v327
        %v3020 = vunpack.c.h.b16 %v327
        %v3021 = vunpack.c.l.b16 %v328
        %v3022 = vunpack.c.h.b16 %v328
        %v3023 = vunpack.c.l.b16 %v329
        %v3024 = vunpack.c.h.b16 %v329
        %v3025 = vunpack.c.l.b16 %v330
        %v3026 = vunpack.c.h.b16 %v330
        %v3027 = vunpack.c.l.b16 %v331
        %v3028 = vunpack.c.h.b16 %v331
        %v3029 = vunpack.c.l.b16 %v332
        %v3030 = vunpack.c.h.b16 %v332
        %v3031 = vunpack.c.l.b16 %v333
        %v3032 = vunpack.c.h.b16 %v333
        %v3033 = vunpack.c.l.b16 %v334
        %v3034 = vunpack.c.h.b16 %v334
        %v3035 = vunpack.c.l.b16 %v335
        %v3036 = vunpack.c.h.b16 %v335
        %v3037 = vunpack.c.l.b16 %v336
        %v3038 = vunpack.c.h.b16 %v336
        %v3039 = vunpack.c.l.b16 %v337
        %v3040 = vunpack.c.h.b16 %v337
        %v3041 = vunpack.c.l.b16 %v338
        %v3042 = vunpack.c.h.b16 %v338
        %v3043 = vunpack.c.l.b16 %v339
        %v3044 = vunpack.c.h.b16 %v339
        %v3045 = vunpack.c.l.b16 %v340
        %v3046 = vunpack.c.h.b16 %v340
        %v3047 = vunpack.c.l.b16 %v341
        %v3048 = vunpack.c.h.b16 %v341
        %v3049 = vunpack.c.l.b16 %v342
        %v3050 = vunpack.c.h.b16 %v342
        %v3051 = vunpack.c.l.b16 %v343
        %v3052 = vunpack.c.h.b16 %v343
        %v3053 = vunpack.c.l.b16 %v344
        %v3054 = vunpack.c.h.b16 %v344
        %v3055 = vunpack.c.l.b16 %v345
        %v3056 = vunpack.c.h.b16 %v345
        %v3057 = vunpack.c.l.b16 %v346
        %v3058 = vunpack.c.h.b16 %v346
        %v3059 = vunpack.c.l.b16 %v347
        %v3060 = vunpack.c.h.b16 %v347
        %v3061 = vunpack.c.l.b16 %v348
        %v3062 = vunpack.c.h.b16 %v348
        %v3063 = vunpack.c.l.b16 %v349
        %v3064 = vunpack.c.h.b16 %v349
        %v3065 = vunpack.c.l.b16 %v350
        %v3066 = vunpack.c.h.b16 %v350
        %v3067 = vunpack.c.l.b16 %v351
        %v3068 = vunpack.c.h.b16 %v351
        %v3069 = vunpack.c.l.b16 %v352
        %v3070 = vunpack.c.h.b16 %v352
        %v3071 = vunpack.c.l.b16 %v353
        %v3072 = vunpack.c.h.b16 %v353
        %v3073 = vunpack.c.l.b16 %v354
        %v3074 = vunpack.c.h.b16 %v354
        %v3075 = vunpack.c.l.b16 %v355
        %v3076 = vunpack.c.h.b16 %v355
        %v3077 = vunpack.c.l.b16 %v356
        %v3078 = vunpack.c.h.b16 %v356
        %v3079 = vunpack.c.l.b16 %v357
        %v3080 = vunpack.c.h.b16 %v357
        %v3081 = vunpack.c.l.b16 %v358
        %v3082 = vunpack.c.h.b16 %v358
        %v3083 = vunpack.c.l.b16 %v359
        %v3084 = vunpack.c.h.b16 %v359
        %v3085 = vunpack.c.l.b16 %v360
        %v3086 = vunpack.c.h.b16 %v360
        %v3087 = vunpack.c.l.b16 %v361
        %v3088 = vunpack.c.h.b16 %v361
        %v3089 = vunpack.c.l.b16 %v362
        %v3090 = vunpack.c.h.b16 %v362
        %v3091 = vunpack.c.l.b16 %v363
        %v3092 = vunpack.c.h.b16 %v363
        %v3093 = vunpack.c.l.b16 %v364
        %v3094 = vunpack.c.h.b16 %v364
        %v3095 = vunpack.c.l.b16 %v365
        %v3096 = vunpack.c.h.b16 %v365
        %v3097 = vunpack.c.l.b16 %v366
        %v3098 = vunpack.c.h.b16 %v366
        %v3099 = vunpack.c.l.b16 %v367
        %v3100 = vunpack.c.h.b16 %v367
        %v3101 = vunpack.c.l.b16 %v368
        %v3102 = vunpack.c.h.b16 %v368
        %v3103 = vunpack.c.l.b16 %v369
        %v3104 = vunpack.c.h.b16 %v369
        %v3105 = vunpack.c.l.b16 %v370
        %v3106 = vunpack.c.h.b16 %v370
        %v3107 = vunpack.c.l.b16 %v371
        %v3108 = vunpack.c.h.b16 %v371
        %v3109 = vunpack.c.l.b16 %v372
        %v3110 = vunpack.c.h.b16 %v372
        %v3111 = vunpack.c.l.b16 %v373
        %v3112 = vunpack.c.h.b16 %v373
        %v3113 = vunpack.c.l.b16 %v374
        %v3114 = vunpack.c.h.b16 %v374
        %v3115 = vunpack.c.l.b16 %v375
        %v3116 = vunpack.c.h.b16 %v375
        %v3117 = vunpack.c.l.b16 %v376
        %v3118 = vunpack.c.h.b16 %v376
        %v3119 = vunpack.c.l.b16 %v377
        %v3120 = vunpack.c.h.b16 %v377
        %v3121 = vunpack.c.l.b16 %v378
        %v3122 = vunpack.c.h.b16 %v378
        %v3123 = vunpack.c.l.b16 %v379
        %v3124 = vunpack.c.h.b16 %v379
        %v3125 = vunpack.c.l.b16 %v380
        %v3126 = vunpack.c.h.b16 %v380
        %v3127 = vunpack.c.l.b16 %v381
        %v3128 = vunpack.c.l.b16 %v382
        %v3129 = vunpack.c.h.b16 %v382
        %v3130 = vunpack.c.l.b16 %v383
        %v3131 = vunpack.c.h.b16 %v383
        %v3132 = vunpack.c.l.b16 %v384
        %v3133 = vunpack.c.h.b16 %v384
        %v3134 = vunpack.c.l.b16 %v385
        %v3135 = vunpack.c.h.b16 %v385
        %v3136 = vunpack.c.l.b16 %v386
        %v3137 = vunpack.c.h.b16 %v386
        %v3138 = vunpack.c.l.b16 %v387
        %v3139 = vunpack.c.h.b16 %v387
        %v3140 = vunpack.c.l.b16 %v388
        %v3141 = vunpack.c.h.b16 %v388
        %v3142 = vunpack.c.l.b16 %v389
        %v3143 = vunpack.c.h.b16 %v389
        %v3144 = vunpack.c.l.b16 %v390
        %v3145 = vunpack.c.h.b16 %v390
        %v3146 = vunpack.c.l.b16 %v391
        %v3147 = vunpack.c.h.b16 %v391
        %v3148 = vunpack.c.l.b16 %v392
        %v3149 = vunpack.c.h.b16 %v392
        %v3150 = vunpack.c.l.b16 %v393
        %v3151 = vunpack.c.h.b16 %v393
        %v3152 = vunpack.c.l.b16 %v394
        %v3153 = vunpack.c.h.b16 %v394
        %v3154 = vunpack.c.l.b16 %v395
        %v3155 = vunpack.c.h.b16 %v395
        %v3156 = vunpack.c.l.b16 %v396
        %v3157 = vunpack.c.h.b16 %v396
        %v3158 = vunpack.c.l.b16 %v397
        %v3159 = vunpack.c.h.b16 %v397
        %v3160 = vunpack.c.l.b16 %v398
        %v3161 = vunpack.c.h.b16 %v398
        %v3162 = vunpack.c.l.b16 %v399
        %v3163 = vunpack.c.h.b16 %v399
        %v3164 = vunpack.c.l.b16 %v400
        %v3165 = vunpack.c.h.b16 %v400
        %v3166 = vunpack.c.l.b16 %v401
        %v3167 = vunpack.c.h.b16 %v401
        %v3168 = vunpack.c.l.b16 %v402
        %v3169 = vunpack.c.h.b16 %v402
        %v3170 = vunpack.c.l.b16 %v403
        %v3171 = vunpack.c.h.b16 %v403
        %v3172 = vunpack.c.l.b16 %v404
        %v3173 = vunpack.c.h.b16 %v404
        %v3174 = vunpack.c.l.b16 %v405
        %v3175 = vunpack.c.h.b16 %v405
        %v3176 = vunpack.c.l.b16 %v406
        %v3177 = vunpack.c.h.b16 %v406
        %v3178 = vunpack.c.l.b16 %v407
        %v3179 = vunpack.c.h.b16 %v407
        %v3180 = vunpack.c.l.b16 %v408
        %v3181 = vunpack.c.h.b16 %v408
        %v3182 = vunpack.c.l.b16 %v409
        %v3183 = vunpack.c.h.b16 %v409
        %v3184 = vunpack.c.l.b16 %v410
        %v3185 = vunpack.c.h.b16 %v410
        %v3186 = vunpack.c.l.b16 %v411
        %v3187 = vunpack.c.h.b16 %v411
        %v3188 = vunpack.c.l.b16 %v412
        %v3189 = vunpack.c.h.b16 %v412
        %v3190 = vunpack.c.l.b16 %v413
        %v3191 = vunpack.c.h.b16 %v413
        %v3192 = vunpack.c.l.b16 %v414
        %v3193 = vunpack.c.h.b16 %v414
        %v3194 = vunpack.c.l.b16 %v415
        %v3195 = vunpack.c.h.b16 %v415
        %v3196 = vunpack.c.l.b16 %v416
        %v3197 = vunpack.c.h.b16 %v416
        %v3198 = vunpack.c.l.b16 %v417
        %v3199 = vunpack.c.h.b16 %v417
        %v3200 = vunpack.c.l.b16 %v418
        %v3201 = vunpack.c.h.b16 %v418
        %v3202 = vunpack.c.l.b16 %v419
        %v3203 = vunpack.c.h.b16 %v419
        %v3204 = vunpack.c.l.b16 %v420
        %v3205 = vunpack.c.h.b16 %v420
        %v3206 = vunpack.c.l.b16 %v421
        %v3207 = vunpack.c.h.b16 %v421
        %v3208 = vunpack.c.l.b16 %v422
        %v3209 = vunpack.c.h.b16 %v422
        %v3210 = vunpack.c.l.b16 %v423
        %v3211 = vunpack.c.h.b16 %v423
        %v3212 = vunpack.c.l.b16 %v424
        %v3213 = vunpack.c.h.b16 %v424
        %v3214 = vunpack.c.l.b16 %v425
        %v3215 = vunpack.c.h.b16 %v425
        %v3216 = vunpack.c.l.b16 %v426
        %v3217 = vunpack.c.h.b16 %v426
        %v3218 = vunpack.c.l.b16 %v427
        %v3219 = vunpack.c.h.b16 %v427
        %v3220 = vunpack.c.l.b16 %v428
        %v3221 = vunpack.c.h.b16 %v428
        %v3222 = vunpack.c.l.b16 %v429
        %v3223 = vunpack.c.h.b16 %v429
        %v3224 = vunpack.c.l.b16 %v430
        %v3225 = vunpack.c.h.b16 %v430
        %v3226 = vunpack.c.l.b16 %v431
        %v3227 = vunpack.c.h.b16 %v431
        %v3228 = vunpack.c.l.b16 %v432
        %v3229 = vunpack.c.h.b16 %v432
        %v3230 = vunpack.c.l.b16 %v433
        %v3231 = vunpack.c.h.b16 %v433
        %v3232 = vunpack.c.l.b16 %v434
        %v3233 = vunpack.c.h.b16 %v434
        %v3234 = vunpack.c.l.b16 %v435
        %v3235 = vunpack.c.h.b16 %v435
        %v3236 = vunpack.c.l.b16 %v436
        %v3237 = vunpack.c.h.b16 %v436
        %v3238 = vunpack.c.l.b16 %v437
        %v3239 = vunpack.c.h.b16 %v437
        %v3240 = vunpack.c.l.b16 %v438
        %v3241 = vunpack.c.h.b16 %v438
        %v3242 = vunpack.c.l.b16 %v439
        %v3243 = vunpack.c.h.b16 %v439
        %v3244 = vunpack.c.l.b16 %v440
        %v3245 = vunpack.c.h.b16 %v440
        %v3246 = vunpack.c.l.b16 %v441
        %v3247 = vunpack.c.h.b16 %v441
        %v3248 = vunpack.c.l.b16 %v442
        %v3249 = vunpack.c.h.b16 %v442
        %v3250 = vunpack.c.l.b16 %v443
        %v3251 = vunpack.c.h.b16 %v443
        %v3252 = vunpack.c.l.b16 %v444
        %v3253 = vunpack.c.h.b16 %v444
        %v3254 = vunpack.c.l.b16 %v445
        %v3255 = vunpack.c.h.b16 %v445
        %v3256 = vunpack.c.l.b16 %v446
        %v3257 = vunpack.c.h.b16 %v446
        %v3258 = vunpack.c.l.b16 %v447
        %v3259 = vunpack.c.h.b16 %v447
        %v3260 = vunpack.c.l.b16 %v448
        %v3261 = vunpack.c.h.b16 %v448
        %v3262 = vunpack.c.l.b16 %v449
        %v3263 = vunpack.c.h.b16 %v449
        %v3264 = vunpack.c.l.b16 %v450
        %v3265 = vunpack.c.h.b16 %v450
        %v3266 = vunpack.c.l.b16 %v451
        %v3267 = vunpack.c.h.b16 %v451
        %v3268 = vunpack.c.l.b16 %v452
        %v3269 = vunpack.c.h.b16 %v452
        %v3270 = vunpack.c.l.b16 %v453
        %v3271 = vunpack.c.h.b16 %v453
        %v3272 = vunpack.c.l.b16 %v454
        %v3273 = vunpack.c.h.b16 %v454
        %v3274 = vunpack.c.l.b16 %v455
        %v3275 = vunpack.c.l.b16 %v456
        %v3276 = vunpack.c.h.b16 %v456
        %v3277 = vunpack.c.l.b16 %v457
        %v3278 = vunpack.c.h.b16 %v457
        %v3279 = vunpack.c.l.b16 %v458
        %v3280 = vunpack.c.h.b16 %v458
        %v3281 = vunpack.c.l.b16 %v459
        %v3282 = vunpack.c.h.b16 %v459
        %v3283 = vunpack.c.l.b16 %v460
        %v3284 = vunpack.c.h.b16 %v460
        %v3285 = vunpack.c.l.b16 %v461
        %v3286 = vunpack.c.h.b16 %v461
        %v3287 = vunpack.c.l.b16 %v462
        %v3288 = vunpack.c.h.b16 %v462
        %v3289 = vunpack.c.l.b16 %v463
        %v3290 = vunpack.c.h.b16 %v463
        %v3291 = vunpack.c.l.b16 %v464
        %v3292 = vunpack.c.h.b16 %v464
        %v3293 = vunpack.c.l.b16 %v465
        %v3294 = vunpack.c.h.b16 %v465
        %v3295 = vunpack.c.l.b16 %v466
        %v3296 = vunpack.c.h.b16 %v466
        %v3297 = vunpack.c.l.b16 %v467
        %v3298 = vunpack.c.h.b16 %v467
        %v3299 = vunpack.c.l.b16 %v468
        %v3300 = vunpack.c.h.b16 %v468
        %v3301 = vunpack.c.l.b16 %v469
        %v3302 = vunpack.c.h.b16 %v469
        %v3303 = vunpack.c.l.b16 %v470
        %v3304 = vunpack.c.h.b16 %v470
        %v3305 = vunpack.c.l.b16 %v471
        %v3306 = vunpack.c.h.b16 %v471
        %v3307 = vunpack.c.l.b16 %v472
        %v3308 = vunpack.c.h.b16 %v472
        %v3309 = vunpack.c.l.b16 %v473
        %v3310 = vunpack.c.h.b16 %v473
        %v3311 = vunpack.c.l.b16 %v474
        %v3312 = vunpack.c.h.b16 %v474
        %v3313 = vunpack.c.l.b16 %v475
        %v3314 = vunpack.c.h.b16 %v475
        %v3315 = vunpack.c.l.b16 %v476
        %v3316 = vunpack.c.h.b16 %v476
        %v3317 = vunpack.c.l.b16 %v477
        %v3318 = vunpack.c.h.b16 %v477
        %v3319 = vunpack.c.l.b16 %v478
        %v3320 = vunpack.c.h.b16 %v478
        %v3321 = vunpack.c.l.b16 %v479
        %v3322 = vunpack.c.h.b16 %v479
        %v3323 = vunpack.c.l.b16 %v480
        %v3324 = vunpack.c.h.b16 %v480
        %v3325 = vunpack.c.l.b16 %v481
        %v3326 = vunpack.c.h.b16 %v481
        %v3327 = vunpack.c.l.b16 %v482
        %v3328 = vunpack.c.h.b16 %v482
        %v3329 = vunpack.c.l.b16 %v483
        %v3330 = vunpack.c.h.b16 %v483
        %v3331 = vunpack.c.l.b16 %v484
        %v3332 = vunpack.c.h.b16 %v484
        %v3333 = vunpack.c.l.b16 %v485
        %v3334 = vunpack.c.h.b16 %v485
        %v3335 = vunpack.c.l.b16 %v486
        %v3336 = vunpack.c.h.b16 %v486
        %v3337 = vunpack.c.l.b16 %v487
        %v3338 = vunpack.c.h.b16 %v487
        %v3339 = vunpack.c.l.b16 %v488
        %v3340 = vunpack.c.h.b16 %v488
        %v3341 = vunpack.c.l.b16 %v489
        %v3342 = vunpack.c.h.b16 %v489
        %v3343 = vunpack.c.l.b16 %v490
        %v3344 = vunpack.c.h.b16 %v490
        %v3345 = vunpack.c.l.b16 %v491
        %v3346 = vunpack.c.h.b16 %v491
        %v3347 = vunpack.c.l.b16 %v492
        %v3348 = vunpack.c.h.b16 %v492
        %v3349 = vunpack.c.l.b16 %v493
        %v3350 = vunpack.c.h.b16 %v493
        %v3351 = vunpack.c.l.b16 %v494
        %v3352 = vunpack.c.h.b16 %v494
        %v3353 = vunpack.c.l.b16 %v495
        %v3354 = vunpack.c.h.b16 %v495
        %v3355 = vunpack.c.l.b16 %v496
        %v3356 = vunpack.c.h.b16 %v496
        %v3357 = vunpack.c.l.b16 %v497
        %v3358 = vunpack.c.h.b16 %v497
        %v3359 = vunpack.c.l.b16 %v498
        %v3360 = vunpack.c.h.b16 %v498
        %v3361 = vunpack.c.l.b16 %v499
        %v3362 = vunpack.c.h.b16 %v499
        %v3363 = vunpack.c.l.b16 %v500
        %v3364 = vunpack.c.h.b16 %v500
        %v3365 = vunpack.c.l.b16 %v501
        %v3366 = vunpack.c.h.b16 %v501
        %v3367 = vunpack.c.l.b16 %v502
        %v3368 = vunpack.c.h.b16 %v502
        %v3369 = vunpack.c.l.b16 %v503
        %v3370 = vunpack.c.h.b16 %v503
        %v3371 = vunpack.c.l.b16 %v504
        %v3372 = vunpack.c.h.b16 %v504
        %v3373 = vunpack.c.l.b16 %v505
        %v3374 = vunpack.c.h.b16 %v505
        %v3375 = vunpack.c.l.b16 %v506
        %v3376 = vunpack.c.h.b16 %v506
        %v3377 = vunpack.c.l.b16 %v507
        %v3378 = vunpack.c.h.b16 %v507
        %v3379 = vunpack.c.l.b16 %v508
        %v3380 = vunpack.c.h.b16 %v508
        %v3381 = vunpack.c.l.b16 %v509
        %v3382 = vunpack.c.h.b16 %v509
        %v3383 = vunpack.c.l.b16 %v510
        %v3384 = vunpack.c.h.b16 %v510
        %v3385 = vunpack.c.l.b16 %v511
        %v3386 = vunpack.c.h.b16 %v511
        %v3387 = vunpack.c.l.b16 %v512
        %v3388 = vunpack.c.h.b16 %v512
        %v3389 = vunpack.c.l.b16 %v513
        %v3390 = vunpack.c.h.b16 %v513
        %v3391 = vunpack.c.l.b16 %v514
        %v3392 = vunpack.c.h.b16 %v514
        %v3393 = vunpack.c.l.b16 %v515
        %v3394 = vunpack.c.h.b16 %v515
        %v3395 = vunpack.c.l.b16 %v516
        %v3396 = vunpack.c.h.b16 %v516
        %v3397 = vunpack.c.l.b16 %v517
        %v3398 = vunpack.c.h.b16 %v517
        %v3399 = vunpack.c.l.b16 %v518
        %v3400 = vunpack.c.h.b16 %v518
        %v3401 = vunpack.c.l.b16 %v519
        %v3402 = vunpack.c.h.b16 %v519
        %v3403 = vunpack.c.l.b16 %v520
        %v3404 = vunpack.c.h.b16 %v520
        %v3405 = vunpack.c.l.b16 %v521
        %v3406 = vunpack.c.h.b16 %v521
        %v3407 = vunpack.c.l.b16 %v522
        %v3408 = vunpack.c.h.b16 %v522
        %v3409 = vunpack.c.l.b16 %v523
        %v3410 = vunpack.c.h.b16 %v523
        %v3411 = vunpack.c.l.b16 %v524
        %v3412 = vunpack.c.h.b16 %v524
        %v3413 = vunpack.c.l.b16 %v525
        %v3414 = vunpack.c.h.b16 %v525
        %v3415 = vunpack.c.l.b16 %v526
        %v3416 = vunpack.c.h.b16 %v526
        %v3417 = vunpack.c.l.b16 %v527
        %v3418 = vunpack.c.h.b16 %v527
        %v3419 = vunpack.c.l.b16 %v528
        %v3420 = vunpack.c.h.b16 %v528
        %v3421 = vunpack.c.l.b16 %v529
        %v3422 = vunpack.c.l.b16 %v530
        %v3423 = vunpack.c.h.b16 %v530
        %v3424 = vunpack.c.l.b16 %v531
        %v3425 = vunpack.c.h.b16 %v531
        %v3426 = vunpack.c.l.b16 %v532
        %v3427 = vunpack.c.h.b16 %v532
        %v3428 = vunpack.c.l.b16 %v533
        %v3429 = vunpack.c.h.b16 %v533
        %v3430 = vunpack.c.l.b16 %v534
        %v3431 = vunpack.c.h.b16 %v534
        %v3432 = vunpack.c.l.b16 %v535
        %v3433 = vunpack.c.h.b16 %v535
        %v3434 = vunpack.c.l.b16 %v536
        %v3435 = vunpack.c.h.b16 %v536
        %v3436 = vunpack.c.l.b16 %v537
        %v3437 = vunpack.c.h.b16 %v537
        %v3438 = vunpack.c.l.b16 %v538
        %v3439 = vunpack.c.h.b16 %v538
        %v3440 = vunpack.c.l.b16 %v539
        %v3441 = vunpack.c.h.b16 %v539
        %v3442 = vunpack.c.l.b16 %v540
        %v3443 = vunpack.c.h.b16 %v540
        %v3444 = vunpack.c.l.b16 %v541
        %v3445 = vunpack.c.h.b16 %v541
        %v3446 = vunpack.c.l.b16 %v542
        %v3447 = vunpack.c.h.b16 %v542
        %v3448 = vunpack.c.l.b16 %v543
        %v3449 = vunpack.c.h.b16 %v543
        %v3450 = vunpack.c.l.b16 %v544
        %v3451 = vunpack.c.h.b16 %v544
        %v3452 = vunpack.c.l.b16 %v545
        %v3453 = vunpack.c.h.b16 %v545
        %v3454 = vunpack.c.l.b16 %v546
        %v3455 = vunpack.c.h.b16 %v546
        %v3456 = vunpack.c.l.b16 %v547
        %v3457 = vunpack.c.h.b16 %v547
        %v3458 = vunpack.c.l.b16 %v548
        %v3459 = vunpack.c.h.b16 %v548
        %v3460 = vunpack.c.l.b16 %v549
        %v3461 = vunpack.c.h.b16 %v549
        %v3462 = vunpack.c.l.b16 %v550
        %v3463 = vunpack.c.h.b16 %v550
        %v3464 = vunpack.c.l.b16 %v551
        %v3465 = vunpack.c.h.b16 %v551
        %v3466 = vunpack.c.l.b16 %v552
        %v3467 = vunpack.c.h.b16 %v552
        %v3468 = vunpack.c.l.b16 %v553
        %v3469 = vunpack.c.h.b16 %v553
        %v3470 = vunpack.c.l.b16 %v554
        %v3471 = vunpack.c.h.b16 %v554
        %v3472 = vunpack.c.l.b16 %v555
        %v3473 = vunpack.c.h.b16 %v555
        %v3474 = vunpack.c.l.b16 %v556
        %v3475 = vunpack.c.h.b16 %v556
        %v3476 = vunpack.c.l.b16 %v557
        %v3477 = vunpack.c.h.b16 %v557
        %v3478 = vunpack.c.l.b16 %v558
        %v3479 = vunpack.c.h.b16 %v558
        %v3480 = vunpack.c.l.b16 %v559
        %v3481 = vunpack.c.h.b16 %v559
        %v3482 = vunpack.c.l.b16 %v560
        %v3483 = vunpack.c.h.b16 %v560
        %v3484 = vunpack.c.l.b16 %v561
        %v3485 = vunpack.c.h.b16 %v561
        %v3486 = vunpack.c.l.b16 %v562
        %v3487 = vunpack.c.h.b16 %v562
        %v3488 = vunpack.c.l.b16 %v563
        %v3489 = vunpack.c.h.b16 %v563
        %v3490 = vunpack.c.l.b16 %v564
        %v3491 = vunpack.c.h.b16 %v564
        %v3492 = vunpack.c.l.b16 %v565
        %v3493 = vunpack.c.h.b16 %v565
        %v3494 = vunpack.c.l.b16 %v566
        %v3495 = vunpack.c.h.b16 %v566
        %v3496 = vunpack.c.l.b16 %v567
        %v3497 = vunpack.c.h.b16 %v567
        %v3498 = vunpack.c.l.b16 %v568
        %v3499 = vunpack.c.h.b16 %v568
        %v3500 = vunpack.c.l.b16 %v569
        %v3501 = vunpack.c.h.b16 %v569
        %v3502 = vunpack.c.l.b16 %v570
        %v3503 = vunpack.c.h.b16 %v570
        %v3504 = vunpack.c.l.b16 %v571
        %v3505 = vunpack.c.h.b16 %v571
        %v3506 = vunpack.c.l.b16 %v572
        %v3507 = vunpack.c.h.b16 %v572
        %v3508 = vunpack.c.l.b16 %v573
        %v3509 = vunpack.c.h.b16 %v573
        %v3510 = vunpack.c.l.b16 %v574
        %v3511 = vunpack.c.h.b16 %v574
        %v3512 = vunpack.c.l.b16 %v575
        %v3513 = vunpack.c.h.b16 %v575
        %v3514 = vunpack.c.l.b16 %v576
        %v3515 = vunpack.c.h.b16 %v576
        %v3516 = vunpack.c.l.b16 %v577
        %v3517 = vunpack.c.h.b16 %v577
        %v3518 = vunpack.c.l.b16 %v578
        %v3519 = vunpack.c.h.b16 %v578
        %v3520 = vunpack.c.l.b16 %v579
        %v3521 = vunpack.c.h.b16 %v579
        %v3522 = vunpack.c.l.b16 %v580
        %v3523 = vunpack.c.h.b16 %v580
        %v3524 = vunpack.c.l.b16 %v581
        %v3525 = vunpack.c.h.b16 %v581
        %v3526 = vunpack.c.l.b16 %v582
        %v3527 = vunpack.c.h.b16 %v582
        %v3528 = vunpack.c.l.b16 %v583
        %v3529 = vunpack.c.h.b16 %v583
        %v3530 = vunpack.c.l.b16 %v584
        %v3531 = vunpack.c.h.b16 %v584
        %v3532 = vunpack.c.l.b16 %v585
        %v3533 = vunpack.c.h.b16 %v585
        %v3534 = vunpack.c.l.b16 %v586
        %v3535 = vunpack.c.h.b16 %v586
        %v3536 = vunpack.c.l.b16 %v587
        %v3537 = vunpack.c.h.b16 %v587
        %v3538 = vunpack.c.l.b16 %v588
        %v3539 = vunpack.c.h.b16 %v588
        %v3540 = vunpack.c.l.b16 %v589
        %v3541 = vunpack.c.h.b16 %v589
        %v3542 = vunpack.c.l.b16 %v590
        %v3543 = vunpack.c.h.b16 %v590
        %v3544 = vunpack.c.l.b16 %v591
        %v3545 = vunpack.c.h.b16 %v591
        %v3546 = vunpack.c.l.b16 %v592
        %v3547 = vunpack.c.h.b16 %v592
        %v3548 = vunpack.c.l.b16 %v593
        %v3549 = vunpack.c.h.b16 %v593
        %v3550 = vunpack.c.l.b16 %v594
        %v3551 = vunpack.c.h.b16 %v594
        %v3552 = vunpack.c.l.b16 %v595
        %v3553 = vunpack.c.h.b16 %v595
        %v3554 = vunpack.c.l.b16 %v596
        %v3555 = vunpack.c.h.b16 %v596
        %v3556 = vunpack.c.l.b16 %v597
        %v3557 = vunpack.c.h.b16 %v597
        %v3558 = vunpack.c.l.b16 %v598
        %v3559 = vunpack.c.h.b16 %v598
        %v3560 = vunpack.c.l.b16 %v599
        %v3561 = vunpack.c.h.b16 %v599
        %v3562 = vunpack.c.l.b16 %v600
        %v3563 = vunpack.c.h.b16 %v600
        %v3564 = vunpack.c.l.b16 %v601
        %v3565 = vunpack.c.h.b16 %v601
        %v3566 = vunpack.c.l.b16 %v602
        %v3567 = vunpack.c.h.b16 %v602
        %v3568 = vunpack.c.l.b16 %v603
        %v3569 = vunpack.c.l.b16 %v604
        %v3570 = vunpack.c.h.b16 %v604
        %v3571 = vunpack.c.l.b16 %v605
        %v3572 = vunpack.c.h.b16 %v605
        %v3573 = vunpack.c.l.b16 %v606
        %v3574 = vunpack.c.h.b16 %v606
        %v3575 = vunpack.c.l.b16 %v607
        %v3576 = vunpack.c.h.b16 %v607
        %v3577 = vunpack.c.l.b16 %v608
        %v3578 = vunpack.c.h.b16 %v608
        %v3579 = vunpack.c.l.b16 %v609
        %v3580 = vunpack.c.h.b16 %v609
        %v3581 = vunpack.c.l.b16 %v610
        %v3582 = vunpack.c.h.b16 %v610
        %v3583 = vunpack.c.l.b16 %v611
        %v3584 = vunpack.c.h.b16 %v611
        %v3585 = vunpack.c.l.b16 %v612
        %v3586 = vunpack.c.h.b16 %v612
        %v3587 = vunpack.c.l.b16 %v613
        %v3588 = vunpack.c.h.b16 %v613
        %v3589 = vunpack.c.l.b16 %v614
        %v3590 = vunpack.c.h.b16 %v614
        %v3591 = vunpack.c.l.b16 %v615
        %v3592 = vunpack.c.h.b16 %v615
        %v3593 = vunpack.c.l.b16 %v616
        %v3594 = vunpack.c.h.b16 %v616
        %v3595 = vunpack.c.l.b16 %v617
        %v3596 = vunpack.c.h.b16 %v617
        %v3597 = vunpack.c.l.b16 %v618
        %v3598 = vunpack.c.h.b16 %v618
        %v3599 = vunpack.c.l.b16 %v619
        %v3600 = vunpack.c.h.b16 %v619
        %v3601 = vunpack.c.l.b16 %v620
        %v3602 = vunpack.c.h.b16 %v620
        %v3603 = vunpack.c.l.b16 %v621
        %v3604 = vunpack.c.h.b16 %v621
        %v3605 = vunpack.c.l.b16 %v622
        %v3606 = vunpack.c.h.b16 %v622
        %v3607 = vunpack.c.l.b16 %v623
        %v3608 = vunpack.c.h.b16 %v623
        %v3609 = vunpack.c.l.b16 %v624
        %v3610 = vunpack.c.h.b16 %v624
        %v3611 = vunpack.c.l.b16 %v625
        %v3612 = vunpack.c.h.b16 %v625
        %v3613 = vunpack.c.l.b16 %v626
        %v3614 = vunpack.c.h.b16 %v626
        %v3615 = vunpack.c.l.b16 %v627
        %v3616 = vunpack.c.h.b16 %v627
        %v3617 = vunpack.c.l.b16 %v628
        %v3618 = vunpack.c.h.b16 %v628
        %v3619 = vunpack.c.l.b16 %v629
        %v3620 = vunpack.c.h.b16 %v629
        %v3621 = vunpack.c.l.b16 %v630
        %v3622 = vunpack.c.h.b16 %v630
        %v3623 = vunpack.c.l.b16 %v631
        %v3624 = vunpack.c.h.b16 %v631
        %v3625 = vunpack.c.l.b16 %v632
        %v3626 = vunpack.c.h.b16 %v632
        %v3627 = vunpack.c.l.b16 %v633
        %v3628 = vunpack.c.h.b16 %v633
        %v3629 = vunpack.c.l.b16 %v634
        %v3630 = vunpack.c.h.b16 %v634
        %v3631 = vunpack.c.l.b16 %v635
        %v3632 = vunpack.c.h.b16 %v635
        %v3633 = vunpack.c.l.b16 %v636
        %v3634 = vunpack.c.h.b16 %v636
        %v3635 = vunpack.c.l.b16 %v637
        %v3636 = vunpack.c.h.b16 %v637
        %v3637 = vunpack.c.l.b16 %v638
        %v3638 = vunpack.c.h.b16 %v638
        %v3639 = vunpack.c.l.b16 %v639
        %v3640 = vunpack.c.h.b16 %v639
        %v3641 = vunpack.c.l.b16 %v640
        %v3642 = vunpack.c.h.b16 %v640
        %v3643 = vunpack.c.l.b16 %v641
        %v3644 = vunpack.c.h.b16 %v641
        %v3645 = vunpack.c.l.b16 %v642
        %v3646 = vunpack.c.h.b16 %v642
        %v3647 = vunpack.c.l.b16 %v643
        %v3648 = vunpack.c.h.b16 %v643
        %v3649 = vunpack.c.l.b16 %v644
        %v3650 = vunpack.c.h.b16 %v644
        %v3651 = vunpack.c.l.b16 %v645
        %v3652 = vunpack.c.h.b16 %v645
        %v3653 = vunpack.c.l.b16 %v646
        %v3654 = vunpack.c.h.b16 %v646
        %v3655 = vunpack.c.l.b16 %v647
        %v3656 = vunpack.c.h.b16 %v647
        %v3657 = vunpack.c.l.b16 %v648
        %v3658 = vunpack.c.h.b16 %v648
        %v3659 = vunpack.c.l.b16 %v649
        %v3660 = vunpack.c.h.b16 %v649
        %v3661 = vunpack.c.l.b16 %v650
        %v3662 = vunpack.c.h.b16 %v650
        %v3663 = vunpack.c.l.b16 %v651
        %v3664 = vunpack.c.h.b16 %v651
        %v3665 = vunpack.c.l.b16 %v652
        %v3666 = vunpack.c.h.b16 %v652
        %v3667 = vunpack.c.l.b16 %v653
        %v3668 = vunpack.c.h.b16 %v653
        %v3669 = vunpack.c.l.b16 %v654
        %v3670 = vunpack.c.h.b16 %v654
        %v3671 = vunpack.c.l.b16 %v655
        %v3672 = vunpack.c.h.b16 %v655
        %v3673 = vunpack.c.l.b16 %v656
        %v3674 = vunpack.c.h.b16 %v656
        %v3675 = vunpack.c.l.b16 %v657
        %v3676 = vunpack.c.h.b16 %v657
        %v3677 = vunpack.c.l.b16 %v658
        %v3678 = vunpack.c.h.b16 %v658
        %v3679 = vunpack.c.l.b16 %v659
        %v3680 = vunpack.c.h.b16 %v659
        %v3681 = vunpack.c.l.b16 %v660
        %v3682 = vunpack.c.h.b16 %v660
        %v3683 = vunpack.c.l.b16 %v661
        %v3684 = vunpack.c.h.b16 %v661
        %v3685 = vunpack.c.l.b16 %v662
        %v3686 = vunpack.c.h.b16 %v662
        %v3687 = vunpack.c.l.b16 %v663
        %v3688 = vunpack.c.h.b16 %v663
        %v3689 = vunpack.c.l.b16 %v664
        %v3690 = vunpack.c.h.b16 %v664
        %v3691 = vunpack.c.l.b16 %v665
        %v3692 = vunpack.c.h.b16 %v665
        %v3693 = vunpack.c.l.b16 %v666
        %v3694 = vunpack.c.h.b16 %v666
        %v3695 = vunpack.c.l.b16 %v667
        %v3696 = vunpack.c.h.b16 %v667
        %v3697 = vunpack.c.l.b16 %v668
        %v3698 = vunpack.c.h.b16 %v668
        %v3699 = vunpack.c.l.b16 %v669
        %v3700 = vunpack.c.h.b16 %v669
        %v3701 = vunpack.c.l.b16 %v670
        %v3702 = vunpack.c.h.b16 %v670
        %v3703 = vunpack.c.l.b16 %v671
        %v3704 = vunpack.c.h.b16 %v671
        %v3705 = vunpack.c.l.b16 %v672
        %v3706 = vunpack.c.h.b16 %v672
        %v3707 = vunpack.c.l.b16 %v673
        %v3708 = vunpack.c.h.b16 %v673
        %v3709 = vunpack.c.l.b16 %v674
        %v3710 = vunpack.c.h.b16 %v674
        %v3711 = vunpack.c.l.b16 %v675
        %v3712 = vunpack.c.h.b16 %v675
        %v3713 = vunpack.c.l.b16 %v676
        %v3714 = vunpack.c.h.b16 %v676
        %v3715 = vunpack.c.l.b16 %v677
        %v3716 = vunpack.c.l.b16 %v678
        %v3717 = vunpack.c.h.b16 %v678
        %v3718 = vunpack.c.l.b16 %v679
        %v3719 = vunpack.c.h.b16 %v679
        %v3720 = vunpack.c.l.b16 %v680
        %v3721 = vunpack.c.h.b16 %v680
        %v3722 = vunpack.c.l.b16 %v681
        %v3723 = vunpack.c.h.b16 %v681
        %v3724 = vunpack.c.l.b16 %v682
        %v3725 = vunpack.c.h.b16 %v682
        %v3726 = vunpack.c.l.b16 %v683
        %v3727 = vunpack.c.h.b16 %v683
        %v3728 = vunpack.c.l.b16 %v684
        %v3729 = vunpack.c.h.b16 %v684
        %v3730 = vunpack.c.l.b16 %v685
        %v3731 = vunpack.c.h.b16 %v685
        %v3732 = vunpack.c.l.b16 %v686
        %v3733 = vunpack.c.h.b16 %v686
        %v3734 = vunpack.c.l.b16 %v687
        %v3735 = vunpack.c.h.b16 %v687
        %v3736 = vunpack.c.l.b16 %v688
        %v3737 = vunpack.c.h.b16 %v688
        %v3738 = vunpack.c.l.b16 %v689
        %v3739 = vunpack.c.h.b16 %v689
        %v3740 = vunpack.c.l.b16 %v690
        %v3741 = vunpack.c.h.b16 %v690
        %v3742 = vunpack.c.l.b16 %v691
        %v3743 = vunpack.c.h.b16 %v691
        %v3744 = vunpack.c.l.b16 %v692
        %v3745 = vunpack.c.h.b16 %v692
        %v3746 = vunpack.c.l.b16 %v693
        %v3747 = vunpack.c.h.b16 %v693
        %v3748 = vunpack.c.l.b16 %v694
        %v3749 = vunpack.c.h.b16 %v694
        %v3750 = vunpack.c.l.b16 %v695
        %v3751 = vunpack.c.h.b16 %v695
        %v3752 = vunpack.c.l.b16 %v696
        %v3753 = vunpack.c.h.b16 %v696
        %v3754 = vunpack.c.l.b16 %v697
        %v3755 = vunpack.c.h.b16 %v697
        %v3756 = vunpack.c.l.b16 %v698
        %v3757 = vunpack.c.h.b16 %v698
        %v3758 = vunpack.c.l.b16 %v699
        %v3759 = vunpack.c.h.b16 %v699
        %v3760 = vunpack.c.l.b16 %v700
        %v3761 = vunpack.c.h.b16 %v700
        %v3762 = vunpack.c.l.b16 %v701
        %v3763 = vunpack.c.h.b16 %v701
        %v3764 = vunpack.c.l.b16 %v702
        %v3765 = vunpack.c.h.b16 %v702
        %v3766 = vunpack.c.l.b16 %v703
        %v3767 = vunpack.c.h.b16 %v703
        %v3768 = vunpack.c.l.b16 %v704
        %v3769 = vunpack.c.h.b16 %v704
        %v3770 = vunpack.c.l.b16 %v705
        %v3771 = vunpack.c.h.b16 %v705
        %v3772 = vunpack.c.l.b16 %v706
        %v3773 = vunpack.c.h.b16 %v706
        %v3774 = vunpack.c.l.b16 %v707
        %v3775 = vunpack.c.h.b16 %v707
        %v3776 = vunpack.c.l.b16 %v708
        %v3777 = vunpack.c.h.b16 %v708
        %v3778 = vunpack.c.l.b16 %v709
        %v3779 = vunpack.c.h.b16 %v709
        %v3780 = vunpack.c.l.b16 %v710
        %v3781 = vunpack.c.h.b16 %v710
        %v3782 = vunpack.c.l.b16 %v711
        %v3783 = vunpack.c.h.b16 %v711
        %v3784 = vunpack.c.l.b16 %v712
        %v3785 = vunpack.c.h.b16 %v712
        %v3786 = vunpack.c.l.b16 %v713
        %v3787 = vunpack.c.h.b16 %v713
        %v3788 = vunpack.c.l.b16 %v714
        %v3789 = vunpack.c.h.b16 %v714
        %v3790 = vunpack.c.l.b16 %v715
        %v3791 = vunpack.c.h.b16 %v715
        %v3792 = vunpack.c.l.b16 %v716
        %v3793 = vunpack.c.h.b16 %v716
        %v3794 = vunpack.c.l.b16 %v717
        %v3795 = vunpack.c.h.b16 %v717
        %v3796 = vunpack.c.l.b16 %v718
        %v3797 = vunpack.c.h.b16 %v718
        %v3798 = vunpack.c.l.b16 %v719
        %v3799 = vunpack.c.h.b16 %v719
        %v3800 = vunpack.c.l.b16 %v720
        %v3801 = vunpack.c.h.b16 %v720
        %v3802 = vunpack.c.l.b16 %v721
        %v3803 = vunpack.c.h.b16 %v721
        %v3804 = vunpack.c.l.b16 %v722
        %v3805 = vunpack.c.h.b16 %v722
        %v3806 = vunpack.c.l.b16 %v723
        %v3807 = vunpack.c.h.b16 %v723
        %v3808 = vunpack.c.l.b16 %v724
        %v3809 = vunpack.c.h.b16 %v724
        %v3810 = vunpack.c.l.b16 %v725
        %v3811 = vunpack.c.h.b16 %v725
        %v3812 = vunpack.c.l.b16 %v726
        %v3813 = vunpack.c.h.b16 %v726
        %v3814 = vunpack.c.l.b16 %v727
        %v3815 = vunpack.c.h.b16 %v727
        %v3816 = vunpack.c.l.b16 %v728
        %v3817 = vunpack.c.h.b16 %v728
        %v3818 = vunpack.c.l.b16 %v729
        %v3819 = vunpack.c.h.b16 %v729
        %v3820 = vunpack.c.l.b16 %v730
        %v3821 = vunpack.c.h.b16 %v730
        %v3822 = vunpack.c.l.b16 %v731
        %v3823 = vunpack.c.h.b16 %v731
        %v3824 = vunpack.c.l.b16 %v732
        %v3825 = vunpack.c.h.b16 %v732
        %v3826 = vunpack.c.l.b16 %v733
        %v3827 = vunpack.c.h.b16 %v733
        %v3828 = vunpack.c.l.b16 %v734
        %v3829 = vunpack.c.h.b16 %v734
        %v3830 = vunpack.c.l.b16 %v735
        %v3831 = vunpack.c.h.b16 %v735
        %v3832 = vunpack.c.l.b16 %v736
        %v3833 = vunpack.c.h.b16 %v736
        %v3834 = vunpack.c.l.b16 %v737
        %v3835 = vunpack.c.h.b16 %v737
        %v3836 = vunpack.c.l.b16 %v738
        %v3837 = vunpack.c.h.b16 %v738
        %v3838 = vunpack.c.l.b16 %v739
        %v3839 = vunpack.c.h.b16 %v739
        %v3840 = vunpack.c.l.b16 %v740
        %v3841 = vunpack.c.h.b16 %v740
        %v3842 = vunpack.c.l.b16 %v741
        %v3843 = vunpack.c.h.b16 %v741
        %v3844 = vunpack.c.l.b16 %v742
        %v3845 = vunpack.c.h.b16 %v742
        %v3846 = vunpack.c.l.b16 %v743
        %v3847 = vunpack.c.h.b16 %v743
        %v3848 = vunpack.c.l.b16 %v744
        %v3849 = vunpack.c.h.b16 %v744
        %v3850 = vunpack.c.l.b16 %v745
        %v3851 = vunpack.c.h.b16 %v745
        %v3852 = vunpack.c.l.b16 %v746
        %v3853 = vunpack.c.h.b16 %v746
        %v3854 = vunpack.c.l.b16 %v747
        %v3855 = vunpack.c.h.b16 %v747
        %v3856 = vunpack.c.l.b16 %v748
        %v3857 = vunpack.c.h.b16 %v748
        %v3858 = vunpack.c.l.b16 %v749
        %v3859 = vunpack.c.h.b16 %v749
        %v3860 = vunpack.c.l.b16 %v750
        %v3861 = vunpack.c.h.b16 %v750
        %v3862 = vunpack.c.l.b16 %v751
        %v3863 = vunpack.c.l.b16 %v752
        %v3864 = vunpack.c.h.b16 %v752
        %v3865 = vunpack.c.l.b16 %v753
        %v3866 = vunpack.c.h.b16 %v753
        %v3867 = vunpack.c.l.b16 %v754
        %v3868 = vunpack.c.h.b16 %v754
        %v3869 = vunpack.c.l.b16 %v755
        %v3870 = vunpack.c.h.b16 %v755
        %v3871 = vunpack.c.l.b16 %v756
        %v3872 = vunpack.c.h.b16 %v756
        %v3873 = vunpack.c.l.b16 %v757
        %v3874 = vunpack.c.h.b16 %v757
        %v3875 = vunpack.c.l.b16 %v758
        %v3876 = vunpack.c.h.b16 %v758
        %v3877 = vunpack.c.l.b16 %v759
        %v3878 = vunpack.c.h.b16 %v759
        %v3879 = vunpack.c.l.b16 %v760
        %v3880 = vunpack.c.h.b16 %v760
        %v3881 = vunpack.c.l.b16 %v761
        %v3882 = vunpack.c.h.b16 %v761
        %v3883 = vunpack.c.l.b16 %v762
        %v3884 = vunpack.c.h.b16 %v762
        %v3885 = vunpack.c.l.b16 %v763
        %v3886 = vunpack.c.h.b16 %v763
        %v3887 = vunpack.c.l.b16 %v764
        %v3888 = vunpack.c.h.b16 %v764
        %v3889 = vunpack.c.l.b16 %v765
        %v3890 = vunpack.c.h.b16 %v765
        %v3891 = vunpack.c.l.b16 %v766
        %v3892 = vunpack.c.h.b16 %v766
        %v3893 = vunpack.c.l.b16 %v767
        %v3894 = vunpack.c.h.b16 %v767
        %v3895 = vunpack.c.l.b16 %v768
        %v3896 = vunpack.c.h.b16 %v768
        %v3897 = vunpack.c.l.b16 %v769
        %v3898 = vunpack.c.h.b16 %v769
        %v3899 = vunpack.c.l.b16 %v770
        %v3900 = vunpack.c.h.b16 %v770
        %v3901 = vunpack.c.l.b16 %v771
        %v3902 = vunpack.c.h.b16 %v771
        %v3903 = vunpack.c.l.b16 %v772
        %v3904 = vunpack.c.h.b16 %v772
        %v3905 = vunpack.c.l.b16 %v773
        %v3906 = vunpack.c.h.b16 %v773
        %v3907 = vunpack.c.l.b16 %v774
        %v3908 = vunpack.c.h.b16 %v774
        %v3909 = vunpack.c.l.b16 %v775
        %v3910 = vunpack.c.h.b16 %v775
        %v3911 = vunpack.c.l.b16 %v776
        %v3912 = vunpack.c.h.b16 %v776
        %v3913 = vunpack.c.l.b16 %v777
        %v3914 = vunpack.c.h.b16 %v777
        %v3915 = vunpack.c.l.b16 %v778
        %v3916 = vunpack.c.h.b16 %v778
        %v3917 = vunpack.c.l.b16 %v779
        %v3918 = vunpack.c.h.b16 %v779
        %v3919 = vunpack.c.l.b16 %v780
        %v3920 = vunpack.c.h.b16 %v780
        %v3921 = vunpack.c.l.b16 %v781
        %v3922 = vunpack.c.h.b16 %v781
        %v3923 = vunpack.c.l.b16 %v782
        %v3924 = vunpack.c.h.b16 %v782
        %v3925 = vunpack.c.l.b16 %v783
        %v3926 = vunpack.c.h.b16 %v783
        %v3927 = vunpack.c.l.b16 %v784
        %v3928 = vunpack.c.h.b16 %v784
        %v3929 = vunpack.c.l.b16 %v785
        %v3930 = vunpack.c.h.b16 %v785
        %v3931 = vunpack.c.l.b16 %v786
        %v3932 = vunpack.c.h.b16 %v786
        %v3933 = vunpack.c.l.b16 %v787
        %v3934 = vunpack.c.h.b16 %v787
        %v3935 = vunpack.c.l.b16 %v788
        %v3936 = vunpack.c.h.b16 %v788
        %v3937 = vunpack.c.l.b16 %v789
        %v3938 = vunpack.c.h.b16 %v789
        %v3939 = vunpack.c.l.b16 %v790
        %v3940 = vunpack.c.h.b16 %v790
        %v3941 = vunpack.c.l.b16 %v791
        %v3942 = vunpack.c.h.b16 %v791
        %v3943 = vunpack.c.l.b16 %v792
        %v3944 = vunpack.c.h.b16 %v792
        %v3945 = vunpack.c.l.b16 %v793
        %v3946 = vunpack.c.h.b16 %v793
        %v3947 = vunpack.c.l.b16 %v794
        %v3948 = vunpack.c.h.b16 %v794
        %v3949 = vunpack.c.l.b16 %v795
        %v3950 = vunpack.c.h.b16 %v795
        %v3951 = vunpack.c.l.b16 %v796
        %v3952 = vunpack.c.h.b16 %v796
        %v3953 = vunpack.c.l.b16 %v797
        %v3954 = vunpack.c.h.b16 %v797
        %v3955 = vunpack.c.l.b16 %v798
        %v3956 = vunpack.c.h.b16 %v798
        %v3957 = vunpack.c.l.b16 %v799
        %v3958 = vunpack.c.h.b16 %v799
        %v3959 = vunpack.c.l.b16 %v800
        %v3960 = vunpack.c.h.b16 %v800
        %v3961 = vunpack.c.l.b16 %v801
        %v3962 = vunpack.c.h.b16 %v801
        %v3963 = vunpack.c.l.b16 %v802
        %v3964 = vunpack.c.h.b16 %v802
        %v3965 = vunpack.c.l.b16 %v803
        %v3966 = vunpack.c.h.b16 %v803
        %v3967 = vunpack.c.l.b16 %v804
        %v3968 = vunpack.c.h.b16 %v804
        %v3969 = vunpack.c.l.b16 %v805
        %v3970 = vunpack.c.h.b16 %v805
        %v3971 = vunpack.c.l.b16 %v806
        %v3972 = vunpack.c.h.b16 %v806
        %v3973 = vunpack.c.l.b16 %v807
        %v3974 = vunpack.c.h.b16 %v807
        %v3975 = vunpack.c.l.b16 %v808
        %v3976 = vunpack.c.h.b16 %v808
        %v3977 = vunpack.c.l.b16 %v809
        %v3978 = vunpack.c.h.b16 %v809
        %v3979 = vunpack.c.l.b16 %v810
        %v3980 = vunpack.c.h.b16 %v810
        %v3981 = vunpack.c.l.b16 %v811
        %v3982 = vunpack.c.h.b16 %v811
        %v3983 = vunpack.c.l.b16 %v812
        %v3984 = vunpack.c.h.b16 %v812
        %v3985 = vunpack.c.l.b16 %v813
        %v3986 = vunpack.c.h.b16 %v813
        %v3987 = vunpack.c.l.b16 %v814
        %v3988 = vunpack.c.h.b16 %v814
        %v3989 = vunpack.c.l.b16 %v815
        %v3990 = vunpack.c.h.b16 %v815
        %v3991 = vunpack.c.l.b16 %v816
        %v3992 = vunpack.c.h.b16 %v816
        %v3993 = vunpack.c.l.b16 %v817
        %v3994 = vunpack.c.h.b16 %v817
        %v3995 = vunpack.c.l.b16 %v818
        %v3996 = vunpack.c.h.b16 %v818
        %v3997 = vunpack.c.l.b16 %v819
        %v3998 = vunpack.c.h.b16 %v819
        %v3999 = vunpack.c.l.b16 %v820
        %v4000 = vunpack.c.h.b16 %v820
        %v4001 = vunpack.c.l.b16 %v821
        %v4002 = vunpack.c.h.b16 %v821
        %v4003 = vunpack.c.l.b16 %v822
        %v4004 = vunpack.c.h.b16 %v822
        %v4005 = vunpack.c.l.b16 %v823
        %v4006 = vunpack.c.h.b16 %v823
        %v4007 = vunpack.c.l.b16 %v824
        %v4008 = vunpack.c.h.b16 %v824
        %v4009 = vunpack.c.l.b16 %v825
        %v4010 = vpack.c.b16 %v2981, %v2834
        %v4011 = vpack.c.b16 %v2982, %v2835
        %v4012 = vpack.c.b16 %v2983, %v2836
        %v4013 = vpack.c.b16 %v2984, %v2837
        %v4014 = vpack.c.b16 %v2985, %v2838
        %v4015 = vpack.c.b16 %v2986, %v2839
        %v4016 = vpack.c.b16 %v2987, %v2840
        %v4017 = vpack.c.b16 %v2988, %v2841
        %v4018 = vpack.c.b16 %v2989, %v2842
        %v4019 = vpack.c.b16 %v2990, %v2843
        %v4020 = vpack.c.b16 %v2991, %v2844
        %v4021 = vpack.c.b16 %v2992, %v2845
        %v4022 = vpack.c.b16 %v2993, %v2846
        %v4023 = vpack.c.b16 %v2994, %v2847
        %v4024 = vpack.c.b16 %v2995, %v2848
        %v4025 = vpack.c.b16 %v2996, %v2849
        %v4026 = vpack.c.b16 %v2997, %v2850
        %v4027 = vpack.c.b16 %v2998, %v2851
        %v4028 = vpack.c.b16 %v2999, %v2852
        %v4029 = vpack.c.b16 %v3000, %v2853
        %v4030 = vpack.c.b16 %v3001, %v2854
        %v4031 = vpack.c.b16 %v3002, %v2855
        %v4032 = vpack.c.b16 %v3003, %v2856
        %v4033 = vpack.c.b16 %v3004, %v2857
        %v4034 = vpack.c.b16 %v3005, %v2858
        %v4035 = vpack.c.b16 %v3006, %v2859
        %v4036 = vpack.c.b16 %v3007, %v2860
        %v4037 = vpack.c.b16 %v3008, %v2861
        %v4038 = vpack.c.b16 %v3009, %v2862
        %v4039 = vpack.c.b16 %v3010, %v2863
        %v4040 = vpack.c.b16 %v3011, %v2864
        %v4041 = vpack.c.b16 %v3012, %v2865
        %v4042 = vpack.c.b16 %v3013, %v2866
        %v4043 = vpack.c.b16 %v3014, %v2867
        %v4044 = vpack.c.b16 %v3015, %v2868
        %v4045 = vpack.c.b16 %v3016, %v2869
        %v4046 = vpack.c.b16 %v3017, %v2870
        %v4047 = vpack.c.b16 %v3018, %v2871
        %v4048 = vpack.c.b16 %v3019, %v2872
        %v4049 = vpack.c.b16 %v3020, %v2873
        %v4050 = vpack.c.b16 %v3021, %v2874
        %v4051 = vpack.c.b16 %v3022, %v2875
        %v4052 = vpack.c.b16 %v3023, %v2876
        %v4053 = vpack.c.b16 %v3024, %v2877
        %v4054 = vpack.c.b16 %v3025, %v2878
        %v4055 = vpack.c.b16 %v3026, %v2879
        %v4056 = vpack.c.b16 %v3027, %v2880
        %v4057 = vpack.c.b16 %v3028, %v2881
        %v4058 = vpack.c.b16 %v3029, %v2882
        %v4059 = vpack.c.b16 %v3030, %v2883
        %v4060 = vpack.c.b16 %v3031, %v2884
        %v4061 = vpack.c.b16 %v3032, %v2885
        %v4062 = vpack.c.b16 %v3033, %v2886
        %v4063 = vpack.c.b16 %v3034, %v2887
        %v4064 = vpack.c.b16 %v3035, %v2888
        %v4065 = vpack.c.b16 %v3036, %v2889
        %v4066 = vpack.c.b16 %v3037, %v2890
        %v4067 = vpack.c.b16 %v3038, %v2891
        %v4068 = vpack.c.b16 %v3039, %v2892
        %v4069 = vpack.c.b16 %v3040, %v2893
        %v4070 = vpack.c.b16 %v3041, %v2894
        %v4071 = vpack.c.b16 %v3042, %v2895
        %v4072 = vpack.c.b16 %v3043, %v2896
        %v4073 = vpack.c.b16 %v3044, %v2897
        %v4074 = vpack.c.b16 %v3045, %v2898
        %v4075 = vpack.c.b16 %v3046, %v2899
        %v4076 = vpack.c.b16 %v3047, %v2900
        %v4077 = vpack.c.b16 %v3048, %v2901
        %v4078 = vpack.c.b16 %v3049, %v2902
        %v4079 = vpack.c.b16 %v3050, %v2903
        %v4080 = vpack.c.b16 %v3051, %v2904
        %v4081 = vpack.c.b16 %v3052, %v2905
        %v4082 = vpack.c.b16 %v3053, %v2906
        %v4083 = vpack.c.b16 %v3054, %v2907
        %v4084 = vpack.c.b16 %v3055, %v2908
        %v4085 = vpack.c.b16 %v3056, %v2909
        %v4086 = vpack.c.b16 %v3057, %v2910
        %v4087 = vpack.c.b16 %v3058, %v2911
        %v4088 = vpack.c.b16 %v3059, %v2912
        %v4089 = vpack.c.b16 %v3060, %v2913
        %v4090 = vpack.c.b16 %v3061, %v2914
        %v4091 = vpack.c.b16 %v3062, %v2915
        %v4092 = vpack.c.b16 %v3063, %v2916
        %v4093 = vpack.c.b16 %v3064, %v2917
        %v4094 = vpack.c.b16 %v3065, %v2918
        %v4095 = vpack.c.b16 %v3066, %v2919
        %v4096 = vpack.c.b16 %v3067, %v2920
        %v4097 = vpack.c.b16 %v3068, %v2921
        %v4098 = vpack.c.b16 %v3069, %v2922
        %v4099 = vpack.c.b16 %v3070, %v2923
        %v4100 = vpack.c.b16 %v3071, %v2924
        %v4101 = vpack.c.b16 %v3072, %v2925
        %v4102 = vpack.c.b16 %v3073, %v2926
        %v4103 = vpack.c.b16 %v3074, %v2927
        %v4104 = vpack.c.b16 %v3075, %v2928
        %v4105 = vpack.c.b16 %v3076, %v2929
        %v4106 = vpack.c.b16 %v3077, %v2930
        %v4107 = vpack.c.b16 %v3078, %v2931
        %v4108 = vpack.c.b16 %v3079, %v2932
        %v4109 = vpack.c.b16 %v3080, %v2933
        %v4110 = vpack.c.b16 %v3081, %v2934
        %v4111 = vpack.c.b16 %v3082, %v2935
        %v4112 = vpack.c.b16 %v3083, %v2936
        %v4113 = vpack.c.b16 %v3084, %v2937
        %v4114 = vpack.c.b16 %v3085, %v2938
        %v4115 = vpack.c.b16 %v3086, %v2939
        %v4116 = vpack.c.b16 %v3087, %v2940
        %v4117 = vpack.c.b16 %v3088, %v2941
        %v4118 = vpack.c.b16 %v3089, %v2942
        %v4119 = vpack.c.b16 %v3090, %v2943
        %v4120 = vpack.c.b16 %v3091, %v2944
        %v4121 = vpack.c.b16 %v3092, %v2945
        %v4122 = vpack.c.b16 %v3093, %v2946
        %v4123 = vpack.c.b16 %v3094, %v2947
        %v4124 = vpack.c.b16 %v3095, %v2948
        %v4125 = vpack.c.b16 %v3096, %v2949
        %v4126 = vpack.c.b16 %v3097, %v2950
        %v4127 = vpack.c.b16 %v3098, %v2951
        %v4128 = vpack.c.b16 %v3099, %v2952
        %v4129 = vpack.c.b16 %v3100, %v2953
        %v4130 = vpack.c.b16 %v3101, %v2954
        %v4131 = vpack.c.b16 %v3102, %v2955
        %v4132 = vpack.c.b16 %v3103, %v2956
        %v4133 = vpack.c.b16 %v3104, %v2957
        %v4134 = vpack.c.b16 %v3105, %v2958
        %v4135 = vpack.c.b16 %v3106, %v2959
        %v4136 = vpack.c.b16 %v3107, %v2960
        %v4137 = vpack.c.b16 %v3108, %v2961
        %v4138 = vpack.c.b16 %v3109, %v2962
        %v4139 = vpack.c.b16 %v3110, %v2963
        %v4140 = vpack.c.b16 %v3111, %v2964
        %v4141 = vpack.c.b16 %v3112, %v2965
        %v4142 = vpack.c.b16 %v3113, %v2966
        %v4143 = vpack.c.b16 %v3114, %v2967
        %v4144 = vpack.c.b16 %v3115, %v2968
        %v4145 = vpack.c.b16 %v3116, %v2969
        %v4146 = vpack.c.b16 %v3117, %v2970
        %v4147 = vpack.c.b16 %v3118, %v2971
        %v4148 = vpack.c.b16 %v3119, %v2972
        %v4149 = vpack.c.b16 %v3120, %v2973
        %v4150 = vpack.c.b16 %v3121, %v2974
        %v4151 = vpack.c.b16 %v3122, %v2975
        %v4152 = vpack.c.b16 %v3123, %v2976
        %v4153 = vpack.c.b16 %v3124, %v2977
        %v4154 = vpack.c.b16 %v3125, %v2978
        %v4155 = vpack.c.b16 %v3126, %v2979
        %v4156 = vpack.c.b16 %v3127, %v2980
        %v4157 = vpack.c.b16 %v3275, %v3128
        %v4158 = vpack.c.b16 %v3276, %v3129
        %v4159 = vpack.c.b16 %v3277, %v3130
        %v4160 = vpack.c.b16 %v3278, %v3131
        %v4161 = vpack.c.b16 %v3279, %v3132
        %v4162 = vpack.c.b16 %v3280, %v3133
        %v4163 = vpack.c.b16 %v3281, %v3134
        %v4164 = vpack.c.b16 %v3282, %v3135
        %v4165 = vpack.c.b16 %v3283, %v3136
        %v4166 = vpack.c.b16 %v3284, %v3137
        %v4167 = vpack.c.b16 %v3285, %v3138
        %v4168 = vpack.c.b16 %v3286, %v3139
        %v4169 = vpack.c.b16 %v3287, %v3140
        %v4170 = vpack.c.b16 %v3288, %v3141
        %v4171 = vpack.c.b16 %v3289, %v3142
        %v4172 = vpack.c.b16 %v3290, %v3143
        %v4173 = vpack.c.b16 %v3291, %v3144
        %v4174 = vpack.c.b16 %v3292, %v3145
        %v4175 = vpack.c.b16 %v3293, %v3146
        %v4176 = vpack.c.b16 %v3294, %v3147
        %v4177 = vpack.c.b16 %v3295, %v3148
        %v4178 = vpack.c.b16 %v3296, %v3149
        %v4179 = vpack.c.b16 %v3297, %v3150
        %v4180 = vpack.c.b16 %v3298, %v3151
        %v4181 = vpack.c.b16 %v3299, %v3152
        %v4182 = vpack.c.b16 %v3300, %v3153
        %v4183 = vpack.c.b16 %v3301, %v3154
        %v4184 = vpack.c.b16 %v3302, %v3155
        %v4185 = vpack.c.b16 %v3303, %v3156
        %v4186 = vpack.c.b16 %v3304, %v3157
        %v4187 = vpack.c.b16 %v3305, %v3158
        %v4188 = vpack.c.b16 %v3306, %v3159
        %v4189 = vpack.c.b16 %v3307, %v3160
        %v4190 = vpack.c.b16 %v3308, %v3161
        %v4191 = vpack.c.b16 %v3309, %v3162
        %v4192 = vpack.c.b16 %v3310, %v3163
        %v4193 = vpack.c.b16 %v3311, %v3164
        %v4194 = vpack.c.b16 %v3312, %v3165
        %v4195 = vpack.c.b16 %v3313, %v3166
        %v4196 = vpack.c.b16 %v3314, %v3167
        %v4197 = vpack.c.b16 %v3315, %v3168
        %v4198 = vpack.c.b16 %v3316, %v3169
        %v4199 = vpack.c.b16 %v3317, %v3170
        %v4200 = vpack.c.b16 %v3318, %v3171
        %v4201 = vpack.c.b16 %v3319, %v3172
        %v4202 = vpack.c.b16 %v3320, %v3173
        %v4203 = vpack.c.b16 %v3321, %v3174
        %v4204 = vpack.c.b16 %v3322, %v3175
        %v4205 = vpack.c.b16 %v3323, %v3176
        %v4206 = vpack.c.b16 %v3324, %v3177
        %v4207 = vpack.c.b16 %v3325, %v3178
        %v4208 = vpack.c.b16 %v3326, %v3179
        %v4209 = vpack.c.b16 %v3327, %v3180
        %v4210 = vpack.c.b16 %v3328, %v3181
        %v4211 = vpack.c.b16 %v3329, %v3182
        %v4212 = vpack.c.b16 %v3330, %v3183
        %v4213 = vpack.c.b16 %v3331, %v3184
        %v4214 = vpack.c.b16 %v3332, %v3185
        %v4215 = vpack.c.b16 %v3333, %v3186
        %v4216 = vpack.c.b16 %v3334, %v3187
        %v4217 = vpack.c.b16 %v3335, %v3188
        %v4218 = vpack.c.b16 %v3336, %v3189
        %v4219 = vpack.c.b16 %v3337, %v3190
        %v4220 = vpack.c.b16 %v3338, %v3191
        %v4221 = vpack.c.b16 %v3339, %v3192
        %v4222 = vpack.c.b16 %v3340, %v3193
        %v4223 = vpack.c.b16 %v3341, %v3194
        %v4224 = vpack.c.b16 %v3342, %v3195
        %v4225 = vpack.c.b16 %v3343, %v3196
        %v4226 = vpack.c.b16 %v3344, %v3197
        %v4227 = vpack.c.b16 %v3345, %v3198
        %v4228 = vpack.c.b16 %v3346, %v3199
        %v4229 = vpack.c.b16 %v3347, %v3200
        %v4230 = vpack.c.b16 %v3348, %v3201
        %v4231 = vpack.c.b16 %v3349, %v3202
        %v4232 = vpack.c.b16 %v3350, %v3203
        %v4233 = vpack.c.b16 %v3351, %v3204
        %v4234 = vpack.c.b16 %v3352, %v3205
        %v4235 = vpack.c.b16 %v3353, %v3206
        %v4236 = vpack.c.b16 %v3354, %v3207
        %v4237 = vpack.c.b16 %v3355, %v3208
        %v4238 = vpack.c.b16 %v3356, %v3209
        %v4239 = vpack.c.b16 %v3357, %v3210
        %v4240 = vpack.c.b16 %v3358, %v3211
        %v4241 = vpack.c.b16 %v3359, %v3212
        %v4242 = vpack.c.b16 %v3360, %v3213
        %v4243 = vpack.c.b16 %v3361, %v3214
        %v4244 = vpack.c.b16 %v3362, %v3215
        %v4245 = vpack.c.b16 %v3363, %v3216
        %v4246 = vpack.c.b16 %v3364, %v3217
        %v4247 = vpack.c.b16 %v3365, %v3218
        %v4248 = vpack.c.b16 %v3366, %v3219
        %v4249 = vpack.c.b16 %v3367, %v3220
        %v4250 = vpack.c.b16 %v3368, %v3221
        %v4251 = vpack.c.b16 %v3369, %v3222
        %v4252 = vpack.c.b16 %v3370, %v3223
        %v4253 = vpack.c.b16 %v3371, %v3224
        %v4254 = vpack.c.b16 %v3372, %v3225
        %v4255 = vpack.c.b16 %v3373, %v3226
        %v4256 = vpack.c.b16 %v3374, %v3227
        %v4257 = vpack.c.b16 %v3375, %v3228
        %v4258 = vpack.c.b16 %v3376, %v3229
        %v4259 = vpack.c.b16 %v3377, %v3230
        %v4260 = vpack.c.b16 %v3378, %v3231
        %v4261 = vpack.c.b16 %v3379, %v3232
        %v4262 = vpack.c.b16 %v3380, %v3233
        %v4263 = vpack.c.b16 %v3381, %v3234
        %v4264 = vpack.c.b16 %v3382, %v3235
        %v4265 = vpack.c.b16 %v3383, %v3236
        %v4266 = vpack.c.b16 %v3384, %v3237
        %v4267 = vpack.c.b16 %v3385, %v3238
        %v4268 = vpack.c.b16 %v3386, %v3239
        %v4269 = vpack.c.b16 %v3387, %v3240
        %v4270 = vpack.c.b16 %v3388, %v3241
        %v4271 = vpack.c.b16 %v3389, %v3242
        %v4272 = vpack.c.b16 %v3390, %v3243
        %v4273 = vpack.c.b16 %v3391, %v3244
        %v4274 = vpack.c.b16 %v3392, %v3245
        %v4275 = vpack.c.b16 %v3393, %v3246
        %v4276 = vpack.c.b16 %v3394, %v3247
        %v4277 = vpack.c.b16 %v3395, %v3248
        %v4278 = vpack.c.b16 %v3396, %v3249
        %v4279 = vpack.c.b16 %v3397, %v3250
        %v4280 = vpack.c.b16 %v3398, %v3251
        %v4281 = vpack.c.b16 %v3399, %v3252
        %v4282 = vpack.c.b16 %v3400, %v3253
        %v4283 = vpack.c.b16 %v3401, %v3254
        %v4284 = vpack.c.b16 %v3402, %v3255
        %v4285 = vpack.c.b16 %v3403, %v3256
        %v4286 = vpack.c.b16 %v3404, %v3257
        %v4287 = vpack.c.b16 %v3405, %v3258
        %v4288 = vpack.c.b16 %v3406, %v3259
        %v4289 = vpack.c.b16 %v3407, %v3260
        %v4290 = vpack.c.b16 %v3408, %v3261
        %v4291 = vpack.c.b16 %v3409, %v3262
        %v4292 = vpack.c.b16 %v3410, %v3263
        %v4293 = vpack.c.b16 %v3411, %v3264
        %v4294 = vpack.c.b16 %v3412, %v3265
        %v4295 = vpack.c.b16 %v3413, %v3266
        %v4296 = vpack.c.b16 %v3414, %v3267
        %v4297 = vpack.c.b16 %v3415, %v3268
        %v4298 = vpack.c.b16 %v3416, %v3269
        %v4299 = vpack.c.b16 %v3417, %v3270
        %v4300 = vpack.c.b16 %v3418, %v3271
        %v4301 = vpack.c.b16 %v3419, %v3272
        %v4302 = vpack.c.b16 %v3420, %v3273
        %v4303 = vpack.c.b16 %v3421, %v3274
        %v4304 = vpack.c.b16 %v3569, %v3422
        %v4305 = vpack.c.b16 %v3570, %v3423
        %v4306 = vpack.c.b16 %v3571, %v3424
        %v4307 = vpack.c.b16 %v3572, %v3425
        %v4308 = vpack.c.b16 %v3573, %v3426
        %v4309 = vpack.c.b16 %v3574, %v3427
        %v4310 = vpack.c.b16 %v3575, %v3428
        %v4311 = vpack.c.b16 %v3576, %v3429
        %v4312 = vpack.c.b16 %v3577, %v3430
        %v4313 = vpack.c.b16 %v3578, %v3431
        %v4314 = vpack.c.b16 %v3579, %v3432
        %v4315 = vpack.c.b16 %v3580, %v3433
        %v4316 = vpack.c.b16 %v3581, %v3434
        %v4317 = vpack.c.b16 %v3582, %v3435
        %v4318 = vpack.c.b16 %v3583, %v3436
        %v4319 = vpack.c.b16 %v3584, %v3437
        %v4320 = vpack.c.b16 %v3585, %v3438
        %v4321 = vpack.c.b16 %v3586, %v3439
        %v4322 = vpack.c.b16 %v3587, %v3440
        %v4323 = vpack.c.b16 %v3588, %v3441
        %v4324 = vpack.c.b16 %v3589, %v3442
        %v4325 = vpack.c.b16 %v3590, %v3443
        %v4326 = vpack.c.b16 %v3591, %v3444
        %v4327 = vpack.c.b16 %v3592, %v3445
        %v4328 = vpack.c.b16 %v3593, %v3446
        %v4329 = vpack.c.b16 %v3594, %v3447
        %v4330 = vpack.c.b16 %v3595, %v3448
        %v4331 = vpack.c.b16 %v3596, %v3449
        %v4332 = vpack.c.b16 %v3597, %v3450
        %v4333 = vpack.c.b16 %v3598, %v3451
        %v4334 = vpack.c.b16 %v3599, %v3452
        %v4335 = vpack.c.b16 %v3600, %v3453
        %v4336 = vpack.c.b16 %v3601, %v3454
        %v4337 = vpack.c.b16 %v3602, %v3455
        %v4338 = vpack.c.b16 %v3603, %v3456
        %v4339 = vpack.c.b16 %v3604, %v3457
        %v4340 = vpack.c.b16 %v3605, %v3458
        %v4341 = vpack.c.b16 %v3606, %v3459
        %v4342 = vpack.c.b16 %v3607, %v3460
        %v4343 = vpack.c.b16 %v3608, %v3461
        %v4344 = vpack.c.b16 %v3609, %v3462
        %v4345 = vpack.c.b16 %v3610, %v3463
        %v4346 = vpack.c.b16 %v3611, %v3464
        %v4347 = vpack.c.b16 %v3612, %v3465
        %v4348 = vpack.c.b16 %v3613, %v3466
        %v4349 = vpack.c.b16 %v3614, %v3467
        %v4350 = vpack.c.b16 %v3615, %v3468
        %v4351 = vpack.c.b16 %v3616, %v3469
        %v4352 = vpack.c.b16 %v3617, %v3470
        %v4353 = vpack.c.b16 %v3618, %v3471
        %v4354 = vpack.c.b16 %v3619, %v3472
        %v4355 = vpack.c.b16 %v3620, %v3473
        %v4356 = vpack.c.b16 %v3621, %v3474
        %v4357 = vpack.c.b16 %v3622, %v3475
        %v4358 = vpack.c.b16 %v3623, %v3476
        %v4359 = vpack.c.b16 %v3624, %v3477
        %v4360 = vpack.c.b16 %v3625, %v3478
        %v4361 = vpack.c.b16 %v3626, %v3479
        %v4362 = vpack.c.b16 %v3627, %v3480
        %v4363 = vpack.c.b16 %v3628, %v3481
        %v4364 = vpack.c.b16 %v3629, %v3482
        %v4365 = vpack.c.b16 %v3630, %v3483
        %v4366 = vpack.c.b16 %v3631, %v3484
        %v4367 = vpack.c.b16 %v3632, %v3485
        %v4368 = vpack.c.b16 %v3633, %v3486
        %v4369 = vpack.c.b16 %v3634, %v3487
        %v4370 = vpack.c.b16 %v3635, %v3488
        %v4371 = vpack.c.b16 %v3636, %v3489
        %v4372 = vpack.c.b16 %v3637, %v3490
        %v4373 = vpack.c.b16 %v3638, %v3491
        %v4374 = vpack.c.b16 %v3639, %v3492
        %v4375 = vpack.c.b16 %v3640, %v3493
        %v4376 = vpack.c.b16 %v3641, %v3494
        %v4377 = vpack.c.b16 %v3642, %v3495
        %v4378 = vpack.c.b16 %v3643, %v3496
        %v4379 = vpack.c.b16 %v3644, %v3497
        %v4380 = vpack.c.b16 %v3645, %v3498
        %v4381 = vpack.c.b16 %v3646, %v3499
        %v4382 = vpack.c.b16 %v3647, %v3500
        %v4383 = vpack.c.b16 %v3648, %v3501
        %v4384 = vpack.c.b16 %v3649, %v3502
        %v4385 = vpack.c.b16 %v3650, %v3503
        %v4386 = vpack.c.b16 %v3651, %v3504
        %v4387 = vpack.c.b16 %v3652, %v3505
        %v4388 = vpack.c.b16 %v3653, %v3506
        %v4389 = vpack.c.b16 %v3654, %v3507
        %v4390 = vpack.c.b16 %v3655, %v3508
        %v4391 = vpack.c.b16 %v3656, %v3509
        %v4392 = vpack.c.b16 %v3657, %v3510
        %v4393 = vpack.c.b16 %v3658, %v3511
        %v4394 = vpack.c.b16 %v3659, %v3512
        %v4395 = vpack.c.b16 %v3660, %v3513
        %v4396 = vpack.c.b16 %v3661, %v3514
        %v4397 = vpack.c.b16 %v3662, %v3515
        %v4398 = vpack.c.b16 %v3663, %v3516
        %v4399 = vpack.c.b16 %v3664, %v3517
        %v4400 = vpack.c.b16 %v3665, %v3518
        %v4401 = vpack.c.b16 %v3666, %v3519
        %v4402 = vpack.c.b16 %v3667, %v3520
        %v4403 = vpack.c.b16 %v3668, %v3521
        %v4404 = vpack.c.b16 %v3669, %v3522
        %v4405 = vpack.c.b16 %v3670, %v3523
        %v4406 = vpack.c.b16 %v3671, %v3524
        %v4407 = vpack.c.b16 %v3672, %v3525
        %v4408 = vpack.c.b16 %v3673, %v3526
        %v4409 = vpack.c.b16 %v3674, %v3527
        %v4410 = vpack.c.b16 %v3675, %v3528
        %v4411 = vpack.c.b16 %v3676, %v3529
        %v4412 = vpack.c.b16 %v3677, %v3530
        %v4413 = vpack.c.b16 %v3678, %v3531
        %v4414 = vpack.c.b16 %v3679, %v3532
        %v4415 = vpack.c.b16 %v3680, %v3533
        %v4416 = vpack.c.b16 %v3681, %v3534
        %v4417 = vpack.c.b16 %v3682, %v3535
        %v4418 = vpack.c.b16 %v3683, %v3536
        %v4419 = vpack.c.b16 %v3684, %v3537
        %v4420 = vpack.c.b16 %v3685, %v3538
        %v4421 = vpack.c.b16 %v3686, %v3539
        %v4422 = vpack.c.b16 %v3687, %v3540
        %v4423 = vpack.c.b16 %v3688, %v3541
        %v4424 = vpack.c.b16 %v3689, %v3542
        %v4425 = vpack.c.b16 %v3690, %v3543
        %v4426 = vpack.c.b16 %v3691, %v3544
        %v4427 = vpack.c.b16 %v3692, %v3545
        %v4428 = vpack.c.b16 %v3693, %v3546
        %v4429 = vpack.c.b16 %v3694, %v3547
        %v4430 = vpack.c.b16 %v3695, %v3548
        %v4431 = vpack.c.b16 %v3696, %v3549
        %v4432 = vpack.c.b16 %v3697, %v3550
        %v4433 = vpack.c.b16 %v3698, %v3551
        %v4434 = vpack.c.b16 %v3699, %v3552
        %v4435 = vpack.c.b16 %v3700, %v3553
        %v4436 = vpack.c.b16 %v3701, %v3554
        %v4437 = vpack.c.b16 %v3702, %v3555
        %v4438 = vpack.c.b16 %v3703, %v3556
        %v4439 = vpack.c.b16 %v3704, %v3557
        %v4440 = vpack.c.b16 %v3705, %v3558
        %v4441 = vpack.c.b16 %v3706, %v3559
        %v4442 = vpack.c.b16 %v3707, %v3560
        %v4443 = vpack.c.b16 %v3708, %v3561
        %v4444 = vpack.c.b16 %v3709, %v3562
        %v4445 = vpack.c.b16 %v3710, %v3563
        %v4446 = vpack.c.b16 %v3711, %v3564
        %v4447 = vpack.c.b16 %v3712, %v3565
        %v4448 = vpack.c.b16 %v3713, %v3566
        %v4449 = vpack.c.b16 %v3714, %v3567
        %v4450 = vpack.c.b16 %v3715, %v3568
        %v4451 = vpack.c.b16 %v3863, %v3716
        %v4452 = vpack.c.b16 %v3864, %v3717
        %v4453 = vpack.c.b16 %v3865, %v3718
        %v4454 = vpack.c.b16 %v3866, %v3719
        %v4455 = vpack.c.b16 %v3867, %v3720
        %v4456 = vpack.c.b16 %v3868, %v3721
        %v4457 = vpack.c.b16 %v3869, %v3722
        %v4458 = vpack.c.b16 %v3870, %v3723
        %v4459 = vpack.c.b16 %v3871, %v3724
        %v4460 = vpack.c.b16 %v3872, %v3725
        %v4461 = vpack.c.b16 %v3873, %v3726
        %v4462 = vpack.c.b16 %v3874, %v3727
        %v4463 = vpack.c.b16 %v3875, %v3728
        %v4464 = vpack.c.b16 %v3876, %v3729
        %v4465 = vpack.c.b16 %v3877, %v3730
        %v4466 = vpack.c.b16 %v3878, %v3731
        %v4467 = vpack.c.b16 %v3879, %v3732
        %v4468 = vpack.c.b16 %v3880, %v3733
        %v4469 = vpack.c.b16 %v3881, %v3734
        %v4470 = vpack.c.b16 %v3882, %v3735
        %v4471 = vpack.c.b16 %v3883, %v3736
        %v4472 = vpack.c.b16 %v3884, %v3737
        %v4473 = vpack.c.b16 %v3885, %v3738
        %v4474 = vpack.c.b16 %v3886, %v3739
        %v4475 = vpack.c.b16 %v3887, %v3740
        %v4476 = vpack.c.b16 %v3888, %v3741
        %v4477 = vpack.c.b16 %v3889, %v3742
        %v4478 = vpack.c.b16 %v3890, %v3743
        %v4479 = vpack.c.b16 %v3891, %v3744
        %v4480 = vpack.c.b16 %v3892, %v3745
        %v4481 = vpack.c.b16 %v3893, %v3746
        %v4482 = vpack.c.b16 %v3894, %v3747
        %v4483 = vpack.c.b16 %v3895, %v3748
        %v4484 = vpack.c.b16 %v3896, %v3749
        %v4485 = vpack.c.b16 %v3897, %v3750
        %v4486 = vpack.c.b16 %v3898, %v3751
        %v4487 = vpack.c.b16 %v3899, %v3752
        %v4488 = vpack.c.b16 %v3900, %v3753
        %v4489 = vpack.c.b16 %v3901, %v3754
        %v4490 = vpack.c.b16 %v3902, %v3755
        %v4491 = vpack.c.b16 %v3903, %v3756
        %v4492 = vpack.c.b16 %v3904, %v3757
        %v4493 = vpack.c.b16 %v3905, %v3758
        %v4494 = vpack.c.b16 %v3906, %v3759
        %v4495 = vpack.c.b16 %v3907, %v3760
        %v4496 = vpack.c.b16 %v3908, %v3761
        %v4497 = vpack.c.b16 %v3909, %v3762
        %v4498 = vpack.c.b16 %v3910, %v3763
        %v4499 = vpack.c.b16 %v3911, %v3764
        %v4500 = vpack.c.b16 %v3912, %v3765
        %v4501 = vpack.c.b16 %v3913, %v3766
        %v4502 = vpack.c.b16 %v3914, %v3767
        %v4503 = vpack.c.b16 %v3915, %v3768
        %v4504 = vpack.c.b16 %v3916, %v3769
        %v4505 = vpack.c.b16 %v3917, %v3770
        %v4506 = vpack.c.b16 %v3918, %v3771
        %v4507 = vpack.c.b16 %v3919, %v3772
        %v4508 = vpack.c.b16 %v3920, %v3773
        %v4509 = vpack.c.b16 %v3921, %v3774
        %v4510 = vpack.c.b16 %v3922, %v3775
        %v4511 = vpack.c.b16 %v3923, %v3776
        %v4512 = vpack.c.b16 %v3924, %v3777
        %v4513 = vpack.c.b16 %v3925, %v3778
        %v4514 = vpack.c.b16 %v3926, %v3779
        %v4515 = vpack.c.b16 %v3927, %v3780
        %v4516 = vpack.c.b16 %v3928, %v3781
        %v4517 = vpack.c.b16 %v3929, %v3782
        %v4518 = vpack.c.b16 %v3930, %v3783
        %v4519 = vpack.c.b16 %v3931, %v3784
        %v4520 = vpack.c.b16 %v3932, %v3785
        %v4521 = vpack.c.b16 %v3933, %v3786
        %v4522 = vpack.c.b16 %v3934, %v3787
        %v4523 = vpack.c.b16 %v3935, %v3788
        %v4524 = vpack.c.b16 %v3936, %v3789
        %v4525 = vpack.c.b16 %v3937, %v3790
        %v4526 = vpack.c.b16 %v3938, %v3791
        %v4527 = vpack.c.b16 %v3939, %v3792
        %v4528 = vpack.c.b16 %v3940, %v3793
        %v4529 = vpack.c.b16 %v3941, %v3794
        %v4530 = vpack.c.b16 %v3942, %v3795
        %v4531 = vpack.c.b16 %v3943, %v3796
        %v4532 = vpack.c.b16 %v3944, %v3797
        %v4533 = vpack.c.b16 %v3945, %v3798
        %v4534 = vpack.c.b16 %v3946, %v3799
        %v4535 = vpack.c.b16 %v3947, %v3800
        %v4536 = vpack.c.b16 %v3948, %v3801
        %v4537 = vpack.c.b16 %v3949, %v3802
        %v4538 = vpack.c.b16 %v3950, %v3803
        %v4539 = vpack.c.b16 %v3951, %v3804
        %v4540 = vpack.c.b16 %v3952, %v3805
        %v4541 = vpack.c.b16 %v3953, %v3806
        %v4542 = vpack.c.b16 %v3954, %v3807
        %v4543 = vpack.c.b16 %v3955, %v3808
        %v4544 = vpack.c.b16 %v3956, %v3809
        %v4545 = vpack.c.b16 %v3957, %v3810
        %v4546 = vpack.c.b16 %v3958, %v3811
        %v4547 = vpack.c.b16 %v3959, %v3812
        %v4548 = vpack.c.b16 %v3960, %v3813
        %v4549 = vpack.c.b16 %v3961, %v3814
        %v4550 = vpack.c.b16 %v3962, %v3815
        %v4551 = vpack.c.b16 %v3963, %v3816
        %v4552 = vpack.c.b16 %v3964, %v3817
        %v4553 = vpack.c.b16 %v3965, %v3818
        %v4554 = vpack.c.b16 %v3966, %v3819
        %v4555 = vpack.c.b16 %v3967, %v3820
        %v4556 = vpack.c.b16 %v3968, %v3821
        %v4557 = vpack.c.b16 %v3969, %v3822
        %v4558 = vpack.c.b16 %v3970, %v3823
        %v4559 = vpack.c.b16 %v3971, %v3824
        %v4560 = vpack.c.b16 %v3972, %v3825
        %v4561 = vpack.c.b16 %v3973, %v3826
        %v4562 = vpack.c.b16 %v3974, %v3827
        %v4563 = vpack.c.b16 %v3975, %v3828
        %v4564 = vpack.c.b16 %v3976, %v3829
        %v4565 = vpack.c.b16 %v3977, %v3830
        %v4566 = vpack.c.b16 %v3978, %v3831
        %v4567 = vpack.c.b16 %v3979, %v3832
        %v4568 = vpack.c.b16 %v3980, %v3833
        %v4569 = vpack.c.b16 %v3981, %v3834
        %v4570 = vpack.c.b16 %v3982, %v3835
        %v4571 = vpack.c.b16 %v3983, %v3836
        %v4572 = vpack.c.b16 %v3984, %v3837
        %v4573 = vpack.c.b16 %v3985, %v3838
        %v4574 = vpack.c.b16 %v3986, %v3839
        %v4575 = vpack.c.b16 %v3987, %v3840
        %v4576 = vpack.c.b16 %v3988, %v3841
        %v4577 = vpack.c.b16 %v3989, %v3842
        %v4578 = vpack.c.b16 %v3990, %v3843
        %v4579 = vpack.c.b16 %v3991, %v3844
        %v4580 = vpack.c.b16 %v3992, %v3845
        %v4581 = vpack.c.b16 %v3993, %v3846
        %v4582 = vpack.c.b16 %v3994, %v3847
        %v4583 = vpack.c.b16 %v3995, %v3848
        %v4584 = vpack.c.b16 %v3996, %v3849
        %v4585 = vpack.c.b16 %v3997, %v3850
        %v4586 = vpack.c.b16 %v3998, %v3851
        %v4587 = vpack.c.b16 %v3999, %v3852
        %v4588 = vpack.c.b16 %v4000, %v3853
        %v4589 = vpack.c.b16 %v4001, %v3854
        %v4590 = vpack.c.b16 %v4002, %v3855
        %v4591 = vpack.c.b16 %v4003, %v3856
        %v4592 = vpack.c.b16 %v4004, %v3857
        %v4593 = vpack.c.b16 %v4005, %v3858
        %v4594 = vpack.c.b16 %v4006, %v3859
        %v4595 = vpack.c.b16 %v4007, %v3860
        %v4596 = vpack.c.b16 %v4008, %v3861
        %v4597 = vpack.c.b16 %v4009, %v3862
        %vm5186 = vcmask 523264
        %v5188 = vsel %vm5186, %v233, 0
        %5190 = vmatprep.subr.bf16.mxu0 %v4011
        %5191 = vmatpush1.bf16.msra.mxu0 %v4010
        %5192 = vmatprep.subr.bf16.mxu0 %v4158
        %5193 = vmatpush1.bf16.msra.mxu0 %v4157
        %5194 = vmatprep.subr.bf16.mxu0 %v4305
        %5195 = vmatpush1.bf16.msra.mxu0 %v4304
        %5196 = vmatprep.subr.bf16.mxu0 %v4452
        %5197 = vmatpush1.bf16.msra.mxu0 %v4451
        %5198 = vmatprep.subr.bf16.mxu0 0
        %5199 = vmatpush1.bf16.msra.mxu0 0
        %5200 = vmatprep.subr.bf16.mxu0 0
        %5201 = vmatpush1.bf16.msra.mxu0 0
        %5202 = vmatprep.subr.bf16.mxu0 0
        %5203 = vmatpush1.bf16.msra.mxu0 0
        %5204 = vmatprep.subr.bf16.mxu0 0
        %5205 = vmatpush1.bf16.msra.mxu0 0
        %5206 = vmatprep.subr.bf16.mxu0 0
        %5207 = vmatpush1.bf16.msra.mxu0 0
        %5208 = vmatprep.subr.bf16.mxu0 0
        %5209 = vmatpush1.bf16.msra.mxu0 0
        %5210 = vmatprep.subr.bf16.mxu0 0
        %5211 = vmatpush1.bf16.msra.mxu0 0
        %5212 = vmatprep.subr.bf16.mxu0 0
        %5213 = vmatpush1.bf16.msra.mxu0 0
        %5214 = vmatprep.subr.bf16.mxu0 0
        %5215 = vmatpush1.bf16.msra.mxu0 0
        %5216 = vmatprep.subr.bf16.mxu0 0
        %5217 = vmatpush1.bf16.msra.mxu0 0
        %5218 = vmatprep.subr.bf16.mxu0 0
        %5219 = vmatpush1.bf16.msra.mxu0 0
        %5220 = vmatprep.subr.bf16.mxu0 0
        %5221 = vmatpush1.bf16.msra.mxu0 0
        %5222 = vmatprep.mubr.bf16.mxu0 0
        %5223 = vmatmul.mubr.bf16.gmra.mrb[0].mxu0 %v5188
        %v5224 = vpop.f32.mrb[0].mxu0
        %v5225 = vadd.f32 %v1657, %v5224
        %v5226 = vpop.f32.mrb[0].mxu0
        %v5227 = vadd.f32 %v1661, %v5226
        %v5228 = vpop.f32.mrb[0].mxu0
        %v5229 = vpop.f32.mrb[0].mxu0
        %5230 = vdwg.mxu0
        %5231 = vmatprep.subr.bf16.mxu0 %v4013
        %5232 = vmatpush1.bf16.msra.mxu0 %v4012
        %5233 = vmatprep.subr.bf16.mxu0 %v4160
        %5234 = vmatpush1.bf16.msra.mxu0 %v4159
        %5235 = vmatprep.subr.bf16.mxu0 %v4307
        %5236 = vmatpush1.bf16.msra.mxu0 %v4306
        %5237 = vmatprep.subr.bf16.mxu0 %v4454
        %5238 = vmatpush1.bf16.msra.mxu0 %v4453
        %5239 = vmatprep.subr.bf16.mxu0 0
        %5240 = vmatpush1.bf16.msra.mxu0 0
        %5241 = vmatprep.subr.bf16.mxu0 0
        %5242 = vmatpush1.bf16.msra.mxu0 0
        %5243 = vmatprep.subr.bf16.mxu0 0
        %5244 = vmatpush1.bf16.msra.mxu0 0
        %5245 = vmatprep.subr.bf16.mxu0 0
        %5246 = vmatpush1.bf16.msra.mxu0 0
        %5247 = vmatprep.subr.bf16.mxu0 0
        %5248 = vmatpush1.bf16.msra.mxu0 0
        %5249 = vmatprep.subr.bf16.mxu0 0
        %5250 = vmatpush1.bf16.msra.mxu0 0
        %5251 = vmatprep.subr.bf16.mxu0 0
        %5252 = vmatpush1.bf16.msra.mxu0 0
        %5253 = vmatprep.subr.bf16.mxu0 0
        %5254 = vmatpush1.bf16.msra.mxu0 0
        %5255 = vmatprep.subr.bf16.mxu0 0
        %5256 = vmatpush1.bf16.msra.mxu0 0
        %5257 = vmatprep.subr.bf16.mxu0 0
        %5258 = vmatpush1.bf16.msra.mxu0 0
        %5259 = vmatprep.subr.bf16.mxu0 0
        %5260 = vmatpush1.bf16.msra.mxu0 0
        %5261 = vmatprep.subr.bf16.mxu0 0
        %5262 = vmatpush1.bf16.msra.mxu0 0
        %5263 = vmatprep.mubr.bf16.mxu0 0
        %5264 = vmatmul.mubr.bf16.gmra.mrb[0].mxu0 %v5188
        %v5265 = vpop.f32.mrb[0].mxu0
        %v5266 = vadd.f32 %v1665, %v5265
        %v5267 = vpop.f32.mrb[0].mxu0
        %v5268 = vadd.f32 %v1669, %v5267
        %v5269 = vpop.f32.mrb[0].mxu0
        %v5270 = vpop.f32.mrb[0].mxu0
        %5271 = vdwg.mxu0
        %5272 = vmatprep.subr.bf16.mxu0 %v4015
        %5273 = vmatpush1.bf16.msra.mxu0 %v4014
        %5274 = vmatprep.subr.bf16.mxu0 %v4162
        %5275 = vmatpush1.bf16.msra.mxu0 %v4161
        %5276 = vmatprep.subr.bf16.mxu0 %v4309
        %5277 = vmatpush1.bf16.msra.mxu0 %v4308
        %5278 = vmatprep.subr.bf16.mxu0 %v4456
        %5279 = vmatpush1.bf16.msra.mxu0 %v4455
        %5280 = vmatprep.subr.bf16.mxu0 0
        %5281 = vmatpush1.bf16.msra.mxu0 0
        %5282 = vmatprep.subr.bf16.mxu0 0
        %5283 = vmatpush1.bf16.msra.mxu0 0
        %5284 = vmatprep.subr.bf16.mxu0 0
        %5285 = vmatpush1.bf16.msra.mxu0 0
        %5286 = vmatprep.subr.bf16.mxu0 0
        %5287 = vmatpush1.bf16.msra.mxu0 0
        %5288 = vmatprep.subr.bf16.mxu0 0
        %5289 = vmatpush1.bf16.msra.mxu0 0
        %5290 = vmatprep.subr.bf16.mxu0 0
        %5291 = vmatpush1.bf16.msra.mxu0 0
        %5292 = vmatprep.subr.bf16.mxu0 0
        %5293 = vmatpush1.bf16.msra.mxu0 0
        %5294 = vmatprep.subr.bf16.mxu0 0
        %5295 = vmatpush1.bf16.msra.mxu0 0
        %5296 = vmatprep.subr.bf16.mxu0 0
        %5297 = vmatpush1.bf16.msra.mxu0 0
        %5298 = vmatprep.subr.bf16.mxu0 0
        %5299 = vmatpush1.bf16.msra.mxu0 0
        %5300 = vmatprep.subr.bf16.mxu0 0
        %5301 = vmatpush1.bf16.msra.mxu0 0
        %5302 = vmatprep.subr.bf16.mxu0 0
        %5303 = vmatpush1.bf16.msra.mxu0 0
        %5304 = vmatprep.mubr.bf16.mxu0 0
        %5305 = vmatmul.mubr.bf16.gmra.mrb[0].mxu0 %v5188
        %v5306 = vpop.f32.mrb[0].mxu0
        %v5307 = vadd.f32 %v1673, %v5306
        %v5308 = vpop.f32.mrb[0].mxu0
        %v5309 = vadd.f32 %v1677, %v5308
        %v5310 = vpop.f32.mrb[0].mxu0
        %v5311 = vpop.f32.mrb[0].mxu0
        %5312 = vdwg.mxu0
        %5313 = vmatprep.subr.bf16.mxu0 %v4017
        %5314 = vmatpush1.bf16.msra.mxu0 %v4016
        %5315 = vmatprep.subr.bf16.mxu0 %v4164
        %5316 = vmatpush1.bf16.msra.mxu0 %v4163
        %5317 = vmatprep.subr.bf16.mxu0 %v4311
        %5318 = vmatpush1.bf16.msra.mxu0 %v4310
        %5319 = vmatprep.subr.bf16.mxu0 %v4458
        %5320 = vmatpush1.bf16.msra.mxu0 %v4457
        %5321 = vmatprep.subr.bf16.mxu0 0
        %5322 = vmatpush1.bf16.msra.mxu0 0
        %5323 = vmatprep.subr.bf16.mxu0 0
        %5324 = vmatpush1.bf16.msra.mxu0 0
        %5325 = vmatprep.subr.bf16.mxu0 0
        %5326 = vmatpush1.bf16.msra.mxu0 0
        %5327 = vmatprep.subr.bf16.mxu0 0
        %5328 = vmatpush1.bf16.msra.mxu0 0
        %5329 = vmatprep.subr.bf16.mxu0 0
        %5330 = vmatpush1.bf16.msra.mxu0 0
        %5331 = vmatprep.subr.bf16.mxu0 0
        %5332 = vmatpush1.bf16.msra.mxu0 0
        %5333 = vmatprep.subr.bf16.mxu0 0
        %5334 = vmatpush1.bf16.msra.mxu0 0
        %5335 = vmatprep.subr.bf16.mxu0 0
        %5336 = vmatpush1.bf16.msra.mxu0 0
        %5337 = vmatprep.subr.bf16.mxu0 0
        %5338 = vmatpush1.bf16.msra.mxu0 0
        %5339 = vmatprep.subr.bf16.mxu0 0
        %5340 = vmatpush1.bf16.msra.mxu0 0
        %5341 = vmatprep.subr.bf16.mxu0 0
        %5342 = vmatpush1.bf16.msra.mxu0 0
        %5343 = vmatprep.subr.bf16.mxu0 0
        %5344 = vmatpush1.bf16.msra.mxu0 0
        %5345 = vmatprep.mubr.bf16.mxu0 0
        %5346 = vmatmul.mubr.bf16.gmra.mrb[0].mxu0 %v5188
        %v5347 = vpop.f32.mrb[0].mxu0
        %v5348 = vadd.f32 %v1681, %v5347
        %v5349 = vpop.f32.mrb[0].mxu0
        %v5350 = vadd.f32 %v1685, %v5349
        %v5351 = vpop.f32.mrb[0].mxu0
        %v5352 = vpop.f32.mrb[0].mxu0
        %5353 = vdwg.mxu0
        %5354 = vmatprep.subr.bf16.mxu0 %v4019
        %5355 = vmatpush1.bf16.msra.mxu0 %v4018
        %5356 = vmatprep.subr.bf16.mxu0 %v4166
        %5357 = vmatpush1.bf16.msra.mxu0 %v4165
        %5358 = vmatprep.subr.bf16.mxu0 %v4313
        %5359 = vmatpush1.bf16.msra.mxu0 %v4312
        %5360 = vmatprep.subr.bf16.mxu0 %v4460
        %5361 = vmatpush1.bf16.msra.mxu0 %v4459
        %5362 = vmatprep.subr.bf16.mxu0 0
        %5363 = vmatpush1.bf16.msra.mxu0 0
        %5364 = vmatprep.subr.bf16.mxu0 0
        %5365 = vmatpush1.bf16.msra.mxu0 0
        %5366 = vmatprep.subr.bf16.mxu0 0
        %5367 = vmatpush1.bf16.msra.mxu0 0
        %5368 = vmatprep.subr.bf16.mxu0 0
        %5369 = vmatpush1.bf16.msra.mxu0 0
        %5370 = vmatprep.subr.bf16.mxu0 0
        %5371 = vmatpush1.bf16.msra.mxu0 0
        %5372 = vmatprep.subr.bf16.mxu0 0
        %5373 = vmatpush1.bf16.msra.mxu0 0
        %5374 = vmatprep.subr.bf16.mxu0 0
        %5375 = vmatpush1.bf16.msra.mxu0 0
        %5376 = vmatprep.subr.bf16.mxu0 0
        %5377 = vmatpush1.bf16.msra.mxu0 0
        %5378 = vmatprep.subr.bf16.mxu0 0
        %5379 = vmatpush1.bf16.msra.mxu0 0
        %5380 = vmatprep.subr.bf16.mxu0 0
        %5381 = vmatpush1.bf16.msra.mxu0 0
        %5382 = vmatprep.subr.bf16.mxu0 0
        %5383 = vmatpush1.bf16.msra.mxu0 0
        %5384 = vmatprep.subr.bf16.mxu0 0
        %5385 = vmatpush1.bf16.msra.mxu0 0
        %5386 = vmatprep.mubr.bf16.mxu0 0
        %5387 = vmatmul.mubr.bf16.gmra.mrb[0].mxu0 %v5188
        %v5388 = vpop.f32.mrb[0].mxu0
        %v5389 = vadd.f32 %v1689, %v5388
        %v5390 = vpop.f32.mrb[0].mxu0
        %v5391 = vadd.f32 %v1693, %v5390
        %v5392 = vpop.f32.mrb[0].mxu0
        %v5393 = vpop.f32.mrb[0].mxu0
        %5394 = vdwg.mxu0
        %5395 = vmatprep.subr.bf16.mxu0 %v4021
        %5396 = vmatpush1.bf16.msra.mxu0 %v4020
        %5397 = vmatprep.subr.bf16.mxu0 %v4168
        %5398 = vmatpush1.bf16.msra.mxu0 %v4167
        %5399 = vmatprep.subr.bf16.mxu0 %v4315
        %5400 = vmatpush1.bf16.msra.mxu0 %v4314
        %5401 = vmatprep.subr.bf16.mxu0 %v4462
        %5402 = vmatpush1.bf16.msra.mxu0 %v4461
        %5403 = vmatprep.subr.bf16.mxu0 0
        %5404 = vmatpush1.bf16.msra.mxu0 0
        %5405 = vmatprep.subr.bf16.mxu0 0
        %5406 = vmatpush1.bf16.msra.mxu0 0
        %5407 = vmatprep.subr.bf16.mxu0 0
        %5408 = vmatpush1.bf16.msra.mxu0 0
        %5409 = vmatprep.subr.bf16.mxu0 0
        %5410 = vmatpush1.bf16.msra.mxu0 0
        %5411 = vmatprep.subr.bf16.mxu0 0
        %5412 = vmatpush1.bf16.msra.mxu0 0
        %5413 = vmatprep.subr.bf16.mxu0 0
        %5414 = vmatpush1.bf16.msra.mxu0 0
        %5415 = vmatprep.subr.bf16.mxu0 0
        %5416 = vmatpush1.bf16.msra.mxu0 0
        %5417 = vmatprep.subr.bf16.mxu0 0
        %5418 = vmatpush1.bf16.msra.mxu0 0
        %5419 = vmatprep.subr.bf16.mxu0 0
        %5420 = vmatpush1.bf16.msra.mxu0 0
        %5421 = vmatprep.subr.bf16.mxu0 0
        %5422 = vmatpush1.bf16.msra.mxu0 0
        %5423 = vmatprep.subr.bf16.mxu0 0
        %5424 = vmatpush1.bf16.msra.mxu0 0
        %5425 = vmatprep.subr.bf16.mxu0 0
        %5426 = vmatpush1.bf16.msra.mxu0 0
        %5427 = vmatprep.mubr.bf16.mxu0 0
        %5428 = vmatmul.mubr.bf16.gmra.mrb[0].mxu0 %v5188
        %v5429 = vpop.f32.mrb[0].mxu0
        %v5430 = vadd.f32 %v1697, %v5429
        %v5431 = vpop.f32.mrb[0].mxu0
        %v5432 = vadd.f32 %v1701, %v5431
        %v5433 = vpop.f32.mrb[0].mxu0
        %v5434 = vpop.f32.mrb[0].mxu0
        %5435 = vdwg.mxu0
        %5436 = vmatprep.subr.bf16.mxu0 %v4023
        %5437 = vmatpush1.bf16.msra.mxu0 %v4022
        %5438 = vmatprep.subr.bf16.mxu0 %v4170
        %5439 = vmatpush1.bf16.msra.mxu0 %v4169
        %5440 = vmatprep.subr.bf16.mxu0 %v4317
        %5441 = vmatpush1.bf16.msra.mxu0 %v4316
        %5442 = vmatprep.subr.bf16.mxu0 %v4464
        %5443 = vmatpush1.bf16.msra.mxu0 %v4463
        %5444 = vmatprep.subr.bf16.mxu0 0
        %5445 = vmatpush1.bf16.msra.mxu0 0
        %5446 = vmatprep.subr.bf16.mxu0 0
        %5447 = vmatpush1.bf16.msra.mxu0 0
        %5448 = vmatprep.subr.bf16.mxu0 0
        %5449 = vmatpush1.bf16.msra.mxu0 0
        %5450 = vmatprep.subr.bf16.mxu0 0
        %5451 = vmatpush1.bf16.msra.mxu0 0
        %5452 = vmatprep.subr.bf16.mxu0 0
        %5453 = vmatpush1.bf16.msra.mxu0 0
        %5454 = vmatprep.subr.bf16.mxu0 0
        %5455 = vmatpush1.bf16.msra.mxu0 0
        %5456 = vmatprep.subr.bf16.mxu0 0
        %5457 = vmatpush1.bf16.msra.mxu0 0
        %5458 = vmatprep.subr.bf16.mxu0 0
        %5459 = vmatpush1.bf16.msra.mxu0 0
        %5460 = vmatprep.subr.bf16.mxu0 0
        %5461 = vmatpush1.bf16.msra.mxu0 0
        %5462 = vmatprep.subr.bf16.mxu0 0
        %5463 = vmatpush1.bf16.msra.mxu0 0
        %5464 = vmatprep.subr.bf16.mxu0 0
        %5465 = vmatpush1.bf16.msra.mxu0 0
        %5466 = vmatprep.subr.bf16.mxu0 0
        %5467 = vmatpush1.bf16.msra.mxu0 0
        %5468 = vmatprep.mubr.bf16.mxu0 0
        %5469 = vmatmul.mubr.bf16.gmra.mrb[0].mxu0 %v5188
        %v5470 = vpop.f32.mrb[0].mxu0
        %v5471 = vadd.f32 %v1705, %v5470
        %v5472 = vpop.f32.mrb[0].mxu0
        %v5473 = vadd.f32 %v1709, %v5472
        %v5474 = vpop.f32.mrb[0].mxu0
        %v5475 = vpop.f32.mrb[0].mxu0
        %5476 = vdwg.mxu0
        %5477 = vmatprep.subr.bf16.mxu0 %v4025
        %5478 = vmatpush1.bf16.msra.mxu0 %v4024
        %5479 = vmatprep.subr.bf16.mxu0 %v4172
        %5480 = vmatpush1.bf16.msra.mxu0 %v4171
        %5481 = vmatprep.subr.bf16.mxu0 %v4319
        %5482 = vmatpush1.bf16.msra.mxu0 %v4318
        %5483 = vmatprep.subr.bf16.mxu0 %v4466
        %5484 = vmatpush1.bf16.msra.mxu0 %v4465
        %5485 = vmatprep.subr.bf16.mxu0 0
        %5486 = vmatpush1.bf16.msra.mxu0 0
        %5487 = vmatprep.subr.bf16.mxu0 0
        %5488 = vmatpush1.bf16.msra.mxu0 0
        %5489 = vmatprep.subr.bf16.mxu0 0
        %5490 = vmatpush1.bf16.msra.mxu0 0
        %5491 = vmatprep.subr.bf16.mxu0 0
        %5492 = vmatpush1.bf16.msra.mxu0 0
        %5493 = vmatprep.subr.bf16.mxu0 0
        %5494 = vmatpush1.bf16.msra.mxu0 0
        %5495 = vmatprep.subr.bf16.mxu0 0
        %5496 = vmatpush1.bf16.msra.mxu0 0
        %5497 = vmatprep.subr.bf16.mxu0 0
        %5498 = vmatpush1.bf16.msra.mxu0 0
        %5499 = vmatprep.subr.bf16.mxu0 0
        %5500 = vmatpush1.bf16.msra.mxu0 0
        %5501 = vmatprep.subr.bf16.mxu0 0
        %5502 = vmatpush1.bf16.msra.mxu0 0
        %5503 = vmatprep.subr.bf16.mxu0 0
        %5504 = vmatpush1.bf16.msra.mxu0 0
        %5505 = vmatprep.subr.bf16.mxu0 0
        %5506 = vmatpush1.bf16.msra.mxu0 0
        %5507 = vmatprep.subr.bf16.mxu0 0
        %5508 = vmatpush1.bf16.msra.mxu0 0
        %5509 = vmatprep.mubr.bf16.mxu0 0
        %5510 = vmatmul.mubr.bf16.gmra.mrb[0].mxu0 %v5188
        %v5511 = vpop.f32.mrb[0].mxu0
        %v5512 = vadd.f32 %v1713, %v5511
        %v5513 = vpop.f32.mrb[0].mxu0
        %v5514 = vadd.f32 %v1717, %v5513
        %v5515 = vpop.f32.mrb[0].mxu0
        %v5516 = vpop.f32.mrb[0].mxu0
        %5517 = vdwg.mxu0
        %5518 = vmatprep.subr.bf16.mxu0 %v4027
        %5519 = vmatpush1.bf16.msra.mxu0 %v4026
        %5520 = vmatprep.subr.bf16.mxu0 %v4174
        %5521 = vmatpush1.bf16.msra.mxu0 %v4173
        %5522 = vmatprep.subr.bf16.mxu0 %v4321
        %5523 = vmatpush1.bf16.msra.mxu0 %v4320
        %5524 = vmatprep.subr.bf16.mxu0 %v4468
        %5525 = vmatpush1.bf16.msra.mxu0 %v4467
        %5526 = vmatprep.subr.bf16.mxu0 0
        %5527 = vmatpush1.bf16.msra.mxu0 0
        %5528 = vmatprep.subr.bf16.mxu0 0
        %5529 = vmatpush1.bf16.msra.mxu0 0
        %5530 = vmatprep.subr.bf16.mxu0 0
        %5531 = vmatpush1.bf16.msra.mxu0 0
        %5532 = vmatprep.subr.bf16.mxu0 0
        %5533 = vmatpush1.bf16.msra.mxu0 0
        %5534 = vmatprep.subr.bf16.mxu0 0
        %5535 = vmatpush1.bf16.msra.mxu0 0
        %5536 = vmatprep.subr.bf16.mxu0 0
        %5537 = vmatpush1.bf16.msra.mxu0 0
        %5538 = vmatprep.subr.bf16.mxu0 0
        %5539 = vmatpush1.bf16.msra.mxu0 0
        %5540 = vmatprep.subr.bf16.mxu0 0
        %5541 = vmatpush1.bf16.msra.mxu0 0
        %5542 = vmatprep.subr.bf16.mxu0 0
        %5543 = vmatpush1.bf16.msra.mxu0 0
        %5544 = vmatprep.subr.bf16.mxu0 0
        %5545 = vmatpush1.bf16.msra.mxu0 0
        %5546 = vmatprep.subr.bf16.mxu0 0
        %5547 = vmatpush1.bf16.msra.mxu0 0
        %5548 = vmatprep.subr.bf16.mxu0 0
        %5549 = vmatpush1.bf16.msra.mxu0 0
        %5550 = vmatprep.mubr.bf16.mxu0 0
        %5551 = vmatmul.mubr.bf16.gmra.mrb[0].mxu0 %v5188
        %v5552 = vpop.f32.mrb[0].mxu0
        %v5553 = vadd.f32 %v1721, %v5552
        %v5554 = vpop.f32.mrb[0].mxu0
        %v5555 = vadd.f32 %v1725, %v5554
        %v5556 = vpop.f32.mrb[0].mxu0
        %v5557 = vpop.f32.mrb[0].mxu0
        %5558 = vdwg.mxu0
        %5559 = vmatprep.subr.bf16.mxu0 %v4029
        %5560 = vmatpush1.bf16.msra.mxu0 %v4028
        %5561 = vmatprep.subr.bf16.mxu0 %v4176
        %5562 = vmatpush1.bf16.msra.mxu0 %v4175
        %5563 = vmatprep.subr.bf16.mxu0 %v4323
        %5564 = vmatpush1.bf16.msra.mxu0 %v4322
        %5565 = vmatprep.subr.bf16.mxu0 %v4470
        %5566 = vmatpush1.bf16.msra.mxu0 %v4469
        %5567 = vmatprep.subr.bf16.mxu0 0
        %5568 = vmatpush1.bf16.msra.mxu0 0
        %5569 = vmatprep.subr.bf16.mxu0 0
        %5570 = vmatpush1.bf16.msra.mxu0 0
        %5571 = vmatprep.subr.bf16.mxu0 0
        %5572 = vmatpush1.bf16.msra.mxu0 0
        %5573 = vmatprep.subr.bf16.mxu0 0
        %5574 = vmatpush1.bf16.msra.mxu0 0
        %5575 = vmatprep.subr.bf16.mxu0 0
        %5576 = vmatpush1.bf16.msra.mxu0 0
        %5577 = vmatprep.subr.bf16.mxu0 0
        %5578 = vmatpush1.bf16.msra.mxu0 0
        %5579 = vmatprep.subr.bf16.mxu0 0
        %5580 = vmatpush1.bf16.msra.mxu0 0
        %5581 = vmatprep.subr.bf16.mxu0 0
        %5582 = vmatpush1.bf16.msra.mxu0 0
        %5583 = vmatprep.subr.bf16.mxu0 0
        %5584 = vmatpush1.bf16.msra.mxu0 0
        %5585 = vmatprep.subr.bf16.mxu0 0
        %5586 = vmatpush1.bf16.msra.mxu0 0
        %5587 = vmatprep.subr.bf16.mxu0 0
        %5588 = vmatpush1.bf16.msra.mxu0 0
        %5589 = vmatprep.subr.bf16.mxu0 0
        %5590 = vmatpush1.bf16.msra.mxu0 0
        %5591 = vmatprep.mubr.bf16.mxu0 0
        %5592 = vmatmul.mubr.bf16.gmra.mrb[0].mxu0 %v5188
        %v5593 = vpop.f32.mrb[0].mxu0
        %v5594 = vadd.f32 %v1729, %v5593
        %v5595 = vpop.f32.mrb[0].mxu0
        %v5596 = vadd.f32 %v1733, %v5595
        %v5597 = vpop.f32.mrb[0].mxu0
        %v5598 = vpop.f32.mrb[0].mxu0
        %5599 = vdwg.mxu0
        %5600 = vmatprep.subr.bf16.mxu0 %v4031
        %5601 = vmatpush1.bf16.msra.mxu0 %v4030
        %5602 = vmatprep.subr.bf16.mxu0 %v4178
        %5603 = vmatpush1.bf16.msra.mxu0 %v4177
        %5604 = vmatprep.subr.bf16.mxu0 %v4325
        %5605 = vmatpush1.bf16.msra.mxu0 %v4324
        %5606 = vmatprep.subr.bf16.mxu0 %v4472
        %5607 = vmatpush1.bf16.msra.mxu0 %v4471
        %5608 = vmatprep.subr.bf16.mxu0 0
        %5609 = vmatpush1.bf16.msra.mxu0 0
        %5610 = vmatprep.subr.bf16.mxu0 0
        %5611 = vmatpush1.bf16.msra.mxu0 0
        %5612 = vmatprep.subr.bf16.mxu0 0
        %5613 = vmatpush1.bf16.msra.mxu0 0
        %5614 = vmatprep.subr.bf16.mxu0 0
        %5615 = vmatpush1.bf16.msra.mxu0 0
        %5616 = vmatprep.subr.bf16.mxu0 0
        %5617 = vmatpush1.bf16.msra.mxu0 0
        %5618 = vmatprep.subr.bf16.mxu0 0
        %5619 = vmatpush1.bf16.msra.mxu0 0
        %5620 = vmatprep.subr.bf16.mxu0 0
        %5621 = vmatpush1.bf16.msra.mxu0 0
        %5622 = vmatprep.subr.bf16.mxu0 0
        %5623 = vmatpush1.bf16.msra.mxu0 0
        %5624 = vmatprep.subr.bf16.mxu0 0
        %5625 = vmatpush1.bf16.msra.mxu0 0
        %5626 = vmatprep.subr.bf16.mxu0 0
        %5627 = vmatpush1.bf16.msra.mxu0 0
        %5628 = vmatprep.subr.bf16.mxu0 0
        %5629 = vmatpush1.bf16.msra.mxu0 0
        %5630 = vmatprep.subr.bf16.mxu0 0
        %5631 = vmatpush1.bf16.msra.mxu0 0
        %5632 = vmatprep.mubr.bf16.mxu0 0
        %5633 = vmatmul.mubr.bf16.gmra.mrb[0].mxu0 %v5188
        %v5634 = vpop.f32.mrb[0].mxu0
        %v5635 = vadd.f32 %v1737, %v5634
        %v5636 = vpop.f32.mrb[0].mxu0
        %v5637 = vadd.f32 %v1741, %v5636
        %v5638 = vpop.f32.mrb[0].mxu0
        %v5639 = vpop.f32.mrb[0].mxu0
        %5640 = vdwg.mxu0
        %5641 = vmatprep.subr.bf16.mxu0 %v4033
        %5642 = vmatpush1.bf16.msra.mxu0 %v4032
        %5643 = vmatprep.subr.bf16.mxu0 %v4180
        %5644 = vmatpush1.bf16.msra.mxu0 %v4179
        %5645 = vmatprep.subr.bf16.mxu0 %v4327
        %5646 = vmatpush1.bf16.msra.mxu0 %v4326
        %5647 = vmatprep.subr.bf16.mxu0 %v4474
        %5648 = vmatpush1.bf16.msra.mxu0 %v4473
        %5649 = vmatprep.subr.bf16.mxu0 0
        %5650 = vmatpush1.bf16.msra.mxu0 0
        %5651 = vmatprep.subr.bf16.mxu0 0
        %5652 = vmatpush1.bf16.msra.mxu0 0
        %5653 = vmatprep.subr.bf16.mxu0 0
        %5654 = vmatpush1.bf16.msra.mxu0 0
        %5655 = vmatprep.subr.bf16.mxu0 0
        %5656 = vmatpush1.bf16.msra.mxu0 0
        %5657 = vmatprep.subr.bf16.mxu0 0
        %5658 = vmatpush1.bf16.msra.mxu0 0
        %5659 = vmatprep.subr.bf16.mxu0 0
        %5660 = vmatpush1.bf16.msra.mxu0 0
        %5661 = vmatprep.subr.bf16.mxu0 0
        %5662 = vmatpush1.bf16.msra.mxu0 0
        %5663 = vmatprep.subr.bf16.mxu0 0
        %5664 = vmatpush1.bf16.msra.mxu0 0
        %5665 = vmatprep.subr.bf16.mxu0 0
        %5666 = vmatpush1.bf16.msra.mxu0 0
        %5667 = vmatprep.subr.bf16.mxu0 0
        %5668 = vmatpush1.bf16.msra.mxu0 0
        %5669 = vmatprep.subr.bf16.mxu0 0
        %5670 = vmatpush1.bf16.msra.mxu0 0
        %5671 = vmatprep.subr.bf16.mxu0 0
        %5672 = vmatpush1.bf16.msra.mxu0 0
        %5673 = vmatprep.mubr.bf16.mxu0 0
        %5674 = vmatmul.mubr.bf16.gmra.mrb[0].mxu0 %v5188
        %v5675 = vpop.f32.mrb[0].mxu0
        %v5676 = vadd.f32 %v1745, %v5675
        %v5677 = vpop.f32.mrb[0].mxu0
        %v5678 = vadd.f32 %v1749, %v5677
        %v5679 = vpop.f32.mrb[0].mxu0
        %v5680 = vpop.f32.mrb[0].mxu0
        %5681 = vdwg.mxu0
        %5682 = vmatprep.subr.bf16.mxu0 %v4035
        %5683 = vmatpush1.bf16.msra.mxu0 %v4034
        %5684 = vmatprep.subr.bf16.mxu0 %v4182
        %5685 = vmatpush1.bf16.msra.mxu0 %v4181
        %5686 = vmatprep.subr.bf16.mxu0 %v4329
        %5687 = vmatpush1.bf16.msra.mxu0 %v4328
        %5688 = vmatprep.subr.bf16.mxu0 %v4476
        %5689 = vmatpush1.bf16.msra.mxu0 %v4475
        %5690 = vmatprep.subr.bf16.mxu0 0
        %5691 = vmatpush1.bf16.msra.mxu0 0
        %5692 = vmatprep.subr.bf16.mxu0 0
        %5693 = vmatpush1.bf16.msra.mxu0 0
        %5694 = vmatprep.subr.bf16.mxu0 0
        %5695 = vmatpush1.bf16.msra.mxu0 0
        %5696 = vmatprep.subr.bf16.mxu0 0
        %5697 = vmatpush1.bf16.msra.mxu0 0
        %5698 = vmatprep.subr.bf16.mxu0 0
        %5699 = vmatpush1.bf16.msra.mxu0 0
        %5700 = vmatprep.subr.bf16.mxu0 0
        %5701 = vmatpush1.bf16.msra.mxu0 0
        %5702 = vmatprep.subr.bf16.mxu0 0
        %5703 = vmatpush1.bf16.msra.mxu0 0
        %5704 = vmatprep.subr.bf16.mxu0 0
        %5705 = vmatpush1.bf16.msra.mxu0 0
        %5706 = vmatprep.subr.bf16.mxu0 0
        %5707 = vmatpush1.bf16.msra.mxu0 0
        %5708 = vmatprep.subr.bf16.mxu0 0
        %5709 = vmatpush1.bf16.msra.mxu0 0
        %5710 = vmatprep.subr.bf16.mxu0 0
        %5711 = vmatpush1.bf16.msra.mxu0 0
        %5712 = vmatprep.subr.bf16.mxu0 0
        %5713 = vmatpush1.bf16.msra.mxu0 0
        %5714 = vmatprep.mubr.bf16.mxu0 0
        %5715 = vmatmul.mubr.bf16.gmra.mrb[0].mxu0 %v5188
        %v5716 = vpop.f32.mrb[0].mxu0
        %v5717 = vadd.f32 %v1753, %v5716
        %v5718 = vpop.f32.mrb[0].mxu0
        %v5719 = vadd.f32 %v1757, %v5718
        %v5720 = vpop.f32.mrb[0].mxu0
        %v5721 = vpop.f32.mrb[0].mxu0
        %5722 = vdwg.mxu0
        %5723 = vmatprep.subr.bf16.mxu0 %v4037
        %5724 = vmatpush1.bf16.msra.mxu0 %v4036
        %5725 = vmatprep.subr.bf16.mxu0 %v4184
        %5726 = vmatpush1.bf16.msra.mxu0 %v4183
        %5727 = vmatprep.subr.bf16.mxu0 %v4331
        %5728 = vmatpush1.bf16.msra.mxu0 %v4330
        %5729 = vmatprep.subr.bf16.mxu0 %v4478
        %5730 = vmatpush1.bf16.msra.mxu0 %v4477
        %5731 = vmatprep.subr.bf16.mxu0 0
        %5732 = vmatpush1.bf16.msra.mxu0 0
        %5733 = vmatprep.subr.bf16.mxu0 0
        %5734 = vmatpush1.bf16.msra.mxu0 0
        %5735 = vmatprep.subr.bf16.mxu0 0
        %5736 = vmatpush1.bf16.msra.mxu0 0
        %5737 = vmatprep.subr.bf16.mxu0 0
        %5738 = vmatpush1.bf16.msra.mxu0 0
        %5739 = vmatprep.subr.bf16.mxu0 0
        %5740 = vmatpush1.bf16.msra.mxu0 0
        %5741 = vmatprep.subr.bf16.mxu0 0
        %5742 = vmatpush1.bf16.msra.mxu0 0
        %5743 = vmatprep.subr.bf16.mxu0 0
        %5744 = vmatpush1.bf16.msra.mxu0 0
        %5745 = vmatprep.subr.bf16.mxu0 0
        %5746 = vmatpush1.bf16.msra.mxu0 0
        %5747 = vmatprep.subr.bf16.mxu0 0
        %5748 = vmatpush1.bf16.msra.mxu0 0
        %5749 = vmatprep.subr.bf16.mxu0 0
        %5750 = vmatpush1.bf16.msra.mxu0 0
        %5751 = vmatprep.subr.bf16.mxu0 0
        %5752 = vmatpush1.bf16.msra.mxu0 0
        %5753 = vmatprep.subr.bf16.mxu0 0
        %5754 = vmatpush1.bf16.msra.mxu0 0
        %5755 = vmatprep.mubr.bf16.mxu0 0
        %5756 = vmatmul.mubr.bf16.gmra.mrb[0].mxu0 %v5188
        %v5757 = vpop.f32.mrb[0].mxu0
        %v5758 = vadd.f32 %v1761, %v5757
        %v5759 = vpop.f32.mrb[0].mxu0
        %v5760 = vadd.f32 %v1765, %v5759
        %v5761 = vpop.f32.mrb[0].mxu0
        %v5762 = vpop.f32.mrb[0].mxu0
        %5763 = vdwg.mxu0
        %5764 = vmatprep.subr.bf16.mxu0 %v4039
        %5765 = vmatpush1.bf16.msra.mxu0 %v4038
        %5766 = vmatprep.subr.bf16.mxu0 %v4186
        %5767 = vmatpush1.bf16.msra.mxu0 %v4185
        %5768 = vmatprep.subr.bf16.mxu0 %v4333
        %5769 = vmatpush1.bf16.msra.mxu0 %v4332
        %5770 = vmatprep.subr.bf16.mxu0 %v4480
        %5771 = vmatpush1.bf16.msra.mxu0 %v4479
        %5772 = vmatprep.subr.bf16.mxu0 0
        %5773 = vmatpush1.bf16.msra.mxu0 0
        %5774 = vmatprep.subr.bf16.mxu0 0
        %5775 = vmatpush1.bf16.msra.mxu0 0
        %5776 = vmatprep.subr.bf16.mxu0 0
        %5777 = vmatpush1.bf16.msra.mxu0 0
        %5778 = vmatprep.subr.bf16.mxu0 0
        %5779 = vmatpush1.bf16.msra.mxu0 0
        %5780 = vmatprep.subr.bf16.mxu0 0
        %5781 = vmatpush1.bf16.msra.mxu0 0
        %5782 = vmatprep.subr.bf16.mxu0 0
        %5783 = vmatpush1.bf16.msra.mxu0 0
        %5784 = vmatprep.subr.bf16.mxu0 0
        %5785 = vmatpush1.bf16.msra.mxu0 0
        %5786 = vmatprep.subr.bf16.mxu0 0
        %5787 = vmatpush1.bf16.msra.mxu0 0
        %5788 = vmatprep.subr.bf16.mxu0 0
        %5789 = vmatpush1.bf16.msra.mxu0 0
        %5790 = vmatprep.subr.bf16.mxu0 0
        %5791 = vmatpush1.bf16.msra.mxu0 0
        %5792 = vmatprep.subr.bf16.mxu0 0
        %5793 = vmatpush1.bf16.msra.mxu0 0
        %5794 = vmatprep.subr.bf16.mxu0 0
        %5795 = vmatpush1.bf16.msra.mxu0 0
        %5796 = vmatprep.mubr.bf16.mxu0 0
        %5797 = vmatmul.mubr.bf16.gmra.mrb[0].mxu0 %v5188
        %v5798 = vpop.f32.mrb[0].mxu0
        %v5799 = vadd.f32 %v1769, %v5798
        %v5800 = vpop.f32.mrb[0].mxu0
        %v5801 = vadd.f32 %v1773, %v5800
        %v5802 = vpop.f32.mrb[0].mxu0
        %v5803 = vpop.f32.mrb[0].mxu0
        %5804 = vdwg.mxu0
        %5805 = vmatprep.subr.bf16.mxu0 %v4041
        %5806 = vmatpush1.bf16.msra.mxu0 %v4040
        %5807 = vmatprep.subr.bf16.mxu0 %v4188
        %5808 = vmatpush1.bf16.msra.mxu0 %v4187
        %5809 = vmatprep.subr.bf16.mxu0 %v4335
        %5810 = vmatpush1.bf16.msra.mxu0 %v4334
        %5811 = vmatprep.subr.bf16.mxu0 %v4482
        %5812 = vmatpush1.bf16.msra.mxu0 %v4481
        %5813 = vmatprep.subr.bf16.mxu0 0
        %5814 = vmatpush1.bf16.msra.mxu0 0
        %5815 = vmatprep.subr.bf16.mxu0 0
        %5816 = vmatpush1.bf16.msra.mxu0 0
        %5817 = vmatprep.subr.bf16.mxu0 0
        %5818 = vmatpush1.bf16.msra.mxu0 0
        %5819 = vmatprep.subr.bf16.mxu0 0
        %5820 = vmatpush1.bf16.msra.mxu0 0
        %5821 = vmatprep.subr.bf16.mxu0 0
        %5822 = vmatpush1.bf16.msra.mxu0 0
        %5823 = vmatprep.subr.bf16.mxu0 0
        %5824 = vmatpush1.bf16.msra.mxu0 0
        %5825 = vmatprep.subr.bf16.mxu0 0
        %5826 = vmatpush1.bf16.msra.mxu0 0
        %5827 = vmatprep.subr.bf16.mxu0 0
        %5828 = vmatpush1.bf16.msra.mxu0 0
        %5829 = vmatprep.subr.bf16.mxu0 0
        %5830 = vmatpush1.bf16.msra.mxu0 0
        %5831 = vmatprep.subr.bf16.mxu0 0
        %5832 = vmatpush1.bf16.msra.mxu0 0
        %5833 = vmatprep.subr.bf16.mxu0 0
        %5834 = vmatpush1.bf16.msra.mxu0 0
        %5835 = vmatprep.subr.bf16.mxu0 0
        %5836 = vmatpush1.bf16.msra.mxu0 0
        %5837 = vmatprep.mubr.bf16.mxu0 0
        %5838 = vmatmul.mubr.bf16.gmra.mrb[0].mxu0 %v5188
        %v5839 = vpop.f32.mrb[0].mxu0
        %v5840 = vadd.f32 %v1777, %v5839
        %v5841 = vpop.f32.mrb[0].mxu0
        %v5842 = vadd.f32 %v1781, %v5841
        %v5843 = vpop.f32.mrb[0].mxu0
        %v5844 = vpop.f32.mrb[0].mxu0
        %5845 = vdwg.mxu0
        %5846 = vmatprep.subr.bf16.mxu0 %v4043
        %5847 = vmatpush1.bf16.msra.mxu0 %v4042
        %5848 = vmatprep.subr.bf16.mxu0 %v4190
        %5849 = vmatpush1.bf16.msra.mxu0 %v4189
        %5850 = vmatprep.subr.bf16.mxu0 %v4337
        %5851 = vmatpush1.bf16.msra.mxu0 %v4336
        %5852 = vmatprep.subr.bf16.mxu0 %v4484
        %5853 = vmatpush1.bf16.msra.mxu0 %v4483
        %5854 = vmatprep.subr.bf16.mxu0 0
        %5855 = vmatpush1.bf16.msra.mxu0 0
        %5856 = vmatprep.subr.bf16.mxu0 0
        %5857 = vmatpush1.bf16.msra.mxu0 0
        %5858 = vmatprep.subr.bf16.mxu0 0
        %5859 = vmatpush1.bf16.msra.mxu0 0
        %5860 = vmatprep.subr.bf16.mxu0 0
        %5861 = vmatpush1.bf16.msra.mxu0 0
        %5862 = vmatprep.subr.bf16.mxu0 0
        %5863 = vmatpush1.bf16.msra.mxu0 0
        %5864 = vmatprep.subr.bf16.mxu0 0
        %5865 = vmatpush1.bf16.msra.mxu0 0
        %5866 = vmatprep.subr.bf16.mxu0 0
        %5867 = vmatpush1.bf16.msra.mxu0 0
        %5868 = vmatprep.subr.bf16.mxu0 0
        %5869 = vmatpush1.bf16.msra.mxu0 0
        %5870 = vmatprep.subr.bf16.mxu0 0
        %5871 = vmatpush1.bf16.msra.mxu0 0
        %5872 = vmatprep.subr.bf16.mxu0 0
        %5873 = vmatpush1.bf16.msra.mxu0 0
        %5874 = vmatprep.subr.bf16.mxu0 0
        %5875 = vmatpush1.bf16.msra.mxu0 0
        %5876 = vmatprep.subr.bf16.mxu0 0
        %5877 = vmatpush1.bf16.msra.mxu0 0
        %5878 = vmatprep.mubr.bf16.mxu0 0
        %5879 = vmatmul.mubr.bf16.gmra.mrb[0].mxu0 %v5188
        %v5880 = vpop.f32.mrb[0].mxu0
        %v5881 = vadd.f32 %v1785, %v5880
        %v5882 = vpop.f32.mrb[0].mxu0
        %v5883 = vadd.f32 %v1789, %v5882
        %v5884 = vpop.f32.mrb[0].mxu0
        %v5885 = vpop.f32.mrb[0].mxu0
        %5886 = vdwg.mxu0
        %5887 = vmatprep.subr.bf16.mxu0 %v4045
        %5888 = vmatpush1.bf16.msra.mxu0 %v4044
        %5889 = vmatprep.subr.bf16.mxu0 %v4192
        %5890 = vmatpush1.bf16.msra.mxu0 %v4191
        %5891 = vmatprep.subr.bf16.mxu0 %v4339
        %5892 = vmatpush1.bf16.msra.mxu0 %v4338
        %5893 = vmatprep.subr.bf16.mxu0 %v4486
        %5894 = vmatpush1.bf16.msra.mxu0 %v4485
        %5895 = vmatprep.subr.bf16.mxu0 0
        %5896 = vmatpush1.bf16.msra.mxu0 0
        %5897 = vmatprep.subr.bf16.mxu0 0
        %5898 = vmatpush1.bf16.msra.mxu0 0
        %5899 = vmatprep.subr.bf16.mxu0 0
        %5900 = vmatpush1.bf16.msra.mxu0 0
        %5901 = vmatprep.subr.bf16.mxu0 0
        %5902 = vmatpush1.bf16.msra.mxu0 0
        %5903 = vmatprep.subr.bf16.mxu0 0
        %5904 = vmatpush1.bf16.msra.mxu0 0
        %5905 = vmatprep.subr.bf16.mxu0 0
        %5906 = vmatpush1.bf16.msra.mxu0 0
        %5907 = vmatprep.subr.bf16.mxu0 0
        %5908 = vmatpush1.bf16.msra.mxu0 0
        %5909 = vmatprep.subr.bf16.mxu0 0
        %5910 = vmatpush1.bf16.msra.mxu0 0
        %5911 = vmatprep.subr.bf16.mxu0 0
        %5912 = vmatpush1.bf16.msra.mxu0 0
        %5913 = vmatprep.subr.bf16.mxu0 0
        %5914 = vmatpush1.bf16.msra.mxu0 0
        %5915 = vmatprep.subr.bf16.mxu0 0
        %5916 = vmatpush1.bf16.msra.mxu0 0
        %5917 = vmatprep.subr.bf16.mxu0 0
        %5918 = vmatpush1.bf16.msra.mxu0 0
        %5919 = vmatprep.mubr.bf16.mxu0 0
        %5920 = vmatmul.mubr.bf16.gmra.mrb[0].mxu0 %v5188
        %v5921 = vpop.f32.mrb[0].mxu0
        %v5922 = vadd.f32 %v1793, %v5921
        %v5923 = vpop.f32.mrb[0].mxu0
        %v5924 = vadd.f32 %v1797, %v5923
        %v5925 = vpop.f32.mrb[0].mxu0
        %v5926 = vpop.f32.mrb[0].mxu0
        %5927 = vdwg.mxu0
        %5928 = vmatprep.subr.bf16.mxu0 %v4047
        %5929 = vmatpush1.bf16.msra.mxu0 %v4046
        %5930 = vmatprep.subr.bf16.mxu0 %v4194
        %5931 = vmatpush1.bf16.msra.mxu0 %v4193
        %5932 = vmatprep.subr.bf16.mxu0 %v4341
        %5933 = vmatpush1.bf16.msra.mxu0 %v4340
        %5934 = vmatprep.subr.bf16.mxu0 %v4488
        %5935 = vmatpush1.bf16.msra.mxu0 %v4487
        %5936 = vmatprep.subr.bf16.mxu0 0
        %5937 = vmatpush1.bf16.msra.mxu0 0
        %5938 = vmatprep.subr.bf16.mxu0 0
        %5939 = vmatpush1.bf16.msra.mxu0 0
        %5940 = vmatprep.subr.bf16.mxu0 0
        %5941 = vmatpush1.bf16.msra.mxu0 0
        %5942 = vmatprep.subr.bf16.mxu0 0
        %5943 = vmatpush1.bf16.msra.mxu0 0
        %5944 = vmatprep.subr.bf16.mxu0 0
        %5945 = vmatpush1.bf16.msra.mxu0 0
        %5946 = vmatprep.subr.bf16.mxu0 0
        %5947 = vmatpush1.bf16.msra.mxu0 0
        %5948 = vmatprep.subr.bf16.mxu0 0
        %5949 = vmatpush1.bf16.msra.mxu0 0
        %5950 = vmatprep.subr.bf16.mxu0 0
        %5951 = vmatpush1.bf16.msra.mxu0 0
        %5952 = vmatprep.subr.bf16.mxu0 0
        %5953 = vmatpush1.bf16.msra.mxu0 0
        %5954 = vmatprep.subr.bf16.mxu0 0
        %5955 = vmatpush1.bf16.msra.mxu0 0
        %5956 = vmatprep.subr.bf16.mxu0 0
        %5957 = vmatpush1.bf16.msra.mxu0 0
        %5958 = vmatprep.subr.bf16.mxu0 0
        %5959 = vmatpush1.bf16.msra.mxu0 0
        %5960 = vmatprep.mubr.bf16.mxu0 0
        %5961 = vmatmul.mubr.bf16.gmra.mrb[0].mxu0 %v5188
        %v5962 = vpop.f32.mrb[0].mxu0
        %v5963 = vadd.f32 %v1801, %v5962
        %v5964 = vpop.f32.mrb[0].mxu0
        %v5965 = vadd.f32 %v1805, %v5964
        %v5966 = vpop.f32.mrb[0].mxu0
        %v5967 = vpop.f32.mrb[0].mxu0
        %5968 = vdwg.mxu0
        %5969 = vmatprep.subr.bf16.mxu0 %v4049
        %5970 = vmatpush1.bf16.msra.mxu0 %v4048
        %5971 = vmatprep.subr.bf16.mxu0 %v4196
        %5972 = vmatpush1.bf16.msra.mxu0 %v4195
        %5973 = vmatprep.subr.bf16.mxu0 %v4343
        %5974 = vmatpush1.bf16.msra.mxu0 %v4342
        %5975 = vmatprep.subr.bf16.mxu0 %v4490
        %5976 = vmatpush1.bf16.msra.mxu0 %v4489
        %5977 = vmatprep.subr.bf16.mxu0 0
        %5978 = vmatpush1.bf16.msra.mxu0 0
        %5979 = vmatprep.subr.bf16.mxu0 0
        %5980 = vmatpush1.bf16.msra.mxu0 0
        %5981 = vmatprep.subr.bf16.mxu0 0
        %5982 = vmatpush1.bf16.msra.mxu0 0
        %5983 = vmatprep.subr.bf16.mxu0 0
        %5984 = vmatpush1.bf16.msra.mxu0 0
        %5985 = vmatprep.subr.bf16.mxu0 0
        %5986 = vmatpush1.bf16.msra.mxu0 0
        %5987 = vmatprep.subr.bf16.mxu0 0
        %5988 = vmatpush1.bf16.msra.mxu0 0
        %5989 = vmatprep.subr.bf16.mxu0 0
        %5990 = vmatpush1.bf16.msra.mxu0 0
        %5991 = vmatprep.subr.bf16.mxu0 0
        %5992 = vmatpush1.bf16.msra.mxu0 0
        %5993 = vmatprep.subr.bf16.mxu0 0
        %5994 = vmatpush1.bf16.msra.mxu0 0
        %5995 = vmatprep.subr.bf16.mxu0 0
        %5996 = vmatpush1.bf16.msra.mxu0 0
        %5997 = vmatprep.subr.bf16.mxu0 0
        %5998 = vmatpush1.bf16.msra.mxu0 0
        %5999 = vmatprep.subr.bf16.mxu0 0
        %6000 = vmatpush1.bf16.msra.mxu0 0
        %6001 = vmatprep.mubr.bf16.mxu0 0
        %6002 = vmatmul.mubr.bf16.gmra.mrb[0].mxu0 %v5188
        %v6003 = vpop.f32.mrb[0].mxu0
        %v6004 = vadd.f32 %v1809, %v6003
        %v6005 = vpop.f32.mrb[0].mxu0
        %v6006 = vadd.f32 %v1813, %v6005
        %v6007 = vpop.f32.mrb[0].mxu0
        %v6008 = vpop.f32.mrb[0].mxu0
        %6009 = vdwg.mxu0
        %6010 = vmatprep.subr.bf16.mxu0 %v4051
        %6011 = vmatpush1.bf16.msra.mxu0 %v4050
        %6012 = vmatprep.subr.bf16.mxu0 %v4198
        %6013 = vmatpush1.bf16.msra.mxu0 %v4197
        %6014 = vmatprep.subr.bf16.mxu0 %v4345
        %6015 = vmatpush1.bf16.msra.mxu0 %v4344
        %6016 = vmatprep.subr.bf16.mxu0 %v4492
        %6017 = vmatpush1.bf16.msra.mxu0 %v4491
        %6018 = vmatprep.subr.bf16.mxu0 0
        %6019 = vmatpush1.bf16.msra.mxu0 0
        %6020 = vmatprep.subr.bf16.mxu0 0
        %6021 = vmatpush1.bf16.msra.mxu0 0
        %6022 = vmatprep.subr.bf16.mxu0 0
        %6023 = vmatpush1.bf16.msra.mxu0 0
        %6024 = vmatprep.subr.bf16.mxu0 0
        %6025 = vmatpush1.bf16.msra.mxu0 0
        %6026 = vmatprep.subr.bf16.mxu0 0
        %6027 = vmatpush1.bf16.msra.mxu0 0
        %6028 = vmatprep.subr.bf16.mxu0 0
        %6029 = vmatpush1.bf16.msra.mxu0 0
        %6030 = vmatprep.subr.bf16.mxu0 0
        %6031 = vmatpush1.bf16.msra.mxu0 0
        %6032 = vmatprep.subr.bf16.mxu0 0
        %6033 = vmatpush1.bf16.msra.mxu0 0
        %6034 = vmatprep.subr.bf16.mxu0 0
        %6035 = vmatpush1.bf16.msra.mxu0 0
        %6036 = vmatprep.subr.bf16.mxu0 0
        %6037 = vmatpush1.bf16.msra.mxu0 0
        %6038 = vmatprep.subr.bf16.mxu0 0
        %6039 = vmatpush1.bf16.msra.mxu0 0
        %6040 = vmatprep.subr.bf16.mxu0 0
        %6041 = vmatpush1.bf16.msra.mxu0 0
        %6042 = vmatprep.mubr.bf16.mxu0 0
        %6043 = vmatmul.mubr.bf16.gmra.mrb[0].mxu0 %v5188
        %v6044 = vpop.f32.mrb[0].mxu0
        %v6045 = vadd.f32 %v1817, %v6044
        %v6046 = vpop.f32.mrb[0].mxu0
        %v6047 = vadd.f32 %v1821, %v6046
        %v6048 = vpop.f32.mrb[0].mxu0
        %v6049 = vpop.f32.mrb[0].mxu0
        %6050 = vdwg.mxu0
        %6051 = vmatprep.subr.bf16.mxu0 %v4053
        %6052 = vmatpush1.bf16.msra.mxu0 %v4052
        %6053 = vmatprep.subr.bf16.mxu0 %v4200
        %6054 = vmatpush1.bf16.msra.mxu0 %v4199
        %6055 = vmatprep.subr.bf16.mxu0 %v4347
        %6056 = vmatpush1.bf16.msra.mxu0 %v4346
        %6057 = vmatprep.subr.bf16.mxu0 %v4494
        %6058 = vmatpush1.bf16.msra.mxu0 %v4493
        %6059 = vmatprep.subr.bf16.mxu0 0
        %6060 = vmatpush1.bf16.msra.mxu0 0
        %6061 = vmatprep.subr.bf16.mxu0 0
        %6062 = vmatpush1.bf16.msra.mxu0 0
        %6063 = vmatprep.subr.bf16.mxu0 0
        %6064 = vmatpush1.bf16.msra.mxu0 0
        %6065 = vmatprep.subr.bf16.mxu0 0
        %6066 = vmatpush1.bf16.msra.mxu0 0
        %6067 = vmatprep.subr.bf16.mxu0 0
        %6068 = vmatpush1.bf16.msra.mxu0 0
        %6069 = vmatprep.subr.bf16.mxu0 0
        %6070 = vmatpush1.bf16.msra.mxu0 0
        %6071 = vmatprep.subr.bf16.mxu0 0
        %6072 = vmatpush1.bf16.msra.mxu0 0
        %6073 = vmatprep.subr.bf16.mxu0 0
        %6074 = vmatpush1.bf16.msra.mxu0 0
        %6075 = vmatprep.subr.bf16.mxu0 0
        %6076 = vmatpush1.bf16.msra.mxu0 0
        %6077 = vmatprep.subr.bf16.mxu0 0
        %6078 = vmatpush1.bf16.msra.mxu0 0
        %6079 = vmatprep.subr.bf16.mxu0 0
        %6080 = vmatpush1.bf16.msra.mxu0 0
        %6081 = vmatprep.subr.bf16.mxu0 0
        %6082 = vmatpush1.bf16.msra.mxu0 0
        %6083 = vmatprep.mubr.bf16.mxu0 0
        %6084 = vmatmul.mubr.bf16.gmra.mrb[0].mxu0 %v5188
        %v6085 = vpop.f32.mrb[0].mxu0
        %v6086 = vadd.f32 %v1825, %v6085
        %v6087 = vpop.f32.mrb[0].mxu0
        %v6088 = vadd.f32 %v1829, %v6087
        %v6089 = vpop.f32.mrb[0].mxu0
        %v6090 = vpop.f32.mrb[0].mxu0
        %6091 = vdwg.mxu0
        %6092 = vmatprep.subr.bf16.mxu0 %v4055
        %6093 = vmatpush1.bf16.msra.mxu0 %v4054
        %6094 = vmatprep.subr.bf16.mxu0 %v4202
        %6095 = vmatpush1.bf16.msra.mxu0 %v4201
        %6096 = vmatprep.subr.bf16.mxu0 %v4349
        %6097 = vmatpush1.bf16.msra.mxu0 %v4348
        %6098 = vmatprep.subr.bf16.mxu0 %v4496
        %6099 = vmatpush1.bf16.msra.mxu0 %v4495
        %6100 = vmatprep.subr.bf16.mxu0 0
        %6101 = vmatpush1.bf16.msra.mxu0 0
        %6102 = vmatprep.subr.bf16.mxu0 0
        %6103 = vmatpush1.bf16.msra.mxu0 0
        %6104 = vmatprep.subr.bf16.mxu0 0
        %6105 = vmatpush1.bf16.msra.mxu0 0
        %6106 = vmatprep.subr.bf16.mxu0 0
        %6107 = vmatpush1.bf16.msra.mxu0 0
        %6108 = vmatprep.subr.bf16.mxu0 0
        %6109 = vmatpush1.bf16.msra.mxu0 0
        %6110 = vmatprep.subr.bf16.mxu0 0
        %6111 = vmatpush1.bf16.msra.mxu0 0
        %6112 = vmatprep.subr.bf16.mxu0 0
        %6113 = vmatpush1.bf16.msra.mxu0 0
        %6114 = vmatprep.subr.bf16.mxu0 0
        %6115 = vmatpush1.bf16.msra.mxu0 0
        %6116 = vmatprep.subr.bf16.mxu0 0
        %6117 = vmatpush1.bf16.msra.mxu0 0
        %6118 = vmatprep.subr.bf16.mxu0 0
        %6119 = vmatpush1.bf16.msra.mxu0 0
        %6120 = vmatprep.subr.bf16.mxu0 0
        %6121 = vmatpush1.bf16.msra.mxu0 0
        %6122 = vmatprep.subr.bf16.mxu0 0
        %6123 = vmatpush1.bf16.msra.mxu0 0
        %6124 = vmatprep.mubr.bf16.mxu0 0
        %6125 = vmatmul.mubr.bf16.gmra.mrb[0].mxu0 %v5188
        %v6126 = vpop.f32.mrb[0].mxu0
        %v6127 = vadd.f32 %v1833, %v6126
        %v6128 = vpop.f32.mrb[0].mxu0
        %v6129 = vadd.f32 %v1837, %v6128
        %v6130 = vpop.f32.mrb[0].mxu0
        %v6131 = vpop.f32.mrb[0].mxu0
        %6132 = vdwg.mxu0
        %6133 = vmatprep.subr.bf16.mxu0 %v4057
        %6134 = vmatpush1.bf16.msra.mxu0 %v4056
        %6135 = vmatprep.subr.bf16.mxu0 %v4204
        %6136 = vmatpush1.bf16.msra.mxu0 %v4203
        %6137 = vmatprep.subr.bf16.mxu0 %v4351
        %6138 = vmatpush1.bf16.msra.mxu0 %v4350
        %6139 = vmatprep.subr.bf16.mxu0 %v4498
        %6140 = vmatpush1.bf16.msra.mxu0 %v4497
        %6141 = vmatprep.subr.bf16.mxu0 0
        %6142 = vmatpush1.bf16.msra.mxu0 0
        %6143 = vmatprep.subr.bf16.mxu0 0
        %6144 = vmatpush1.bf16.msra.mxu0 0
        %6145 = vmatprep.subr.bf16.mxu0 0
        %6146 = vmatpush1.bf16.msra.mxu0 0
        %6147 = vmatprep.subr.bf16.mxu0 0
        %6148 = vmatpush1.bf16.msra.mxu0 0
        %6149 = vmatprep.subr.bf16.mxu0 0
        %6150 = vmatpush1.bf16.msra.mxu0 0
        %6151 = vmatprep.subr.bf16.mxu0 0
        %6152 = vmatpush1.bf16.msra.mxu0 0
        %6153 = vmatprep.subr.bf16.mxu0 0
        %6154 = vmatpush1.bf16.msra.mxu0 0
        %6155 = vmatprep.subr.bf16.mxu0 0
        %6156 = vmatpush1.bf16.msra.mxu0 0
        %6157 = vmatprep.subr.bf16.mxu0 0
        %6158 = vmatpush1.bf16.msra.mxu0 0
        %6159 = vmatprep.subr.bf16.mxu0 0
        %6160 = vmatpush1.bf16.msra.mxu0 0
        %6161 = vmatprep.subr.bf16.mxu0 0
        %6162 = vmatpush1.bf16.msra.mxu0 0
        %6163 = vmatprep.subr.bf16.mxu0 0
        %6164 = vmatpush1.bf16.msra.mxu0 0
        %6165 = vmatprep.mubr.bf16.mxu0 0
        %6166 = vmatmul.mubr.bf16.gmra.mrb[0].mxu0 %v5188
        %v6167 = vpop.f32.mrb[0].mxu0
        %v6168 = vadd.f32 %v1841, %v6167
        %v6169 = vpop.f32.mrb[0].mxu0
        %v6170 = vadd.f32 %v1845, %v6169
        %v6171 = vpop.f32.mrb[0].mxu0
        %v6172 = vpop.f32.mrb[0].mxu0
        %6173 = vdwg.mxu0
        %6174 = vmatprep.subr.bf16.mxu0 %v4059
        %6175 = vmatpush1.bf16.msra.mxu0 %v4058
        %6176 = vmatprep.subr.bf16.mxu0 %v4206
        %6177 = vmatpush1.bf16.msra.mxu0 %v4205
        %6178 = vmatprep.subr.bf16.mxu0 %v4353
        %6179 = vmatpush1.bf16.msra.mxu0 %v4352
        %6180 = vmatprep.subr.bf16.mxu0 %v4500
        %6181 = vmatpush1.bf16.msra.mxu0 %v4499
        %6182 = vmatprep.subr.bf16.mxu0 0
        %6183 = vmatpush1.bf16.msra.mxu0 0
        %6184 = vmatprep.subr.bf16.mxu0 0
        %6185 = vmatpush1.bf16.msra.mxu0 0
        %6186 = vmatprep.subr.bf16.mxu0 0
        %6187 = vmatpush1.bf16.msra.mxu0 0
        %6188 = vmatprep.subr.bf16.mxu0 0
        %6189 = vmatpush1.bf16.msra.mxu0 0
        %6190 = vmatprep.subr.bf16.mxu0 0
        %6191 = vmatpush1.bf16.msra.mxu0 0
        %6192 = vmatprep.subr.bf16.mxu0 0
        %6193 = vmatpush1.bf16.msra.mxu0 0
        %6194 = vmatprep.subr.bf16.mxu0 0
        %6195 = vmatpush1.bf16.msra.mxu0 0
        %6196 = vmatprep.subr.bf16.mxu0 0
        %6197 = vmatpush1.bf16.msra.mxu0 0
        %6198 = vmatprep.subr.bf16.mxu0 0
        %6199 = vmatpush1.bf16.msra.mxu0 0
        %6200 = vmatprep.subr.bf16.mxu0 0
        %6201 = vmatpush1.bf16.msra.mxu0 0
        %6202 = vmatprep.subr.bf16.mxu0 0
        %6203 = vmatpush1.bf16.msra.mxu0 0
        %6204 = vmatprep.subr.bf16.mxu0 0
        %6205 = vmatpush1.bf16.msra.mxu0 0
        %6206 = vmatprep.mubr.bf16.mxu0 0
        %6207 = vmatmul.mubr.bf16.gmra.mrb[0].mxu0 %v5188
        %v6208 = vpop.f32.mrb[0].mxu0
        %v6209 = vadd.f32 %v1849, %v6208
        %v6210 = vpop.f32.mrb[0].mxu0
        %v6211 = vadd.f32 %v1853, %v6210
        %v6212 = vpop.f32.mrb[0].mxu0
        %v6213 = vpop.f32.mrb[0].mxu0
        %6214 = vdwg.mxu0
        %6215 = vmatprep.subr.bf16.mxu0 %v4061
        %6216 = vmatpush1.bf16.msra.mxu0 %v4060
        %6217 = vmatprep.subr.bf16.mxu0 %v4208
        %6218 = vmatpush1.bf16.msra.mxu0 %v4207
        %6219 = vmatprep.subr.bf16.mxu0 %v4355
        %6220 = vmatpush1.bf16.msra.mxu0 %v4354
        %6221 = vmatprep.subr.bf16.mxu0 %v4502
        %6222 = vmatpush1.bf16.msra.mxu0 %v4501
        %6223 = vmatprep.subr.bf16.mxu0 0
        %6224 = vmatpush1.bf16.msra.mxu0 0
        %6225 = vmatprep.subr.bf16.mxu0 0
        %6226 = vmatpush1.bf16.msra.mxu0 0
        %6227 = vmatprep.subr.bf16.mxu0 0
        %6228 = vmatpush1.bf16.msra.mxu0 0
        %6229 = vmatprep.subr.bf16.mxu0 0
        %6230 = vmatpush1.bf16.msra.mxu0 0
        %6231 = vmatprep.subr.bf16.mxu0 0
        %6232 = vmatpush1.bf16.msra.mxu0 0
        %6233 = vmatprep.subr.bf16.mxu0 0
        %6234 = vmatpush1.bf16.msra.mxu0 0
        %6235 = vmatprep.subr.bf16.mxu0 0
        %6236 = vmatpush1.bf16.msra.mxu0 0
        %6237 = vmatprep.subr.bf16.mxu0 0
        %6238 = vmatpush1.bf16.msra.mxu0 0
        %6239 = vmatprep.subr.bf16.mxu0 0
        %6240 = vmatpush1.bf16.msra.mxu0 0
        %6241 = vmatprep.subr.bf16.mxu0 0
        %6242 = vmatpush1.bf16.msra.mxu0 0
        %6243 = vmatprep.subr.bf16.mxu0 0
        %6244 = vmatpush1.bf16.msra.mxu0 0
        %6245 = vmatprep.subr.bf16.mxu0 0
        %6246 = vmatpush1.bf16.msra.mxu0 0
        %6247 = vmatprep.mubr.bf16.mxu0 0
        %6248 = vmatmul.mubr.bf16.gmra.mrb[0].mxu0 %v5188
        %v6249 = vpop.f32.mrb[0].mxu0
        %v6250 = vadd.f32 %v1857, %v6249
        %v6251 = vpop.f32.mrb[0].mxu0
        %v6252 = vadd.f32 %v1861, %v6251
        %v6253 = vpop.f32.mrb[0].mxu0
        %v6254 = vpop.f32.mrb[0].mxu0
        %6255 = vdwg.mxu0
        %6256 = vmatprep.subr.bf16.mxu0 %v4063
        %6257 = vmatpush1.bf16.msra.mxu0 %v4062
        %6258 = vmatprep.subr.bf16.mxu0 %v4210
        %6259 = vmatpush1.bf16.msra.mxu0 %v4209
        %6260 = vmatprep.subr.bf16.mxu0 %v4357
        %6261 = vmatpush1.bf16.msra.mxu0 %v4356
        %6262 = vmatprep.subr.bf16.mxu0 %v4504
        %6263 = vmatpush1.bf16.msra.mxu0 %v4503
        %6264 = vmatprep.subr.bf16.mxu0 0
        %6265 = vmatpush1.bf16.msra.mxu0 0
        %6266 = vmatprep.subr.bf16.mxu0 0
        %6267 = vmatpush1.bf16.msra.mxu0 0
        %6268 = vmatprep.subr.bf16.mxu0 0
        %6269 = vmatpush1.bf16.msra.mxu0 0
        %6270 = vmatprep.subr.bf16.mxu0 0
        %6271 = vmatpush1.bf16.msra.mxu0 0
        %6272 = vmatprep.subr.bf16.mxu0 0
        %6273 = vmatpush1.bf16.msra.mxu0 0
        %6274 = vmatprep.subr.bf16.mxu0 0
        %6275 = vmatpush1.bf16.msra.mxu0 0
        %6276 = vmatprep.subr.bf16.mxu0 0
        %6277 = vmatpush1.bf16.msra.mxu0 0
        %6278 = vmatprep.subr.bf16.mxu0 0
        %6279 = vmatpush1.bf16.msra.mxu0 0
        %6280 = vmatprep.subr.bf16.mxu0 0
        %6281 = vmatpush1.bf16.msra.mxu0 0
        %6282 = vmatprep.subr.bf16.mxu0 0
        %6283 = vmatpush1.bf16.msra.mxu0 0
        %6284 = vmatprep.subr.bf16.mxu0 0
        %6285 = vmatpush1.bf16.msra.mxu0 0
        %6286 = vmatprep.subr.bf16.mxu0 0
        %6287 = vmatpush1.bf16.msra.mxu0 0
        %6288 = vmatprep.mubr.bf16.mxu0 0
        %6289 = vmatmul.mubr.bf16.gmra.mrb[0].mxu0 %v5188
        %v6290 = vpop.f32.mrb[0].mxu0
        %v6291 = vadd.f32 %v1865, %v6290
        %v6292 = vpop.f32.mrb[0].mxu0
        %v6293 = vadd.f32 %v1869, %v6292
        %v6294 = vpop.f32.mrb[0].mxu0
        %v6295 = vpop.f32.mrb[0].mxu0
        %6296 = vdwg.mxu0
        %6297 = vmatprep.subr.bf16.mxu0 %v4065
        %6298 = vmatpush1.bf16.msra.mxu0 %v4064
        %6299 = vmatprep.subr.bf16.mxu0 %v4212
        %6300 = vmatpush1.bf16.msra.mxu0 %v4211
        %6301 = vmatprep.subr.bf16.mxu0 %v4359
        %6302 = vmatpush1.bf16.msra.mxu0 %v4358
        %6303 = vmatprep.subr.bf16.mxu0 %v4506
        %6304 = vmatpush1.bf16.msra.mxu0 %v4505
        %6305 = vmatprep.subr.bf16.mxu0 0
        %6306 = vmatpush1.bf16.msra.mxu0 0
        %6307 = vmatprep.subr.bf16.mxu0 0
        %6308 = vmatpush1.bf16.msra.mxu0 0
        %6309 = vmatprep.subr.bf16.mxu0 0
        %6310 = vmatpush1.bf16.msra.mxu0 0
        %6311 = vmatprep.subr.bf16.mxu0 0
        %6312 = vmatpush1.bf16.msra.mxu0 0
        %6313 = vmatprep.subr.bf16.mxu0 0
        %6314 = vmatpush1.bf16.msra.mxu0 0
        %6315 = vmatprep.subr.bf16.mxu0 0
        %6316 = vmatpush1.bf16.msra.mxu0 0
        %6317 = vmatprep.subr.bf16.mxu0 0
        %6318 = vmatpush1.bf16.msra.mxu0 0
        %6319 = vmatprep.subr.bf16.mxu0 0
        %6320 = vmatpush1.bf16.msra.mxu0 0
        %6321 = vmatprep.subr.bf16.mxu0 0
        %6322 = vmatpush1.bf16.msra.mxu0 0
        %6323 = vmatprep.subr.bf16.mxu0 0
        %6324 = vmatpush1.bf16.msra.mxu0 0
        %6325 = vmatprep.subr.bf16.mxu0 0
        %6326 = vmatpush1.bf16.msra.mxu0 0
        %6327 = vmatprep.subr.bf16.mxu0 0
        %6328 = vmatpush1.bf16.msra.mxu0 0
        %6329 = vmatprep.mubr.bf16.mxu0 0
        %6330 = vmatmul.mubr.bf16.gmra.mrb[0].mxu0 %v5188
        %v6331 = vpop.f32.mrb[0].mxu0
        %v6332 = vadd.f32 %v1873, %v6331
        %v6333 = vpop.f32.mrb[0].mxu0
        %v6334 = vadd.f32 %v1877, %v6333
        %v6335 = vpop.f32.mrb[0].mxu0
        %v6336 = vpop.f32.mrb[0].mxu0
        %6337 = vdwg.mxu0
        %6338 = vmatprep.subr.bf16.mxu0 %v4067
        %6339 = vmatpush1.bf16.msra.mxu0 %v4066
        %6340 = vmatprep.subr.bf16.mxu0 %v4214
        %6341 = vmatpush1.bf16.msra.mxu0 %v4213
        %6342 = vmatprep.subr.bf16.mxu0 %v4361
        %6343 = vmatpush1.bf16.msra.mxu0 %v4360
        %6344 = vmatprep.subr.bf16.mxu0 %v4508
        %6345 = vmatpush1.bf16.msra.mxu0 %v4507
        %6346 = vmatprep.subr.bf16.mxu0 0
        %6347 = vmatpush1.bf16.msra.mxu0 0
        %6348 = vmatprep.subr.bf16.mxu0 0
        %6349 = vmatpush1.bf16.msra.mxu0 0
        %6350 = vmatprep.subr.bf16.mxu0 0
        %6351 = vmatpush1.bf16.msra.mxu0 0
        %6352 = vmatprep.subr.bf16.mxu0 0
        %6353 = vmatpush1.bf16.msra.mxu0 0
        %6354 = vmatprep.subr.bf16.mxu0 0
        %6355 = vmatpush1.bf16.msra.mxu0 0
        %6356 = vmatprep.subr.bf16.mxu0 0
        %6357 = vmatpush1.bf16.msra.mxu0 0
        %6358 = vmatprep.subr.bf16.mxu0 0
        %6359 = vmatpush1.bf16.msra.mxu0 0
        %6360 = vmatprep.subr.bf16.mxu0 0
        %6361 = vmatpush1.bf16.msra.mxu0 0
        %6362 = vmatprep.subr.bf16.mxu0 0
        %6363 = vmatpush1.bf16.msra.mxu0 0
        %6364 = vmatprep.subr.bf16.mxu0 0
        %6365 = vmatpush1.bf16.msra.mxu0 0
        %6366 = vmatprep.subr.bf16.mxu0 0
        %6367 = vmatpush1.bf16.msra.mxu0 0
        %6368 = vmatprep.subr.bf16.mxu0 0
        %6369 = vmatpush1.bf16.msra.mxu0 0
        %6370 = vmatprep.mubr.bf16.mxu0 0
        %6371 = vmatmul.mubr.bf16.gmra.mrb[0].mxu0 %v5188
        %v6372 = vpop.f32.mrb[0].mxu0
        %v6373 = vadd.f32 %v1881, %v6372
        %v6374 = vpop.f32.mrb[0].mxu0
        %v6375 = vadd.f32 %v1885, %v6374
        %v6376 = vpop.f32.mrb[0].mxu0
        %v6377 = vpop.f32.mrb[0].mxu0
        %6378 = vdwg.mxu0
        %6379 = vmatprep.subr.bf16.mxu0 %v4069
        %6380 = vmatpush1.bf16.msra.mxu0 %v4068
        %6381 = vmatprep.subr.bf16.mxu0 %v4216
        %6382 = vmatpush1.bf16.msra.mxu0 %v4215
        %6383 = vmatprep.subr.bf16.mxu0 %v4363
        %6384 = vmatpush1.bf16.msra.mxu0 %v4362
        %6385 = vmatprep.subr.bf16.mxu0 %v4510
        %6386 = vmatpush1.bf16.msra.mxu0 %v4509
        %6387 = vmatprep.subr.bf16.mxu0 0
        %6388 = vmatpush1.bf16.msra.mxu0 0
        %6389 = vmatprep.subr.bf16.mxu0 0
        %6390 = vmatpush1.bf16.msra.mxu0 0
        %6391 = vmatprep.subr.bf16.mxu0 0
        %6392 = vmatpush1.bf16.msra.mxu0 0
        %6393 = vmatprep.subr.bf16.mxu0 0
        %6394 = vmatpush1.bf16.msra.mxu0 0
        %6395 = vmatprep.subr.bf16.mxu0 0
        %6396 = vmatpush1.bf16.msra.mxu0 0
        %6397 = vmatprep.subr.bf16.mxu0 0
        %6398 = vmatpush1.bf16.msra.mxu0 0
        %6399 = vmatprep.subr.bf16.mxu0 0
        %6400 = vmatpush1.bf16.msra.mxu0 0
        %6401 = vmatprep.subr.bf16.mxu0 0
        %6402 = vmatpush1.bf16.msra.mxu0 0
        %6403 = vmatprep.subr.bf16.mxu0 0
        %6404 = vmatpush1.bf16.msra.mxu0 0
        %6405 = vmatprep.subr.bf16.mxu0 0
        %6406 = vmatpush1.bf16.msra.mxu0 0
        %6407 = vmatprep.subr.bf16.mxu0 0
        %6408 = vmatpush1.bf16.msra.mxu0 0
        %6409 = vmatprep.subr.bf16.mxu0 0
        %6410 = vmatpush1.bf16.msra.mxu0 0
        %6411 = vmatprep.mubr.bf16.mxu0 0
        %6412 = vmatmul.mubr.bf16.gmra.mrb[0].mxu0 %v5188
        %v6413 = vpop.f32.mrb[0].mxu0
        %v6414 = vadd.f32 %v1889, %v6413
        %v6415 = vpop.f32.mrb[0].mxu0
        %v6416 = vadd.f32 %v1893, %v6415
        %v6417 = vpop.f32.mrb[0].mxu0
        %v6418 = vpop.f32.mrb[0].mxu0
        %6419 = vdwg.mxu0
        %6420 = vmatprep.subr.bf16.mxu0 %v4071
        %6421 = vmatpush1.bf16.msra.mxu0 %v4070
        %6422 = vmatprep.subr.bf16.mxu0 %v4218
        %6423 = vmatpush1.bf16.msra.mxu0 %v4217
        %6424 = vmatprep.subr.bf16.mxu0 %v4365
        %6425 = vmatpush1.bf16.msra.mxu0 %v4364
        %6426 = vmatprep.subr.bf16.mxu0 %v4512
        %6427 = vmatpush1.bf16.msra.mxu0 %v4511
        %6428 = vmatprep.subr.bf16.mxu0 0
        %6429 = vmatpush1.bf16.msra.mxu0 0
        %6430 = vmatprep.subr.bf16.mxu0 0
        %6431 = vmatpush1.bf16.msra.mxu0 0
        %6432 = vmatprep.subr.bf16.mxu0 0
        %6433 = vmatpush1.bf16.msra.mxu0 0
        %6434 = vmatprep.subr.bf16.mxu0 0
        %6435 = vmatpush1.bf16.msra.mxu0 0
        %6436 = vmatprep.subr.bf16.mxu0 0
        %6437 = vmatpush1.bf16.msra.mxu0 0
        %6438 = vmatprep.subr.bf16.mxu0 0
        %6439 = vmatpush1.bf16.msra.mxu0 0
        %6440 = vmatprep.subr.bf16.mxu0 0
        %6441 = vmatpush1.bf16.msra.mxu0 0
        %6442 = vmatprep.subr.bf16.mxu0 0
        %6443 = vmatpush1.bf16.msra.mxu0 0
        %6444 = vmatprep.subr.bf16.mxu0 0
        %6445 = vmatpush1.bf16.msra.mxu0 0
        %6446 = vmatprep.subr.bf16.mxu0 0
        %6447 = vmatpush1.bf16.msra.mxu0 0
        %6448 = vmatprep.subr.bf16.mxu0 0
        %6449 = vmatpush1.bf16.msra.mxu0 0
        %6450 = vmatprep.subr.bf16.mxu0 0
        %6451 = vmatpush1.bf16.msra.mxu0 0
        %6452 = vmatprep.mubr.bf16.mxu0 0
        %6453 = vmatmul.mubr.bf16.gmra.mrb[0].mxu0 %v5188
        %v6454 = vpop.f32.mrb[0].mxu0
        %v6455 = vadd.f32 %v1897, %v6454
        %v6456 = vpop.f32.mrb[0].mxu0
        %v6457 = vadd.f32 %v1901, %v6456
        %v6458 = vpop.f32.mrb[0].mxu0
        %v6459 = vpop.f32.mrb[0].mxu0
        %6460 = vdwg.mxu0
        %6461 = vmatprep.subr.bf16.mxu0 %v4073
        %6462 = vmatpush1.bf16.msra.mxu0 %v4072
        %6463 = vmatprep.subr.bf16.mxu0 %v4220
        %6464 = vmatpush1.bf16.msra.mxu0 %v4219
        %6465 = vmatprep.subr.bf16.mxu0 %v4367
        %6466 = vmatpush1.bf16.msra.mxu0 %v4366
        %6467 = vmatprep.subr.bf16.mxu0 %v4514
        %6468 = vmatpush1.bf16.msra.mxu0 %v4513
        %6469 = vmatprep.subr.bf16.mxu0 0
        %6470 = vmatpush1.bf16.msra.mxu0 0
        %6471 = vmatprep.subr.bf16.mxu0 0
        %6472 = vmatpush1.bf16.msra.mxu0 0
        %6473 = vmatprep.subr.bf16.mxu0 0
        %6474 = vmatpush1.bf16.msra.mxu0 0
        %6475 = vmatprep.subr.bf16.mxu0 0
        %6476 = vmatpush1.bf16.msra.mxu0 0
        %6477 = vmatprep.subr.bf16.mxu0 0
        %6478 = vmatpush1.bf16.msra.mxu0 0
        %6479 = vmatprep.subr.bf16.mxu0 0
        %6480 = vmatpush1.bf16.msra.mxu0 0
        %6481 = vmatprep.subr.bf16.mxu0 0
        %6482 = vmatpush1.bf16.msra.mxu0 0
        %6483 = vmatprep.subr.bf16.mxu0 0
        %6484 = vmatpush1.bf16.msra.mxu0 0
        %6485 = vmatprep.subr.bf16.mxu0 0
        %6486 = vmatpush1.bf16.msra.mxu0 0
        %6487 = vmatprep.subr.bf16.mxu0 0
        %6488 = vmatpush1.bf16.msra.mxu0 0
        %6489 = vmatprep.subr.bf16.mxu0 0
        %6490 = vmatpush1.bf16.msra.mxu0 0
        %6491 = vmatprep.subr.bf16.mxu0 0
        %6492 = vmatpush1.bf16.msra.mxu0 0
        %6493 = vmatprep.mubr.bf16.mxu0 0
        %6494 = vmatmul.mubr.bf16.gmra.mrb[0].mxu0 %v5188
        %v6495 = vpop.f32.mrb[0].mxu0
        %v6496 = vadd.f32 %v1905, %v6495
        %v6497 = vpop.f32.mrb[0].mxu0
        %v6498 = vadd.f32 %v1909, %v6497
        %v6499 = vpop.f32.mrb[0].mxu0
        %v6500 = vpop.f32.mrb[0].mxu0
        %6501 = vdwg.mxu0
        %6502 = vmatprep.subr.bf16.mxu0 %v4075
        %6503 = vmatpush1.bf16.msra.mxu0 %v4074
        %6504 = vmatprep.subr.bf16.mxu0 %v4222
        %6505 = vmatpush1.bf16.msra.mxu0 %v4221
        %6506 = vmatprep.subr.bf16.mxu0 %v4369
        %6507 = vmatpush1.bf16.msra.mxu0 %v4368
        %6508 = vmatprep.subr.bf16.mxu0 %v4516
        %6509 = vmatpush1.bf16.msra.mxu0 %v4515
        %6510 = vmatprep.subr.bf16.mxu0 0
        %6511 = vmatpush1.bf16.msra.mxu0 0
        %6512 = vmatprep.subr.bf16.mxu0 0
        %6513 = vmatpush1.bf16.msra.mxu0 0
        %6514 = vmatprep.subr.bf16.mxu0 0
        %6515 = vmatpush1.bf16.msra.mxu0 0
        %6516 = vmatprep.subr.bf16.mxu0 0
        %6517 = vmatpush1.bf16.msra.mxu0 0
        %6518 = vmatprep.subr.bf16.mxu0 0
        %6519 = vmatpush1.bf16.msra.mxu0 0
        %6520 = vmatprep.subr.bf16.mxu0 0
        %6521 = vmatpush1.bf16.msra.mxu0 0
        %6522 = vmatprep.subr.bf16.mxu0 0
        %6523 = vmatpush1.bf16.msra.mxu0 0
        %6524 = vmatprep.subr.bf16.mxu0 0
        %6525 = vmatpush1.bf16.msra.mxu0 0
        %6526 = vmatprep.subr.bf16.mxu0 0
        %6527 = vmatpush1.bf16.msra.mxu0 0
        %6528 = vmatprep.subr.bf16.mxu0 0
        %6529 = vmatpush1.bf16.msra.mxu0 0
        %6530 = vmatprep.subr.bf16.mxu0 0
        %6531 = vmatpush1.bf16.msra.mxu0 0
        %6532 = vmatprep.subr.bf16.mxu0 0
        %6533 = vmatpush1.bf16.msra.mxu0 0
        %6534 = vmatprep.mubr.bf16.mxu0 0
        %6535 = vmatmul.mubr.bf16.gmra.mrb[0].mxu0 %v5188
        %v6536 = vpop.f32.mrb[0].mxu0
        %v6537 = vadd.f32 %v1913, %v6536
        %v6538 = vpop.f32.mrb[0].mxu0
        %v6539 = vadd.f32 %v1917, %v6538
        %v6540 = vpop.f32.mrb[0].mxu0
        %v6541 = vpop.f32.mrb[0].mxu0
        %6542 = vdwg.mxu0
        %6543 = vmatprep.subr.bf16.mxu0 %v4077
        %6544 = vmatpush1.bf16.msra.mxu0 %v4076
        %6545 = vmatprep.subr.bf16.mxu0 %v4224
        %6546 = vmatpush1.bf16.msra.mxu0 %v4223
        %6547 = vmatprep.subr.bf16.mxu0 %v4371
        %6548 = vmatpush1.bf16.msra.mxu0 %v4370
        %6549 = vmatprep.subr.bf16.mxu0 %v4518
        %6550 = vmatpush1.bf16.msra.mxu0 %v4517
        %6551 = vmatprep.subr.bf16.mxu0 0
        %6552 = vmatpush1.bf16.msra.mxu0 0
        %6553 = vmatprep.subr.bf16.mxu0 0
        %6554 = vmatpush1.bf16.msra.mxu0 0
        %6555 = vmatprep.subr.bf16.mxu0 0
        %6556 = vmatpush1.bf16.msra.mxu0 0
        %6557 = vmatprep.subr.bf16.mxu0 0
        %6558 = vmatpush1.bf16.msra.mxu0 0
        %6559 = vmatprep.subr.bf16.mxu0 0
        %6560 = vmatpush1.bf16.msra.mxu0 0
        %6561 = vmatprep.subr.bf16.mxu0 0
        %6562 = vmatpush1.bf16.msra.mxu0 0
        %6563 = vmatprep.subr.bf16.mxu0 0
        %6564 = vmatpush1.bf16.msra.mxu0 0
        %6565 = vmatprep.subr.bf16.mxu0 0
        %6566 = vmatpush1.bf16.msra.mxu0 0
        %6567 = vmatprep.subr.bf16.mxu0 0
        %6568 = vmatpush1.bf16.msra.mxu0 0
        %6569 = vmatprep.subr.bf16.mxu0 0
        %6570 = vmatpush1.bf16.msra.mxu0 0
        %6571 = vmatprep.subr.bf16.mxu0 0
        %6572 = vmatpush1.bf16.msra.mxu0 0
        %6573 = vmatprep.subr.bf16.mxu0 0
        %6574 = vmatpush1.bf16.msra.mxu0 0
        %6575 = vmatprep.mubr.bf16.mxu0 0
        %6576 = vmatmul.mubr.bf16.gmra.mrb[0].mxu0 %v5188
        %v6577 = vpop.f32.mrb[0].mxu0
        %v6578 = vadd.f32 %v1921, %v6577
        %v6579 = vpop.f32.mrb[0].mxu0
        %v6580 = vadd.f32 %v1925, %v6579
        %v6581 = vpop.f32.mrb[0].mxu0
        %v6582 = vpop.f32.mrb[0].mxu0
        %6583 = vdwg.mxu0
        %6584 = vmatprep.subr.bf16.mxu0 %v4079
        %6585 = vmatpush1.bf16.msra.mxu0 %v4078
        %6586 = vmatprep.subr.bf16.mxu0 %v4226
        %6587 = vmatpush1.bf16.msra.mxu0 %v4225
        %6588 = vmatprep.subr.bf16.mxu0 %v4373
        %6589 = vmatpush1.bf16.msra.mxu0 %v4372
        %6590 = vmatprep.subr.bf16.mxu0 %v4520
        %6591 = vmatpush1.bf16.msra.mxu0 %v4519
        %6592 = vmatprep.subr.bf16.mxu0 0
        %6593 = vmatpush1.bf16.msra.mxu0 0
        %6594 = vmatprep.subr.bf16.mxu0 0
        %6595 = vmatpush1.bf16.msra.mxu0 0
        %6596 = vmatprep.subr.bf16.mxu0 0
        %6597 = vmatpush1.bf16.msra.mxu0 0
        %6598 = vmatprep.subr.bf16.mxu0 0
        %6599 = vmatpush1.bf16.msra.mxu0 0
        %6600 = vmatprep.subr.bf16.mxu0 0
        %6601 = vmatpush1.bf16.msra.mxu0 0
        %6602 = vmatprep.subr.bf16.mxu0 0
        %6603 = vmatpush1.bf16.msra.mxu0 0
        %6604 = vmatprep.subr.bf16.mxu0 0
        %6605 = vmatpush1.bf16.msra.mxu0 0
        %6606 = vmatprep.subr.bf16.mxu0 0
        %6607 = vmatpush1.bf16.msra.mxu0 0
        %6608 = vmatprep.subr.bf16.mxu0 0
        %6609 = vmatpush1.bf16.msra.mxu0 0
        %6610 = vmatprep.subr.bf16.mxu0 0
        %6611 = vmatpush1.bf16.msra.mxu0 0
        %6612 = vmatprep.subr.bf16.mxu0 0
        %6613 = vmatpush1.bf16.msra.mxu0 0
        %6614 = vmatprep.subr.bf16.mxu0 0
        %6615 = vmatpush1.bf16.msra.mxu0 0
        %6616 = vmatprep.mubr.bf16.mxu0 0
        %6617 = vmatmul.mubr.bf16.gmra.mrb[0].mxu0 %v5188
        %v6618 = vpop.f32.mrb[0].mxu0
        %v6619 = vadd.f32 %v1929, %v6618
        %v6620 = vpop.f32.mrb[0].mxu0
        %v6621 = vadd.f32 %v1933, %v6620
        %v6622 = vpop.f32.mrb[0].mxu0
        %v6623 = vpop.f32.mrb[0].mxu0
        %6624 = vdwg.mxu0
        %6625 = vmatprep.subr.bf16.mxu0 %v4081
        %6626 = vmatpush1.bf16.msra.mxu0 %v4080
        %6627 = vmatprep.subr.bf16.mxu0 %v4228
        %6628 = vmatpush1.bf16.msra.mxu0 %v4227
        %6629 = vmatprep.subr.bf16.mxu0 %v4375
        %6630 = vmatpush1.bf16.msra.mxu0 %v4374
        %6631 = vmatprep.subr.bf16.mxu0 %v4522
        %6632 = vmatpush1.bf16.msra.mxu0 %v4521
        %6633 = vmatprep.subr.bf16.mxu0 0
        %6634 = vmatpush1.bf16.msra.mxu0 0
        %6635 = vmatprep.subr.bf16.mxu0 0
        %6636 = vmatpush1.bf16.msra.mxu0 0
        %6637 = vmatprep.subr.bf16.mxu0 0
        %6638 = vmatpush1.bf16.msra.mxu0 0
        %6639 = vmatprep.subr.bf16.mxu0 0
        %6640 = vmatpush1.bf16.msra.mxu0 0
        %6641 = vmatprep.subr.bf16.mxu0 0
        %6642 = vmatpush1.bf16.msra.mxu0 0
        %6643 = vmatprep.subr.bf16.mxu0 0
        %6644 = vmatpush1.bf16.msra.mxu0 0
        %6645 = vmatprep.subr.bf16.mxu0 0
        %6646 = vmatpush1.bf16.msra.mxu0 0
        %6647 = vmatprep.subr.bf16.mxu0 0
        %6648 = vmatpush1.bf16.msra.mxu0 0
        %6649 = vmatprep.subr.bf16.mxu0 0
        %6650 = vmatpush1.bf16.msra.mxu0 0
        %6651 = vmatprep.subr.bf16.mxu0 0
        %6652 = vmatpush1.bf16.msra.mxu0 0
        %6653 = vmatprep.subr.bf16.mxu0 0
        %6654 = vmatpush1.bf16.msra.mxu0 0
        %6655 = vmatprep.subr.bf16.mxu0 0
        %6656 = vmatpush1.bf16.msra.mxu0 0
        %6657 = vmatprep.mubr.bf16.mxu0 0
        %6658 = vmatmul.mubr.bf16.gmra.mrb[0].mxu0 %v5188
        %v6659 = vpop.f32.mrb[0].mxu0
        %v6660 = vadd.f32 %v1937, %v6659
        %v6661 = vpop.f32.mrb[0].mxu0
        %v6662 = vadd.f32 %v1941, %v6661
        %v6663 = vpop.f32.mrb[0].mxu0
        %v6664 = vpop.f32.mrb[0].mxu0
        %6665 = vdwg.mxu0
        %6666 = vmatprep.subr.bf16.mxu0 %v4083
        %6667 = vmatpush1.bf16.msra.mxu0 %v4082
        %6668 = vmatprep.subr.bf16.mxu0 %v4230
        %6669 = vmatpush1.bf16.msra.mxu0 %v4229
        %6670 = vmatprep.subr.bf16.mxu0 %v4377
        %6671 = vmatpush1.bf16.msra.mxu0 %v4376
        %6672 = vmatprep.subr.bf16.mxu0 %v4524
        %6673 = vmatpush1.bf16.msra.mxu0 %v4523
        %6674 = vmatprep.subr.bf16.mxu0 0
        %6675 = vmatpush1.bf16.msra.mxu0 0
        %6676 = vmatprep.subr.bf16.mxu0 0
        %6677 = vmatpush1.bf16.msra.mxu0 0
        %6678 = vmatprep.subr.bf16.mxu0 0
        %6679 = vmatpush1.bf16.msra.mxu0 0
        %6680 = vmatprep.subr.bf16.mxu0 0
        %6681 = vmatpush1.bf16.msra.mxu0 0
        %6682 = vmatprep.subr.bf16.mxu0 0
        %6683 = vmatpush1.bf16.msra.mxu0 0
        %6684 = vmatprep.subr.bf16.mxu0 0
        %6685 = vmatpush1.bf16.msra.mxu0 0
        %6686 = vmatprep.subr.bf16.mxu0 0
        %6687 = vmatpush1.bf16.msra.mxu0 0
        %6688 = vmatprep.subr.bf16.mxu0 0
        %6689 = vmatpush1.bf16.msra.mxu0 0
        %6690 = vmatprep.subr.bf16.mxu0 0
        %6691 = vmatpush1.bf16.msra.mxu0 0
        %6692 = vmatprep.subr.bf16.mxu0 0
        %6693 = vmatpush1.bf16.msra.mxu0 0
        %6694 = vmatprep.subr.bf16.mxu0 0
        %6695 = vmatpush1.bf16.msra.mxu0 0
        %6696 = vmatprep.subr.bf16.mxu0 0
        %6697 = vmatpush1.bf16.msra.mxu0 0
        %6698 = vmatprep.mubr.bf16.mxu0 0
        %6699 = vmatmul.mubr.bf16.gmra.mrb[0].mxu0 %v5188
        %v6700 = vpop.f32.mrb[0].mxu0
        %v6701 = vadd.f32 %v1945, %v6700
        %v6702 = vpop.f32.mrb[0].mxu0
        %v6703 = vadd.f32 %v1949, %v6702
        %v6704 = vpop.f32.mrb[0].mxu0
        %v6705 = vpop.f32.mrb[0].mxu0
        %6706 = vdwg.mxu0
        %6707 = vmatprep.subr.bf16.mxu0 %v4085
        %6708 = vmatpush1.bf16.msra.mxu0 %v4084
        %6709 = vmatprep.subr.bf16.mxu0 %v4232
        %6710 = vmatpush1.bf16.msra.mxu0 %v4231
        %6711 = vmatprep.subr.bf16.mxu0 %v4379
        %6712 = vmatpush1.bf16.msra.mxu0 %v4378
        %6713 = vmatprep.subr.bf16.mxu0 %v4526
        %6714 = vmatpush1.bf16.msra.mxu0 %v4525
        %6715 = vmatprep.subr.bf16.mxu0 0
        %6716 = vmatpush1.bf16.msra.mxu0 0
        %6717 = vmatprep.subr.bf16.mxu0 0
        %6718 = vmatpush1.bf16.msra.mxu0 0
        %6719 = vmatprep.subr.bf16.mxu0 0
        %6720 = vmatpush1.bf16.msra.mxu0 0
        %6721 = vmatprep.subr.bf16.mxu0 0
        %6722 = vmatpush1.bf16.msra.mxu0 0
        %6723 = vmatprep.subr.bf16.mxu0 0
        %6724 = vmatpush1.bf16.msra.mxu0 0
        %6725 = vmatprep.subr.bf16.mxu0 0
        %6726 = vmatpush1.bf16.msra.mxu0 0
        %6727 = vmatprep.subr.bf16.mxu0 0
        %6728 = vmatpush1.bf16.msra.mxu0 0
        %6729 = vmatprep.subr.bf16.mxu0 0
        %6730 = vmatpush1.bf16.msra.mxu0 0
        %6731 = vmatprep.subr.bf16.mxu0 0
        %6732 = vmatpush1.bf16.msra.mxu0 0
        %6733 = vmatprep.subr.bf16.mxu0 0
        %6734 = vmatpush1.bf16.msra.mxu0 0
        %6735 = vmatprep.subr.bf16.mxu0 0
        %6736 = vmatpush1.bf16.msra.mxu0 0
        %6737 = vmatprep.subr.bf16.mxu0 0
        %6738 = vmatpush1.bf16.msra.mxu0 0
        %6739 = vmatprep.mubr.bf16.mxu0 0
        %6740 = vmatmul.mubr.bf16.gmra.mrb[0].mxu0 %v5188
        %v6741 = vpop.f32.mrb[0].mxu0
        %v6742 = vadd.f32 %v1953, %v6741
        %v6743 = vpop.f32.mrb[0].mxu0
        %v6744 = vadd.f32 %v1957, %v6743
        %v6745 = vpop.f32.mrb[0].mxu0
        %v6746 = vpop.f32.mrb[0].mxu0
        %6747 = vdwg.mxu0
        %6748 = vmatprep.subr.bf16.mxu0 %v4087
        %6749 = vmatpush1.bf16.msra.mxu0 %v4086
        %6750 = vmatprep.subr.bf16.mxu0 %v4234
        %6751 = vmatpush1.bf16.msra.mxu0 %v4233
        %6752 = vmatprep.subr.bf16.mxu0 %v4381
        %6753 = vmatpush1.bf16.msra.mxu0 %v4380
        %6754 = vmatprep.subr.bf16.mxu0 %v4528
        %6755 = vmatpush1.bf16.msra.mxu0 %v4527
        %6756 = vmatprep.subr.bf16.mxu0 0
        %6757 = vmatpush1.bf16.msra.mxu0 0
        %6758 = vmatprep.subr.bf16.mxu0 0
        %6759 = vmatpush1.bf16.msra.mxu0 0
        %6760 = vmatprep.subr.bf16.mxu0 0
        %6761 = vmatpush1.bf16.msra.mxu0 0
        %6762 = vmatprep.subr.bf16.mxu0 0
        %6763 = vmatpush1.bf16.msra.mxu0 0
        %6764 = vmatprep.subr.bf16.mxu0 0
        %6765 = vmatpush1.bf16.msra.mxu0 0
        %6766 = vmatprep.subr.bf16.mxu0 0
        %6767 = vmatpush1.bf16.msra.mxu0 0
        %6768 = vmatprep.subr.bf16.mxu0 0
        %6769 = vmatpush1.bf16.msra.mxu0 0
        %6770 = vmatprep.subr.bf16.mxu0 0
        %6771 = vmatpush1.bf16.msra.mxu0 0
        %6772 = vmatprep.subr.bf16.mxu0 0
        %6773 = vmatpush1.bf16.msra.mxu0 0
        %6774 = vmatprep.subr.bf16.mxu0 0
        %6775 = vmatpush1.bf16.msra.mxu0 0
        %6776 = vmatprep.subr.bf16.mxu0 0
        %6777 = vmatpush1.bf16.msra.mxu0 0
        %6778 = vmatprep.subr.bf16.mxu0 0
        %6779 = vmatpush1.bf16.msra.mxu0 0
        %6780 = vmatprep.mubr.bf16.mxu0 0
        %6781 = vmatmul.mubr.bf16.gmra.mrb[0].mxu0 %v5188
        %v6782 = vpop.f32.mrb[0].mxu0
        %v6783 = vadd.f32 %v1961, %v6782
        %v6784 = vpop.f32.mrb[0].mxu0
        %v6785 = vadd.f32 %v1965, %v6784
        %v6786 = vpop.f32.mrb[0].mxu0
        %v6787 = vpop.f32.mrb[0].mxu0
        %6788 = vdwg.mxu0
        %6789 = vmatprep.subr.bf16.mxu0 %v4089
        %6790 = vmatpush1.bf16.msra.mxu0 %v4088
        %6791 = vmatprep.subr.bf16.mxu0 %v4236
        %6792 = vmatpush1.bf16.msra.mxu0 %v4235
        %6793 = vmatprep.subr.bf16.mxu0 %v4383
        %6794 = vmatpush1.bf16.msra.mxu0 %v4382
        %6795 = vmatprep.subr.bf16.mxu0 %v4530
        %6796 = vmatpush1.bf16.msra.mxu0 %v4529
        %6797 = vmatprep.subr.bf16.mxu0 0
        %6798 = vmatpush1.bf16.msra.mxu0 0
        %6799 = vmatprep.subr.bf16.mxu0 0
        %6800 = vmatpush1.bf16.msra.mxu0 0
        %6801 = vmatprep.subr.bf16.mxu0 0
        %6802 = vmatpush1.bf16.msra.mxu0 0
        %6803 = vmatprep.subr.bf16.mxu0 0
        %6804 = vmatpush1.bf16.msra.mxu0 0
        %6805 = vmatprep.subr.bf16.mxu0 0
        %6806 = vmatpush1.bf16.msra.mxu0 0
        %6807 = vmatprep.subr.bf16.mxu0 0
        %6808 = vmatpush1.bf16.msra.mxu0 0
        %6809 = vmatprep.subr.bf16.mxu0 0
        %6810 = vmatpush1.bf16.msra.mxu0 0
        %6811 = vmatprep.subr.bf16.mxu0 0
        %6812 = vmatpush1.bf16.msra.mxu0 0
        %6813 = vmatprep.subr.bf16.mxu0 0
        %6814 = vmatpush1.bf16.msra.mxu0 0
        %6815 = vmatprep.subr.bf16.mxu0 0
        %6816 = vmatpush1.bf16.msra.mxu0 0
        %6817 = vmatprep.subr.bf16.mxu0 0
        %6818 = vmatpush1.bf16.msra.mxu0 0
        %6819 = vmatprep.subr.bf16.mxu0 0
        %6820 = vmatpush1.bf16.msra.mxu0 0
        %6821 = vmatprep.mubr.bf16.mxu0 0
        %6822 = vmatmul.mubr.bf16.gmra.mrb[0].mxu0 %v5188
        %v6823 = vpop.f32.mrb[0].mxu0
        %v6824 = vadd.f32 %v1969, %v6823
        %v6825 = vpop.f32.mrb[0].mxu0
        %v6826 = vadd.f32 %v1973, %v6825
        %v6827 = vpop.f32.mrb[0].mxu0
        %v6828 = vpop.f32.mrb[0].mxu0
        %6829 = vdwg.mxu0
        %6830 = vmatprep.subr.bf16.mxu0 %v4091
        %6831 = vmatpush1.bf16.msra.mxu0 %v4090
        %6832 = vmatprep.subr.bf16.mxu0 %v4238
        %6833 = vmatpush1.bf16.msra.mxu0 %v4237
        %6834 = vmatprep.subr.bf16.mxu0 %v4385
        %6835 = vmatpush1.bf16.msra.mxu0 %v4384
        %6836 = vmatprep.subr.bf16.mxu0 %v4532
        %6837 = vmatpush1.bf16.msra.mxu0 %v4531
        %6838 = vmatprep.subr.bf16.mxu0 0
        %6839 = vmatpush1.bf16.msra.mxu0 0
        %6840 = vmatprep.subr.bf16.mxu0 0
        %6841 = vmatpush1.bf16.msra.mxu0 0
        %6842 = vmatprep.subr.bf16.mxu0 0
        %6843 = vmatpush1.bf16.msra.mxu0 0
        %6844 = vmatprep.subr.bf16.mxu0 0
        %6845 = vmatpush1.bf16.msra.mxu0 0
        %6846 = vmatprep.subr.bf16.mxu0 0
        %6847 = vmatpush1.bf16.msra.mxu0 0
        %6848 = vmatprep.subr.bf16.mxu0 0
        %6849 = vmatpush1.bf16.msra.mxu0 0
        %6850 = vmatprep.subr.bf16.mxu0 0
        %6851 = vmatpush1.bf16.msra.mxu0 0
        %6852 = vmatprep.subr.bf16.mxu0 0
        %6853 = vmatpush1.bf16.msra.mxu0 0
        %6854 = vmatprep.subr.bf16.mxu0 0
        %6855 = vmatpush1.bf16.msra.mxu0 0
        %6856 = vmatprep.subr.bf16.mxu0 0
        %6857 = vmatpush1.bf16.msra.mxu0 0
        %6858 = vmatprep.subr.bf16.mxu0 0
        %6859 = vmatpush1.bf16.msra.mxu0 0
        %6860 = vmatprep.subr.bf16.mxu0 0
        %6861 = vmatpush1.bf16.msra.mxu0 0
        %6862 = vmatprep.mubr.bf16.mxu0 0
        %6863 = vmatmul.mubr.bf16.gmra.mrb[0].mxu0 %v5188
        %v6864 = vpop.f32.mrb[0].mxu0
        %v6865 = vadd.f32 %v1977, %v6864
        %v6866 = vpop.f32.mrb[0].mxu0
        %v6867 = vadd.f32 %v1981, %v6866
        %v6868 = vpop.f32.mrb[0].mxu0
        %v6869 = vpop.f32.mrb[0].mxu0
        %6870 = vdwg.mxu0
        %6871 = vmatprep.subr.bf16.mxu0 %v4093
        %6872 = vmatpush1.bf16.msra.mxu0 %v4092
        %6873 = vmatprep.subr.bf16.mxu0 %v4240
        %6874 = vmatpush1.bf16.msra.mxu0 %v4239
        %6875 = vmatprep.subr.bf16.mxu0 %v4387
        %6876 = vmatpush1.bf16.msra.mxu0 %v4386
        %6877 = vmatprep.subr.bf16.mxu0 %v4534
        %6878 = vmatpush1.bf16.msra.mxu0 %v4533
        %6879 = vmatprep.subr.bf16.mxu0 0
        %6880 = vmatpush1.bf16.msra.mxu0 0
        %6881 = vmatprep.subr.bf16.mxu0 0
        %6882 = vmatpush1.bf16.msra.mxu0 0
        %6883 = vmatprep.subr.bf16.mxu0 0
        %6884 = vmatpush1.bf16.msra.mxu0 0
        %6885 = vmatprep.subr.bf16.mxu0 0
        %6886 = vmatpush1.bf16.msra.mxu0 0
        %6887 = vmatprep.subr.bf16.mxu0 0
        %6888 = vmatpush1.bf16.msra.mxu0 0
        %6889 = vmatprep.subr.bf16.mxu0 0
        %6890 = vmatpush1.bf16.msra.mxu0 0
        %6891 = vmatprep.subr.bf16.mxu0 0
        %6892 = vmatpush1.bf16.msra.mxu0 0
        %6893 = vmatprep.subr.bf16.mxu0 0
        %6894 = vmatpush1.bf16.msra.mxu0 0
        %6895 = vmatprep.subr.bf16.mxu0 0
        %6896 = vmatpush1.bf16.msra.mxu0 0
        %6897 = vmatprep.subr.bf16.mxu0 0
        %6898 = vmatpush1.bf16.msra.mxu0 0
        %6899 = vmatprep.subr.bf16.mxu0 0
        %6900 = vmatpush1.bf16.msra.mxu0 0
        %6901 = vmatprep.subr.bf16.mxu0 0
        %6902 = vmatpush1.bf16.msra.mxu0 0
        %6903 = vmatprep.mubr.bf16.mxu0 0
        %6904 = vmatmul.mubr.bf16.gmra.mrb[0].mxu0 %v5188
        %v6905 = vpop.f32.mrb[0].mxu0
        %v6906 = vadd.f32 %v1985, %v6905
        %v6907 = vpop.f32.mrb[0].mxu0
        %v6908 = vadd.f32 %v1989, %v6907
        %v6909 = vpop.f32.mrb[0].mxu0
        %v6910 = vpop.f32.mrb[0].mxu0
        %6911 = vdwg.mxu0
        %6912 = vmatprep.subr.bf16.mxu0 %v4095
        %6913 = vmatpush1.bf16.msra.mxu0 %v4094
        %6914 = vmatprep.subr.bf16.mxu0 %v4242
        %6915 = vmatpush1.bf16.msra.mxu0 %v4241
        %6916 = vmatprep.subr.bf16.mxu0 %v4389
        %6917 = vmatpush1.bf16.msra.mxu0 %v4388
        %6918 = vmatprep.subr.bf16.mxu0 %v4536
        %6919 = vmatpush1.bf16.msra.mxu0 %v4535
        %6920 = vmatprep.subr.bf16.mxu0 0
        %6921 = vmatpush1.bf16.msra.mxu0 0
        %6922 = vmatprep.subr.bf16.mxu0 0
        %6923 = vmatpush1.bf16.msra.mxu0 0
        %6924 = vmatprep.subr.bf16.mxu0 0
        %6925 = vmatpush1.bf16.msra.mxu0 0
        %6926 = vmatprep.subr.bf16.mxu0 0
        %6927 = vmatpush1.bf16.msra.mxu0 0
        %6928 = vmatprep.subr.bf16.mxu0 0
        %6929 = vmatpush1.bf16.msra.mxu0 0
        %6930 = vmatprep.subr.bf16.mxu0 0
        %6931 = vmatpush1.bf16.msra.mxu0 0
        %6932 = vmatprep.subr.bf16.mxu0 0
        %6933 = vmatpush1.bf16.msra.mxu0 0
        %6934 = vmatprep.subr.bf16.mxu0 0
        %6935 = vmatpush1.bf16.msra.mxu0 0
        %6936 = vmatprep.subr.bf16.mxu0 0
        %6937 = vmatpush1.bf16.msra.mxu0 0
        %6938 = vmatprep.subr.bf16.mxu0 0
        %6939 = vmatpush1.bf16.msra.mxu0 0
        %6940 = vmatprep.subr.bf16.mxu0 0
        %6941 = vmatpush1.bf16.msra.mxu0 0
        %6942 = vmatprep.subr.bf16.mxu0 0
        %6943 = vmatpush1.bf16.msra.mxu0 0
        %6944 = vmatprep.mubr.bf16.mxu0 0
        %6945 = vmatmul.mubr.bf16.gmra.mrb[0].mxu0 %v5188
        %v6946 = vpop.f32.mrb[0].mxu0
        %v6947 = vadd.f32 %v1993, %v6946
        %v6948 = vpop.f32.mrb[0].mxu0
        %v6949 = vadd.f32 %v1997, %v6948
        %v6950 = vpop.f32.mrb[0].mxu0
        %v6951 = vpop.f32.mrb[0].mxu0
        %6952 = vdwg.mxu0
        %6953 = vmatprep.subr.bf16.mxu0 %v4097
        %6954 = vmatpush1.bf16.msra.mxu0 %v4096
        %6955 = vmatprep.subr.bf16.mxu0 %v4244
        %6956 = vmatpush1.bf16.msra.mxu0 %v4243
        %6957 = vmatprep.subr.bf16.mxu0 %v4391
        %6958 = vmatpush1.bf16.msra.mxu0 %v4390
        %6959 = vmatprep.subr.bf16.mxu0 %v4538
        %6960 = vmatpush1.bf16.msra.mxu0 %v4537
        %6961 = vmatprep.subr.bf16.mxu0 0
        %6962 = vmatpush1.bf16.msra.mxu0 0
        %6963 = vmatprep.subr.bf16.mxu0 0
        %6964 = vmatpush1.bf16.msra.mxu0 0
        %6965 = vmatprep.subr.bf16.mxu0 0
        %6966 = vmatpush1.bf16.msra.mxu0 0
        %6967 = vmatprep.subr.bf16.mxu0 0
        %6968 = vmatpush1.bf16.msra.mxu0 0
        %6969 = vmatprep.subr.bf16.mxu0 0
        %6970 = vmatpush1.bf16.msra.mxu0 0
        %6971 = vmatprep.subr.bf16.mxu0 0
        %6972 = vmatpush1.bf16.msra.mxu0 0
        %6973 = vmatprep.subr.bf16.mxu0 0
        %6974 = vmatpush1.bf16.msra.mxu0 0
        %6975 = vmatprep.subr.bf16.mxu0 0
        %6976 = vmatpush1.bf16.msra.mxu0 0
        %6977 = vmatprep.subr.bf16.mxu0 0
        %6978 = vmatpush1.bf16.msra.mxu0 0
        %6979 = vmatprep.subr.bf16.mxu0 0
        %6980 = vmatpush1.bf16.msra.mxu0 0
        %6981 = vmatprep.subr.bf16.mxu0 0
        %6982 = vmatpush1.bf16.msra.mxu0 0
        %6983 = vmatprep.subr.bf16.mxu0 0
        %6984 = vmatpush1.bf16.msra.mxu0 0
        %6985 = vmatprep.mubr.bf16.mxu0 0
        %6986 = vmatmul.mubr.bf16.gmra.mrb[0].mxu0 %v5188
        %v6987 = vpop.f32.mrb[0].mxu0
        %v6988 = vadd.f32 %v2001, %v6987
        %v6989 = vpop.f32.mrb[0].mxu0
        %v6990 = vadd.f32 %v2005, %v6989
        %v6991 = vpop.f32.mrb[0].mxu0
        %v6992 = vpop.f32.mrb[0].mxu0
        %6993 = vdwg.mxu0
        %6994 = vmatprep.subr.bf16.mxu0 %v4099
        %6995 = vmatpush1.bf16.msra.mxu0 %v4098
        %6996 = vmatprep.subr.bf16.mxu0 %v4246
        %6997 = vmatpush1.bf16.msra.mxu0 %v4245
        %6998 = vmatprep.subr.bf16.mxu0 %v4393
        %6999 = vmatpush1.bf16.msra.mxu0 %v4392
        %7000 = vmatprep.subr.bf16.mxu0 %v4540
        %7001 = vmatpush1.bf16.msra.mxu0 %v4539
        %7002 = vmatprep.subr.bf16.mxu0 0
        %7003 = vmatpush1.bf16.msra.mxu0 0
        %7004 = vmatprep.subr.bf16.mxu0 0
        %7005 = vmatpush1.bf16.msra.mxu0 0
        %7006 = vmatprep.subr.bf16.mxu0 0
        %7007 = vmatpush1.bf16.msra.mxu0 0
        %7008 = vmatprep.subr.bf16.mxu0 0
        %7009 = vmatpush1.bf16.msra.mxu0 0
        %7010 = vmatprep.subr.bf16.mxu0 0
        %7011 = vmatpush1.bf16.msra.mxu0 0
        %7012 = vmatprep.subr.bf16.mxu0 0
        %7013 = vmatpush1.bf16.msra.mxu0 0
        %7014 = vmatprep.subr.bf16.mxu0 0
        %7015 = vmatpush1.bf16.msra.mxu0 0
        %7016 = vmatprep.subr.bf16.mxu0 0
        %7017 = vmatpush1.bf16.msra.mxu0 0
        %7018 = vmatprep.subr.bf16.mxu0 0
        %7019 = vmatpush1.bf16.msra.mxu0 0
        %7020 = vmatprep.subr.bf16.mxu0 0
        %7021 = vmatpush1.bf16.msra.mxu0 0
        %7022 = vmatprep.subr.bf16.mxu0 0
        %7023 = vmatpush1.bf16.msra.mxu0 0
        %7024 = vmatprep.subr.bf16.mxu0 0
        %7025 = vmatpush1.bf16.msra.mxu0 0
        %7026 = vmatprep.mubr.bf16.mxu0 0
        %7027 = vmatmul.mubr.bf16.gmra.mrb[0].mxu0 %v5188
        %v7028 = vpop.f32.mrb[0].mxu0
        %v7029 = vadd.f32 %v2009, %v7028
        %v7030 = vpop.f32.mrb[0].mxu0
        %v7031 = vadd.f32 %v2013, %v7030
        %v7032 = vpop.f32.mrb[0].mxu0
        %v7033 = vpop.f32.mrb[0].mxu0
        %7034 = vdwg.mxu0
        %7035 = vmatprep.subr.bf16.mxu0 %v4101
        %7036 = vmatpush1.bf16.msra.mxu0 %v4100
        %7037 = vmatprep.subr.bf16.mxu0 %v4248
        %7038 = vmatpush1.bf16.msra.mxu0 %v4247
        %7039 = vmatprep.subr.bf16.mxu0 %v4395
        %7040 = vmatpush1.bf16.msra.mxu0 %v4394
        %7041 = vmatprep.subr.bf16.mxu0 %v4542
        %7042 = vmatpush1.bf16.msra.mxu0 %v4541
        %7043 = vmatprep.subr.bf16.mxu0 0
        %7044 = vmatpush1.bf16.msra.mxu0 0
        %7045 = vmatprep.subr.bf16.mxu0 0
        %7046 = vmatpush1.bf16.msra.mxu0 0
        %7047 = vmatprep.subr.bf16.mxu0 0
        %7048 = vmatpush1.bf16.msra.mxu0 0
        %7049 = vmatprep.subr.bf16.mxu0 0
        %7050 = vmatpush1.bf16.msra.mxu0 0
        %7051 = vmatprep.subr.bf16.mxu0 0
        %7052 = vmatpush1.bf16.msra.mxu0 0
        %7053 = vmatprep.subr.bf16.mxu0 0
        %7054 = vmatpush1.bf16.msra.mxu0 0
        %7055 = vmatprep.subr.bf16.mxu0 0
        %7056 = vmatpush1.bf16.msra.mxu0 0
        %7057 = vmatprep.subr.bf16.mxu0 0
        %7058 = vmatpush1.bf16.msra.mxu0 0
        %7059 = vmatprep.subr.bf16.mxu0 0
        %7060 = vmatpush1.bf16.msra.mxu0 0
        %7061 = vmatprep.subr.bf16.mxu0 0
        %7062 = vmatpush1.bf16.msra.mxu0 0
        %7063 = vmatprep.subr.bf16.mxu0 0
        %7064 = vmatpush1.bf16.msra.mxu0 0
        %7065 = vmatprep.subr.bf16.mxu0 0
        %7066 = vmatpush1.bf16.msra.mxu0 0
        %7067 = vmatprep.mubr.bf16.mxu0 0
        %7068 = vmatmul.mubr.bf16.gmra.mrb[0].mxu0 %v5188
        %v7069 = vpop.f32.mrb[0].mxu0
        %v7070 = vadd.f32 %v2017, %v7069
        %v7071 = vpop.f32.mrb[0].mxu0
        %v7072 = vadd.f32 %v2021, %v7071
        %v7073 = vpop.f32.mrb[0].mxu0
        %v7074 = vpop.f32.mrb[0].mxu0
        %7075 = vdwg.mxu0
        %7076 = vmatprep.subr.bf16.mxu0 %v4103
        %7077 = vmatpush1.bf16.msra.mxu0 %v4102
        %7078 = vmatprep.subr.bf16.mxu0 %v4250
        %7079 = vmatpush1.bf16.msra.mxu0 %v4249
        %7080 = vmatprep.subr.bf16.mxu0 %v4397
        %7081 = vmatpush1.bf16.msra.mxu0 %v4396
        %7082 = vmatprep.subr.bf16.mxu0 %v4544
        %7083 = vmatpush1.bf16.msra.mxu0 %v4543
        %7084 = vmatprep.subr.bf16.mxu0 0
        %7085 = vmatpush1.bf16.msra.mxu0 0
        %7086 = vmatprep.subr.bf16.mxu0 0
        %7087 = vmatpush1.bf16.msra.mxu0 0
        %7088 = vmatprep.subr.bf16.mxu0 0
        %7089 = vmatpush1.bf16.msra.mxu0 0
        %7090 = vmatprep.subr.bf16.mxu0 0
        %7091 = vmatpush1.bf16.msra.mxu0 0
        %7092 = vmatprep.subr.bf16.mxu0 0
        %7093 = vmatpush1.bf16.msra.mxu0 0
        %7094 = vmatprep.subr.bf16.mxu0 0
        %7095 = vmatpush1.bf16.msra.mxu0 0
        %7096 = vmatprep.subr.bf16.mxu0 0
        %7097 = vmatpush1.bf16.msra.mxu0 0
        %7098 = vmatprep.subr.bf16.mxu0 0
        %7099 = vmatpush1.bf16.msra.mxu0 0
        %7100 = vmatprep.subr.bf16.mxu0 0
        %7101 = vmatpush1.bf16.msra.mxu0 0
        %7102 = vmatprep.subr.bf16.mxu0 0
        %7103 = vmatpush1.bf16.msra.mxu0 0
        %7104 = vmatprep.subr.bf16.mxu0 0
        %7105 = vmatpush1.bf16.msra.mxu0 0
        %7106 = vmatprep.subr.bf16.mxu0 0
        %7107 = vmatpush1.bf16.msra.mxu0 0
        %7108 = vmatprep.mubr.bf16.mxu0 0
        %7109 = vmatmul.mubr.bf16.gmra.mrb[0].mxu0 %v5188
        %v7110 = vpop.f32.mrb[0].mxu0
        %v7111 = vadd.f32 %v2025, %v7110
        %v7112 = vpop.f32.mrb[0].mxu0
        %v7113 = vadd.f32 %v2029, %v7112
        %v7114 = vpop.f32.mrb[0].mxu0
        %v7115 = vpop.f32.mrb[0].mxu0
        %7116 = vdwg.mxu0
        %7117 = vmatprep.subr.bf16.mxu0 %v4105
        %7118 = vmatpush1.bf16.msra.mxu0 %v4104
        %7119 = vmatprep.subr.bf16.mxu0 %v4252
        %7120 = vmatpush1.bf16.msra.mxu0 %v4251
        %7121 = vmatprep.subr.bf16.mxu0 %v4399
        %7122 = vmatpush1.bf16.msra.mxu0 %v4398
        %7123 = vmatprep.subr.bf16.mxu0 %v4546
        %7124 = vmatpush1.bf16.msra.mxu0 %v4545
        %7125 = vmatprep.subr.bf16.mxu0 0
        %7126 = vmatpush1.bf16.msra.mxu0 0
        %7127 = vmatprep.subr.bf16.mxu0 0
        %7128 = vmatpush1.bf16.msra.mxu0 0
        %7129 = vmatprep.subr.bf16.mxu0 0
        %7130 = vmatpush1.bf16.msra.mxu0 0
        %7131 = vmatprep.subr.bf16.mxu0 0
        %7132 = vmatpush1.bf16.msra.mxu0 0
        %7133 = vmatprep.subr.bf16.mxu0 0
        %7134 = vmatpush1.bf16.msra.mxu0 0
        %7135 = vmatprep.subr.bf16.mxu0 0
        %7136 = vmatpush1.bf16.msra.mxu0 0
        %7137 = vmatprep.subr.bf16.mxu0 0
        %7138 = vmatpush1.bf16.msra.mxu0 0
        %7139 = vmatprep.subr.bf16.mxu0 0
        %7140 = vmatpush1.bf16.msra.mxu0 0
        %7141 = vmatprep.subr.bf16.mxu0 0
        %7142 = vmatpush1.bf16.msra.mxu0 0
        %7143 = vmatprep.subr.bf16.mxu0 0
        %7144 = vmatpush1.bf16.msra.mxu0 0
        %7145 = vmatprep.subr.bf16.mxu0 0
        %7146 = vmatpush1.bf16.msra.mxu0 0
        %7147 = vmatprep.subr.bf16.mxu0 0
        %7148 = vmatpush1.bf16.msra.mxu0 0
        %7149 = vmatprep.mubr.bf16.mxu0 0
        %7150 = vmatmul.mubr.bf16.gmra.mrb[0].mxu0 %v5188
        %v7151 = vpop.f32.mrb[0].mxu0
        %v7152 = vadd.f32 %v2033, %v7151
        %v7153 = vpop.f32.mrb[0].mxu0
        %v7154 = vadd.f32 %v2037, %v7153
        %v7155 = vpop.f32.mrb[0].mxu0
        %v7156 = vpop.f32.mrb[0].mxu0
        %7157 = vdwg.mxu0
        %7158 = vmatprep.subr.bf16.mxu0 %v4107
        %7159 = vmatpush1.bf16.msra.mxu0 %v4106
        %7160 = vmatprep.subr.bf16.mxu0 %v4254
        %7161 = vmatpush1.bf16.msra.mxu0 %v4253
        %7162 = vmatprep.subr.bf16.mxu0 %v4401
        %7163 = vmatpush1.bf16.msra.mxu0 %v4400
        %7164 = vmatprep.subr.bf16.mxu0 %v4548
        %7165 = vmatpush1.bf16.msra.mxu0 %v4547
        %7166 = vmatprep.subr.bf16.mxu0 0
        %7167 = vmatpush1.bf16.msra.mxu0 0
        %7168 = vmatprep.subr.bf16.mxu0 0
        %7169 = vmatpush1.bf16.msra.mxu0 0
        %7170 = vmatprep.subr.bf16.mxu0 0
        %7171 = vmatpush1.bf16.msra.mxu0 0
        %7172 = vmatprep.subr.bf16.mxu0 0
        %7173 = vmatpush1.bf16.msra.mxu0 0
        %7174 = vmatprep.subr.bf16.mxu0 0
        %7175 = vmatpush1.bf16.msra.mxu0 0
        %7176 = vmatprep.subr.bf16.mxu0 0
        %7177 = vmatpush1.bf16.msra.mxu0 0
        %7178 = vmatprep.subr.bf16.mxu0 0
        %7179 = vmatpush1.bf16.msra.mxu0 0
        %7180 = vmatprep.subr.bf16.mxu0 0
        %7181 = vmatpush1.bf16.msra.mxu0 0
        %7182 = vmatprep.subr.bf16.mxu0 0
        %7183 = vmatpush1.bf16.msra.mxu0 0
        %7184 = vmatprep.subr.bf16.mxu0 0
        %7185 = vmatpush1.bf16.msra.mxu0 0
        %7186 = vmatprep.subr.bf16.mxu0 0
        %7187 = vmatpush1.bf16.msra.mxu0 0
        %7188 = vmatprep.subr.bf16.mxu0 0
        %7189 = vmatpush1.bf16.msra.mxu0 0
        %7190 = vmatprep.mubr.bf16.mxu0 0
        %7191 = vmatmul.mubr.bf16.gmra.mrb[0].mxu0 %v5188
        %v7192 = vpop.f32.mrb[0].mxu0
        %v7193 = vadd.f32 %v2041, %v7192
        %v7194 = vpop.f32.mrb[0].mxu0
        %v7195 = vadd.f32 %v2045, %v7194
        %v7196 = vpop.f32.mrb[0].mxu0
        %v7197 = vpop.f32.mrb[0].mxu0
        %7198 = vdwg.mxu0
        %7199 = vmatprep.subr.bf16.mxu0 %v4109
        %7200 = vmatpush1.bf16.msra.mxu0 %v4108
        %7201 = vmatprep.subr.bf16.mxu0 %v4256
        %7202 = vmatpush1.bf16.msra.mxu0 %v4255
        %7203 = vmatprep.subr.bf16.mxu0 %v4403
        %7204 = vmatpush1.bf16.msra.mxu0 %v4402
        %7205 = vmatprep.subr.bf16.mxu0 %v4550
        %7206 = vmatpush1.bf16.msra.mxu0 %v4549
        %7207 = vmatprep.subr.bf16.mxu0 0
        %7208 = vmatpush1.bf16.msra.mxu0 0
        %7209 = vmatprep.subr.bf16.mxu0 0
        %7210 = vmatpush1.bf16.msra.mxu0 0
        %7211 = vmatprep.subr.bf16.mxu0 0
        %7212 = vmatpush1.bf16.msra.mxu0 0
        %7213 = vmatprep.subr.bf16.mxu0 0
        %7214 = vmatpush1.bf16.msra.mxu0 0
        %7215 = vmatprep.subr.bf16.mxu0 0
        %7216 = vmatpush1.bf16.msra.mxu0 0
        %7217 = vmatprep.subr.bf16.mxu0 0
        %7218 = vmatpush1.bf16.msra.mxu0 0
        %7219 = vmatprep.subr.bf16.mxu0 0
        %7220 = vmatpush1.bf16.msra.mxu0 0
        %7221 = vmatprep.subr.bf16.mxu0 0
        %7222 = vmatpush1.bf16.msra.mxu0 0
        %7223 = vmatprep.subr.bf16.mxu0 0
        %7224 = vmatpush1.bf16.msra.mxu0 0
        %7225 = vmatprep.subr.bf16.mxu0 0
        %7226 = vmatpush1.bf16.msra.mxu0 0
        %7227 = vmatprep.subr.bf16.mxu0 0
        %7228 = vmatpush1.bf16.msra.mxu0 0
        %7229 = vmatprep.subr.bf16.mxu0 0
        %7230 = vmatpush1.bf16.msra.mxu0 0
        %7231 = vmatprep.mubr.bf16.mxu0 0
        %7232 = vmatmul.mubr.bf16.gmra.mrb[0].mxu0 %v5188
        %v7233 = vpop.f32.mrb[0].mxu0
        %v7234 = vadd.f32 %v2049, %v7233
        %v7235 = vpop.f32.mrb[0].mxu0
        %v7236 = vadd.f32 %v2053, %v7235
        %v7237 = vpop.f32.mrb[0].mxu0
        %v7238 = vpop.f32.mrb[0].mxu0
        %7239 = vdwg.mxu0
        %7240 = vmatprep.subr.bf16.mxu0 %v4111
        %7241 = vmatpush1.bf16.msra.mxu0 %v4110
        %7242 = vmatprep.subr.bf16.mxu0 %v4258
        %7243 = vmatpush1.bf16.msra.mxu0 %v4257
        %7244 = vmatprep.subr.bf16.mxu0 %v4405
        %7245 = vmatpush1.bf16.msra.mxu0 %v4404
        %7246 = vmatprep.subr.bf16.mxu0 %v4552
        %7247 = vmatpush1.bf16.msra.mxu0 %v4551
        %7248 = vmatprep.subr.bf16.mxu0 0
        %7249 = vmatpush1.bf16.msra.mxu0 0
        %7250 = vmatprep.subr.bf16.mxu0 0
        %7251 = vmatpush1.bf16.msra.mxu0 0
        %7252 = vmatprep.subr.bf16.mxu0 0
        %7253 = vmatpush1.bf16.msra.mxu0 0
        %7254 = vmatprep.subr.bf16.mxu0 0
        %7255 = vmatpush1.bf16.msra.mxu0 0
        %7256 = vmatprep.subr.bf16.mxu0 0
        %7257 = vmatpush1.bf16.msra.mxu0 0
        %7258 = vmatprep.subr.bf16.mxu0 0
        %7259 = vmatpush1.bf16.msra.mxu0 0
        %7260 = vmatprep.subr.bf16.mxu0 0
        %7261 = vmatpush1.bf16.msra.mxu0 0
        %7262 = vmatprep.subr.bf16.mxu0 0
        %7263 = vmatpush1.bf16.msra.mxu0 0
        %7264 = vmatprep.subr.bf16.mxu0 0
        %7265 = vmatpush1.bf16.msra.mxu0 0
        %7266 = vmatprep.subr.bf16.mxu0 0
        %7267 = vmatpush1.bf16.msra.mxu0 0
        %7268 = vmatprep.subr.bf16.mxu0 0
        %7269 = vmatpush1.bf16.msra.mxu0 0
        %7270 = vmatprep.subr.bf16.mxu0 0
        %7271 = vmatpush1.bf16.msra.mxu0 0
        %7272 = vmatprep.mubr.bf16.mxu0 0
        %7273 = vmatmul.mubr.bf16.gmra.mrb[0].mxu0 %v5188
        %v7274 = vpop.f32.mrb[0].mxu0
        %v7275 = vadd.f32 %v2057, %v7274
        %v7276 = vpop.f32.mrb[0].mxu0
        %v7277 = vadd.f32 %v2061, %v7276
        %v7278 = vpop.f32.mrb[0].mxu0
        %v7279 = vpop.f32.mrb[0].mxu0
        %7280 = vdwg.mxu0
        %7281 = vmatprep.subr.bf16.mxu0 %v4113
        %7282 = vmatpush1.bf16.msra.mxu0 %v4112
        %7283 = vmatprep.subr.bf16.mxu0 %v4260
        %7284 = vmatpush1.bf16.msra.mxu0 %v4259
        %7285 = vmatprep.subr.bf16.mxu0 %v4407
        %7286 = vmatpush1.bf16.msra.mxu0 %v4406
        %7287 = vmatprep.subr.bf16.mxu0 %v4554
        %7288 = vmatpush1.bf16.msra.mxu0 %v4553
        %7289 = vmatprep.subr.bf16.mxu0 0
        %7290 = vmatpush1.bf16.msra.mxu0 0
        %7291 = vmatprep.subr.bf16.mxu0 0
        %7292 = vmatpush1.bf16.msra.mxu0 0
        %7293 = vmatprep.subr.bf16.mxu0 0
        %7294 = vmatpush1.bf16.msra.mxu0 0
        %7295 = vmatprep.subr.bf16.mxu0 0
        %7296 = vmatpush1.bf16.msra.mxu0 0
        %7297 = vmatprep.subr.bf16.mxu0 0
        %7298 = vmatpush1.bf16.msra.mxu0 0
        %7299 = vmatprep.subr.bf16.mxu0 0
        %7300 = vmatpush1.bf16.msra.mxu0 0
        %7301 = vmatprep.subr.bf16.mxu0 0
        %7302 = vmatpush1.bf16.msra.mxu0 0
        %7303 = vmatprep.subr.bf16.mxu0 0
        %7304 = vmatpush1.bf16.msra.mxu0 0
        %7305 = vmatprep.subr.bf16.mxu0 0
        %7306 = vmatpush1.bf16.msra.mxu0 0
        %7307 = vmatprep.subr.bf16.mxu0 0
        %7308 = vmatpush1.bf16.msra.mxu0 0
        %7309 = vmatprep.subr.bf16.mxu0 0
        %7310 = vmatpush1.bf16.msra.mxu0 0
        %7311 = vmatprep.subr.bf16.mxu0 0
        %7312 = vmatpush1.bf16.msra.mxu0 0
        %7313 = vmatprep.mubr.bf16.mxu0 0
        %7314 = vmatmul.mubr.bf16.gmra.mrb[0].mxu0 %v5188
        %v7315 = vpop.f32.mrb[0].mxu0
        %v7316 = vadd.f32 %v2065, %v7315
        %v7317 = vpop.f32.mrb[0].mxu0
        %v7318 = vadd.f32 %v2069, %v7317
        %v7319 = vpop.f32.mrb[0].mxu0
        %v7320 = vpop.f32.mrb[0].mxu0
        %7321 = vdwg.mxu0
        %7322 = vmatprep.subr.bf16.mxu0 %v4115
        %7323 = vmatpush1.bf16.msra.mxu0 %v4114
        %7324 = vmatprep.subr.bf16.mxu0 %v4262
        %7325 = vmatpush1.bf16.msra.mxu0 %v4261
        %7326 = vmatprep.subr.bf16.mxu0 %v4409
        %7327 = vmatpush1.bf16.msra.mxu0 %v4408
        %7328 = vmatprep.subr.bf16.mxu0 %v4556
        %7329 = vmatpush1.bf16.msra.mxu0 %v4555
        %7330 = vmatprep.subr.bf16.mxu0 0
        %7331 = vmatpush1.bf16.msra.mxu0 0
        %7332 = vmatprep.subr.bf16.mxu0 0
        %7333 = vmatpush1.bf16.msra.mxu0 0
        %7334 = vmatprep.subr.bf16.mxu0 0
        %7335 = vmatpush1.bf16.msra.mxu0 0
        %7336 = vmatprep.subr.bf16.mxu0 0
        %7337 = vmatpush1.bf16.msra.mxu0 0
        %7338 = vmatprep.subr.bf16.mxu0 0
        %7339 = vmatpush1.bf16.msra.mxu0 0
        %7340 = vmatprep.subr.bf16.mxu0 0
        %7341 = vmatpush1.bf16.msra.mxu0 0
        %7342 = vmatprep.subr.bf16.mxu0 0
        %7343 = vmatpush1.bf16.msra.mxu0 0
        %7344 = vmatprep.subr.bf16.mxu0 0
        %7345 = vmatpush1.bf16.msra.mxu0 0
        %7346 = vmatprep.subr.bf16.mxu0 0
        %7347 = vmatpush1.bf16.msra.mxu0 0
        %7348 = vmatprep.subr.bf16.mxu0 0
        %7349 = vmatpush1.bf16.msra.mxu0 0
        %7350 = vmatprep.subr.bf16.mxu0 0
        %7351 = vmatpush1.bf16.msra.mxu0 0
        %7352 = vmatprep.subr.bf16.mxu0 0
        %7353 = vmatpush1.bf16.msra.mxu0 0
        %7354 = vmatprep.mubr.bf16.mxu0 0
        %7355 = vmatmul.mubr.bf16.gmra.mrb[0].mxu0 %v5188
        %v7356 = vpop.f32.mrb[0].mxu0
        %v7357 = vadd.f32 %v2073, %v7356
        %v7358 = vpop.f32.mrb[0].mxu0
        %v7359 = vadd.f32 %v2077, %v7358
        %v7360 = vpop.f32.mrb[0].mxu0
        %v7361 = vpop.f32.mrb[0].mxu0
        %7362 = vdwg.mxu0
        %7363 = vmatprep.subr.bf16.mxu0 %v4117
        %7364 = vmatpush1.bf16.msra.mxu0 %v4116
        %7365 = vmatprep.subr.bf16.mxu0 %v4264
        %7366 = vmatpush1.bf16.msra.mxu0 %v4263
        %7367 = vmatprep.subr.bf16.mxu0 %v4411
        %7368 = vmatpush1.bf16.msra.mxu0 %v4410
        %7369 = vmatprep.subr.bf16.mxu0 %v4558
        %7370 = vmatpush1.bf16.msra.mxu0 %v4557
        %7371 = vmatprep.subr.bf16.mxu0 0
        %7372 = vmatpush1.bf16.msra.mxu0 0
        %7373 = vmatprep.subr.bf16.mxu0 0
        %7374 = vmatpush1.bf16.msra.mxu0 0
        %7375 = vmatprep.subr.bf16.mxu0 0
        %7376 = vmatpush1.bf16.msra.mxu0 0
        %7377 = vmatprep.subr.bf16.mxu0 0
        %7378 = vmatpush1.bf16.msra.mxu0 0
        %7379 = vmatprep.subr.bf16.mxu0 0
        %7380 = vmatpush1.bf16.msra.mxu0 0
        %7381 = vmatprep.subr.bf16.mxu0 0
        %7382 = vmatpush1.bf16.msra.mxu0 0
        %7383 = vmatprep.subr.bf16.mxu0 0
        %7384 = vmatpush1.bf16.msra.mxu0 0
        %7385 = vmatprep.subr.bf16.mxu0 0
        %7386 = vmatpush1.bf16.msra.mxu0 0
        %7387 = vmatprep.subr.bf16.mxu0 0
        %7388 = vmatpush1.bf16.msra.mxu0 0
        %7389 = vmatprep.subr.bf16.mxu0 0
        %7390 = vmatpush1.bf16.msra.mxu0 0
        %7391 = vmatprep.subr.bf16.mxu0 0
        %7392 = vmatpush1.bf16.msra.mxu0 0
        %7393 = vmatprep.subr.bf16.mxu0 0
        %7394 = vmatpush1.bf16.msra.mxu0 0
        %7395 = vmatprep.mubr.bf16.mxu0 0
        %7396 = vmatmul.mubr.bf16.gmra.mrb[0].mxu0 %v5188
        %v7397 = vpop.f32.mrb[0].mxu0
        %v7398 = vadd.f32 %v2081, %v7397
        %v7399 = vpop.f32.mrb[0].mxu0
        %v7400 = vadd.f32 %v2085, %v7399
        %v7401 = vpop.f32.mrb[0].mxu0
        %v7402 = vpop.f32.mrb[0].mxu0
        %7403 = vdwg.mxu0
        %7404 = vmatprep.subr.bf16.mxu0 %v4119
        %7405 = vmatpush1.bf16.msra.mxu0 %v4118
        %7406 = vmatprep.subr.bf16.mxu0 %v4266
        %7407 = vmatpush1.bf16.msra.mxu0 %v4265
        %7408 = vmatprep.subr.bf16.mxu0 %v4413
        %7409 = vmatpush1.bf16.msra.mxu0 %v4412
        %7410 = vmatprep.subr.bf16.mxu0 %v4560
        %7411 = vmatpush1.bf16.msra.mxu0 %v4559
        %7412 = vmatprep.subr.bf16.mxu0 0
        %7413 = vmatpush1.bf16.msra.mxu0 0
        %7414 = vmatprep.subr.bf16.mxu0 0
        %7415 = vmatpush1.bf16.msra.mxu0 0
        %7416 = vmatprep.subr.bf16.mxu0 0
        %7417 = vmatpush1.bf16.msra.mxu0 0
        %7418 = vmatprep.subr.bf16.mxu0 0
        %7419 = vmatpush1.bf16.msra.mxu0 0
        %7420 = vmatprep.subr.bf16.mxu0 0
        %7421 = vmatpush1.bf16.msra.mxu0 0
        %7422 = vmatprep.subr.bf16.mxu0 0
        %7423 = vmatpush1.bf16.msra.mxu0 0
        %7424 = vmatprep.subr.bf16.mxu0 0
        %7425 = vmatpush1.bf16.msra.mxu0 0
        %7426 = vmatprep.subr.bf16.mxu0 0
        %7427 = vmatpush1.bf16.msra.mxu0 0
        %7428 = vmatprep.subr.bf16.mxu0 0
        %7429 = vmatpush1.bf16.msra.mxu0 0
        %7430 = vmatprep.subr.bf16.mxu0 0
        %7431 = vmatpush1.bf16.msra.mxu0 0
        %7432 = vmatprep.subr.bf16.mxu0 0
        %7433 = vmatpush1.bf16.msra.mxu0 0
        %7434 = vmatprep.subr.bf16.mxu0 0
        %7435 = vmatpush1.bf16.msra.mxu0 0
        %7436 = vmatprep.mubr.bf16.mxu0 0
        %7437 = vmatmul.mubr.bf16.gmra.mrb[0].mxu0 %v5188
        %v7438 = vpop.f32.mrb[0].mxu0
        %v7439 = vadd.f32 %v2089, %v7438
        %v7440 = vpop.f32.mrb[0].mxu0
        %v7441 = vadd.f32 %v2093, %v7440
        %v7442 = vpop.f32.mrb[0].mxu0
        %v7443 = vpop.f32.mrb[0].mxu0
        %7444 = vdwg.mxu0
        %7445 = vmatprep.subr.bf16.mxu0 %v4121
        %7446 = vmatpush1.bf16.msra.mxu0 %v4120
        %7447 = vmatprep.subr.bf16.mxu0 %v4268
        %7448 = vmatpush1.bf16.msra.mxu0 %v4267
        %7449 = vmatprep.subr.bf16.mxu0 %v4415
        %7450 = vmatpush1.bf16.msra.mxu0 %v4414
        %7451 = vmatprep.subr.bf16.mxu0 %v4562
        %7452 = vmatpush1.bf16.msra.mxu0 %v4561
        %7453 = vmatprep.subr.bf16.mxu0 0
        %7454 = vmatpush1.bf16.msra.mxu0 0
        %7455 = vmatprep.subr.bf16.mxu0 0
        %7456 = vmatpush1.bf16.msra.mxu0 0
        %7457 = vmatprep.subr.bf16.mxu0 0
        %7458 = vmatpush1.bf16.msra.mxu0 0
        %7459 = vmatprep.subr.bf16.mxu0 0
        %7460 = vmatpush1.bf16.msra.mxu0 0
        %7461 = vmatprep.subr.bf16.mxu0 0
        %7462 = vmatpush1.bf16.msra.mxu0 0
        %7463 = vmatprep.subr.bf16.mxu0 0
        %7464 = vmatpush1.bf16.msra.mxu0 0
        %7465 = vmatprep.subr.bf16.mxu0 0
        %7466 = vmatpush1.bf16.msra.mxu0 0
        %7467 = vmatprep.subr.bf16.mxu0 0
        %7468 = vmatpush1.bf16.msra.mxu0 0
        %7469 = vmatprep.subr.bf16.mxu0 0
        %7470 = vmatpush1.bf16.msra.mxu0 0
        %7471 = vmatprep.subr.bf16.mxu0 0
        %7472 = vmatpush1.bf16.msra.mxu0 0
        %7473 = vmatprep.subr.bf16.mxu0 0
        %7474 = vmatpush1.bf16.msra.mxu0 0
        %7475 = vmatprep.subr.bf16.mxu0 0
        %7476 = vmatpush1.bf16.msra.mxu0 0
        %7477 = vmatprep.mubr.bf16.mxu0 0
        %7478 = vmatmul.mubr.bf16.gmra.mrb[0].mxu0 %v5188
        %v7479 = vpop.f32.mrb[0].mxu0
        %v7480 = vadd.f32 %v2097, %v7479
        %v7481 = vpop.f32.mrb[0].mxu0
        %v7482 = vadd.f32 %v2101, %v7481
        %v7483 = vpop.f32.mrb[0].mxu0
        %v7484 = vpop.f32.mrb[0].mxu0
        %7485 = vdwg.mxu0
        %7486 = vmatprep.subr.bf16.mxu0 %v4123
        %7487 = vmatpush1.bf16.msra.mxu0 %v4122
        %7488 = vmatprep.subr.bf16.mxu0 %v4270
        %7489 = vmatpush1.bf16.msra.mxu0 %v4269
        %7490 = vmatprep.subr.bf16.mxu0 %v4417
        %7491 = vmatpush1.bf16.msra.mxu0 %v4416
        %7492 = vmatprep.subr.bf16.mxu0 %v4564
        %7493 = vmatpush1.bf16.msra.mxu0 %v4563
        %7494 = vmatprep.subr.bf16.mxu0 0
        %7495 = vmatpush1.bf16.msra.mxu0 0
        %7496 = vmatprep.subr.bf16.mxu0 0
        %7497 = vmatpush1.bf16.msra.mxu0 0
        %7498 = vmatprep.subr.bf16.mxu0 0
        %7499 = vmatpush1.bf16.msra.mxu0 0
        %7500 = vmatprep.subr.bf16.mxu0 0
        %7501 = vmatpush1.bf16.msra.mxu0 0
        %7502 = vmatprep.subr.bf16.mxu0 0
        %7503 = vmatpush1.bf16.msra.mxu0 0
        %7504 = vmatprep.subr.bf16.mxu0 0
        %7505 = vmatpush1.bf16.msra.mxu0 0
        %7506 = vmatprep.subr.bf16.mxu0 0
        %7507 = vmatpush1.bf16.msra.mxu0 0
        %7508 = vmatprep.subr.bf16.mxu0 0
        %7509 = vmatpush1.bf16.msra.mxu0 0
        %7510 = vmatprep.subr.bf16.mxu0 0
        %7511 = vmatpush1.bf16.msra.mxu0 0
        %7512 = vmatprep.subr.bf16.mxu0 0
        %7513 = vmatpush1.bf16.msra.mxu0 0
        %7514 = vmatprep.subr.bf16.mxu0 0
        %7515 = vmatpush1.bf16.msra.mxu0 0
        %7516 = vmatprep.subr.bf16.mxu0 0
        %7517 = vmatpush1.bf16.msra.mxu0 0
        %7518 = vmatprep.mubr.bf16.mxu0 0
        %7519 = vmatmul.mubr.bf16.gmra.mrb[0].mxu0 %v5188
        %v7520 = vpop.f32.mrb[0].mxu0
        %v7521 = vadd.f32 %v2105, %v7520
        %v7522 = vpop.f32.mrb[0].mxu0
        %v7523 = vadd.f32 %v2109, %v7522
        %v7524 = vpop.f32.mrb[0].mxu0
        %v7525 = vpop.f32.mrb[0].mxu0
        %7526 = vdwg.mxu0
        %7527 = vmatprep.subr.bf16.mxu0 %v4125
        %7528 = vmatpush1.bf16.msra.mxu0 %v4124
        %7529 = vmatprep.subr.bf16.mxu0 %v4272
        %7530 = vmatpush1.bf16.msra.mxu0 %v4271
        %7531 = vmatprep.subr.bf16.mxu0 %v4419
        %7532 = vmatpush1.bf16.msra.mxu0 %v4418
        %7533 = vmatprep.subr.bf16.mxu0 %v4566
        %7534 = vmatpush1.bf16.msra.mxu0 %v4565
        %7535 = vmatprep.subr.bf16.mxu0 0
        %7536 = vmatpush1.bf16.msra.mxu0 0
        %7537 = vmatprep.subr.bf16.mxu0 0
        %7538 = vmatpush1.bf16.msra.mxu0 0
        %7539 = vmatprep.subr.bf16.mxu0 0
        %7540 = vmatpush1.bf16.msra.mxu0 0
        %7541 = vmatprep.subr.bf16.mxu0 0
        %7542 = vmatpush1.bf16.msra.mxu0 0
        %7543 = vmatprep.subr.bf16.mxu0 0
        %7544 = vmatpush1.bf16.msra.mxu0 0
        %7545 = vmatprep.subr.bf16.mxu0 0
        %7546 = vmatpush1.bf16.msra.mxu0 0
        %7547 = vmatprep.subr.bf16.mxu0 0
        %7548 = vmatpush1.bf16.msra.mxu0 0
        %7549 = vmatprep.subr.bf16.mxu0 0
        %7550 = vmatpush1.bf16.msra.mxu0 0
        %7551 = vmatprep.subr.bf16.mxu0 0
        %7552 = vmatpush1.bf16.msra.mxu0 0
        %7553 = vmatprep.subr.bf16.mxu0 0
        %7554 = vmatpush1.bf16.msra.mxu0 0
        %7555 = vmatprep.subr.bf16.mxu0 0
        %7556 = vmatpush1.bf16.msra.mxu0 0
        %7557 = vmatprep.subr.bf16.mxu0 0
        %7558 = vmatpush1.bf16.msra.mxu0 0
        %7559 = vmatprep.mubr.bf16.mxu0 0
        %7560 = vmatmul.mubr.bf16.gmra.mrb[0].mxu0 %v5188
        %v7561 = vpop.f32.mrb[0].mxu0
        %v7562 = vadd.f32 %v2113, %v7561
        %v7563 = vpop.f32.mrb[0].mxu0
        %v7564 = vadd.f32 %v2117, %v7563
        %v7565 = vpop.f32.mrb[0].mxu0
        %v7566 = vpop.f32.mrb[0].mxu0
        %7567 = vdwg.mxu0
        %7568 = vmatprep.subr.bf16.mxu0 %v4127
        %7569 = vmatpush1.bf16.msra.mxu0 %v4126
        %7570 = vmatprep.subr.bf16.mxu0 %v4274
        %7571 = vmatpush1.bf16.msra.mxu0 %v4273
        %7572 = vmatprep.subr.bf16.mxu0 %v4421
        %7573 = vmatpush1.bf16.msra.mxu0 %v4420
        %7574 = vmatprep.subr.bf16.mxu0 %v4568
        %7575 = vmatpush1.bf16.msra.mxu0 %v4567
        %7576 = vmatprep.subr.bf16.mxu0 0
        %7577 = vmatpush1.bf16.msra.mxu0 0
        %7578 = vmatprep.subr.bf16.mxu0 0
        %7579 = vmatpush1.bf16.msra.mxu0 0
        %7580 = vmatprep.subr.bf16.mxu0 0
        %7581 = vmatpush1.bf16.msra.mxu0 0
        %7582 = vmatprep.subr.bf16.mxu0 0
        %7583 = vmatpush1.bf16.msra.mxu0 0
        %7584 = vmatprep.subr.bf16.mxu0 0
        %7585 = vmatpush1.bf16.msra.mxu0 0
        %7586 = vmatprep.subr.bf16.mxu0 0
        %7587 = vmatpush1.bf16.msra.mxu0 0
        %7588 = vmatprep.subr.bf16.mxu0 0
        %7589 = vmatpush1.bf16.msra.mxu0 0
        %7590 = vmatprep.subr.bf16.mxu0 0
        %7591 = vmatpush1.bf16.msra.mxu0 0
        %7592 = vmatprep.subr.bf16.mxu0 0
        %7593 = vmatpush1.bf16.msra.mxu0 0
        %7594 = vmatprep.subr.bf16.mxu0 0
        %7595 = vmatpush1.bf16.msra.mxu0 0
        %7596 = vmatprep.subr.bf16.mxu0 0
        %7597 = vmatpush1.bf16.msra.mxu0 0
        %7598 = vmatprep.subr.bf16.mxu0 0
        %7599 = vmatpush1.bf16.msra.mxu0 0
        %7600 = vmatprep.mubr.bf16.mxu0 0
        %7601 = vmatmul.mubr.bf16.gmra.mrb[0].mxu0 %v5188
        %v7602 = vpop.f32.mrb[0].mxu0
        %v7603 = vadd.f32 %v2121, %v7602
        %v7604 = vpop.f32.mrb[0].mxu0
        %v7605 = vadd.f32 %v2125, %v7604
        %v7606 = vpop.f32.mrb[0].mxu0
        %v7607 = vpop.f32.mrb[0].mxu0
        %7608 = vdwg.mxu0
        %7609 = vmatprep.subr.bf16.mxu0 %v4129
        %7610 = vmatpush1.bf16.msra.mxu0 %v4128
        %7611 = vmatprep.subr.bf16.mxu0 %v4276
        %7612 = vmatpush1.bf16.msra.mxu0 %v4275
        %7613 = vmatprep.subr.bf16.mxu0 %v4423
        %7614 = vmatpush1.bf16.msra.mxu0 %v4422
        %7615 = vmatprep.subr.bf16.mxu0 %v4570
        %7616 = vmatpush1.bf16.msra.mxu0 %v4569
        %7617 = vmatprep.subr.bf16.mxu0 0
        %7618 = vmatpush1.bf16.msra.mxu0 0
        %7619 = vmatprep.subr.bf16.mxu0 0
        %7620 = vmatpush1.bf16.msra.mxu0 0
        %7621 = vmatprep.subr.bf16.mxu0 0
        %7622 = vmatpush1.bf16.msra.mxu0 0
        %7623 = vmatprep.subr.bf16.mxu0 0
        %7624 = vmatpush1.bf16.msra.mxu0 0
        %7625 = vmatprep.subr.bf16.mxu0 0
        %7626 = vmatpush1.bf16.msra.mxu0 0
        %7627 = vmatprep.subr.bf16.mxu0 0
        %7628 = vmatpush1.bf16.msra.mxu0 0
        %7629 = vmatprep.subr.bf16.mxu0 0
        %7630 = vmatpush1.bf16.msra.mxu0 0
        %7631 = vmatprep.subr.bf16.mxu0 0
        %7632 = vmatpush1.bf16.msra.mxu0 0
        %7633 = vmatprep.subr.bf16.mxu0 0
        %7634 = vmatpush1.bf16.msra.mxu0 0
        %7635 = vmatprep.subr.bf16.mxu0 0
        %7636 = vmatpush1.bf16.msra.mxu0 0
        %7637 = vmatprep.subr.bf16.mxu0 0
        %7638 = vmatpush1.bf16.msra.mxu0 0
        %7639 = vmatprep.subr.bf16.mxu0 0
        %7640 = vmatpush1.bf16.msra.mxu0 0
        %7641 = vmatprep.mubr.bf16.mxu0 0
        %7642 = vmatmul.mubr.bf16.gmra.mrb[0].mxu0 %v5188
        %v7643 = vpop.f32.mrb[0].mxu0
        %v7644 = vadd.f32 %v2129, %v7643
        %v7645 = vpop.f32.mrb[0].mxu0
        %v7646 = vadd.f32 %v2133, %v7645
        %v7647 = vpop.f32.mrb[0].mxu0
        %v7648 = vpop.f32.mrb[0].mxu0
        %7649 = vdwg.mxu0
        %7650 = vmatprep.subr.bf16.mxu0 %v4131
        %7651 = vmatpush1.bf16.msra.mxu0 %v4130
        %7652 = vmatprep.subr.bf16.mxu0 %v4278
        %7653 = vmatpush1.bf16.msra.mxu0 %v4277
        %7654 = vmatprep.subr.bf16.mxu0 %v4425
        %7655 = vmatpush1.bf16.msra.mxu0 %v4424
        %7656 = vmatprep.subr.bf16.mxu0 %v4572
        %7657 = vmatpush1.bf16.msra.mxu0 %v4571
        %7658 = vmatprep.subr.bf16.mxu0 0
        %7659 = vmatpush1.bf16.msra.mxu0 0
        %7660 = vmatprep.subr.bf16.mxu0 0
        %7661 = vmatpush1.bf16.msra.mxu0 0
        %7662 = vmatprep.subr.bf16.mxu0 0
        %7663 = vmatpush1.bf16.msra.mxu0 0
        %7664 = vmatprep.subr.bf16.mxu0 0
        %7665 = vmatpush1.bf16.msra.mxu0 0
        %7666 = vmatprep.subr.bf16.mxu0 0
        %7667 = vmatpush1.bf16.msra.mxu0 0
        %7668 = vmatprep.subr.bf16.mxu0 0
        %7669 = vmatpush1.bf16.msra.mxu0 0
        %7670 = vmatprep.subr.bf16.mxu0 0
        %7671 = vmatpush1.bf16.msra.mxu0 0
        %7672 = vmatprep.subr.bf16.mxu0 0
        %7673 = vmatpush1.bf16.msra.mxu0 0
        %7674 = vmatprep.subr.bf16.mxu0 0
        %7675 = vmatpush1.bf16.msra.mxu0 0
        %7676 = vmatprep.subr.bf16.mxu0 0
        %7677 = vmatpush1.bf16.msra.mxu0 0
        %7678 = vmatprep.subr.bf16.mxu0 0
        %7679 = vmatpush1.bf16.msra.mxu0 0
        %7680 = vmatprep.subr.bf16.mxu0 0
        %7681 = vmatpush1.bf16.msra.mxu0 0
        %7682 = vmatprep.mubr.bf16.mxu0 0
        %7683 = vmatmul.mubr.bf16.gmra.mrb[0].mxu0 %v5188
        %v7684 = vpop.f32.mrb[0].mxu0
        %v7685 = vadd.f32 %v2137, %v7684
        %v7686 = vpop.f32.mrb[0].mxu0
        %v7687 = vadd.f32 %v2141, %v7686
        %v7688 = vpop.f32.mrb[0].mxu0
        %v7689 = vpop.f32.mrb[0].mxu0
        %7690 = vdwg.mxu0
        %7691 = vmatprep.subr.bf16.mxu0 %v4133
        %7692 = vmatpush1.bf16.msra.mxu0 %v4132
        %7693 = vmatprep.subr.bf16.mxu0 %v4280
        %7694 = vmatpush1.bf16.msra.mxu0 %v4279
        %7695 = vmatprep.subr.bf16.mxu0 %v4427
        %7696 = vmatpush1.bf16.msra.mxu0 %v4426
        %7697 = vmatprep.subr.bf16.mxu0 %v4574
        %7698 = vmatpush1.bf16.msra.mxu0 %v4573
        %7699 = vmatprep.subr.bf16.mxu0 0
        %7700 = vmatpush1.bf16.msra.mxu0 0
        %7701 = vmatprep.subr.bf16.mxu0 0
        %7702 = vmatpush1.bf16.msra.mxu0 0
        %7703 = vmatprep.subr.bf16.mxu0 0
        %7704 = vmatpush1.bf16.msra.mxu0 0
        %7705 = vmatprep.subr.bf16.mxu0 0
        %7706 = vmatpush1.bf16.msra.mxu0 0
        %7707 = vmatprep.subr.bf16.mxu0 0
        %7708 = vmatpush1.bf16.msra.mxu0 0
        %7709 = vmatprep.subr.bf16.mxu0 0
        %7710 = vmatpush1.bf16.msra.mxu0 0
        %7711 = vmatprep.subr.bf16.mxu0 0
        %7712 = vmatpush1.bf16.msra.mxu0 0
        %7713 = vmatprep.subr.bf16.mxu0 0
        %7714 = vmatpush1.bf16.msra.mxu0 0
        %7715 = vmatprep.subr.bf16.mxu0 0
        %7716 = vmatpush1.bf16.msra.mxu0 0
        %7717 = vmatprep.subr.bf16.mxu0 0
        %7718 = vmatpush1.bf16.msra.mxu0 0
        %7719 = vmatprep.subr.bf16.mxu0 0
        %7720 = vmatpush1.bf16.msra.mxu0 0
        %7721 = vmatprep.subr.bf16.mxu0 0
        %7722 = vmatpush1.bf16.msra.mxu0 0
        %7723 = vmatprep.mubr.bf16.mxu0 0
        %7724 = vmatmul.mubr.bf16.gmra.mrb[0].mxu0 %v5188
        %v7725 = vpop.f32.mrb[0].mxu0
        %v7726 = vadd.f32 %v2145, %v7725
        %v7727 = vpop.f32.mrb[0].mxu0
        %v7728 = vadd.f32 %v2149, %v7727
        %v7729 = vpop.f32.mrb[0].mxu0
        %v7730 = vpop.f32.mrb[0].mxu0
        %7731 = vdwg.mxu0
        %7732 = vmatprep.subr.bf16.mxu0 %v4135
        %7733 = vmatpush1.bf16.msra.mxu0 %v4134
        %7734 = vmatprep.subr.bf16.mxu0 %v4282
        %7735 = vmatpush1.bf16.msra.mxu0 %v4281
        %7736 = vmatprep.subr.bf16.mxu0 %v4429
        %7737 = vmatpush1.bf16.msra.mxu0 %v4428
        %7738 = vmatprep.subr.bf16.mxu0 %v4576
        %7739 = vmatpush1.bf16.msra.mxu0 %v4575
        %7740 = vmatprep.subr.bf16.mxu0 0
        %7741 = vmatpush1.bf16.msra.mxu0 0
        %7742 = vmatprep.subr.bf16.mxu0 0
        %7743 = vmatpush1.bf16.msra.mxu0 0
        %7744 = vmatprep.subr.bf16.mxu0 0
        %7745 = vmatpush1.bf16.msra.mxu0 0
        %7746 = vmatprep.subr.bf16.mxu0 0
        %7747 = vmatpush1.bf16.msra.mxu0 0
        %7748 = vmatprep.subr.bf16.mxu0 0
        %7749 = vmatpush1.bf16.msra.mxu0 0
        %7750 = vmatprep.subr.bf16.mxu0 0
        %7751 = vmatpush1.bf16.msra.mxu0 0
        %7752 = vmatprep.subr.bf16.mxu0 0
        %7753 = vmatpush1.bf16.msra.mxu0 0
        %7754 = vmatprep.subr.bf16.mxu0 0
        %7755 = vmatpush1.bf16.msra.mxu0 0
        %7756 = vmatprep.subr.bf16.mxu0 0
        %7757 = vmatpush1.bf16.msra.mxu0 0
        %7758 = vmatprep.subr.bf16.mxu0 0
        %7759 = vmatpush1.bf16.msra.mxu0 0
        %7760 = vmatprep.subr.bf16.mxu0 0
        %7761 = vmatpush1.bf16.msra.mxu0 0
        %7762 = vmatprep.subr.bf16.mxu0 0
        %7763 = vmatpush1.bf16.msra.mxu0 0
        %7764 = vmatprep.mubr.bf16.mxu0 0
        %7765 = vmatmul.mubr.bf16.gmra.mrb[0].mxu0 %v5188
        %v7766 = vpop.f32.mrb[0].mxu0
        %v7767 = vadd.f32 %v2153, %v7766
        %v7768 = vpop.f32.mrb[0].mxu0
        %v7769 = vadd.f32 %v2157, %v7768
        %v7770 = vpop.f32.mrb[0].mxu0
        %v7771 = vpop.f32.mrb[0].mxu0
        %7772 = vdwg.mxu0
        %7773 = vmatprep.subr.bf16.mxu0 %v4137
        %7774 = vmatpush1.bf16.msra.mxu0 %v4136
        %7775 = vmatprep.subr.bf16.mxu0 %v4284
        %7776 = vmatpush1.bf16.msra.mxu0 %v4283
        %7777 = vmatprep.subr.bf16.mxu0 %v4431
        %7778 = vmatpush1.bf16.msra.mxu0 %v4430
        %7779 = vmatprep.subr.bf16.mxu0 %v4578
        %7780 = vmatpush1.bf16.msra.mxu0 %v4577
        %7781 = vmatprep.subr.bf16.mxu0 0
        %7782 = vmatpush1.bf16.msra.mxu0 0
        %7783 = vmatprep.subr.bf16.mxu0 0
        %7784 = vmatpush1.bf16.msra.mxu0 0
        %7785 = vmatprep.subr.bf16.mxu0 0
        %7786 = vmatpush1.bf16.msra.mxu0 0
        %7787 = vmatprep.subr.bf16.mxu0 0
        %7788 = vmatpush1.bf16.msra.mxu0 0
        %7789 = vmatprep.subr.bf16.mxu0 0
        %7790 = vmatpush1.bf16.msra.mxu0 0
        %7791 = vmatprep.subr.bf16.mxu0 0
        %7792 = vmatpush1.bf16.msra.mxu0 0
        %7793 = vmatprep.subr.bf16.mxu0 0
        %7794 = vmatpush1.bf16.msra.mxu0 0
        %7795 = vmatprep.subr.bf16.mxu0 0
        %7796 = vmatpush1.bf16.msra.mxu0 0
        %7797 = vmatprep.subr.bf16.mxu0 0
        %7798 = vmatpush1.bf16.msra.mxu0 0
        %7799 = vmatprep.subr.bf16.mxu0 0
        %7800 = vmatpush1.bf16.msra.mxu0 0
        %7801 = vmatprep.subr.bf16.mxu0 0
        %7802 = vmatpush1.bf16.msra.mxu0 0
        %7803 = vmatprep.subr.bf16.mxu0 0
        %7804 = vmatpush1.bf16.msra.mxu0 0
        %7805 = vmatprep.mubr.bf16.mxu0 0
        %7806 = vmatmul.mubr.bf16.gmra.mrb[0].mxu0 %v5188
        %v7807 = vpop.f32.mrb[0].mxu0
        %v7808 = vadd.f32 %v2161, %v7807
        %v7809 = vpop.f32.mrb[0].mxu0
        %v7810 = vadd.f32 %v2165, %v7809
        %v7811 = vpop.f32.mrb[0].mxu0
        %v7812 = vpop.f32.mrb[0].mxu0
        %7813 = vdwg.mxu0
        %7814 = vmatprep.subr.bf16.mxu0 %v4139
        %7815 = vmatpush1.bf16.msra.mxu0 %v4138
        %7816 = vmatprep.subr.bf16.mxu0 %v4286
        %7817 = vmatpush1.bf16.msra.mxu0 %v4285
        %7818 = vmatprep.subr.bf16.mxu0 %v4433
        %7819 = vmatpush1.bf16.msra.mxu0 %v4432
        %7820 = vmatprep.subr.bf16.mxu0 %v4580
        %7821 = vmatpush1.bf16.msra.mxu0 %v4579
        %7822 = vmatprep.subr.bf16.mxu0 0
        %7823 = vmatpush1.bf16.msra.mxu0 0
        %7824 = vmatprep.subr.bf16.mxu0 0
        %7825 = vmatpush1.bf16.msra.mxu0 0
        %7826 = vmatprep.subr.bf16.mxu0 0
        %7827 = vmatpush1.bf16.msra.mxu0 0
        %7828 = vmatprep.subr.bf16.mxu0 0
        %7829 = vmatpush1.bf16.msra.mxu0 0
        %7830 = vmatprep.subr.bf16.mxu0 0
        %7831 = vmatpush1.bf16.msra.mxu0 0
        %7832 = vmatprep.subr.bf16.mxu0 0
        %7833 = vmatpush1.bf16.msra.mxu0 0
        %7834 = vmatprep.subr.bf16.mxu0 0
        %7835 = vmatpush1.bf16.msra.mxu0 0
        %7836 = vmatprep.subr.bf16.mxu0 0
        %7837 = vmatpush1.bf16.msra.mxu0 0
        %7838 = vmatprep.subr.bf16.mxu0 0
        %7839 = vmatpush1.bf16.msra.mxu0 0
        %7840 = vmatprep.subr.bf16.mxu0 0
        %7841 = vmatpush1.bf16.msra.mxu0 0
        %7842 = vmatprep.subr.bf16.mxu0 0
        %7843 = vmatpush1.bf16.msra.mxu0 0
        %7844 = vmatprep.subr.bf16.mxu0 0
        %7845 = vmatpush1.bf16.msra.mxu0 0
        %7846 = vmatprep.mubr.bf16.mxu0 0
        %7847 = vmatmul.mubr.bf16.gmra.mrb[0].mxu0 %v5188
        %v7848 = vpop.f32.mrb[0].mxu0
        %v7849 = vadd.f32 %v2169, %v7848
        %v7850 = vpop.f32.mrb[0].mxu0
        %v7851 = vadd.f32 %v2173, %v7850
        %v7852 = vpop.f32.mrb[0].mxu0
        %v7853 = vpop.f32.mrb[0].mxu0
        %7854 = vdwg.mxu0
        %7855 = vmatprep.subr.bf16.mxu0 %v4141
        %7856 = vmatpush1.bf16.msra.mxu0 %v4140
        %7857 = vmatprep.subr.bf16.mxu0 %v4288
        %7858 = vmatpush1.bf16.msra.mxu0 %v4287
        %7859 = vmatprep.subr.bf16.mxu0 %v4435
        %7860 = vmatpush1.bf16.msra.mxu0 %v4434
        %7861 = vmatprep.subr.bf16.mxu0 %v4582
        %7862 = vmatpush1.bf16.msra.mxu0 %v4581
        %7863 = vmatprep.subr.bf16.mxu0 0
        %7864 = vmatpush1.bf16.msra.mxu0 0
        %7865 = vmatprep.subr.bf16.mxu0 0
        %7866 = vmatpush1.bf16.msra.mxu0 0
        %7867 = vmatprep.subr.bf16.mxu0 0
        %7868 = vmatpush1.bf16.msra.mxu0 0
        %7869 = vmatprep.subr.bf16.mxu0 0
        %7870 = vmatpush1.bf16.msra.mxu0 0
        %7871 = vmatprep.subr.bf16.mxu0 0
        %7872 = vmatpush1.bf16.msra.mxu0 0
        %7873 = vmatprep.subr.bf16.mxu0 0
        %7874 = vmatpush1.bf16.msra.mxu0 0
        %7875 = vmatprep.subr.bf16.mxu0 0
        %7876 = vmatpush1.bf16.msra.mxu0 0
        %7877 = vmatprep.subr.bf16.mxu0 0
        %7878 = vmatpush1.bf16.msra.mxu0 0
        %7879 = vmatprep.subr.bf16.mxu0 0
        %7880 = vmatpush1.bf16.msra.mxu0 0
        %7881 = vmatprep.subr.bf16.mxu0 0
        %7882 = vmatpush1.bf16.msra.mxu0 0
        %7883 = vmatprep.subr.bf16.mxu0 0
        %7884 = vmatpush1.bf16.msra.mxu0 0
        %7885 = vmatprep.subr.bf16.mxu0 0
        %7886 = vmatpush1.bf16.msra.mxu0 0
        %7887 = vmatprep.mubr.bf16.mxu0 0
        %7888 = vmatmul.mubr.bf16.gmra.mrb[0].mxu0 %v5188
        %v7889 = vpop.f32.mrb[0].mxu0
        %v7890 = vadd.f32 %v2177, %v7889
        %v7891 = vpop.f32.mrb[0].mxu0
        %v7892 = vadd.f32 %v2181, %v7891
        %v7893 = vpop.f32.mrb[0].mxu0
        %v7894 = vpop.f32.mrb[0].mxu0
        %7895 = vdwg.mxu0
        %7896 = vmatprep.subr.bf16.mxu0 %v4143
        %7897 = vmatpush1.bf16.msra.mxu0 %v4142
        %7898 = vmatprep.subr.bf16.mxu0 %v4290
        %7899 = vmatpush1.bf16.msra.mxu0 %v4289
        %7900 = vmatprep.subr.bf16.mxu0 %v4437
        %7901 = vmatpush1.bf16.msra.mxu0 %v4436
        %7902 = vmatprep.subr.bf16.mxu0 %v4584
        %7903 = vmatpush1.bf16.msra.mxu0 %v4583
        %7904 = vmatprep.subr.bf16.mxu0 0
        %7905 = vmatpush1.bf16.msra.mxu0 0
        %7906 = vmatprep.subr.bf16.mxu0 0
        %7907 = vmatpush1.bf16.msra.mxu0 0
        %7908 = vmatprep.subr.bf16.mxu0 0
        %7909 = vmatpush1.bf16.msra.mxu0 0
        %7910 = vmatprep.subr.bf16.mxu0 0
        %7911 = vmatpush1.bf16.msra.mxu0 0
        %7912 = vmatprep.subr.bf16.mxu0 0
        %7913 = vmatpush1.bf16.msra.mxu0 0
        %7914 = vmatprep.subr.bf16.mxu0 0
        %7915 = vmatpush1.bf16.msra.mxu0 0
        %7916 = vmatprep.subr.bf16.mxu0 0
        %7917 = vmatpush1.bf16.msra.mxu0 0
        %7918 = vmatprep.subr.bf16.mxu0 0
        %7919 = vmatpush1.bf16.msra.mxu0 0
        %7920 = vmatprep.subr.bf16.mxu0 0
        %7921 = vmatpush1.bf16.msra.mxu0 0
        %7922 = vmatprep.subr.bf16.mxu0 0
        %7923 = vmatpush1.bf16.msra.mxu0 0
        %7924 = vmatprep.subr.bf16.mxu0 0
        %7925 = vmatpush1.bf16.msra.mxu0 0
        %7926 = vmatprep.subr.bf16.mxu0 0
        %7927 = vmatpush1.bf16.msra.mxu0 0
        %7928 = vmatprep.mubr.bf16.mxu0 0
        %7929 = vmatmul.mubr.bf16.gmra.mrb[0].mxu0 %v5188
        %v7930 = vpop.f32.mrb[0].mxu0
        %v7931 = vadd.f32 %v2185, %v7930
        %v7932 = vpop.f32.mrb[0].mxu0
        %v7933 = vadd.f32 %v2189, %v7932
        %v7934 = vpop.f32.mrb[0].mxu0
        %v7935 = vpop.f32.mrb[0].mxu0
        %7936 = vdwg.mxu0
        %7937 = vmatprep.subr.bf16.mxu0 %v4145
        %7938 = vmatpush1.bf16.msra.mxu0 %v4144
        %7939 = vmatprep.subr.bf16.mxu0 %v4292
        %7940 = vmatpush1.bf16.msra.mxu0 %v4291
        %7941 = vmatprep.subr.bf16.mxu0 %v4439
        %7942 = vmatpush1.bf16.msra.mxu0 %v4438
        %7943 = vmatprep.subr.bf16.mxu0 %v4586
        %7944 = vmatpush1.bf16.msra.mxu0 %v4585
        %7945 = vmatprep.subr.bf16.mxu0 0
        %7946 = vmatpush1.bf16.msra.mxu0 0
        %7947 = vmatprep.subr.bf16.mxu0 0
        %7948 = vmatpush1.bf16.msra.mxu0 0
        %7949 = vmatprep.subr.bf16.mxu0 0
        %7950 = vmatpush1.bf16.msra.mxu0 0
        %7951 = vmatprep.subr.bf16.mxu0 0
        %7952 = vmatpush1.bf16.msra.mxu0 0
        %7953 = vmatprep.subr.bf16.mxu0 0
        %7954 = vmatpush1.bf16.msra.mxu0 0
        %7955 = vmatprep.subr.bf16.mxu0 0
        %7956 = vmatpush1.bf16.msra.mxu0 0
        %7957 = vmatprep.subr.bf16.mxu0 0
        %7958 = vmatpush1.bf16.msra.mxu0 0
        %7959 = vmatprep.subr.bf16.mxu0 0
        %7960 = vmatpush1.bf16.msra.mxu0 0
        %7961 = vmatprep.subr.bf16.mxu0 0
        %7962 = vmatpush1.bf16.msra.mxu0 0
        %7963 = vmatprep.subr.bf16.mxu0 0
        %7964 = vmatpush1.bf16.msra.mxu0 0
        %7965 = vmatprep.subr.bf16.mxu0 0
        %7966 = vmatpush1.bf16.msra.mxu0 0
        %7967 = vmatprep.subr.bf16.mxu0 0
        %7968 = vmatpush1.bf16.msra.mxu0 0
        %7969 = vmatprep.mubr.bf16.mxu0 0
        %7970 = vmatmul.mubr.bf16.gmra.mrb[0].mxu0 %v5188
        %v7971 = vpop.f32.mrb[0].mxu0
        %v7972 = vadd.f32 %v2193, %v7971
        %v7973 = vpop.f32.mrb[0].mxu0
        %v7974 = vadd.f32 %v2197, %v7973
        %v7975 = vpop.f32.mrb[0].mxu0
        %v7976 = vpop.f32.mrb[0].mxu0
        %7977 = vdwg.mxu0
        %7978 = vmatprep.subr.bf16.mxu0 %v4147
        %7979 = vmatpush1.bf16.msra.mxu0 %v4146
        %7980 = vmatprep.subr.bf16.mxu0 %v4294
        %7981 = vmatpush1.bf16.msra.mxu0 %v4293
        %7982 = vmatprep.subr.bf16.mxu0 %v4441
        %7983 = vmatpush1.bf16.msra.mxu0 %v4440
        %7984 = vmatprep.subr.bf16.mxu0 %v4588
        %7985 = vmatpush1.bf16.msra.mxu0 %v4587
        %7986 = vmatprep.subr.bf16.mxu0 0
        %7987 = vmatpush1.bf16.msra.mxu0 0
        %7988 = vmatprep.subr.bf16.mxu0 0
        %7989 = vmatpush1.bf16.msra.mxu0 0
        %7990 = vmatprep.subr.bf16.mxu0 0
        %7991 = vmatpush1.bf16.msra.mxu0 0
        %7992 = vmatprep.subr.bf16.mxu0 0
        %7993 = vmatpush1.bf16.msra.mxu0 0
        %7994 = vmatprep.subr.bf16.mxu0 0
        %7995 = vmatpush1.bf16.msra.mxu0 0
        %7996 = vmatprep.subr.bf16.mxu0 0
        %7997 = vmatpush1.bf16.msra.mxu0 0
        %7998 = vmatprep.subr.bf16.mxu0 0
        %7999 = vmatpush1.bf16.msra.mxu0 0
        %8000 = vmatprep.subr.bf16.mxu0 0
        %8001 = vmatpush1.bf16.msra.mxu0 0
        %8002 = vmatprep.subr.bf16.mxu0 0
        %8003 = vmatpush1.bf16.msra.mxu0 0
        %8004 = vmatprep.subr.bf16.mxu0 0
        %8005 = vmatpush1.bf16.msra.mxu0 0
        %8006 = vmatprep.subr.bf16.mxu0 0
        %8007 = vmatpush1.bf16.msra.mxu0 0
        %8008 = vmatprep.subr.bf16.mxu0 0
        %8009 = vmatpush1.bf16.msra.mxu0 0
        %8010 = vmatprep.mubr.bf16.mxu0 0
        %8011 = vmatmul.mubr.bf16.gmra.mrb[0].mxu0 %v5188
        %v8012 = vpop.f32.mrb[0].mxu0
        %v8013 = vadd.f32 %v2201, %v8012
        %v8014 = vpop.f32.mrb[0].mxu0
        %v8015 = vadd.f32 %v2205, %v8014
        %v8016 = vpop.f32.mrb[0].mxu0
        %v8017 = vpop.f32.mrb[0].mxu0
        %8018 = vdwg.mxu0
        %8019 = vmatprep.subr.bf16.mxu0 %v4149
        %8020 = vmatpush1.bf16.msra.mxu0 %v4148
        %8021 = vmatprep.subr.bf16.mxu0 %v4296
        %8022 = vmatpush1.bf16.msra.mxu0 %v4295
        %8023 = vmatprep.subr.bf16.mxu0 %v4443
        %8024 = vmatpush1.bf16.msra.mxu0 %v4442
        %8025 = vmatprep.subr.bf16.mxu0 %v4590
        %8026 = vmatpush1.bf16.msra.mxu0 %v4589
        %8027 = vmatprep.subr.bf16.mxu0 0
        %8028 = vmatpush1.bf16.msra.mxu0 0
        %8029 = vmatprep.subr.bf16.mxu0 0
        %8030 = vmatpush1.bf16.msra.mxu0 0
        %8031 = vmatprep.subr.bf16.mxu0 0
        %8032 = vmatpush1.bf16.msra.mxu0 0
        %8033 = vmatprep.subr.bf16.mxu0 0
        %8034 = vmatpush1.bf16.msra.mxu0 0
        %8035 = vmatprep.subr.bf16.mxu0 0
        %8036 = vmatpush1.bf16.msra.mxu0 0
        %8037 = vmatprep.subr.bf16.mxu0 0
        %8038 = vmatpush1.bf16.msra.mxu0 0
        %8039 = vmatprep.subr.bf16.mxu0 0
        %8040 = vmatpush1.bf16.msra.mxu0 0
        %8041 = vmatprep.subr.bf16.mxu0 0
        %8042 = vmatpush1.bf16.msra.mxu0 0
        %8043 = vmatprep.subr.bf16.mxu0 0
        %8044 = vmatpush1.bf16.msra.mxu0 0
        %8045 = vmatprep.subr.bf16.mxu0 0
        %8046 = vmatpush1.bf16.msra.mxu0 0
        %8047 = vmatprep.subr.bf16.mxu0 0
        %8048 = vmatpush1.bf16.msra.mxu0 0
        %8049 = vmatprep.subr.bf16.mxu0 0
        %8050 = vmatpush1.bf16.msra.mxu0 0
        %8051 = vmatprep.mubr.bf16.mxu0 0
        %8052 = vmatmul.mubr.bf16.gmra.mrb[0].mxu0 %v5188
        %v8053 = vpop.f32.mrb[0].mxu0
        %v8054 = vadd.f32 %v2209, %v8053
        %v8055 = vpop.f32.mrb[0].mxu0
        %v8056 = vadd.f32 %v2213, %v8055
        %v8057 = vpop.f32.mrb[0].mxu0
        %v8058 = vpop.f32.mrb[0].mxu0
        %8059 = vdwg.mxu0
        %8060 = vmatprep.subr.bf16.mxu0 %v4151
        %8061 = vmatpush1.bf16.msra.mxu0 %v4150
        %8062 = vmatprep.subr.bf16.mxu0 %v4298
        %8063 = vmatpush1.bf16.msra.mxu0 %v4297
        %8064 = vmatprep.subr.bf16.mxu0 %v4445
        %8065 = vmatpush1.bf16.msra.mxu0 %v4444
        %8066 = vmatprep.subr.bf16.mxu0 %v4592
        %8067 = vmatpush1.bf16.msra.mxu0 %v4591
        %8068 = vmatprep.subr.bf16.mxu0 0
        %8069 = vmatpush1.bf16.msra.mxu0 0
        %8070 = vmatprep.subr.bf16.mxu0 0
        %8071 = vmatpush1.bf16.msra.mxu0 0
        %8072 = vmatprep.subr.bf16.mxu0 0
        %8073 = vmatpush1.bf16.msra.mxu0 0
        %8074 = vmatprep.subr.bf16.mxu0 0
        %8075 = vmatpush1.bf16.msra.mxu0 0
        %8076 = vmatprep.subr.bf16.mxu0 0
        %8077 = vmatpush1.bf16.msra.mxu0 0
        %8078 = vmatprep.subr.bf16.mxu0 0
        %8079 = vmatpush1.bf16.msra.mxu0 0
        %8080 = vmatprep.subr.bf16.mxu0 0
        %8081 = vmatpush1.bf16.msra.mxu0 0
        %8082 = vmatprep.subr.bf16.mxu0 0
        %8083 = vmatpush1.bf16.msra.mxu0 0
        %8084 = vmatprep.subr.bf16.mxu0 0
        %8085 = vmatpush1.bf16.msra.mxu0 0
        %8086 = vmatprep.subr.bf16.mxu0 0
        %8087 = vmatpush1.bf16.msra.mxu0 0
        %8088 = vmatprep.subr.bf16.mxu0 0
        %8089 = vmatpush1.bf16.msra.mxu0 0
        %8090 = vmatprep.subr.bf16.mxu0 0
        %8091 = vmatpush1.bf16.msra.mxu0 0
        %8092 = vmatprep.mubr.bf16.mxu0 0
        %8093 = vmatmul.mubr.bf16.gmra.mrb[0].mxu0 %v5188
        %v8094 = vpop.f32.mrb[0].mxu0
        %v8095 = vadd.f32 %v2217, %v8094
        %v8096 = vpop.f32.mrb[0].mxu0
        %v8097 = vadd.f32 %v2221, %v8096
        %v8098 = vpop.f32.mrb[0].mxu0
        %v8099 = vpop.f32.mrb[0].mxu0
        %8100 = vdwg.mxu0
        %8101 = vmatprep.subr.bf16.mxu0 %v4153
        %8102 = vmatpush1.bf16.msra.mxu0 %v4152
        %8103 = vmatprep.subr.bf16.mxu0 %v4300
        %8104 = vmatpush1.bf16.msra.mxu0 %v4299
        %8105 = vmatprep.subr.bf16.mxu0 %v4447
        %8106 = vmatpush1.bf16.msra.mxu0 %v4446
        %8107 = vmatprep.subr.bf16.mxu0 %v4594
        %8108 = vmatpush1.bf16.msra.mxu0 %v4593
        %8109 = vmatprep.subr.bf16.mxu0 0
        %8110 = vmatpush1.bf16.msra.mxu0 0
        %8111 = vmatprep.subr.bf16.mxu0 0
        %8112 = vmatpush1.bf16.msra.mxu0 0
        %8113 = vmatprep.subr.bf16.mxu0 0
        %8114 = vmatpush1.bf16.msra.mxu0 0
        %8115 = vmatprep.subr.bf16.mxu0 0
        %8116 = vmatpush1.bf16.msra.mxu0 0
        %8117 = vmatprep.subr.bf16.mxu0 0
        %8118 = vmatpush1.bf16.msra.mxu0 0
        %8119 = vmatprep.subr.bf16.mxu0 0
        %8120 = vmatpush1.bf16.msra.mxu0 0
        %8121 = vmatprep.subr.bf16.mxu0 0
        %8122 = vmatpush1.bf16.msra.mxu0 0
        %8123 = vmatprep.subr.bf16.mxu0 0
        %8124 = vmatpush1.bf16.msra.mxu0 0
        %8125 = vmatprep.subr.bf16.mxu0 0
        %8126 = vmatpush1.bf16.msra.mxu0 0
        %8127 = vmatprep.subr.bf16.mxu0 0
        %8128 = vmatpush1.bf16.msra.mxu0 0
        %8129 = vmatprep.subr.bf16.mxu0 0
        %8130 = vmatpush1.bf16.msra.mxu0 0
        %8131 = vmatprep.subr.bf16.mxu0 0
        %8132 = vmatpush1.bf16.msra.mxu0 0
        %8133 = vmatprep.mubr.bf16.mxu0 0
        %8134 = vmatmul.mubr.bf16.gmra.mrb[0].mxu0 %v5188
        %v8135 = vpop.f32.mrb[0].mxu0
        %v8136 = vadd.f32 %v2225, %v8135
        %v8137 = vpop.f32.mrb[0].mxu0
        %v8138 = vadd.f32 %v2229, %v8137
        %v8139 = vpop.f32.mrb[0].mxu0
        %v8140 = vpop.f32.mrb[0].mxu0
        %8141 = vdwg.mxu0
        %8142 = vmatprep.subr.bf16.mxu0 %v4155
        %8143 = vmatpush1.bf16.msra.mxu0 %v4154
        %8144 = vmatprep.subr.bf16.mxu0 %v4302
        %8145 = vmatpush1.bf16.msra.mxu0 %v4301
        %8146 = vmatprep.subr.bf16.mxu0 %v4449
        %8147 = vmatpush1.bf16.msra.mxu0 %v4448
        %8148 = vmatprep.subr.bf16.mxu0 %v4596
        %8149 = vmatpush1.bf16.msra.mxu0 %v4595
        %8150 = vmatprep.subr.bf16.mxu0 0
        %8151 = vmatpush1.bf16.msra.mxu0 0
        %8152 = vmatprep.subr.bf16.mxu0 0
        %8153 = vmatpush1.bf16.msra.mxu0 0
        %8154 = vmatprep.subr.bf16.mxu0 0
        %8155 = vmatpush1.bf16.msra.mxu0 0
        %8156 = vmatprep.subr.bf16.mxu0 0
        %8157 = vmatpush1.bf16.msra.mxu0 0
        %8158 = vmatprep.subr.bf16.mxu0 0
        %8159 = vmatpush1.bf16.msra.mxu0 0
        %8160 = vmatprep.subr.bf16.mxu0 0
        %8161 = vmatpush1.bf16.msra.mxu0 0
        %8162 = vmatprep.subr.bf16.mxu0 0
        %8163 = vmatpush1.bf16.msra.mxu0 0
        %8164 = vmatprep.subr.bf16.mxu0 0
        %8165 = vmatpush1.bf16.msra.mxu0 0
        %8166 = vmatprep.subr.bf16.mxu0 0
        %8167 = vmatpush1.bf16.msra.mxu0 0
        %8168 = vmatprep.subr.bf16.mxu0 0
        %8169 = vmatpush1.bf16.msra.mxu0 0
        %8170 = vmatprep.subr.bf16.mxu0 0
        %8171 = vmatpush1.bf16.msra.mxu0 0
        %8172 = vmatprep.subr.bf16.mxu0 0
        %8173 = vmatpush1.bf16.msra.mxu0 0
        %8174 = vmatprep.mubr.bf16.mxu0 0
        %8175 = vmatmul.mubr.bf16.gmra.mrb[0].mxu0 %v5188
        %v8176 = vpop.f32.mrb[0].mxu0
        %v8177 = vadd.f32 %v2233, %v8176
        %v8178 = vpop.f32.mrb[0].mxu0
        %v8179 = vadd.f32 %v2237, %v8178
        %v8180 = vpop.f32.mrb[0].mxu0
        %v8181 = vpop.f32.mrb[0].mxu0
        %8182 = vdwg.mxu0
        %8183 = vmatprep.subr.bf16.mxu0 0
        %8184 = vmatpush1.bf16.msra.mxu0 %v4156
        %8185 = vmatprep.subr.bf16.mxu0 0
        %8186 = vmatpush1.bf16.msra.mxu0 %v4303
        %8187 = vmatprep.subr.bf16.mxu0 0
        %8188 = vmatpush1.bf16.msra.mxu0 %v4450
        %8189 = vmatprep.subr.bf16.mxu0 0
        %8190 = vmatpush1.bf16.msra.mxu0 %v4597
        %8191 = vmatprep.subr.bf16.mxu0 0
        %8192 = vmatpush1.bf16.msra.mxu0 0
        %8193 = vmatprep.subr.bf16.mxu0 0
        %8194 = vmatpush1.bf16.msra.mxu0 0
        %8195 = vmatprep.subr.bf16.mxu0 0
        %8196 = vmatpush1.bf16.msra.mxu0 0
        %8197 = vmatprep.subr.bf16.mxu0 0
        %8198 = vmatpush1.bf16.msra.mxu0 0
        %8199 = vmatprep.subr.bf16.mxu0 0
        %8200 = vmatpush1.bf16.msra.mxu0 0
        %8201 = vmatprep.subr.bf16.mxu0 0
        %8202 = vmatpush1.bf16.msra.mxu0 0
        %8203 = vmatprep.subr.bf16.mxu0 0
        %8204 = vmatpush1.bf16.msra.mxu0 0
        %8205 = vmatprep.subr.bf16.mxu0 0
        %8206 = vmatpush1.bf16.msra.mxu0 0
        %8207 = vmatprep.subr.bf16.mxu0 0
        %8208 = vmatpush1.bf16.msra.mxu0 0
        %8209 = vmatprep.subr.bf16.mxu0 0
        %8210 = vmatpush1.bf16.msra.mxu0 0
        %8211 = vmatprep.subr.bf16.mxu0 0
        %8212 = vmatpush1.bf16.msra.mxu0 0
        %8213 = vmatprep.subr.bf16.mxu0 0
        %8214 = vmatpush1.bf16.msra.mxu0 0
        %8215 = vmatprep.mubr.bf16.mxu0 0
        %8216 = vmatmul.mubr.bf16.gmra.mrb[0].mxu0 %v5188
        %v8217 = vpop.f32.mrb[0].mxu0
        %v8218 = vadd.f32 %v2241, %v8217
        %v8219 = vpop.f32.mrb[0].mxu0
        %v8220 = vpop.f32.mrb[0].mxu0
        %v8221 = vpop.f32.mrb[0].mxu0
        %8222 = vdwg.mxu0
        %v8223 = vmax.f32 %v5225, 0.0
        %v8224 = vmax.f32 %v5227, 0.0
        %v8225 = vmax.f32 %v5266, 0.0
        %v8226 = vmax.f32 %v5268, 0.0
        %v8227 = vmax.f32 %v5307, 0.0
        %v8228 = vmax.f32 %v5309, 0.0
        %v8229 = vmax.f32 %v5348, 0.0
        %v8230 = vmax.f32 %v5350, 0.0
        %v8231 = vmax.f32 %v5389, 0.0
        %v8232 = vmax.f32 %v5391, 0.0
        %v8233 = vmax.f32 %v5430, 0.0
        %v8234 = vmax.f32 %v5432, 0.0
        %v8235 = vmax.f32 %v5471, 0.0
        %v8236 = vmax.f32 %v5473, 0.0
        %v8237 = vmax.f32 %v5512, 0.0
        %v8238 = vmax.f32 %v5514, 0.0
        %v8239 = vmax.f32 %v5553, 0.0
        %v8240 = vmax.f32 %v5555, 0.0
        %v8241 = vmax.f32 %v5594, 0.0
        %v8242 = vmax.f32 %v5596, 0.0
        %v8243 = vmax.f32 %v5635, 0.0
        %v8244 = vmax.f32 %v5637, 0.0
        %v8245 = vmax.f32 %v5676, 0.0
        %v8246 = vmax.f32 %v5678, 0.0
        %v8247 = vmax.f32 %v5717, 0.0
        %v8248 = vmax.f32 %v5719, 0.0
        %v8249 = vmax.f32 %v5758, 0.0
        %v8250 = vmax.f32 %v5760, 0.0
        %v8251 = vmax.f32 %v5799, 0.0
        %v8252 = vmax.f32 %v5801, 0.0
        %v8253 = vmax.f32 %v5840, 0.0
        %v8254 = vmax.f32 %v5842, 0.0
        %v8255 = vmax.f32 %v5881, 0.0
        %v8256 = vmax.f32 %v5883, 0.0
        %v8257 = vmax.f32 %v5922, 0.0
        %v8258 = vmax.f32 %v5924, 0.0
        %v8259 = vmax.f32 %v5963, 0.0
        %v8260 = vmax.f32 %v5965, 0.0
        %v8261 = vmax.f32 %v6004, 0.0
        %v8262 = vmax.f32 %v6006, 0.0
        %v8263 = vmax.f32 %v6045, 0.0
        %v8264 = vmax.f32 %v6047, 0.0
        %v8265 = vmax.f32 %v6086, 0.0
        %v8266 = vmax.f32 %v6088, 0.0
        %v8267 = vmax.f32 %v6127, 0.0
        %v8268 = vmax.f32 %v6129, 0.0
        %v8269 = vmax.f32 %v6168, 0.0
        %v8270 = vmax.f32 %v6170, 0.0
        %v8271 = vmax.f32 %v6209, 0.0
        %v8272 = vmax.f32 %v6211, 0.0
        %v8273 = vmax.f32 %v6250, 0.0
        %v8274 = vmax.f32 %v6252, 0.0
        %v8275 = vmax.f32 %v6291, 0.0
        %v8276 = vmax.f32 %v6293, 0.0
        %v8277 = vmax.f32 %v6332, 0.0
        %v8278 = vmax.f32 %v6334, 0.0
        %v8279 = vmax.f32 %v6373, 0.0
        %v8280 = vmax.f32 %v6375, 0.0
        %v8281 = vmax.f32 %v6414, 0.0
        %v8282 = vmax.f32 %v6416, 0.0
        %v8283 = vmax.f32 %v6455, 0.0
        %v8284 = vmax.f32 %v6457, 0.0
        %v8285 = vmax.f32 %v6496, 0.0
        %v8286 = vmax.f32 %v6498, 0.0
        %v8287 = vmax.f32 %v6537, 0.0
        %v8288 = vmax.f32 %v6539, 0.0
        %v8289 = vmax.f32 %v6578, 0.0
        %v8290 = vmax.f32 %v6580, 0.0
        %v8291 = vmax.f32 %v6619, 0.0
        %v8292 = vmax.f32 %v6621, 0.0
        %v8293 = vmax.f32 %v6660, 0.0
        %v8294 = vmax.f32 %v6662, 0.0
        %v8295 = vmax.f32 %v6701, 0.0
        %v8296 = vmax.f32 %v6703, 0.0
        %v8297 = vmax.f32 %v6742, 0.0
        %v8298 = vmax.f32 %v6744, 0.0
        %v8299 = vmax.f32 %v6783, 0.0
        %v8300 = vmax.f32 %v6785, 0.0
        %v8301 = vmax.f32 %v6824, 0.0
        %v8302 = vmax.f32 %v6826, 0.0
        %v8303 = vmax.f32 %v6865, 0.0
        %v8304 = vmax.f32 %v6867, 0.0
        %v8305 = vmax.f32 %v6906, 0.0
        %v8306 = vmax.f32 %v6908, 0.0
        %v8307 = vmax.f32 %v6947, 0.0
        %v8308 = vmax.f32 %v6949, 0.0
        %v8309 = vmax.f32 %v6988, 0.0
        %v8310 = vmax.f32 %v6990, 0.0
        %v8311 = vmax.f32 %v7029, 0.0
        %v8312 = vmax.f32 %v7031, 0.0
        %v8313 = vmax.f32 %v7070, 0.0
        %v8314 = vmax.f32 %v7072, 0.0
        %v8315 = vmax.f32 %v7111, 0.0
        %v8316 = vmax.f32 %v7113, 0.0
        %v8317 = vmax.f32 %v7152, 0.0
        %v8318 = vmax.f32 %v7154, 0.0
        %v8319 = vmax.f32 %v7193, 0.0
        %v8320 = vmax.f32 %v7195, 0.0
        %v8321 = vmax.f32 %v7234, 0.0
        %v8322 = vmax.f32 %v7236, 0.0
        %v8323 = vmax.f32 %v7275, 0.0
        %v8324 = vmax.f32 %v7277, 0.0
        %v8325 = vmax.f32 %v7316, 0.0
        %v8326 = vmax.f32 %v7318, 0.0
        %v8327 = vmax.f32 %v7357, 0.0
        %v8328 = vmax.f32 %v7359, 0.0
        %v8329 = vmax.f32 %v7398, 0.0
        %v8330 = vmax.f32 %v7400, 0.0
        %v8331 = vmax.f32 %v7439, 0.0
        %v8332 = vmax.f32 %v7441, 0.0
        %v8333 = vmax.f32 %v7480, 0.0
        %v8334 = vmax.f32 %v7482, 0.0
        %v8335 = vmax.f32 %v7521, 0.0
        %v8336 = vmax.f32 %v7523, 0.0
        %v8337 = vmax.f32 %v7562, 0.0
        %v8338 = vmax.f32 %v7564, 0.0
        %v8339 = vmax.f32 %v7603, 0.0
        %v8340 = vmax.f32 %v7605, 0.0
        %v8341 = vmax.f32 %v7644, 0.0
        %v8342 = vmax.f32 %v7646, 0.0
        %v8343 = vmax.f32 %v7685, 0.0
        %v8344 = vmax.f32 %v7687, 0.0
        %v8345 = vmax.f32 %v7726, 0.0
        %v8346 = vmax.f32 %v7728, 0.0
        %v8347 = vmax.f32 %v7767, 0.0
        %v8348 = vmax.f32 %v7769, 0.0
        %v8349 = vmax.f32 %v7808, 0.0
        %v8350 = vmax.f32 %v7810, 0.0
        %v8351 = vmax.f32 %v7849, 0.0
        %v8352 = vmax.f32 %v7851, 0.0
        %v8353 = vmax.f32 %v7890, 0.0
        %v8354 = vmax.f32 %v7892, 0.0
        %v8355 = vmax.f32 %v7931, 0.0
        %v8356 = vmax.f32 %v7933, 0.0
        %v8357 = vmax.f32 %v7972, 0.0
        %v8358 = vmax.f32 %v7974, 0.0
        %v8359 = vmax.f32 %v8013, 0.0
        %v8360 = vmax.f32 %v8015, 0.0
        %v8361 = vmax.f32 %v8054, 0.0
        %v8362 = vmax.f32 %v8056, 0.0
        %v8363 = vmax.f32 %v8095, 0.0
        %v8364 = vmax.f32 %v8097, 0.0
        %v8365 = vmax.f32 %v8136, 0.0
        %v8366 = vmax.f32 %v8138, 0.0
        %v8367 = vmax.f32 %v8177, 0.0
        %v8368 = vmax.f32 %v8179, 0.0
        %v8369 = vmax.f32 %v8218, 0.0
        %v8517 = vcombine.low %v8223, %v8224
        %v8518 = vcombine.low %v8225, %v8226
        %v8520 = vunpack.c.l.s4 1983009808
        %v8521 = vunpack.c.0.s8 %v8520
        %v8522 = vlaneseq
        %v8523 = vshrl.u32 %v8522, 7
        %v8524 = vsub.s32 %v8521, %v8523
        %v8525 = vrot.slane %v8517, %v8524
        %v8527 = vunpack.c.l.s4 1983009808
        %v8528 = vunpack.c.0.s8 %v8527
        %v8529 = vlaneseq
        %v8530 = vshrl.u32 %v8529, 7
        %v8531 = vsub.s32 %v8528, %v8530
        %v8532 = vrot.slane %v8518, %v8531
        %v8533 = vcombine.low %v8525, %v8532
        %v8534 = vcombine.low %v8227, %v8228
        %v8535 = vcombine.low %v8229, %v8230
        %v8537 = vunpack.c.l.s4 1983009808
        %v8538 = vunpack.c.0.s8 %v8537
        %v8539 = vlaneseq
        %v8540 = vshrl.u32 %v8539, 7
        %v8541 = vsub.s32 %v8538, %v8540
        %v8542 = vrot.slane %v8534, %v8541
        %v8544 = vunpack.c.l.s4 1983009808
        %v8545 = vunpack.c.0.s8 %v8544
        %v8546 = vlaneseq
        %v8547 = vshrl.u32 %v8546, 7
        %v8548 = vsub.s32 %v8545, %v8547
        %v8549 = vrot.slane %v8535, %v8548
        %v8550 = vcombine.low %v8542, %v8549
        %v8551 = vcombine.low %v8231, %v8232
        %v8552 = vcombine.low %v8233, %v8234
        %v8554 = vunpack.c.l.s4 1983009808
        %v8555 = vunpack.c.0.s8 %v8554
        %v8556 = vlaneseq
        %v8557 = vshrl.u32 %v8556, 7
        %v8558 = vsub.s32 %v8555, %v8557
        %v8559 = vrot.slane %v8551, %v8558
        %v8561 = vunpack.c.l.s4 1983009808
        %v8562 = vunpack.c.0.s8 %v8561
        %v8563 = vlaneseq
        %v8564 = vshrl.u32 %v8563, 7
        %v8565 = vsub.s32 %v8562, %v8564
        %v8566 = vrot.slane %v8552, %v8565
        %v8567 = vcombine.low %v8559, %v8566
        %v8568 = vcombine.low %v8235, %v8236
        %v8569 = vcombine.low %v8237, %v8238
        %v8571 = vunpack.c.l.s4 1983009808
        %v8572 = vunpack.c.0.s8 %v8571
        %v8573 = vlaneseq
        %v8574 = vshrl.u32 %v8573, 7
        %v8575 = vsub.s32 %v8572, %v8574
        %v8576 = vrot.slane %v8568, %v8575
        %v8578 = vunpack.c.l.s4 1983009808
        %v8579 = vunpack.c.0.s8 %v8578
        %v8580 = vlaneseq
        %v8581 = vshrl.u32 %v8580, 7
        %v8582 = vsub.s32 %v8579, %v8581
        %v8583 = vrot.slane %v8569, %v8582
        %v8584 = vcombine.low %v8576, %v8583
        %v8585 = vcombine.low %v8239, %v8240
        %v8586 = vcombine.low %v8241, %v8242
        %v8588 = vunpack.c.l.s4 1983009808
        %v8589 = vunpack.c.0.s8 %v8588
        %v8590 = vlaneseq
        %v8591 = vshrl.u32 %v8590, 7
        %v8592 = vsub.s32 %v8589, %v8591
        %v8593 = vrot.slane %v8585, %v8592
        %v8595 = vunpack.c.l.s4 1983009808
        %v8596 = vunpack.c.0.s8 %v8595
        %v8597 = vlaneseq
        %v8598 = vshrl.u32 %v8597, 7
        %v8599 = vsub.s32 %v8596, %v8598
        %v8600 = vrot.slane %v8586, %v8599
        %v8601 = vcombine.low %v8593, %v8600
        %v8602 = vcombine.low %v8243, %v8244
        %v8603 = vcombine.low %v8245, %v8246
        %v8605 = vunpack.c.l.s4 1983009808
        %v8606 = vunpack.c.0.s8 %v8605
        %v8607 = vlaneseq
        %v8608 = vshrl.u32 %v8607, 7
        %v8609 = vsub.s32 %v8606, %v8608
        %v8610 = vrot.slane %v8602, %v8609
        %v8612 = vunpack.c.l.s4 1983009808
        %v8613 = vunpack.c.0.s8 %v8612
        %v8614 = vlaneseq
        %v8615 = vshrl.u32 %v8614, 7
        %v8616 = vsub.s32 %v8613, %v8615
        %v8617 = vrot.slane %v8603, %v8616
        %v8618 = vcombine.low %v8610, %v8617
        %v8619 = vcombine.low %v8247, %v8248
        %v8620 = vcombine.low %v8249, %v8250
        %v8622 = vunpack.c.l.s4 1983009808
        %v8623 = vunpack.c.0.s8 %v8622
        %v8624 = vlaneseq
        %v8625 = vshrl.u32 %v8624, 7
        %v8626 = vsub.s32 %v8623, %v8625
        %v8627 = vrot.slane %v8619, %v8626
        %v8629 = vunpack.c.l.s4 1983009808
        %v8630 = vunpack.c.0.s8 %v8629
        %v8631 = vlaneseq
        %v8632 = vshrl.u32 %v8631, 7
        %v8633 = vsub.s32 %v8630, %v8632
        %v8634 = vrot.slane %v8620, %v8633
        %v8635 = vcombine.low %v8627, %v8634
        %v8636 = vcombine.low %v8251, %v8252
        %v8637 = vcombine.low %v8253, %v8254
        %v8639 = vunpack.c.l.s4 1983009808
        %v8640 = vunpack.c.0.s8 %v8639
        %v8641 = vlaneseq
        %v8642 = vshrl.u32 %v8641, 7
        %v8643 = vsub.s32 %v8640, %v8642
        %v8644 = vrot.slane %v8636, %v8643
        %v8646 = vunpack.c.l.s4 1983009808
        %v8647 = vunpack.c.0.s8 %v8646
        %v8648 = vlaneseq
        %v8649 = vshrl.u32 %v8648, 7
        %v8650 = vsub.s32 %v8647, %v8649
        %v8651 = vrot.slane %v8637, %v8650
        %v8652 = vcombine.low %v8644, %v8651
        %v8653 = vcombine.low %v8255, %v8256
        %v8654 = vcombine.low %v8257, %v8258
        %v8656 = vunpack.c.l.s4 1983009808
        %v8657 = vunpack.c.0.s8 %v8656
        %v8658 = vlaneseq
        %v8659 = vshrl.u32 %v8658, 7
        %v8660 = vsub.s32 %v8657, %v8659
        %v8661 = vrot.slane %v8653, %v8660
        %v8663 = vunpack.c.l.s4 1983009808
        %v8664 = vunpack.c.0.s8 %v8663
        %v8665 = vlaneseq
        %v8666 = vshrl.u32 %v8665, 7
        %v8667 = vsub.s32 %v8664, %v8666
        %v8668 = vrot.slane %v8654, %v8667
        %v8669 = vcombine.low %v8661, %v8668
        %v8670 = vcombine.low %v8259, %v8260
        %v8671 = vcombine.low %v8261, %v8262
        %v8673 = vunpack.c.l.s4 1983009808
        %v8674 = vunpack.c.0.s8 %v8673
        %v8675 = vlaneseq
        %v8676 = vshrl.u32 %v8675, 7
        %v8677 = vsub.s32 %v8674, %v8676
        %v8678 = vrot.slane %v8670, %v8677
        %v8680 = vunpack.c.l.s4 1983009808
        %v8681 = vunpack.c.0.s8 %v8680
        %v8682 = vlaneseq
        %v8683 = vshrl.u32 %v8682, 7
        %v8684 = vsub.s32 %v8681, %v8683
        %v8685 = vrot.slane %v8671, %v8684
        %v8686 = vcombine.low %v8678, %v8685
        %v8687 = vcombine.low %v8263, %v8264
        %v8688 = vcombine.low %v8265, %v8266
        %v8690 = vunpack.c.l.s4 1983009808
        %v8691 = vunpack.c.0.s8 %v8690
        %v8692 = vlaneseq
        %v8693 = vshrl.u32 %v8692, 7
        %v8694 = vsub.s32 %v8691, %v8693
        %v8695 = vrot.slane %v8687, %v8694
        %v8697 = vunpack.c.l.s4 1983009808
        %v8698 = vunpack.c.0.s8 %v8697
        %v8699 = vlaneseq
        %v8700 = vshrl.u32 %v8699, 7
        %v8701 = vsub.s32 %v8698, %v8700
        %v8702 = vrot.slane %v8688, %v8701
        %v8703 = vcombine.low %v8695, %v8702
        %v8704 = vcombine.low %v8267, %v8268
        %v8705 = vcombine.low %v8269, %v8270
        %v8707 = vunpack.c.l.s4 1983009808
        %v8708 = vunpack.c.0.s8 %v8707
        %v8709 = vlaneseq
        %v8710 = vshrl.u32 %v8709, 7
        %v8711 = vsub.s32 %v8708, %v8710
        %v8712 = vrot.slane %v8704, %v8711
        %v8714 = vunpack.c.l.s4 1983009808
        %v8715 = vunpack.c.0.s8 %v8714
        %v8716 = vlaneseq
        %v8717 = vshrl.u32 %v8716, 7
        %v8718 = vsub.s32 %v8715, %v8717
        %v8719 = vrot.slane %v8705, %v8718
        %v8720 = vcombine.low %v8712, %v8719
        %v8721 = vcombine.low %v8271, %v8272
        %v8722 = vcombine.low %v8273, %v8274
        %v8724 = vunpack.c.l.s4 1983009808
        %v8725 = vunpack.c.0.s8 %v8724
        %v8726 = vlaneseq
        %v8727 = vshrl.u32 %v8726, 7
        %v8728 = vsub.s32 %v8725, %v8727
        %v8729 = vrot.slane %v8721, %v8728
        %v8731 = vunpack.c.l.s4 1983009808
        %v8732 = vunpack.c.0.s8 %v8731
        %v8733 = vlaneseq
        %v8734 = vshrl.u32 %v8733, 7
        %v8735 = vsub.s32 %v8732, %v8734
        %v8736 = vrot.slane %v8722, %v8735
        %v8737 = vcombine.low %v8729, %v8736
        %v8738 = vcombine.low %v8275, %v8276
        %v8739 = vcombine.low %v8277, %v8278
        %v8741 = vunpack.c.l.s4 1983009808
        %v8742 = vunpack.c.0.s8 %v8741
        %v8743 = vlaneseq
        %v8744 = vshrl.u32 %v8743, 7
        %v8745 = vsub.s32 %v8742, %v8744
        %v8746 = vrot.slane %v8738, %v8745
        %v8748 = vunpack.c.l.s4 1983009808
        %v8749 = vunpack.c.0.s8 %v8748
        %v8750 = vlaneseq
        %v8751 = vshrl.u32 %v8750, 7
        %v8752 = vsub.s32 %v8749, %v8751
        %v8753 = vrot.slane %v8739, %v8752
        %v8754 = vcombine.low %v8746, %v8753
        %v8755 = vcombine.low %v8279, %v8280
        %v8756 = vcombine.low %v8281, %v8282
        %v8758 = vunpack.c.l.s4 1983009808
        %v8759 = vunpack.c.0.s8 %v8758
        %v8760 = vlaneseq
        %v8761 = vshrl.u32 %v8760, 7
        %v8762 = vsub.s32 %v8759, %v8761
        %v8763 = vrot.slane %v8755, %v8762
        %v8765 = vunpack.c.l.s4 1983009808
        %v8766 = vunpack.c.0.s8 %v8765
        %v8767 = vlaneseq
        %v8768 = vshrl.u32 %v8767, 7
        %v8769 = vsub.s32 %v8766, %v8768
        %v8770 = vrot.slane %v8756, %v8769
        %v8771 = vcombine.low %v8763, %v8770
        %v8772 = vcombine.low %v8283, %v8284
        %v8773 = vcombine.low %v8285, %v8286
        %v8775 = vunpack.c.l.s4 1983009808
        %v8776 = vunpack.c.0.s8 %v8775
        %v8777 = vlaneseq
        %v8778 = vshrl.u32 %v8777, 7
        %v8779 = vsub.s32 %v8776, %v8778
        %v8780 = vrot.slane %v8772, %v8779
        %v8782 = vunpack.c.l.s4 1983009808
        %v8783 = vunpack.c.0.s8 %v8782
        %v8784 = vlaneseq
        %v8785 = vshrl.u32 %v8784, 7
        %v8786 = vsub.s32 %v8783, %v8785
        %v8787 = vrot.slane %v8773, %v8786
        %v8788 = vcombine.low %v8780, %v8787
        %v8789 = vcombine.low %v8287, %v8288
        %v8790 = vcombine.low %v8289, %v8290
        %v8792 = vunpack.c.l.s4 1983009808
        %v8793 = vunpack.c.0.s8 %v8792
        %v8794 = vlaneseq
        %v8795 = vshrl.u32 %v8794, 7
        %v8796 = vsub.s32 %v8793, %v8795
        %v8797 = vrot.slane %v8789, %v8796
        %v8799 = vunpack.c.l.s4 1983009808
        %v8800 = vunpack.c.0.s8 %v8799
        %v8801 = vlaneseq
        %v8802 = vshrl.u32 %v8801, 7
        %v8803 = vsub.s32 %v8800, %v8802
        %v8804 = vrot.slane %v8790, %v8803
        %v8805 = vcombine.low %v8797, %v8804
        %v8806 = vcombine.low %v8291, %v8292
        %v8807 = vcombine.low %v8293, %v8294
        %v8809 = vunpack.c.l.s4 1983009808
        %v8810 = vunpack.c.0.s8 %v8809
        %v8811 = vlaneseq
        %v8812 = vshrl.u32 %v8811, 7
        %v8813 = vsub.s32 %v8810, %v8812
        %v8814 = vrot.slane %v8806, %v8813
        %v8816 = vunpack.c.l.s4 1983009808
        %v8817 = vunpack.c.0.s8 %v8816
        %v8818 = vlaneseq
        %v8819 = vshrl.u32 %v8818, 7
        %v8820 = vsub.s32 %v8817, %v8819
        %v8821 = vrot.slane %v8807, %v8820
        %v8822 = vcombine.low %v8814, %v8821
        %v8823 = vcombine.low %v8295, %v8296
        %v8824 = vcombine.low %v8297, %v8298
        %v8826 = vunpack.c.l.s4 1983009808
        %v8827 = vunpack.c.0.s8 %v8826
        %v8828 = vlaneseq
        %v8829 = vshrl.u32 %v8828, 7
        %v8830 = vsub.s32 %v8827, %v8829
        %v8831 = vrot.slane %v8823, %v8830
        %v8833 = vunpack.c.l.s4 1983009808
        %v8834 = vunpack.c.0.s8 %v8833
        %v8835 = vlaneseq
        %v8836 = vshrl.u32 %v8835, 7
        %v8837 = vsub.s32 %v8834, %v8836
        %v8838 = vrot.slane %v8824, %v8837
        %v8839 = vcombine.low %v8831, %v8838
        %v8840 = vcombine.low %v8299, %v8300
        %v8841 = vcombine.low %v8301, %v8302
        %v8843 = vunpack.c.l.s4 1983009808
        %v8844 = vunpack.c.0.s8 %v8843
        %v8845 = vlaneseq
        %v8846 = vshrl.u32 %v8845, 7
        %v8847 = vsub.s32 %v8844, %v8846
        %v8848 = vrot.slane %v8840, %v8847
        %v8850 = vunpack.c.l.s4 1983009808
        %v8851 = vunpack.c.0.s8 %v8850
        %v8852 = vlaneseq
        %v8853 = vshrl.u32 %v8852, 7
        %v8854 = vsub.s32 %v8851, %v8853
        %v8855 = vrot.slane %v8841, %v8854
        %v8856 = vcombine.low %v8848, %v8855
        %v8857 = vcombine.low %v8303, %v8304
        %v8858 = vcombine.low %v8305, %v8306
        %v8860 = vunpack.c.l.s4 1983009808
        %v8861 = vunpack.c.0.s8 %v8860
        %v8862 = vlaneseq
        %v8863 = vshrl.u32 %v8862, 7
        %v8864 = vsub.s32 %v8861, %v8863
        %v8865 = vrot.slane %v8857, %v8864
        %v8867 = vunpack.c.l.s4 1983009808
        %v8868 = vunpack.c.0.s8 %v8867
        %v8869 = vlaneseq
        %v8870 = vshrl.u32 %v8869, 7
        %v8871 = vsub.s32 %v8868, %v8870
        %v8872 = vrot.slane %v8858, %v8871
        %v8873 = vcombine.low %v8865, %v8872
        %v8874 = vcombine.low %v8307, %v8308
        %v8875 = vcombine.low %v8309, %v8310
        %v8877 = vunpack.c.l.s4 1983009808
        %v8878 = vunpack.c.0.s8 %v8877
        %v8879 = vlaneseq
        %v8880 = vshrl.u32 %v8879, 7
        %v8881 = vsub.s32 %v8878, %v8880
        %v8882 = vrot.slane %v8874, %v8881
        %v8884 = vunpack.c.l.s4 1983009808
        %v8885 = vunpack.c.0.s8 %v8884
        %v8886 = vlaneseq
        %v8887 = vshrl.u32 %v8886, 7
        %v8888 = vsub.s32 %v8885, %v8887
        %v8889 = vrot.slane %v8875, %v8888
        %v8890 = vcombine.low %v8882, %v8889
        %v8891 = vcombine.low %v8311, %v8312
        %v8892 = vcombine.low %v8313, %v8314
        %v8894 = vunpack.c.l.s4 1983009808
        %v8895 = vunpack.c.0.s8 %v8894
        %v8896 = vlaneseq
        %v8897 = vshrl.u32 %v8896, 7
        %v8898 = vsub.s32 %v8895, %v8897
        %v8899 = vrot.slane %v8891, %v8898
        %v8901 = vunpack.c.l.s4 1983009808
        %v8902 = vunpack.c.0.s8 %v8901
        %v8903 = vlaneseq
        %v8904 = vshrl.u32 %v8903, 7
        %v8905 = vsub.s32 %v8902, %v8904
        %v8906 = vrot.slane %v8892, %v8905
        %v8907 = vcombine.low %v8899, %v8906
        %v8908 = vcombine.low %v8315, %v8316
        %v8909 = vcombine.low %v8317, %v8318
        %v8911 = vunpack.c.l.s4 1983009808
        %v8912 = vunpack.c.0.s8 %v8911
        %v8913 = vlaneseq
        %v8914 = vshrl.u32 %v8913, 7
        %v8915 = vsub.s32 %v8912, %v8914
        %v8916 = vrot.slane %v8908, %v8915
        %v8918 = vunpack.c.l.s4 1983009808
        %v8919 = vunpack.c.0.s8 %v8918
        %v8920 = vlaneseq
        %v8921 = vshrl.u32 %v8920, 7
        %v8922 = vsub.s32 %v8919, %v8921
        %v8923 = vrot.slane %v8909, %v8922
        %v8924 = vcombine.low %v8916, %v8923
        %v8925 = vcombine.low %v8319, %v8320
        %v8926 = vcombine.low %v8321, %v8322
        %v8928 = vunpack.c.l.s4 1983009808
        %v8929 = vunpack.c.0.s8 %v8928
        %v8930 = vlaneseq
        %v8931 = vshrl.u32 %v8930, 7
        %v8932 = vsub.s32 %v8929, %v8931
        %v8933 = vrot.slane %v8925, %v8932
        %v8935 = vunpack.c.l.s4 1983009808
        %v8936 = vunpack.c.0.s8 %v8935
        %v8937 = vlaneseq
        %v8938 = vshrl.u32 %v8937, 7
        %v8939 = vsub.s32 %v8936, %v8938
        %v8940 = vrot.slane %v8926, %v8939
        %v8941 = vcombine.low %v8933, %v8940
        %v8942 = vcombine.low %v8323, %v8324
        %v8943 = vcombine.low %v8325, %v8326
        %v8945 = vunpack.c.l.s4 1983009808
        %v8946 = vunpack.c.0.s8 %v8945
        %v8947 = vlaneseq
        %v8948 = vshrl.u32 %v8947, 7
        %v8949 = vsub.s32 %v8946, %v8948
        %v8950 = vrot.slane %v8942, %v8949
        %v8952 = vunpack.c.l.s4 1983009808
        %v8953 = vunpack.c.0.s8 %v8952
        %v8954 = vlaneseq
        %v8955 = vshrl.u32 %v8954, 7
        %v8956 = vsub.s32 %v8953, %v8955
        %v8957 = vrot.slane %v8943, %v8956
        %v8958 = vcombine.low %v8950, %v8957
        %v8959 = vcombine.low %v8327, %v8328
        %v8960 = vcombine.low %v8329, %v8330
        %v8962 = vunpack.c.l.s4 1983009808
        %v8963 = vunpack.c.0.s8 %v8962
        %v8964 = vlaneseq
        %v8965 = vshrl.u32 %v8964, 7
        %v8966 = vsub.s32 %v8963, %v8965
        %v8967 = vrot.slane %v8959, %v8966
        %v8969 = vunpack.c.l.s4 1983009808
        %v8970 = vunpack.c.0.s8 %v8969
        %v8971 = vlaneseq
        %v8972 = vshrl.u32 %v8971, 7
        %v8973 = vsub.s32 %v8970, %v8972
        %v8974 = vrot.slane %v8960, %v8973
        %v8975 = vcombine.low %v8967, %v8974
        %v8976 = vcombine.low %v8331, %v8332
        %v8977 = vcombine.low %v8333, %v8334
        %v8979 = vunpack.c.l.s4 1983009808
        %v8980 = vunpack.c.0.s8 %v8979
        %v8981 = vlaneseq
        %v8982 = vshrl.u32 %v8981, 7
        %v8983 = vsub.s32 %v8980, %v8982
        %v8984 = vrot.slane %v8976, %v8983
        %v8986 = vunpack.c.l.s4 1983009808
        %v8987 = vunpack.c.0.s8 %v8986
        %v8988 = vlaneseq
        %v8989 = vshrl.u32 %v8988, 7
        %v8990 = vsub.s32 %v8987, %v8989
        %v8991 = vrot.slane %v8977, %v8990
        %v8992 = vcombine.low %v8984, %v8991
        %v8993 = vcombine.low %v8335, %v8336
        %v8994 = vcombine.low %v8337, %v8338
        %v8996 = vunpack.c.l.s4 1983009808
        %v8997 = vunpack.c.0.s8 %v8996
        %v8998 = vlaneseq
        %v8999 = vshrl.u32 %v8998, 7
        %v9000 = vsub.s32 %v8997, %v8999
        %v9001 = vrot.slane %v8993, %v9000
        %v9003 = vunpack.c.l.s4 1983009808
        %v9004 = vunpack.c.0.s8 %v9003
        %v9005 = vlaneseq
        %v9006 = vshrl.u32 %v9005, 7
        %v9007 = vsub.s32 %v9004, %v9006
        %v9008 = vrot.slane %v8994, %v9007
        %v9009 = vcombine.low %v9001, %v9008
        %v9010 = vcombine.low %v8339, %v8340
        %v9011 = vcombine.low %v8341, %v8342
        %v9013 = vunpack.c.l.s4 1983009808
        %v9014 = vunpack.c.0.s8 %v9013
        %v9015 = vlaneseq
        %v9016 = vshrl.u32 %v9015, 7
        %v9017 = vsub.s32 %v9014, %v9016
        %v9018 = vrot.slane %v9010, %v9017
        %v9020 = vunpack.c.l.s4 1983009808
        %v9021 = vunpack.c.0.s8 %v9020
        %v9022 = vlaneseq
        %v9023 = vshrl.u32 %v9022, 7
        %v9024 = vsub.s32 %v9021, %v9023
        %v9025 = vrot.slane %v9011, %v9024
        %v9026 = vcombine.low %v9018, %v9025
        %v9027 = vcombine.low %v8343, %v8344
        %v9028 = vcombine.low %v8345, %v8346
        %v9030 = vunpack.c.l.s4 1983009808
        %v9031 = vunpack.c.0.s8 %v9030
        %v9032 = vlaneseq
        %v9033 = vshrl.u32 %v9032, 7
        %v9034 = vsub.s32 %v9031, %v9033
        %v9035 = vrot.slane %v9027, %v9034
        %v9037 = vunpack.c.l.s4 1983009808
        %v9038 = vunpack.c.0.s8 %v9037
        %v9039 = vlaneseq
        %v9040 = vshrl.u32 %v9039, 7
        %v9041 = vsub.s32 %v9038, %v9040
        %v9042 = vrot.slane %v9028, %v9041
        %v9043 = vcombine.low %v9035, %v9042
        %v9044 = vcombine.low %v8347, %v8348
        %v9045 = vcombine.low %v8349, %v8350
        %v9047 = vunpack.c.l.s4 1983009808
        %v9048 = vunpack.c.0.s8 %v9047
        %v9049 = vlaneseq
        %v9050 = vshrl.u32 %v9049, 7
        %v9051 = vsub.s32 %v9048, %v9050
        %v9052 = vrot.slane %v9044, %v9051
        %v9054 = vunpack.c.l.s4 1983009808
        %v9055 = vunpack.c.0.s8 %v9054
        %v9056 = vlaneseq
        %v9057 = vshrl.u32 %v9056, 7
        %v9058 = vsub.s32 %v9055, %v9057
        %v9059 = vrot.slane %v9045, %v9058
        %v9060 = vcombine.low %v9052, %v9059
        %v9061 = vcombine.low %v8351, %v8352
        %v9062 = vcombine.low %v8353, %v8354
        %v9064 = vunpack.c.l.s4 1983009808
        %v9065 = vunpack.c.0.s8 %v9064
        %v9066 = vlaneseq
        %v9067 = vshrl.u32 %v9066, 7
        %v9068 = vsub.s32 %v9065, %v9067
        %v9069 = vrot.slane %v9061, %v9068
        %v9071 = vunpack.c.l.s4 1983009808
        %v9072 = vunpack.c.0.s8 %v9071
        %v9073 = vlaneseq
        %v9074 = vshrl.u32 %v9073, 7
        %v9075 = vsub.s32 %v9072, %v9074
        %v9076 = vrot.slane %v9062, %v9075
        %v9077 = vcombine.low %v9069, %v9076
        %v9078 = vcombine.low %v8355, %v8356
        %v9079 = vcombine.low %v8357, %v8358
        %v9081 = vunpack.c.l.s4 1983009808
        %v9082 = vunpack.c.0.s8 %v9081
        %v9083 = vlaneseq
        %v9084 = vshrl.u32 %v9083, 7
        %v9085 = vsub.s32 %v9082, %v9084
        %v9086 = vrot.slane %v9078, %v9085
        %v9088 = vunpack.c.l.s4 1983009808
        %v9089 = vunpack.c.0.s8 %v9088
        %v9090 = vlaneseq
        %v9091 = vshrl.u32 %v9090, 7
        %v9092 = vsub.s32 %v9089, %v9091
        %v9093 = vrot.slane %v9079, %v9092
        %v9094 = vcombine.low %v9086, %v9093
        %v9095 = vcombine.low %v8359, %v8360
        %v9096 = vcombine.low %v8361, %v8362
        %v9098 = vunpack.c.l.s4 1983009808
        %v9099 = vunpack.c.0.s8 %v9098
        %v9100 = vlaneseq
        %v9101 = vshrl.u32 %v9100, 7
        %v9102 = vsub.s32 %v9099, %v9101
        %v9103 = vrot.slane %v9095, %v9102
        %v9105 = vunpack.c.l.s4 1983009808
        %v9106 = vunpack.c.0.s8 %v9105
        %v9107 = vlaneseq
        %v9108 = vshrl.u32 %v9107, 7
        %v9109 = vsub.s32 %v9106, %v9108
        %v9110 = vrot.slane %v9096, %v9109
        %v9111 = vcombine.low %v9103, %v9110
        %v9112 = vcombine.low %v8363, %v8364
        %v9113 = vcombine.low %v8365, %v8366
        %v9115 = vunpack.c.l.s4 1983009808
        %v9116 = vunpack.c.0.s8 %v9115
        %v9117 = vlaneseq
        %v9118 = vshrl.u32 %v9117, 7
        %v9119 = vsub.s32 %v9116, %v9118
        %v9120 = vrot.slane %v9112, %v9119
        %v9122 = vunpack.c.l.s4 1983009808
        %v9123 = vunpack.c.0.s8 %v9122
        %v9124 = vlaneseq
        %v9125 = vshrl.u32 %v9124, 7
        %v9126 = vsub.s32 %v9123, %v9125
        %v9127 = vrot.slane %v9113, %v9126
        %v9128 = vcombine.low %v9120, %v9127
        %v9129 = vcombine.low %v8367, %v8368
        %v9131 = vunpack.c.l.s4 1983009808
        %v9132 = vunpack.c.0.s8 %v9131
        %v9133 = vlaneseq
        %v9134 = vshrl.u32 %v9133, 7
        %v9135 = vsub.s32 %v9132, %v9134
        %v9136 = vrot.slane %v9129, %v9135
        %v9138 = vunpack.c.l.s4 1983009808
        %v9139 = vunpack.c.0.s8 %v9138
        %v9140 = vlaneseq
        %v9141 = vshrl.u32 %v9140, 7
        %v9142 = vsub.s32 %v9139, %v9141
        %v9143 = vrot.slane %v8369, %v9142
        %v9144 = vcombine.low %v9136, %v9143
        %9182 = vst [vmem:[%s230] sm:$0xff] %v8533
        %9183 = vst [vmem:[%s230 + $0x8] sm:$0xff] %v8550
        %9184 = vst [vmem:[%s230 + $0x10] sm:$0xff] %v8567
        %9185 = vst [vmem:[%s230 + $0x18] sm:$0xff] %v8584
        %9186 = vst [vmem:[%s230 + $0x20] sm:$0xff] %v8601
        %9187 = vst [vmem:[%s230 + $0x28] sm:$0xff] %v8618
        %9188 = vst [vmem:[%s230 + $0x30] sm:$0xff] %v8635
        %9189 = vst [vmem:[%s230 + $0x38] sm:$0xff] %v8652
        %9190 = vst [vmem:[%s230 + $0x40] sm:$0xff] %v8669
        %9191 = vst [vmem:[%s230 + $0x48] sm:$0xff] %v8686
        %9192 = vst [vmem:[%s230 + $0x50] sm:$0xff] %v8703
        %9193 = vst [vmem:[%s230 + $0x58] sm:$0xff] %v8720
        %9194 = vst [vmem:[%s230 + $0x60] sm:$0xff] %v8737
        %9195 = vst [vmem:[%s230 + $0x68] sm:$0xff] %v8754
        %9196 = vst [vmem:[%s230 + $0x70] sm:$0xff] %v8771
        %9197 = vst [vmem:[%s230 + $0x78] sm:$0xff] %v8788
        %9198 = vst [vmem:[%s230 + $0x80] sm:$0xff] %v8805
        %9199 = vst [vmem:[%s230 + $0x88] sm:$0xff] %v8822
        %9200 = vst [vmem:[%s230 + $0x90] sm:$0xff] %v8839
        %9201 = vst [vmem:[%s230 + $0x98] sm:$0xff] %v8856
        %9202 = vst [vmem:[%s230 + $0xa0] sm:$0xff] %v8873
        %9203 = vst [vmem:[%s230 + $0xa8] sm:$0xff] %v8890
        %9204 = vst [vmem:[%s230 + $0xb0] sm:$0xff] %v8907
        %9205 = vst [vmem:[%s230 + $0xb8] sm:$0xff] %v8924
        %9206 = vst [vmem:[%s230 + $0xc0] sm:$0xff] %v8941
        %9207 = vst [vmem:[%s230 + $0xc8] sm:$0xff] %v8958
        %9208 = vst [vmem:[%s230 + $0xd0] sm:$0xff] %v8975
        %9209 = vst [vmem:[%s230 + $0xd8] sm:$0xff] %v8992
        %9210 = vst [vmem:[%s230 + $0xe0] sm:$0xff] %v9009
        %9211 = vst [vmem:[%s230 + $0xe8] sm:$0xff] %v9026
        %9212 = vst [vmem:[%s230 + $0xf0] sm:$0xff] %v9043
        %9213 = vst [vmem:[%s230 + $0xf8] sm:$0xff] %v9060
        %9214 = vst [vmem:[%s230 + $0x100] sm:$0xff] %v9077
        %9215 = vst [vmem:[%s230 + $0x108] sm:$0xff] %v9094
        %9216 = vst [vmem:[%s230 + $0x110] sm:$0xff] %v9111
        %9217 = vst [vmem:[%s230 + $0x118] sm:$0xff] %v9128
        %9218 = vst [vmem:[%s230 + $0x120] sm:$0x3f] %v9144
        %s9219 = smul.u32 147, %s20
        %p9220 = scmp.lt.s32.totalorder %s9219, 1175
        %s9221 = scalar_select %p9220, %s9219, 1175
        %s9222 = smul.addr %s9221, 2
        %s9223 = scalar_lea.vmem %s3, %s9222
        // Predicated region
        $region41: #{linear_decoder_forward.1} parent=31 // pred_check
          %p9224 = pneg %p111
        $region42: #{linear_decoder_forward.1} parent=31 // pred_check_branch
          %9226 = sbr.rel (%p9224) target = $region44
        $region43: #{linear_decoder_forward.1} parent=31 // pred_region
          %s9227 = smul.u32 147, %s20
        $region44: #{linear_decoder_forward.1} parent=31 // pred_fallthru
          _
      $region32: #{linear_decoder_forward.1} parent=5 // pred_fallthru
        _
      %p9228 = scmp.le.s32.totalorder 2, %s15
      // Predicated region
      $region45: #{linear_decoder_forward.1} parent=5 // pred_check
        %p9229 = pneg %p9228
      $region46: #{linear_decoder_forward.1} parent=5 // pred_check_branch
        %9231 = sbr.rel (%p9229) target = $region48
      $region47: #{linear_decoder_forward.1} parent=5 // pred_region
        %s9232 = ssub.s32 %s15, 2
        // Predicated region
        $region49: #{linear_decoder_forward.1} parent=47 // pred_check
          %p9233 = pneg %p117
        $region50: #{linear_decoder_forward.1} parent=47 // pred_check_branch
          %9235 = sbr.rel (%p9233) target = $region52
        $region51: #{linear_decoder_forward.1} parent=47 // pred_region
          %s9236 = smul.u32 147, %s21
          %p9237 = scmp.lt.s32.totalorder %s9236, 1175
          %s9238 = scalar_select %p9237, %s9236, 1175
          %s9239 = smul.addr %s9238, 2
          %s9240 = scalar_lea.vmem %s3, %s9239
        $region52: #{linear_decoder_forward.1} parent=47 // pred_fallthru
          _
      $region48: #{linear_decoder_forward.1} parent=5 // pred_fallthru
        _
    $region6: #{linear_decoder_forward.1} parent=1 // loop_footer
      %s19 = sadd.s32 1, %s15
    $region7: #{linear_decoder_forward.1} parent=1 // loop_footer_branch
      %14 = sbr.rel target = $region3
    $region8: #{linear_decoder_forward.1} parent=1 // loop_exit
      _
    %9241 = vsyncpa [#allocation3], 1
    %s9242 = scalar_lea.sflag [#allocation3], 1
    %9243 = vsyncpa %s9242, 1
    %9244 = vsyncpa [#allocation5], 1
    %s9245 = scalar_lea.sflag [#allocation5], 1
    %9246 = vsyncpa %s9245, 1

</llo_original>
